<compile_context>
chip_gen: v7x
topology: tpu7x:2x2x1
jax: 0.10.0
libtpu: 0.0.40
codegen_flags: <defaults>
</compile_context>

<pallas_src>
import jax
import jax.numpy as jnp
from jax import lax
from jax.experimental import pallas as pl
from jax.experimental.pallas import tpu as pltpu

EPS = 1e-3      # norm_cfg eps
POOL_R = 4      # SCBottleneck.pooling_r


# ---------------------------------------------------------------------------
# In-kernel helpers
# ---------------------------------------------------------------------------
def _zero_halo(pad, H, W):
    """Zero only the 1-px border of a (H+2, W+2, C) scratch buffer."""
    C = pad.shape[-1]
    pad[0:1, :, :] = jnp.zeros((1, W + 2, C), pad.dtype)
    pad[H + 1:H + 2, :, :] = jnp.zeros((1, W + 2, C), pad.dtype)
    pad[:, 0:1, :] = jnp.zeros((H + 2, 1, C), pad.dtype)
    pad[:, W + 1:W + 2, :] = jnp.zeros((H + 2, 1, C), pad.dtype)


def _conv3x3(pad_ref, w_ref, H, W):
    """3x3 conv over a zero-padded (H+2, W+2, C) bf16 buffer as 9 tap matmuls.

    The sublane-misaligned column shift (dj) is hoisted so only 3 shifted
    copies are materialized; the row shift (di) slices the untiled leading dim
    and is effectively free.  Returns an (H*W, Co) f32 accumulator (no bias).
    """
    C = pad_ref.shape[-1]
    Co = w_ref.shape[-1]
    acc = jnp.zeros((H * W, Co), jnp.float32)
    for dj in range(3):
        col = pad_ref[:, dj:dj + W, :]                  # (H+2, W, C) bf16
        for di in range(3):
            patch = col[di:di + H].reshape(H * W, C)
            acc = acc + jnp.dot(patch, w_ref[di * 3 + dj],
                                preferred_element_type=jnp.float32)
    return acc


# ---------------------------------------------------------------------------
# Fused per-image kernel
# ---------------------------------------------------------------------------
def _scbottleneck_kernel(x_ref, w1_ref, b1_ref,
                         wk2_ref, bk2_ref, wk3_ref, bk3_ref,
                         wk4_ref, bk4_ref, w3_ref, b3_ref,
                         out_ref, pad1, pad2, padp):
    _, H, W, Cin = x_ref.shape
    gw = w1_ref.shape[1]
    R = POOL_R
    Hp, Wp = H // R, W // R

    # Halo-only zeroing every step (interiors are fully rewritten below).
    # Unconditional so it stays correct if the batch axis is sharded across
    # TensorCores (megacore), where program_id(0)==0 may never run on a core.
    _zero_halo(pad1, H, W)
    _zero_halo(pad2, H, W)
    _zero_halo(padp, Hp, Wp)

    # ---- conv1 (1x1) + BN + ReLU (BN scale folded into w1) ----
    xv = x_ref[0].reshape(H * W, Cin)
    ob = jnp.dot(xv.astype(jnp.bfloat16), w1_ref[...],
                 preferred_element_type=jnp.float32)
    ob = jnp.maximum(ob + b1_ref[...], 0.0)             # (H*W, gw) f32
    ob_hw = ob.reshape(H, W, gw)

    # out_b (identity) in bf16 scratch for the k3 taps
    pad1[1:H + 1, 1:W + 1, :] = ob_hw.astype(pad1.dtype)

    # ---- 4x4 average pool: VPU adds over row groups + one sublane reduce ----
    sh = ob_hw.reshape(Hp, R, W, gw)
    sh = sh[:, 0] + sh[:, 1] + sh[:, 2] + sh[:, 3]       # (Hp, W, gw) f32
    pooled = sh.reshape(Hp, Wp, R, gw).sum(axis=2) * (1.0 / (R * R))
    padp[1:Hp + 1, 1:Wp + 1, :] = pooled.astype(padp.dtype)

    # ---- k3 = conv3x3(out_b) + BN shift ----
    k3 = _conv3x3(pad1, wk3_ref, H, W) + bk3_ref[...]    # (H*W, gw) f32

    # ---- k2 = conv3x3(pooled) + BN shift, whole pooled map ----
    k2 = _conv3x3(padp, wk2_ref, Hp, Wp) + bk2_ref[...]  # (Hp*Wp, gw) f32
    k2hw = k2.reshape(Hp, Wp, gw)

    # ---- nearest 4x upsample via broadcast + reshape (no matmul) ----
    upw = jnp.broadcast_to(k2hw[:, :, None, :],
                           (Hp, Wp, R, gw)).reshape(Hp, W, gw)
    up = jnp.broadcast_to(upw[:, None, :, :],
                          (Hp, R, W, gw)).reshape(H, W, gw)

    # ---- sigmoid gate, multiply with k3, one bulk store into pad2 ----
    gated = k3.reshape(H, W, gw) * jax.nn.sigmoid(ob_hw + up)
    pad2[1:H + 1, 1:W + 1, :] = gated.astype(pad2.dtype)

    # ---- k4 = conv3x3(gated) + BN shift, then the bottleneck's outer ReLU ----
    y4 = jnp.maximum(_conv3x3(pad2, wk4_ref, H, W) + bk4_ref[...], 0.0)

    # ---- conv3 (1x1, BN scale folded) + shift + residual + ReLU ----
    res = x_ref[0].reshape(H * W, Cin).astype(jnp.float32)
    out = jnp.dot(y4.astype(jnp.bfloat16), w3_ref[...],
                  preferred_element_type=jnp.float32)
    out = jnp.maximum(out + b3_ref[...] + res, 0.0)
    out_ref[0] = out.reshape(H, W, out.shape[-1]).astype(out_ref.dtype)


def scbottleneck_pallas(x, kp):
    N, H, W, Cin = x.shape
    gw = kp["w1"].shape[1]
    planes = kp["w3"].shape[1]
    Hp, Wp = H // POOL_R, W // POOL_R

    # Rough VMEM budget: double-buffered f32 x/out blocks, bf16 pad scratch,
    # a handful of live full-map f32 temporaries.  Generous floor, v7x-safe cap.
    est = (4 * H * W * (Cin + planes) * 4
           + 2 * (H + 2) * (W + 2) * gw * 2 + (Hp + 2) * (Wp + 2) * gw * 2
           + 8 * H * W * gw * 4)
    vmem_limit = int(min(64 * 1024 * 1024, max(32 * 1024 * 1024, 2 * est)))

    rep2 = lambda n: (0, 0)
    rep3 = lambda n: (0, 0, 0)
    img4 = lambda n: (n, 0, 0, 0)

    return pl.pallas_call(
        _scbottleneck_kernel,
        out_shape=jax.ShapeDtypeStruct((N, H, W, planes), x.dtype),
        grid=(N,),
        in_specs=[
            pl.BlockSpec((1, H, W, Cin), img4),      # x (f32, also the residual)
            pl.BlockSpec((Cin, gw), rep2),           # w1 (bf16, BN scale folded)
            pl.BlockSpec((1, gw), rep2),             # b1
            pl.BlockSpec((9, gw, gw), rep3),         # wk2 (bf16)
            pl.BlockSpec((1, gw), rep2),             # bk2
            pl.BlockSpec((9, gw, gw), rep3),         # wk3 (bf16)
            pl.BlockSpec((1, gw), rep2),             # bk3
            pl.BlockSpec((9, gw, gw), rep3),         # wk4 (bf16)
            pl.BlockSpec((1, gw), rep2),             # bk4
            pl.BlockSpec((gw, planes), rep2),        # w3 (bf16)
            pl.BlockSpec((1, planes), rep2),         # b3
        ],
        out_specs=pl.BlockSpec((1, H, W, planes), img4),
        scratch_shapes=[
            pltpu.VMEM((H + 2, W + 2, gw), jnp.bfloat16),    # padded out_b
            pltpu.VMEM((H + 2, W + 2, gw), jnp.bfloat16),    # padded gated map
            pltpu.VMEM((Hp + 2, Wp + 2, gw), jnp.bfloat16),  # padded pooled map
        ],
        compiler_params=pltpu.CompilerParams(
            dimension_semantics=("parallel",),
            vmem_limit_bytes=vmem_limit),
    )(x, kp["w1"], kp["b1"], kp["wk2"], kp["bk2"], kp["wk3"], kp["bk3"],
      kp["wk4"], kp["bk4"], kp["w3"], kp["b3"])


# ---------------------------------------------------------------------------
# Parameter folding (inference-mode BN -> scale folded into weights + shift)
# ---------------------------------------------------------------------------
def bn_fold(gamma, beta, mean, var):
    scale = gamma / jnp.sqrt(var + EPS)
    shift = beta - mean * scale
    return scale, shift


def prepare_kernel_params(P):
    gw = P["w1_hwio"].shape[-1]
    planes = P["w3_hwio"].shape[-1]
    kp = {}

    s1, b1 = bn_fold(*P["bn1"])
    kp["w1"] = (P["w1_hwio"].reshape(-1, gw) * s1[None, :]).astype(jnp.bfloat16)
    kp["b1"] = b1.reshape(1, gw).astype(jnp.float32)

    for name, wkey in (("k2", "wk2_hwio"), ("k3", "wk3_hwio"), ("k4", "wk4_hwio")):
        s, b = bn_fold(*P["bn" + name])
        w9 = P[wkey].reshape(9, gw, gw) * s[None, None, :]
        kp["w" + name] = w9.astype(jnp.bfloat16)      # every MXU operand in bf16
        kp["b" + name] = b.reshape(1, gw).astype(jnp.float32)

    s3, b3 = bn_fold(*P["bn3"])
    kp["w3"] = (P["w3_hwio"].reshape(gw, planes) * s3[None, :]).astype(jnp.bfloat16)
    kp["b3"] = b3.reshape(1, planes).astype(jnp.float32)
    return kp


def scbottleneck_forward(x, P):
    """x: (N, H, W, inplanes) NHWC float32."""
    N, H, W, Cin = x.shape
    planes = P["w3_hwio"].shape[-1]
    assert H % POOL_R == 0 and W % POOL_R == 0, "H, W must be multiples of 4"
    assert Cin == planes, "downsample=None path requires inplanes == planes"
    kp = prepare_kernel_params(P)
    return scbottleneck_pallas(x, kp)


# ---------------------------------------------------------------------------
# Pure-JAX f32 reference (matches the PyTorch module semantics)
# ---------------------------------------------------------------------------
def ref_forward(x, P):
    def conv(y, w, pad):
        return lax.conv_general_dilated(
            y, w, (1, 1), [(pad, pad), (pad, pad)],
            dimension_numbers=("NHWC", "HWIO", "NHWC"))

    def bn(y, p):
        g, b, m, v = p
        return (y - m) / jnp.sqrt(v + EPS) * g + b

    N, H, W, _ = x.shape
    gw = P["w1_hwio"].shape[-1]
    Hp, Wp = H // POOL_R, W // POOL_R

    out_b = jnp.maximum(bn(conv(x, P["w1_hwio"], 0), P["bn1"]), 0.0)
    ident = out_b
    pooled = out_b.reshape(N, Hp, POOL_R, Wp, POOL_R, gw).mean((2, 4))
    k2 = bn(conv(pooled, P["wk2_hwio"], 1), P["bnk2"])
    up = jnp.repeat(jnp.repeat(k2, POOL_R, axis=1), POOL_R, axis=2)
    gate = jax.nn.sigmoid(ident + up)
    k3 = bn(conv(out_b, P["wk3_hwio"], 1), P["bnk3"])
    out = k3 * gate
    out = jnp.maximum(bn(conv(out, P["wk4_hwio"], 1), P["bnk4"]), 0.0)
    out = bn(conv(out, P["w3_hwio"], 0), P["bn3"])
    return jnp.maximum(out + x, 0.0)


# ---------------------------------------------------------------------------
# Deterministic parameter construction
# ---------------------------------------------------------------------------
def make_params(key, inplanes, planes):
    gw = planes // 4  # expansion = 4
    ks = jax.random.split(key, 10)

    def convw(k, kh, kw, ci, co):
        return 0.1 * jax.random.normal(k, (kh, kw, ci, co), jnp.float32)

    def bnp(k, c):
        k1, k2, k3, k4 = jax.random.split(k, 4)
        gamma = 1.0 + 0.1 * jax.random.normal(k1, (c,), jnp.float32)
        beta = 0.1 * jax.random.normal(k2, (c,), jnp.float32)
        mean = 0.1 * jax.random.normal(k3, (c,), jnp.float32)
        var = 1.0 + 0.1 * jnp.abs(jax.random.normal(k4, (c,), jnp.float32))
        return (gamma, beta, mean, var)

    P = {}
    P["w1_hwio"] = convw(ks[0], 1, 1, inplanes, gw)
    P["wk2_hwio"] = convw(ks[1], 3, 3, gw, gw)
    P["wk3_hwio"] = convw(ks[2], 3, 3, gw, gw)
    P["wk4_hwio"] = convw(ks[3], 3, 3, gw, gw)
    P["w3_hwio"] = convw(ks[4], 1, 1, gw, planes)
    P["bn1"] = bnp(ks[5], gw)
    P["bnk2"] = bnp(ks[6], gw)
    P["bnk3"] = bnp(ks[7], gw)
    P["bnk4"] = bnp(ks[8], gw)
    P["bn3"] = bnp(ks[9], planes)
    return P


if __name__ == "__main__":
    key = jax.random.PRNGKey(0)
    kx, kpk = jax.random.split(key)

    N, H, W = 2, 16, 16
    inplanes = planes = 16  # downsample=None => residual requires planes == inplanes

    P = make_params(kpk, inplanes, planes)
    x = jax.random.normal(kx, (N, H, W, inplanes), jnp.float32)

    out = scbottleneck_forward(x, P)
    out = jax.block_until_ready(out)

    ref = ref_forward(x, P)
    assert out.shape == ref.shape == (N, H, W, planes)
    # tolerance reflects bf16 MXU operands vs the f32 reference
    maxdiff = float(jnp.max(jnp.abs(out - ref)))
    assert bool(jnp.allclose(out, ref, atol=5e-2, rtol=5e-2)), (
        "mismatch: max abs diff = %g" % maxdiff)

    print("KERNEL_OK")
</pallas_src>

<mosaic_0001>
module attributes {stable_mosaic.version = 11 : i64} {
  func.func @_scbottleneck_kernel(%arg0: i32, %arg1: memref<1x16x16x16xf32, #tpu.memory_space<vmem>>, %arg2: memref<16x4xbf16, #tpu.memory_space<vmem>>, %arg3: memref<1x4xf32, #tpu.memory_space<vmem>>, %arg4: memref<9x4x4xbf16, #tpu.memory_space<vmem>>, %arg5: memref<1x4xf32, #tpu.memory_space<vmem>>, %arg6: memref<9x4x4xbf16, #tpu.memory_space<vmem>>, %arg7: memref<1x4xf32, #tpu.memory_space<vmem>>, %arg8: memref<9x4x4xbf16, #tpu.memory_space<vmem>>, %arg9: memref<1x4xf32, #tpu.memory_space<vmem>>, %arg10: memref<4x16xbf16, #tpu.memory_space<vmem>>, %arg11: memref<1x16xf32, #tpu.memory_space<vmem>>, %arg12: memref<1x16x16x16xf32, #tpu.memory_space<vmem>>, %arg13: memref<18x18x4xbf16, #tpu.memory_space<vmem>>, %arg14: memref<18x18x4xbf16, #tpu.memory_space<vmem>>, %arg15: memref<6x6x4xbf16, #tpu.memory_space<vmem>>) attributes {dimension_semantics = [#tpu.dimension_semantics<parallel>], iteration_bounds = array<i64: 2>, scalar_prefetch = 0 : i64, scratch_operands = 3 : i64, tpu.core_type = #tpu.core_type<tc>, window_params = [{transform_indices = @transform_0, window_bounds = array<i64: 1, 16, 16, 16>}, {pipeline_mode = #tpu.pipeline_mode<synchronous>, transform_indices = @transform_1, window_bounds = array<i64: 16, 4>}, {pipeline_mode = #tpu.pipeline_mode<synchronous>, transform_indices = @transform_2, window_bounds = array<i64: 1, 4>}, {pipeline_mode = #tpu.pipeline_mode<synchronous>, transform_indices = @transform_3, window_bounds = array<i64: 9, 4, 4>}, {pipeline_mode = #tpu.pipeline_mode<synchronous>, transform_indices = @transform_4, window_bounds = array<i64: 1, 4>}, {pipeline_mode = #tpu.pipeline_mode<synchronous>, transform_indices = @transform_5, window_bounds = array<i64: 9, 4, 4>}, {pipeline_mode = #tpu.pipeline_mode<synchronous>, transform_indices = @transform_6, window_bounds = array<i64: 1, 4>}, {pipeline_mode = #tpu.pipeline_mode<synchronous>, transform_indices = @transform_7, window_bounds = array<i64: 9, 4, 4>}, {pipeline_mode = #tpu.pipeline_mode<synchronous>, transform_indices = @transform_8, window_bounds = array<i64: 1, 4>}, {pipeline_mode = #tpu.pipeline_mode<synchronous>, transform_indices = @transform_9, window_bounds = array<i64: 4, 16>}, {pipeline_mode = #tpu.pipeline_mode<synchronous>, transform_indices = @transform_10, window_bounds = array<i64: 1, 16>}, {transform_indices = @transform_11, window_bounds = array<i64: 1, 16, 16, 16>}]} {
    %cst = arith.constant 0.000000e+00 : bf16
    %0 = vector.broadcast %cst : bf16 to vector<1x18x4xbf16>
    %c0 = arith.constant 0 : index
    %c0_0 = arith.constant 0 : index
    %c0_1 = arith.constant 0 : index
    %1 = vector.load %arg13[%c0, %c0_0, %c0_1] : memref<18x18x4xbf16, #tpu.memory_space<vmem>>, vector<1x18x4xbf16>
    tpu.vector_store %arg13[%c0, %c0_0, %c0_1], %0 {strides = array<i32>} : memref<18x18x4xbf16, #tpu.memory_space<vmem>>, vector<1x18x4xbf16>,
    %cst_2 = arith.constant 0.000000e+00 : bf16
    %2 = vector.broadcast %cst_2 : bf16 to vector<1x18x4xbf16>
    %c17 = arith.constant 17 : index
    %c0_3 = arith.constant 0 : index
    %c0_4 = arith.constant 0 : index
    %3 = vector.load %arg13[%c17, %c0_3, %c0_4] : memref<18x18x4xbf16, #tpu.memory_space<vmem>>, vector<1x18x4xbf16>
    tpu.vector_store %arg13[%c17, %c0_3, %c0_4], %2 {strides = array<i32>} : memref<18x18x4xbf16, #tpu.memory_space<vmem>>, vector<1x18x4xbf16>,
    %cst_5 = arith.constant 0.000000e+00 : bf16
    %4 = vector.broadcast %cst_5 : bf16 to vector<18x1x4xbf16>
    %c0_6 = arith.constant 0 : index
    %c0_7 = arith.constant 0 : index
    %c0_8 = arith.constant 0 : index
    %5 = vector.load %arg13[%c0_6, %c0_7, %c0_8] : memref<18x18x4xbf16, #tpu.memory_space<vmem>>, vector<18x1x4xbf16>
    tpu.vector_store %arg13[%c0_6, %c0_7, %c0_8], %4 {strides = array<i32>} : memref<18x18x4xbf16, #tpu.memory_space<vmem>>, vector<18x1x4xbf16>,
    %cst_9 = arith.constant 0.000000e+00 : bf16
    %6 = vector.broadcast %cst_9 : bf16 to vector<18x1x4xbf16>
    %c0_10 = arith.constant 0 : index
    %c17_11 = arith.constant 17 : index
    %c0_12 = arith.constant 0 : index
    %7 = vector.load %arg13[%c0_10, %c17_11, %c0_12] : memref<18x18x4xbf16, #tpu.memory_space<vmem>>, vector<18x1x4xbf16>
    tpu.vector_store %arg13[%c0_10, %c17_11, %c0_12], %6 {strides = array<i32>} : memref<18x18x4xbf16, #tpu.memory_space<vmem>>, vector<18x1x4xbf16>,
    %cst_13 = arith.constant 0.000000e+00 : bf16
    %8 = vector.broadcast %cst_13 : bf16 to vector<1x18x4xbf16>
    %c0_14 = arith.constant 0 : index
    %c0_15 = arith.constant 0 : index
    %c0_16 = arith.constant 0 : index
    %9 = vector.load %arg14[%c0_14, %c0_15, %c0_16] : memref<18x18x4xbf16, #tpu.memory_space<vmem>>, vector<1x18x4xbf16>
    tpu.vector_store %arg14[%c0_14, %c0_15, %c0_16], %8 {strides = array<i32>} : memref<18x18x4xbf16, #tpu.memory_space<vmem>>, vector<1x18x4xbf16>,
    %cst_17 = arith.constant 0.000000e+00 : bf16
    %10 = vector.broadcast %cst_17 : bf16 to vector<1x18x4xbf16>
    %c17_18 = arith.constant 17 : index
    %c0_19 = arith.constant 0 : index
    %c0_20 = arith.constant 0 : index
    %11 = vector.load %arg14[%c17_18, %c0_19, %c0_20] : memref<18x18x4xbf16, #tpu.memory_space<vmem>>, vector<1x18x4xbf16>
    tpu.vector_store %arg14[%c17_18, %c0_19, %c0_20], %10 {strides = array<i32>} : memref<18x18x4xbf16, #tpu.memory_space<vmem>>, vector<1x18x4xbf16>,
    %cst_21 = arith.constant 0.000000e+00 : bf16
    %12 = vector.broadcast %cst_21 : bf16 to vector<18x1x4xbf16>
    %c0_22 = arith.constant 0 : index
    %c0_23 = arith.constant 0 : index
    %c0_24 = arith.constant 0 : index
    %13 = vector.load %arg14[%c0_22, %c0_23, %c0_24] : memref<18x18x4xbf16, #tpu.memory_space<vmem>>, vector<18x1x4xbf16>
    tpu.vector_store %arg14[%c0_22, %c0_23, %c0_24], %12 {strides = array<i32>} : memref<18x18x4xbf16, #tpu.memory_space<vmem>>, vector<18x1x4xbf16>,
    %cst_25 = arith.constant 0.000000e+00 : bf16
    %14 = vector.broadcast %cst_25 : bf16 to vector<18x1x4xbf16>
    %c0_26 = arith.constant 0 : index
    %c17_27 = arith.constant 17 : index
    %c0_28 = arith.constant 0 : index
    %15 = vector.load %arg14[%c0_26, %c17_27, %c0_28] : memref<18x18x4xbf16, #tpu.memory_space<vmem>>, vector<18x1x4xbf16>
    tpu.vector_store %arg14[%c0_26, %c17_27, %c0_28], %14 {strides = array<i32>} : memref<18x18x4xbf16, #tpu.memory_space<vmem>>, vector<18x1x4xbf16>,
    %cst_29 = arith.constant 0.000000e+00 : bf16
    %16 = vector.broadcast %cst_29 : bf16 to vector<1x6x4xbf16>
    %c0_30 = arith.constant 0 : index
    %c0_31 = arith.constant 0 : index
    %c0_32 = arith.constant 0 : index
    %17 = vector.load %arg15[%c0_30, %c0_31, %c0_32] : memref<6x6x4xbf16, #tpu.memory_space<vmem>>, vector<1x6x4xbf16>
    tpu.vector_store %arg15[%c0_30, %c0_31, %c0_32], %16 {strides = array<i32>} : memref<6x6x4xbf16, #tpu.memory_space<vmem>>, vector<1x6x4xbf16>,
    %cst_33 = arith.constant 0.000000e+00 : bf16
    %18 = vector.broadcast %cst_33 : bf16 to vector<1x6x4xbf16>
    %c5 = arith.constant 5 : index
    %c0_34 = arith.constant 0 : index
    %c0_35 = arith.constant 0 : index
    %19 = vector.load %arg15[%c5, %c0_34, %c0_35] : memref<6x6x4xbf16, #tpu.memory_space<vmem>>, vector<1x6x4xbf16>
    tpu.vector_store %arg15[%c5, %c0_34, %c0_35], %18 {strides = array<i32>} : memref<6x6x4xbf16, #tpu.memory_space<vmem>>, vector<1x6x4xbf16>,
    %cst_36 = arith.constant 0.000000e+00 : bf16
    %20 = vector.broadcast %cst_36 : bf16 to vector<6x1x4xbf16>
    %c0_37 = arith.constant 0 : index
    %c0_38 = arith.constant 0 : index
    %c0_39 = arith.constant 0 : index
    %21 = vector.load %arg15[%c0_37, %c0_38, %c0_39] : memref<6x6x4xbf16, #tpu.memory_space<vmem>>, vector<6x1x4xbf16>
    tpu.vector_store %arg15[%c0_37, %c0_38, %c0_39], %20 {strides = array<i32>} : memref<6x6x4xbf16, #tpu.memory_space<vmem>>, vector<6x1x4xbf16>,
    %cst_40 = arith.constant 0.000000e+00 : bf16
    %22 = vector.broadcast %cst_40 : bf16 to vector<6x1x4xbf16>
    %c0_41 = arith.constant 0 : index
    %c5_42 = arith.constant 5 : index
    %c0_43 = arith.constant 0 : index
    %23 = vector.load %arg15[%c0_41, %c5_42, %c0_43] : memref<6x6x4xbf16, #tpu.memory_space<vmem>>, vector<6x1x4xbf16>
    tpu.vector_store %arg15[%c0_41, %c5_42, %c0_43], %22 {strides = array<i32>} : memref<6x6x4xbf16, #tpu.memory_space<vmem>>, vector<6x1x4xbf16>,
    %c0_44 = arith.constant 0 : index
    %c0_45 = arith.constant 0 : index
    %c0_46 = arith.constant 0 : index
    %c0_47 = arith.constant 0 : index
    %24 = vector.load %arg1[%c0_44, %c0_45, %c0_46, %c0_47] : memref<1x16x16x16xf32, #tpu.memory_space<vmem>>, vector<1x16x16x16xf32>
    %25 = vector.shape_cast %24 : vector<1x16x16x16xf32> to vector<16x16x16xf32>
    %26 = vector.shape_cast %25 : vector<16x16x16xf32> to vector<256x16xf32>
    %27 = arith.truncf %26 : vector<256x16xf32> to vector<256x16xbf16>
    %c0_48 = arith.constant 0 : index
    %c0_49 = arith.constant 0 : index
    %28 = vector.load %arg2[%c0_48, %c0_49] : memref<16x4xbf16, #tpu.memory_space<vmem>>, vector<16x4xbf16>
    %cst_50 = arith.constant dense<0.000000e+00> : vector<256x4xf32>
    %29 = tpu.matmul %27, %28, %cst_50 {dimension_numbers = #tpu.dot_dimension_numbers<[1], [0], [0], [1], [0, 0, 1, 1], [], []>} : vector<256x16xbf16>, vector<16x4xbf16>, vector<256x4xf32> -> vector<256x4xf32>
    %c0_51 = arith.constant 0 : index
    %c0_52 = arith.constant 0 : index
    %30 = vector.load %arg3[%c0_51, %c0_52] : memref<1x4xf32, #tpu.memory_space<vmem>>, vector<1x4xf32>
    %31 = vector.broadcast %30 : vector<1x4xf32> to vector<256x4xf32>
    %32 = arith.addf %29, %31 : vector<256x4xf32>
    %cst_53 = arith.constant 0.000000e+00 : f32
    %33 = vector.broadcast %cst_53 : f32 to vector<256x4xf32>
    %34 = arith.maximumf %32, %33 : vector<256x4xf32>
    %35 = vector.shape_cast %34 : vector<256x4xf32> to vector<16x16x4xf32>
    %36 = arith.truncf %35 : vector<16x16x4xf32> to vector<16x16x4xbf16>
    %c1 = arith.constant 1 : index
    %c1_54 = arith.constant 1 : index
    %c0_55 = arith.constant 0 : index
    %37 = vector.load %arg13[%c1, %c1_54, %c0_55] : memref<18x18x4xbf16, #tpu.memory_space<vmem>>, vector<16x16x4xbf16>
    tpu.vector_store %arg13[%c1, %c1_54, %c0_55], %36 {strides = array<i32>} : memref<18x18x4xbf16, #tpu.memory_space<vmem>>, vector<16x16x4xbf16>,
    %38 = vector.shape_cast %35 : vector<16x16x4xf32> to vector<4x4x16x4xf32>
    %39 = vector.extract_strided_slice %38 {offsets = [0, 0, 0, 0], sizes = [4, 1, 16, 4], strides = [1, 1, 1, 1]} : vector<4x4x16x4xf32> to vector<4x1x16x4xf32>
    %40 = vector.shape_cast %39 : vector<4x1x16x4xf32> to vector<4x16x4xf32>
    %41 = vector.extract_strided_slice %38 {offsets = [0, 1, 0, 0], sizes = [4, 1, 16, 4], strides = [1, 1, 1, 1]} : vector<4x4x16x4xf32> to vector<4x1x16x4xf32>
    %42 = vector.shape_cast %41 : vector<4x1x16x4xf32> to vector<4x16x4xf32>
    %43 = arith.addf %40, %42 : vector<4x16x4xf32>
    %44 = vector.extract_strided_slice %38 {offsets = [0, 2, 0, 0], sizes = [4, 1, 16, 4], strides = [1, 1, 1, 1]} : vector<4x4x16x4xf32> to vector<4x1x16x4xf32>
    %45 = vector.shape_cast %44 : vector<4x1x16x4xf32> to vector<4x16x4xf32>
    %46 = arith.addf %43, %45 : vector<4x16x4xf32>
    %47 = vector.extract_strided_slice %38 {offsets = [0, 3, 0, 0], sizes = [4, 1, 16, 4], strides = [1, 1, 1, 1]} : vector<4x4x16x4xf32> to vector<4x1x16x4xf32>
    %48 = vector.shape_cast %47 : vector<4x1x16x4xf32> to vector<4x16x4xf32>
    %49 = arith.addf %46, %48 : vector<4x16x4xf32>
    %50 = vector.shape_cast %49 : vector<4x16x4xf32> to vector<4x4x4x4xf32>
    %cst_56 = arith.constant dense<0.000000e+00> : vector<4x4x4xf32>
    %51 = vector.multi_reduction <add>, %50, %cst_56 [2] : vector<4x4x4x4xf32> to vector<4x4x4xf32>
    %cst_57 = arith.constant 6.250000e-02 : f32
    %52 = vector.broadcast %cst_57 : f32 to vector<4x4x4xf32>
    %53 = arith.mulf %51, %52 : vector<4x4x4xf32>
    %54 = arith.truncf %53 : vector<4x4x4xf32> to vector<4x4x4xbf16>
    %c1_58 = arith.constant 1 : index
    %c1_59 = arith.constant 1 : index
    %c0_60 = arith.constant 0 : index
    %55 = vector.load %arg15[%c1_58, %c1_59, %c0_60] : memref<6x6x4xbf16, #tpu.memory_space<vmem>>, vector<4x4x4xbf16>
    tpu.vector_store %arg15[%c1_58, %c1_59, %c0_60], %54 {strides = array<i32>} : memref<6x6x4xbf16, #tpu.memory_space<vmem>>, vector<4x4x4xbf16>,
    %cst_61 = arith.constant 0.000000e+00 : f32
    %56 = vector.broadcast %cst_61 : f32 to vector<256x4xf32>
    %c0_62 = arith.constant 0 : index
    %c0_63 = arith.constant 0 : index
    %c0_64 = arith.constant 0 : index
    %57 = vector.load %arg13[%c0_62, %c0_63, %c0_64] : memref<18x18x4xbf16, #tpu.memory_space<vmem>>, vector<18x16x4xbf16>
    %58 = vector.extract_strided_slice %57 {offsets = [0, 0, 0], sizes = [16, 16, 4], strides = [1, 1, 1]} : vector<18x16x4xbf16> to vector<16x16x4xbf16>
    %59 = vector.shape_cast %58 : vector<16x16x4xbf16> to vector<256x4xbf16>
    %c0_65 = arith.constant 0 : index
    %c0_66 = arith.constant 0 : index
    %c0_67 = arith.constant 0 : index
    %60 = vector.load %arg6[%c0_65, %c0_66, %c0_67] : memref<9x4x4xbf16, #tpu.memory_space<vmem>>, vector<1x4x4xbf16>
    %61 = vector.shape_cast %60 : vector<1x4x4xbf16> to vector<4x4xbf16>
    %cst_68 = arith.constant dense<0.000000e+00> : vector<256x4xf32>
    %62 = tpu.matmul %59, %61, %cst_68 {dimension_numbers = #tpu.dot_dimension_numbers<[1], [0], [0], [1], [0, 0, 1, 1], [], []>} : vector<256x4xbf16>, vector<4x4xbf16>, vector<256x4xf32> -> vector<256x4xf32>
    %63 = arith.addf %56, %62 : vector<256x4xf32>
    %64 = vector.extract_strided_slice %57 {offsets = [1, 0, 0], sizes = [16, 16, 4], strides = [1, 1, 1]} : vector<18x16x4xbf16> to vector<16x16x4xbf16>
    %65 = vector.shape_cast %64 : vector<16x16x4xbf16> to vector<256x4xbf16>
    %c3 = arith.constant 3 : index
    %c0_69 = arith.constant 0 : index
    %c0_70 = arith.constant 0 : index
    %66 = vector.load %arg6[%c3, %c0_69, %c0_70] : memref<9x4x4xbf16, #tpu.memory_space<vmem>>, vector<1x4x4xbf16>
    %67 = vector.shape_cast %66 : vector<1x4x4xbf16> to vector<4x4xbf16>
    %cst_71 = arith.constant dense<0.000000e+00> : vector<256x4xf32>
    %68 = tpu.matmul %65, %67, %cst_71 {dimension_numbers = #tpu.dot_dimension_numbers<[1], [0], [0], [1], [0, 0, 1, 1], [], []>} : vector<256x4xbf16>, vector<4x4xbf16>, vector<256x4xf32> -> vector<256x4xf32>
    %69 = arith.addf %63, %68 : vector<256x4xf32>
    %70 = vector.extract_strided_slice %57 {offsets = [2, 0, 0], sizes = [16, 16, 4], strides = [1, 1, 1]} : vector<18x16x4xbf16> to vector<16x16x4xbf16>
    %71 = vector.shape_cast %70 : vector<16x16x4xbf16> to vector<256x4xbf16>
    %c6 = arith.constant 6 : index
    %c0_72 = arith.constant 0 : index
    %c0_73 = arith.constant 0 : index
    %72 = vector.load %arg6[%c6, %c0_72, %c0_73] : memref<9x4x4xbf16, #tpu.memory_space<vmem>>, vector<1x4x4xbf16>
    %73 = vector.shape_cast %72 : vector<1x4x4xbf16> to vector<4x4xbf16>
    %cst_74 = arith.constant dense<0.000000e+00> : vector<256x4xf32>
    %74 = tpu.matmul %71, %73, %cst_74 {dimension_numbers = #tpu.dot_dimension_numbers<[1], [0], [0], [1], [0, 0, 1, 1], [], []>} : vector<256x4xbf16>, vector<4x4xbf16>, vector<256x4xf32> -> vector<256x4xf32>
    %75 = arith.addf %69, %74 : vector<256x4xf32>
    %c0_75 = arith.constant 0 : index
    %c1_76 = arith.constant 1 : index
    %c0_77 = arith.constant 0 : index
    %76 = vector.load %arg13[%c0_75, %c1_76, %c0_77] : memref<18x18x4xbf16, #tpu.memory_space<vmem>>, vector<18x16x4xbf16>
    %77 = vector.extract_strided_slice %76 {offsets = [0, 0, 0], sizes = [16, 16, 4], strides = [1, 1, 1]} : vector<18x16x4xbf16> to vector<16x16x4xbf16>
    %78 = vector.shape_cast %77 : vector<16x16x4xbf16> to vector<256x4xbf16>
    %c1_78 = arith.constant 1 : index
    %c0_79 = arith.constant 0 : index
    %c0_80 = arith.constant 0 : index
    %79 = vector.load %arg6[%c1_78, %c0_79, %c0_80] : memref<9x4x4xbf16, #tpu.memory_space<vmem>>, vector<1x4x4xbf16>
    %80 = vector.shape_cast %79 : vector<1x4x4xbf16> to vector<4x4xbf16>
    %cst_81 = arith.constant dense<0.000000e+00> : vector<256x4xf32>
    %81 = tpu.matmul %78, %80, %cst_81 {dimension_numbers = #tpu.dot_dimension_numbers<[1], [0], [0], [1], [0, 0, 1, 1], [], []>} : vector<256x4xbf16>, vector<4x4xbf16>, vector<256x4xf32> -> vector<256x4xf32>
    %82 = arith.addf %75, %81 : vector<256x4xf32>
    %83 = vector.extract_strided_slice %76 {offsets = [1, 0, 0], sizes = [16, 16, 4], strides = [1, 1, 1]} : vector<18x16x4xbf16> to vector<16x16x4xbf16>
    %84 = vector.shape_cast %83 : vector<16x16x4xbf16> to vector<256x4xbf16>
    %c4 = arith.constant 4 : index
    %c0_82 = arith.constant 0 : index
    %c0_83 = arith.constant 0 : index
    %85 = vector.load %arg6[%c4, %c0_82, %c0_83] : memref<9x4x4xbf16, #tpu.memory_space<vmem>>, vector<1x4x4xbf16>
    %86 = vector.shape_cast %85 : vector<1x4x4xbf16> to vector<4x4xbf16>
    %cst_84 = arith.constant dense<0.000000e+00> : vector<256x4xf32>
    %87 = tpu.matmul %84, %86, %cst_84 {dimension_numbers = #tpu.dot_dimension_numbers<[1], [0], [0], [1], [0, 0, 1, 1], [], []>} : vector<256x4xbf16>, vector<4x4xbf16>, vector<256x4xf32> -> vector<256x4xf32>
    %88 = arith.addf %82, %87 : vector<256x4xf32>
    %89 = vector.extract_strided_slice %76 {offsets = [2, 0, 0], sizes = [16, 16, 4], strides = [1, 1, 1]} : vector<18x16x4xbf16> to vector<16x16x4xbf16>
    %90 = vector.shape_cast %89 : vector<16x16x4xbf16> to vector<256x4xbf16>
    %c7 = arith.constant 7 : index
    %c0_85 = arith.constant 0 : index
    %c0_86 = arith.constant 0 : index
    %91 = vector.load %arg6[%c7, %c0_85, %c0_86] : memref<9x4x4xbf16, #tpu.memory_space<vmem>>, vector<1x4x4xbf16>
    %92 = vector.shape_cast %91 : vector<1x4x4xbf16> to vector<4x4xbf16>
    %cst_87 = arith.constant dense<0.000000e+00> : vector<256x4xf32>
    %93 = tpu.matmul %90, %92, %cst_87 {dimension_numbers = #tpu.dot_dimension_numbers<[1], [0], [0], [1], [0, 0, 1, 1], [], []>} : vector<256x4xbf16>, vector<4x4xbf16>, vector<256x4xf32> -> vector<256x4xf32>
    %94 = arith.addf %88, %93 : vector<256x4xf32>
    %c0_88 = arith.constant 0 : index
    %c2 = arith.constant 2 : index
    %c0_89 = arith.constant 0 : index
    %95 = vector.load %arg13[%c0_88, %c2, %c0_89] : memref<18x18x4xbf16, #tpu.memory_space<vmem>>, vector<18x16x4xbf16>
    %96 = vector.extract_strided_slice %95 {offsets = [0, 0, 0], sizes = [16, 16, 4], strides = [1, 1, 1]} : vector<18x16x4xbf16> to vector<16x16x4xbf16>
    %97 = vector.shape_cast %96 : vector<16x16x4xbf16> to vector<256x4xbf16>
    %c2_90 = arith.constant 2 : index
    %c0_91 = arith.constant 0 : index
    %c0_92 = arith.constant 0 : index
    %98 = vector.load %arg6[%c2_90, %c0_91, %c0_92] : memref<9x4x4xbf16, #tpu.memory_space<vmem>>, vector<1x4x4xbf16>
    %99 = vector.shape_cast %98 : vector<1x4x4xbf16> to vector<4x4xbf16>
    %cst_93 = arith.constant dense<0.000000e+00> : vector<256x4xf32>
    %100 = tpu.matmul %97, %99, %cst_93 {dimension_numbers = #tpu.dot_dimension_numbers<[1], [0], [0], [1], [0, 0, 1, 1], [], []>} : vector<256x4xbf16>, vector<4x4xbf16>, vector<256x4xf32> -> vector<256x4xf32>
    %101 = arith.addf %94, %100 : vector<256x4xf32>
    %102 = vector.extract_strided_slice %95 {offsets = [1, 0, 0], sizes = [16, 16, 4], strides = [1, 1, 1]} : vector<18x16x4xbf16> to vector<16x16x4xbf16>
    %103 = vector.shape_cast %102 : vector<16x16x4xbf16> to vector<256x4xbf16>
    %c5_94 = arith.constant 5 : index
    %c0_95 = arith.constant 0 : index
    %c0_96 = arith.constant 0 : index
    %104 = vector.load %arg6[%c5_94, %c0_95, %c0_96] : memref<9x4x4xbf16, #tpu.memory_space<vmem>>, vector<1x4x4xbf16>
    %105 = vector.shape_cast %104 : vector<1x4x4xbf16> to vector<4x4xbf16>
    %cst_97 = arith.constant dense<0.000000e+00> : vector<256x4xf32>
    %106 = tpu.matmul %103, %105, %cst_97 {dimension_numbers = #tpu.dot_dimension_numbers<[1], [0], [0], [1], [0, 0, 1, 1], [], []>} : vector<256x4xbf16>, vector<4x4xbf16>, vector<256x4xf32> -> vector<256x4xf32>
    %107 = arith.addf %101, %106 : vector<256x4xf32>
    %108 = vector.extract_strided_slice %95 {offsets = [2, 0, 0], sizes = [16, 16, 4], strides = [1, 1, 1]} : vector<18x16x4xbf16> to vector<16x16x4xbf16>
    %109 = vector.shape_cast %108 : vector<16x16x4xbf16> to vector<256x4xbf16>
    %c8 = arith.constant 8 : index
    %c0_98 = arith.constant 0 : index
    %c0_99 = arith.constant 0 : index
    %110 = vector.load %arg6[%c8, %c0_98, %c0_99] : memref<9x4x4xbf16, #tpu.memory_space<vmem>>, vector<1x4x4xbf16>
    %111 = vector.shape_cast %110 : vector<1x4x4xbf16> to vector<4x4xbf16>
    %cst_100 = arith.constant dense<0.000000e+00> : vector<256x4xf32>
    %112 = tpu.matmul %109, %111, %cst_100 {dimension_numbers = #tpu.dot_dimension_numbers<[1], [0], [0], [1], [0, 0, 1, 1], [], []>} : vector<256x4xbf16>, vector<4x4xbf16>, vector<256x4xf32> -> vector<256x4xf32>
    %113 = arith.addf %107, %112 : vector<256x4xf32>
    %c0_101 = arith.constant 0 : index
    %c0_102 = arith.constant 0 : index
    %114 = vector.load %arg7[%c0_101, %c0_102] : memref<1x4xf32, #tpu.memory_space<vmem>>, vector<1x4xf32>
    %115 = vector.broadcast %114 : vector<1x4xf32> to vector<256x4xf32>
    %116 = arith.addf %113, %115 : vector<256x4xf32>
    %cst_103 = arith.constant 0.000000e+00 : f32
    %117 = vector.broadcast %cst_103 : f32 to vector<16x4xf32>
    %c0_104 = arith.constant 0 : index
    %c0_105 = arith.constant 0 : index
    %c0_106 = arith.constant 0 : index
    %118 = vector.load %arg15[%c0_104, %c0_105, %c0_106] : memref<6x6x4xbf16, #tpu.memory_space<vmem>>, vector<6x4x4xbf16>
    %119 = vector.extract_strided_slice %118 {offsets = [0, 0, 0], sizes = [4, 4, 4], strides = [1, 1, 1]} : vector<6x4x4xbf16> to vector<4x4x4xbf16>
    %120 = vector.shape_cast %119 : vector<4x4x4xbf16> to vector<16x4xbf16>
    %c0_107 = arith.constant 0 : index
    %c0_108 = arith.constant 0 : index
    %c0_109 = arith.constant 0 : index
    %121 = vector.load %arg4[%c0_107, %c0_108, %c0_109] : memref<9x4x4xbf16, #tpu.memory_space<vmem>>, vector<1x4x4xbf16>
    %122 = vector.shape_cast %121 : vector<1x4x4xbf16> to vector<4x4xbf16>
    %cst_110 = arith.constant dense<0.000000e+00> : vector<16x4xf32>
    %123 = tpu.matmul %120, %122, %cst_110 {dimension_numbers = #tpu.dot_dimension_numbers<[1], [0], [0], [1], [0, 0, 1, 1], [], []>} : vector<16x4xbf16>, vector<4x4xbf16>, vector<16x4xf32> -> vector<16x4xf32>
    %124 = arith.addf %117, %123 : vector<16x4xf32>
    %125 = vector.extract_strided_slice %118 {offsets = [1, 0, 0], sizes = [4, 4, 4], strides = [1, 1, 1]} : vector<6x4x4xbf16> to vector<4x4x4xbf16>
    %126 = vector.shape_cast %125 : vector<4x4x4xbf16> to vector<16x4xbf16>
    %c3_111 = arith.constant 3 : index
    %c0_112 = arith.constant 0 : index
    %c0_113 = arith.constant 0 : index
    %127 = vector.load %arg4[%c3_111, %c0_112, %c0_113] : memref<9x4x4xbf16, #tpu.memory_space<vmem>>, vector<1x4x4xbf16>
    %128 = vector.shape_cast %127 : vector<1x4x4xbf16> to vector<4x4xbf16>
    %cst_114 = arith.constant dense<0.000000e+00> : vector<16x4xf32>
    %129 = tpu.matmul %126, %128, %cst_114 {dimension_numbers = #tpu.dot_dimension_numbers<[1], [0], [0], [1], [0, 0, 1, 1], [], []>} : vector<16x4xbf16>, vector<4x4xbf16>, vector<16x4xf32> -> vector<16x4xf32>
    %130 = arith.addf %124, %129 : vector<16x4xf32>
    %131 = vector.extract_strided_slice %118 {offsets = [2, 0, 0], sizes = [4, 4, 4], strides = [1, 1, 1]} : vector<6x4x4xbf16> to vector<4x4x4xbf16>
    %132 = vector.shape_cast %131 : vector<4x4x4xbf16> to vector<16x4xbf16>
    %c6_115 = arith.constant 6 : index
    %c0_116 = arith.constant 0 : index
    %c0_117 = arith.constant 0 : index
    %133 = vector.load %arg4[%c6_115, %c0_116, %c0_117] : memref<9x4x4xbf16, #tpu.memory_space<vmem>>, vector<1x4x4xbf16>
    %134 = vector.shape_cast %133 : vector<1x4x4xbf16> to vector<4x4xbf16>
    %cst_118 = arith.constant dense<0.000000e+00> : vector<16x4xf32>
    %135 = tpu.matmul %132, %134, %cst_118 {dimension_numbers = #tpu.dot_dimension_numbers<[1], [0], [0], [1], [0, 0, 1, 1], [], []>} : vector<16x4xbf16>, vector<4x4xbf16>, vector<16x4xf32> -> vector<16x4xf32>
    %136 = arith.addf %130, %135 : vector<16x4xf32>
    %c0_119 = arith.constant 0 : index
    %c1_120 = arith.constant 1 : index
    %c0_121 = arith.constant 0 : index
    %137 = vector.load %arg15[%c0_119, %c1_120, %c0_121] : memref<6x6x4xbf16, #tpu.memory_space<vmem>>, vector<6x4x4xbf16>
    %138 = vector.extract_strided_slice %137 {offsets = [0, 0, 0], sizes = [4, 4, 4], strides = [1, 1, 1]} : vector<6x4x4xbf16> to vector<4x4x4xbf16>
    %139 = vector.shape_cast %138 : vector<4x4x4xbf16> to vector<16x4xbf16>
    %c1_122 = arith.constant 1 : index
    %c0_123 = arith.constant 0 : index
    %c0_124 = arith.constant 0 : index
    %140 = vector.load %arg4[%c1_122, %c0_123, %c0_124] : memref<9x4x4xbf16, #tpu.memory_space<vmem>>, vector<1x4x4xbf16>
    %141 = vector.shape_cast %140 : vector<1x4x4xbf16> to vector<4x4xbf16>
    %cst_125 = arith.constant dense<0.000000e+00> : vector<16x4xf32>
    %142 = tpu.matmul %139, %141, %cst_125 {dimension_numbers = #tpu.dot_dimension_numbers<[1], [0], [0], [1], [0, 0, 1, 1], [], []>} : vector<16x4xbf16>, vector<4x4xbf16>, vector<16x4xf32> -> vector<16x4xf32>
    %143 = arith.addf %136, %142 : vector<16x4xf32>
    %144 = vector.extract_strided_slice %137 {offsets = [1, 0, 0], sizes = [4, 4, 4], strides = [1, 1, 1]} : vector<6x4x4xbf16> to vector<4x4x4xbf16>
    %145 = vector.shape_cast %144 : vector<4x4x4xbf16> to vector<16x4xbf16>
    %c4_126 = arith.constant 4 : index
    %c0_127 = arith.constant 0 : index
    %c0_128 = arith.constant 0 : index
    %146 = vector.load %arg4[%c4_126, %c0_127, %c0_128] : memref<9x4x4xbf16, #tpu.memory_space<vmem>>, vector<1x4x4xbf16>
    %147 = vector.shape_cast %146 : vector<1x4x4xbf16> to vector<4x4xbf16>
    %cst_129 = arith.constant dense<0.000000e+00> : vector<16x4xf32>
    %148 = tpu.matmul %145, %147, %cst_129 {dimension_numbers = #tpu.dot_dimension_numbers<[1], [0], [0], [1], [0, 0, 1, 1], [], []>} : vector<16x4xbf16>, vector<4x4xbf16>, vector<16x4xf32> -> vector<16x4xf32>
    %149 = arith.addf %143, %148 : vector<16x4xf32>
    %150 = vector.extract_strided_slice %137 {offsets = [2, 0, 0], sizes = [4, 4, 4], strides = [1, 1, 1]} : vector<6x4x4xbf16> to vector<4x4x4xbf16>
    %151 = vector.shape_cast %150 : vector<4x4x4xbf16> to vector<16x4xbf16>
    %c7_130 = arith.constant 7 : index
    %c0_131 = arith.constant 0 : index
    %c0_132 = arith.constant 0 : index
    %152 = vector.load %arg4[%c7_130, %c0_131, %c0_132] : memref<9x4x4xbf16, #tpu.memory_space<vmem>>, vector<1x4x4xbf16>
    %153 = vector.shape_cast %152 : vector<1x4x4xbf16> to vector<4x4xbf16>
    %cst_133 = arith.constant dense<0.000000e+00> : vector<16x4xf32>
    %154 = tpu.matmul %151, %153, %cst_133 {dimension_numbers = #tpu.dot_dimension_numbers<[1], [0], [0], [1], [0, 0, 1, 1], [], []>} : vector<16x4xbf16>, vector<4x4xbf16>, vector<16x4xf32> -> vector<16x4xf32>
    %155 = arith.addf %149, %154 : vector<16x4xf32>
    %c0_134 = arith.constant 0 : index
    %c2_135 = arith.constant 2 : index
    %c0_136 = arith.constant 0 : index
    %156 = vector.load %arg15[%c0_134, %c2_135, %c0_136] : memref<6x6x4xbf16, #tpu.memory_space<vmem>>, vector<6x4x4xbf16>
    %157 = vector.extract_strided_slice %156 {offsets = [0, 0, 0], sizes = [4, 4, 4], strides = [1, 1, 1]} : vector<6x4x4xbf16> to vector<4x4x4xbf16>
    %158 = vector.shape_cast %157 : vector<4x4x4xbf16> to vector<16x4xbf16>
    %c2_137 = arith.constant 2 : index
    %c0_138 = arith.constant 0 : index
    %c0_139 = arith.constant 0 : index
    %159 = vector.load %arg4[%c2_137, %c0_138, %c0_139] : memref<9x4x4xbf16, #tpu.memory_space<vmem>>, vector<1x4x4xbf16>
    %160 = vector.shape_cast %159 : vector<1x4x4xbf16> to vector<4x4xbf16>
    %cst_140 = arith.constant dense<0.000000e+00> : vector<16x4xf32>
    %161 = tpu.matmul %158, %160, %cst_140 {dimension_numbers = #tpu.dot_dimension_numbers<[1], [0], [0], [1], [0, 0, 1, 1], [], []>} : vector<16x4xbf16>, vector<4x4xbf16>, vector<16x4xf32> -> vector<16x4xf32>
    %162 = arith.addf %155, %161 : vector<16x4xf32>
    %163 = vector.extract_strided_slice %156 {offsets = [1, 0, 0], sizes = [4, 4, 4], strides = [1, 1, 1]} : vector<6x4x4xbf16> to vector<4x4x4xbf16>
    %164 = vector.shape_cast %163 : vector<4x4x4xbf16> to vector<16x4xbf16>
    %c5_141 = arith.constant 5 : index
    %c0_142 = arith.constant 0 : index
    %c0_143 = arith.constant 0 : index
    %165 = vector.load %arg4[%c5_141, %c0_142, %c0_143] : memref<9x4x4xbf16, #tpu.memory_space<vmem>>, vector<1x4x4xbf16>
    %166 = vector.shape_cast %165 : vector<1x4x4xbf16> to vector<4x4xbf16>
    %cst_144 = arith.constant dense<0.000000e+00> : vector<16x4xf32>
    %167 = tpu.matmul %164, %166, %cst_144 {dimension_numbers = #tpu.dot_dimension_numbers<[1], [0], [0], [1], [0, 0, 1, 1], [], []>} : vector<16x4xbf16>, vector<4x4xbf16>, vector<16x4xf32> -> vector<16x4xf32>
    %168 = arith.addf %162, %167 : vector<16x4xf32>
    %169 = vector.extract_strided_slice %156 {offsets = [2, 0, 0], sizes = [4, 4, 4], strides = [1, 1, 1]} : vector<6x4x4xbf16> to vector<4x4x4xbf16>
    %170 = vector.shape_cast %169 : vector<4x4x4xbf16> to vector<16x4xbf16>
    %c8_145 = arith.constant 8 : index
    %c0_146 = arith.constant 0 : index
    %c0_147 = arith.constant 0 : index
    %171 = vector.load %arg4[%c8_145, %c0_146, %c0_147] : memref<9x4x4xbf16, #tpu.memory_space<vmem>>, vector<1x4x4xbf16>
    %172 = vector.shape_cast %171 : vector<1x4x4xbf16> to vector<4x4xbf16>
    %cst_148 = arith.constant dense<0.000000e+00> : vector<16x4xf32>
    %173 = tpu.matmul %170, %172, %cst_148 {dimension_numbers = #tpu.dot_dimension_numbers<[1], [0], [0], [1], [0, 0, 1, 1], [], []>} : vector<16x4xbf16>, vector<4x4xbf16>, vector<16x4xf32> -> vector<16x4xf32>
    %174 = arith.addf %168, %173 : vector<16x4xf32>
    %c0_149 = arith.constant 0 : index
    %c0_150 = arith.constant 0 : index
    %175 = vector.load %arg5[%c0_149, %c0_150] : memref<1x4xf32, #tpu.memory_space<vmem>>, vector<1x4xf32>
    %176 = vector.broadcast %175 : vector<1x4xf32> to vector<16x4xf32>
    %177 = arith.addf %174, %176 : vector<16x4xf32>
    %178 = vector.shape_cast %177 : vector<16x4xf32> to vector<4x4x4xf32>
    %179 = vector.shape_cast %178 : vector<4x4x4xf32> to vector<4x4x1x4xf32>
    %180 = vector.shape_cast %179 : vector<4x4x1x4xf32> to vector<4x4x1x4xf32>
    %181 = vector.broadcast %180 : vector<4x4x1x4xf32> to vector<4x4x4x4xf32>
    %182 = vector.shape_cast %181 : vector<4x4x4x4xf32> to vector<4x16x4xf32>
    %183 = vector.shape_cast %182 : vector<4x16x4xf32> to vector<4x1x16x4xf32>
    %184 = vector.shape_cast %183 : vector<4x1x16x4xf32> to vector<4x1x16x4xf32>
    %185 = vector.broadcast %184 : vector<4x1x16x4xf32> to vector<4x4x16x4xf32>
    %186 = vector.shape_cast %185 : vector<4x4x16x4xf32> to vector<16x16x4xf32>
    %187 = vector.shape_cast %116 : vector<256x4xf32> to vector<16x16x4xf32>
    %188 = arith.addf %35, %186 : vector<16x16x4xf32>
    %189 = arith.negf %188 : vector<16x16x4xf32>
    %190 = math.exp %189 : vector<16x16x4xf32>
    %cst_151 = arith.constant 1.000000e+00 : f32
    %191 = vector.broadcast %cst_151 : f32 to vector<16x16x4xf32>
    %192 = arith.addf %191, %190 : vector<16x16x4xf32>
    %193 = arith.divf %191, %192 : vector<16x16x4xf32>
    %194 = arith.mulf %187, %193 : vector<16x16x4xf32>
    %195 = arith.truncf %194 : vector<16x16x4xf32> to vector<16x16x4xbf16>
    %c1_152 = arith.constant 1 : index
    %c1_153 = arith.constant 1 : index
    %c0_154 = arith.constant 0 : index
    %196 = vector.load %arg14[%c1_152, %c1_153, %c0_154] : memref<18x18x4xbf16, #tpu.memory_space<vmem>>, vector<16x16x4xbf16>
    tpu.vector_store %arg14[%c1_152, %c1_153, %c0_154], %195 {strides = array<i32>} : memref<18x18x4xbf16, #tpu.memory_space<vmem>>, vector<16x16x4xbf16>,
    %cst_155 = arith.constant 0.000000e+00 : f32
    %197 = vector.broadcast %cst_155 : f32 to vector<256x4xf32>
    %c0_156 = arith.constant 0 : index
    %c0_157 = arith.constant 0 : index
    %c0_158 = arith.constant 0 : index
    %198 = vector.load %arg14[%c0_156, %c0_157, %c0_158] : memref<18x18x4xbf16, #tpu.memory_space<vmem>>, vector<18x16x4xbf16>
    %199 = vector.extract_strided_slice %198 {offsets = [0, 0, 0], sizes = [16, 16, 4], strides = [1, 1, 1]} : vector<18x16x4xbf16> to vector<16x16x4xbf16>
    %200 = vector.shape_cast %199 : vector<16x16x4xbf16> to vector<256x4xbf16>
    %c0_159 = arith.constant 0 : index
    %c0_160 = arith.constant 0 : index
    %c0_161 = arith.constant 0 : index
    %201 = vector.load %arg8[%c0_159, %c0_160, %c0_161] : memref<9x4x4xbf16, #tpu.memory_space<vmem>>, vector<1x4x4xbf16>
    %202 = vector.shape_cast %201 : vector<1x4x4xbf16> to vector<4x4xbf16>
    %cst_162 = arith.constant dense<0.000000e+00> : vector<256x4xf32>
    %203 = tpu.matmul %200, %202, %cst_162 {dimension_numbers = #tpu.dot_dimension_numbers<[1], [0], [0], [1], [0, 0, 1, 1], [], []>} : vector<256x4xbf16>, vector<4x4xbf16>, vector<256x4xf32> -> vector<256x4xf32>
    %204 = arith.addf %197, %203 : vector<256x4xf32>
    %205 = vector.extract_strided_slice %198 {offsets = [1, 0, 0], sizes = [16, 16, 4], strides = [1, 1, 1]} : vector<18x16x4xbf16> to vector<16x16x4xbf16>
    %206 = vector.shape_cast %205 : vector<16x16x4xbf16> to vector<256x4xbf16>
    %c3_163 = arith.constant 3 : index
    %c0_164 = arith.constant 0 : index
    %c0_165 = arith.constant 0 : index
    %207 = vector.load %arg8[%c3_163, %c0_164, %c0_165] : memref<9x4x4xbf16, #tpu.memory_space<vmem>>, vector<1x4x4xbf16>
    %208 = vector.shape_cast %207 : vector<1x4x4xbf16> to vector<4x4xbf16>
    %cst_166 = arith.constant dense<0.000000e+00> : vector<256x4xf32>
    %209 = tpu.matmul %206, %208, %cst_166 {dimension_numbers = #tpu.dot_dimension_numbers<[1], [0], [0], [1], [0, 0, 1, 1], [], []>} : vector<256x4xbf16>, vector<4x4xbf16>, vector<256x4xf32> -> vector<256x4xf32>
    %210 = arith.addf %204, %209 : vector<256x4xf32>
    %211 = vector.extract_strided_slice %198 {offsets = [2, 0, 0], sizes = [16, 16, 4], strides = [1, 1, 1]} : vector<18x16x4xbf16> to vector<16x16x4xbf16>
    %212 = vector.shape_cast %211 : vector<16x16x4xbf16> to vector<256x4xbf16>
    %c6_167 = arith.constant 6 : index
    %c0_168 = arith.constant 0 : index
    %c0_169 = arith.constant 0 : index
    %213 = vector.load %arg8[%c6_167, %c0_168, %c0_169] : memref<9x4x4xbf16, #tpu.memory_space<vmem>>, vector<1x4x4xbf16>
    %214 = vector.shape_cast %213 : vector<1x4x4xbf16> to vector<4x4xbf16>
    %cst_170 = arith.constant dense<0.000000e+00> : vector<256x4xf32>
    %215 = tpu.matmul %212, %214, %cst_170 {dimension_numbers = #tpu.dot_dimension_numbers<[1], [0], [0], [1], [0, 0, 1, 1], [], []>} : vector<256x4xbf16>, vector<4x4xbf16>, vector<256x4xf32> -> vector<256x4xf32>
    %216 = arith.addf %210, %215 : vector<256x4xf32>
    %c0_171 = arith.constant 0 : index
    %c1_172 = arith.constant 1 : index
    %c0_173 = arith.constant 0 : index
    %217 = vector.load %arg14[%c0_171, %c1_172, %c0_173] : memref<18x18x4xbf16, #tpu.memory_space<vmem>>, vector<18x16x4xbf16>
    %218 = vector.extract_strided_slice %217 {offsets = [0, 0, 0], sizes = [16, 16, 4], strides = [1, 1, 1]} : vector<18x16x4xbf16> to vector<16x16x4xbf16>
    %219 = vector.shape_cast %218 : vector<16x16x4xbf16> to vector<256x4xbf16>
    %c1_174 = arith.constant 1 : index
    %c0_175 = arith.constant 0 : index
    %c0_176 = arith.constant 0 : index
    %220 = vector.load %arg8[%c1_174, %c0_175, %c0_176] : memref<9x4x4xbf16, #tpu.memory_space<vmem>>, vector<1x4x4xbf16>
    %221 = vector.shape_cast %220 : vector<1x4x4xbf16> to vector<4x4xbf16>
    %cst_177 = arith.constant dense<0.000000e+00> : vector<256x4xf32>
    %222 = tpu.matmul %219, %221, %cst_177 {dimension_numbers = #tpu.dot_dimension_numbers<[1], [0], [0], [1], [0, 0, 1, 1], [], []>} : vector<256x4xbf16>, vector<4x4xbf16>, vector<256x4xf32> -> vector<256x4xf32>
    %223 = arith.addf %216, %222 : vector<256x4xf32>
    %224 = vector.extract_strided_slice %217 {offsets = [1, 0, 0], sizes = [16, 16, 4], strides = [1, 1, 1]} : vector<18x16x4xbf16> to vector<16x16x4xbf16>
    %225 = vector.shape_cast %224 : vector<16x16x4xbf16> to vector<256x4xbf16>
    %c4_178 = arith.constant 4 : index
    %c0_179 = arith.constant 0 : index
    %c0_180 = arith.constant 0 : index
    %226 = vector.load %arg8[%c4_178, %c0_179, %c0_180] : memref<9x4x4xbf16, #tpu.memory_space<vmem>>, vector<1x4x4xbf16>
    %227 = vector.shape_cast %226 : vector<1x4x4xbf16> to vector<4x4xbf16>
    %cst_181 = arith.constant dense<0.000000e+00> : vector<256x4xf32>
    %228 = tpu.matmul %225, %227, %cst_181 {dimension_numbers = #tpu.dot_dimension_numbers<[1], [0], [0], [1], [0, 0, 1, 1], [], []>} : vector<256x4xbf16>, vector<4x4xbf16>, vector<256x4xf32> -> vector<256x4xf32>
    %229 = arith.addf %223, %228 : vector<256x4xf32>
    %230 = vector.extract_strided_slice %217 {offsets = [2, 0, 0], sizes = [16, 16, 4], strides = [1, 1, 1]} : vector<18x16x4xbf16> to vector<16x16x4xbf16>
    %231 = vector.shape_cast %230 : vector<16x16x4xbf16> to vector<256x4xbf16>
    %c7_182 = arith.constant 7 : index
    %c0_183 = arith.constant 0 : index
    %c0_184 = arith.constant 0 : index
    %232 = vector.load %arg8[%c7_182, %c0_183, %c0_184] : memref<9x4x4xbf16, #tpu.memory_space<vmem>>, vector<1x4x4xbf16>
    %233 = vector.shape_cast %232 : vector<1x4x4xbf16> to vector<4x4xbf16>
    %cst_185 = arith.constant dense<0.000000e+00> : vector<256x4xf32>
    %234 = tpu.matmul %231, %233, %cst_185 {dimension_numbers = #tpu.dot_dimension_numbers<[1], [0], [0], [1], [0, 0, 1, 1], [], []>} : vector<256x4xbf16>, vector<4x4xbf16>, vector<256x4xf32> -> vector<256x4xf32>
    %235 = arith.addf %229, %234 : vector<256x4xf32>
    %c0_186 = arith.constant 0 : index
    %c2_187 = arith.constant 2 : index
    %c0_188 = arith.constant 0 : index
    %236 = vector.load %arg14[%c0_186, %c2_187, %c0_188] : memref<18x18x4xbf16, #tpu.memory_space<vmem>>, vector<18x16x4xbf16>
    %237 = vector.extract_strided_slice %236 {offsets = [0, 0, 0], sizes = [16, 16, 4], strides = [1, 1, 1]} : vector<18x16x4xbf16> to vector<16x16x4xbf16>
    %238 = vector.shape_cast %237 : vector<16x16x4xbf16> to vector<256x4xbf16>
    %c2_189 = arith.constant 2 : index
    %c0_190 = arith.constant 0 : index
    %c0_191 = arith.constant 0 : index
    %239 = vector.load %arg8[%c2_189, %c0_190, %c0_191] : memref<9x4x4xbf16, #tpu.memory_space<vmem>>, vector<1x4x4xbf16>
    %240 = vector.shape_cast %239 : vector<1x4x4xbf16> to vector<4x4xbf16>
    %cst_192 = arith.constant dense<0.000000e+00> : vector<256x4xf32>
    %241 = tpu.matmul %238, %240, %cst_192 {dimension_numbers = #tpu.dot_dimension_numbers<[1], [0], [0], [1], [0, 0, 1, 1], [], []>} : vector<256x4xbf16>, vector<4x4xbf16>, vector<256x4xf32> -> vector<256x4xf32>
    %242 = arith.addf %235, %241 : vector<256x4xf32>
    %243 = vector.extract_strided_slice %236 {offsets = [1, 0, 0], sizes = [16, 16, 4], strides = [1, 1, 1]} : vector<18x16x4xbf16> to vector<16x16x4xbf16>
    %244 = vector.shape_cast %243 : vector<16x16x4xbf16> to vector<256x4xbf16>
    %c5_193 = arith.constant 5 : index
    %c0_194 = arith.constant 0 : index
    %c0_195 = arith.constant 0 : index
    %245 = vector.load %arg8[%c5_193, %c0_194, %c0_195] : memref<9x4x4xbf16, #tpu.memory_space<vmem>>, vector<1x4x4xbf16>
    %246 = vector.shape_cast %245 : vector<1x4x4xbf16> to vector<4x4xbf16>
    %cst_196 = arith.constant dense<0.000000e+00> : vector<256x4xf32>
    %247 = tpu.matmul %244, %246, %cst_196 {dimension_numbers = #tpu.dot_dimension_numbers<[1], [0], [0], [1], [0, 0, 1, 1], [], []>} : vector<256x4xbf16>, vector<4x4xbf16>, vector<256x4xf32> -> vector<256x4xf32>
    %248 = arith.addf %242, %247 : vector<256x4xf32>
    %249 = vector.extract_strided_slice %236 {offsets = [2, 0, 0], sizes = [16, 16, 4], strides = [1, 1, 1]} : vector<18x16x4xbf16> to vector<16x16x4xbf16>
    %250 = vector.shape_cast %249 : vector<16x16x4xbf16> to vector<256x4xbf16>
    %c8_197 = arith.constant 8 : index
    %c0_198 = arith.constant 0 : index
    %c0_199 = arith.constant 0 : index
    %251 = vector.load %arg8[%c8_197, %c0_198, %c0_199] : memref<9x4x4xbf16, #tpu.memory_space<vmem>>, vector<1x4x4xbf16>
    %252 = vector.shape_cast %251 : vector<1x4x4xbf16> to vector<4x4xbf16>
    %cst_200 = arith.constant dense<0.000000e+00> : vector<256x4xf32>
    %253 = tpu.matmul %250, %252, %cst_200 {dimension_numbers = #tpu.dot_dimension_numbers<[1], [0], [0], [1], [0, 0, 1, 1], [], []>} : vector<256x4xbf16>, vector<4x4xbf16>, vector<256x4xf32> -> vector<256x4xf32>
    %254 = arith.addf %248, %253 : vector<256x4xf32>
    %c0_201 = arith.constant 0 : index
    %c0_202 = arith.constant 0 : index
    %255 = vector.load %arg9[%c0_201, %c0_202] : memref<1x4xf32, #tpu.memory_space<vmem>>, vector<1x4xf32>
    %256 = vector.broadcast %255 : vector<1x4xf32> to vector<256x4xf32>
    %257 = arith.addf %254, %256 : vector<256x4xf32>
    %cst_203 = arith.constant 0.000000e+00 : f32
    %258 = vector.broadcast %cst_203 : f32 to vector<256x4xf32>
    %259 = arith.maximumf %257, %258 : vector<256x4xf32>
    %c0_204 = arith.constant 0 : index
    %c0_205 = arith.constant 0 : index
    %c0_206 = arith.constant 0 : index
    %c0_207 = arith.constant 0 : index
    %260 = vector.load %arg1[%c0_204, %c0_205, %c0_206, %c0_207] : memref<1x16x16x16xf32, #tpu.memory_space<vmem>>, vector<1x16x16x16xf32>
    %261 = vector.shape_cast %260 : vector<1x16x16x16xf32> to vector<16x16x16xf32>
    %262 = vector.shape_cast %261 : vector<16x16x16xf32> to vector<256x16xf32>
    %263 = arith.truncf %259 : vector<256x4xf32> to vector<256x4xbf16>
    %c0_208 = arith.constant 0 : index
    %c0_209 = arith.constant 0 : index
    %264 = vector.load %arg10[%c0_208, %c0_209] : memref<4x16xbf16, #tpu.memory_space<vmem>>, vector<4x16xbf16>
    %cst_210 = arith.constant dense<0.000000e+00> : vector<256x16xf32>
    %265 = tpu.matmul %263, %264, %cst_210 {dimension_numbers = #tpu.dot_dimension_numbers<[1], [0], [0], [1], [0, 0, 1, 1], [], []>} : vector<256x4xbf16>, vector<4x16xbf16>, vector<256x16xf32> -> vector<256x16xf32>
    %c0_211 = arith.constant 0 : index
    %c0_212 = arith.constant 0 : index
    %266 = vector.load %arg11[%c0_211, %c0_212] : memref<1x16xf32, #tpu.memory_space<vmem>>, vector<1x16xf32>
    %267 = vector.broadcast %266 : vector<1x16xf32> to vector<256x16xf32>
    %268 = arith.addf %265, %267 : vector<256x16xf32>
    %269 = arith.addf %268, %262 : vector<256x16xf32>
    %cst_213 = arith.constant 0.000000e+00 : f32
    %270 = vector.broadcast %cst_213 : f32 to vector<256x16xf32>
    %271 = arith.maximumf %269, %270 : vector<256x16xf32>
    %272 = vector.shape_cast %271 : vector<256x16xf32> to vector<16x16x16xf32>
    %c0_214 = arith.constant 0 : index
    %c0_215 = arith.constant 0 : index
    %c0_216 = arith.constant 0 : index
    %c0_217 = arith.constant 0 : index
    %273 = vector.load %arg12[%c0_214, %c0_215, %c0_216, %c0_217] : memref<1x16x16x16xf32, #tpu.memory_space<vmem>>, vector<1x16x16x16xf32>
    %274 = vector.shape_cast %273 : vector<1x16x16x16xf32> to vector<16x16x16xf32>
    %275 = vector.shape_cast %272 : vector<16x16x16xf32> to vector<1x16x16x16xf32>
    tpu.vector_store %arg12[%c0_214, %c0_215, %c0_216, %c0_217], %275 {strides = array<i32>} : memref<1x16x16x16xf32, #tpu.memory_space<vmem>>, vector<1x16x16x16xf32>,
    return
  }
  func.func @transform_0(%arg0: i32) -> (i32, i32, i32, i32) {
    %c0_i32 = arith.constant 0 : i32
    %c0_i32_0 = arith.constant 0 : i32
    %c0_i32_1 = arith.constant 0 : i32
    %c0_i32_2 = arith.constant 0 : i32
    return %arg0, %c0_i32, %c0_i32_0, %c0_i32_1 : i32, i32, i32, i32
  }
  func.func @transform_1(%arg0: i32) -> (i32, i32) {
    %c0_i32 = arith.constant 0 : i32
    %c0_i32_0 = arith.constant 0 : i32
    %c0_i32_1 = arith.constant 0 : i32
    return %c0_i32, %c0_i32_0 : i32, i32
  }
  func.func @transform_2(%arg0: i32) -> (i32, i32) {
    %c0_i32 = arith.constant 0 : i32
    %c0_i32_0 = arith.constant 0 : i32
    %c0_i32_1 = arith.constant 0 : i32
    return %c0_i32, %c0_i32_0 : i32, i32
  }
  func.func @transform_3(%arg0: i32) -> (i32, i32, i32) {
    %c0_i32 = arith.constant 0 : i32
    %c0_i32_0 = arith.constant 0 : i32
    %c0_i32_1 = arith.constant 0 : i32
    %c0_i32_2 = arith.constant 0 : i32
    return %c0_i32, %c0_i32_0, %c0_i32_1 : i32, i32, i32
  }
  func.func @transform_4(%arg0: i32) -> (i32, i32) {
    %c0_i32 = arith.constant 0 : i32
    %c0_i32_0 = arith.constant 0 : i32
    %c0_i32_1 = arith.constant 0 : i32
    return %c0_i32, %c0_i32_0 : i32, i32
  }
  func.func @transform_5(%arg0: i32) -> (i32, i32, i32) {
    %c0_i32 = arith.constant 0 : i32
    %c0_i32_0 = arith.constant 0 : i32
    %c0_i32_1 = arith.constant 0 : i32
    %c0_i32_2 = arith.constant 0 : i32
    return %c0_i32, %c0_i32_0, %c0_i32_1 : i32, i32, i32
  }
  func.func @transform_6(%arg0: i32) -> (i32, i32) {
    %c0_i32 = arith.constant 0 : i32
    %c0_i32_0 = arith.constant 0 : i32
    %c0_i32_1 = arith.constant 0 : i32
    return %c0_i32, %c0_i32_0 : i32, i32
  }
  func.func @transform_7(%arg0: i32) -> (i32, i32, i32) {
    %c0_i32 = arith.constant 0 : i32
    %c0_i32_0 = arith.constant 0 : i32
    %c0_i32_1 = arith.constant 0 : i32
    %c0_i32_2 = arith.constant 0 : i32
    return %c0_i32, %c0_i32_0, %c0_i32_1 : i32, i32, i32
  }
  func.func @transform_8(%arg0: i32) -> (i32, i32) {
    %c0_i32 = arith.constant 0 : i32
    %c0_i32_0 = arith.constant 0 : i32
    %c0_i32_1 = arith.constant 0 : i32
    return %c0_i32, %c0_i32_0 : i32, i32
  }
  func.func @transform_9(%arg0: i32) -> (i32, i32) {
    %c0_i32 = arith.constant 0 : i32
    %c0_i32_0 = arith.constant 0 : i32
    %c0_i32_1 = arith.constant 0 : i32
    return %c0_i32, %c0_i32_0 : i32, i32
  }
  func.func @transform_10(%arg0: i32) -> (i32, i32) {
    %c0_i32 = arith.constant 0 : i32
    %c0_i32_0 = arith.constant 0 : i32
    %c0_i32_1 = arith.constant 0 : i32
    return %c0_i32, %c0_i32_0 : i32, i32
  }
  func.func @transform_11(%arg0: i32) -> (i32, i32, i32, i32) {
    %c0_i32 = arith.constant 0 : i32
    %c0_i32_0 = arith.constant 0 : i32
    %c0_i32_1 = arith.constant 0 : i32
    %c0_i32_2 = arith.constant 0 : i32
    return %arg0, %c0_i32, %c0_i32_0, %c0_i32_1 : i32, i32, i32, i32
  }
}

</mosaic_0001>

<llo_original>
// kernel: tpu_custom_call.1
$region0: #{tpu_custom_call.1}
  #allocation0 [shape = 'u32[]', space=smem, size = 0x4, offset = 0x4, fixed_abs, tag = 'smem constant byte address 0x4 - core index']
  #allocation1 [shape = 'u32[144,128]{1,0:T(1,128)}', space=vmem, size = 0x12000, scoped, tag = 'internal scratch']
  #allocation2 [shape = 'bf16[18,18,4]{2,1,0:T(8,128)(2,1)}', space=vmem, size = 0x1b000, scoped, tag = 'scratch operand']
  #allocation3 [shape = 'bf16[18,18,4]{2,1,0:T(8,128)(2,1)}', space=vmem, size = 0x1b000, scoped, tag = 'scratch operand']
  #allocation4 [shape = 'bf16[6,6,4]{2,1,0:T(8,128)(2,1)}', space=vmem, size = 0x3000, scoped, tag = 'scratch operand']
  %s0 = inlined_call_operand.hbm [shape: f32[2,16,16,16], index: 0, kind: input, shape index: {}]
  %s1 = inlined_call_operand.vmem [shape: bf16[16,4], index: 1, kind: input, shape index: {}]
  %s2 = inlined_call_operand.vmem [shape: f32[1,4], index: 2, kind: input, shape index: {}]
  %s3 = inlined_call_operand.vmem [shape: bf16[9,4,4], index: 3, kind: input, shape index: {}]
  %s4 = inlined_call_operand.vmem [shape: f32[1,4], index: 4, kind: input, shape index: {}]
  %s5 = inlined_call_operand.vmem [shape: bf16[9,4,4], index: 5, kind: input, shape index: {}]
  %s6 = inlined_call_operand.vmem [shape: f32[1,4], index: 6, kind: input, shape index: {}]
  %s7 = inlined_call_operand.vmem [shape: bf16[9,4,4], index: 7, kind: input, shape index: {}]
  %s8 = inlined_call_operand.vmem [shape: f32[1,4], index: 8, kind: input, shape index: {}]
  %s9 = inlined_call_operand.vmem [shape: bf16[4,16], index: 9, kind: input, shape index: {}]
  %s10 = inlined_call_operand.vmem [shape: f32[1,16], index: 10, kind: input, shape index: {}]
  %s11 = inlined_call_operand.hbm [shape: f32[2,16,16,16], index: 11, kind: output, shape index: {}]
  %s12 = sld [smem:[#allocation0]]
  $region81: #{tpu_custom_call.1} parent=0
    _
  %s14 = ssub.s32 1, %s12
  %s15 = scalar_select 0, %s14, %s12
  $region1: #{tpu_custom_call.1} parent=0
    #allocation5 [shape = 'u8[262144]{0}', space=vmem, size = 0x40000, scoped, tag = 'input window, operand 0']
    #allocation6 [shape = 's32[2]{0}', space=sflag, size = 0x8, scoped, tag = 'scoped memory for tpu_custom_call.1']
    #allocation7 [shape = 's32[2]{0}', space=sflag, size = 0x8, scoped, tag = 'scoped memory for tpu_custom_call.1']
    #allocation8 [shape = 'u8[262144]{0}', space=vmem, size = 0x40000, scoped, tag = 'output window, operand 0']
    %16 = vsyncpa [#allocation6], 0
    %s17 = scalar_lea.sflag [#allocation6], 1
    %18 = vsyncpa %s17, 0
    %19 = vsyncpa [#allocation7], 0
    %s20 = scalar_lea.sflag [#allocation7], 1
    %21 = vsyncpa %s20, 0
    loop: start=0, step=1, limit=4
    $region2: #{tpu_custom_call.1} parent=1 // loop_pre_header
      _
    $region3: #{tpu_custom_call.1} parent=1 // loop_header
      %s23 = sphi 0, %s27
      %p24 = scmp.ge.s32.totalorder %s23, 4
      %s33 = sphi 0, %s35
      %s36 = sphi 0, %s33
      %s37 = sphi 0, %s36
      %s53 = sphi 0, %s37
      %s57 = sphi 0, %s57
      %s59 = sphi 0, %s57
      %s60 = sphi 0, %s59
      %s74 = sphi 0, %s60
      %s78 = sphi 0, %s78
      %s80 = sphi 0, %s78
      %s81 = sphi 0, %s80
      %s95 = sphi 0, %s81
      %s99 = sphi 0, %s99
      %s101 = sphi 0, %s99
      %s102 = sphi 0, %s101
      %s116 = sphi 0, %s102
      %s120 = sphi 0, %s120
      %s122 = sphi 0, %s120
      %s123 = sphi 0, %s122
      %s137 = sphi 0, %s123
      %s141 = sphi 0, %s141
      %s143 = sphi 0, %s141
      %s144 = sphi 0, %s143
      %s158 = sphi 0, %s144
      %s162 = sphi 0, %s162
      %s164 = sphi 0, %s162
      %s165 = sphi 0, %s164
      %s179 = sphi 0, %s165
      %s183 = sphi 0, %s183
      %s185 = sphi 0, %s183
      %s186 = sphi 0, %s185
      %s200 = sphi 0, %s186
      %s204 = sphi 0, %s204
      %s206 = sphi 0, %s204
      %s207 = sphi 0, %s206
      %s221 = sphi 0, %s207
      %s225 = sphi 0, %s225
      %s227 = sphi 0, %s225
      %s228 = sphi 0, %s227
      %s242 = sphi 0, %s228
      %s246 = sphi 0, %s246
      %s248 = sphi 0, %s246
      %s249 = sphi 0, %s248
      %s263 = sphi 0, %s249
      %s269 = sphi 0, %s271
      %s272 = sphi 0, %s269
      %s273 = sphi 0, %s272
      %s289 = sphi 0, %s273
    $region4: #{tpu_custom_call.1} parent=1 // loop_header_branch
      %26 = sbr.rel (%p24) target = $region8
    $region5: #{tpu_custom_call.1} parent=1 // loop_body
      %s28 = ssub.s32 %s23, 1
      %s29 = ssub.s32 %s23, 2
      %s30 = sadd.s32 %s23, 1
      %s31 = ssub.s32 %s23, %s30
      %p32 = scmp.eq.s32.totalorder %s31, 0
      %s34 = sadd.s32 %s33, 1
      %s35 = scalar_select %p32, %s33, %s34
      %p38 = pneg %p32
      %p39 = scmp.eq.s32.totalorder %s23, 1
      %p40 = por %p38, %p39
      %p41 = scmp.ne.s32.totalorder %s33, %s36
      %p42 = scmp.eq.s32.totalorder %s23, 0
      %p43 = por %p41, %p42
      %p44 = scmp.ne.s32.totalorder %s33, %s36
      %p45 = scmp.eq.s32.totalorder %s28, 1
      %p46 = por %p44, %p45
      %p47 = scmp.ne.s32.totalorder %s36, %s37
      %p48 = scmp.eq.s32.totalorder %s28, 0
      %p49 = por %p47, %p48
      %p50 = scmp.ne.s32.totalorder %s36, %s37
      %p51 = scmp.eq.s32.totalorder %s29, 1
      %p52 = por %p50, %p51
      %p54 = scmp.ne.s32.totalorder %s37, %s53
      %p55 = scmp.eq.s32.totalorder %s29, 0
      %p56 = por %p54, %p55
      %s58 = sadd.s32 %s57, 1
      %p61 = scmp.eq.s32.totalorder %s23, 1
      %p62 = scmp.ne.s32.totalorder %s57, %s59
      %p63 = scmp.eq.s32.totalorder %s23, 0
      %p64 = por %p62, %p63
      %p65 = scmp.ne.s32.totalorder %s57, %s59
      %p66 = scmp.eq.s32.totalorder %s28, 1
      %p67 = por %p65, %p66
      %p68 = scmp.ne.s32.totalorder %s59, %s60
      %p69 = scmp.eq.s32.totalorder %s28, 0
      %p70 = por %p68, %p69
      %p71 = scmp.ne.s32.totalorder %s59, %s60
      %p72 = scmp.eq.s32.totalorder %s29, 1
      %p73 = por %p71, %p72
      %p75 = scmp.ne.s32.totalorder %s60, %s74
      %p76 = scmp.eq.s32.totalorder %s29, 0
      %p77 = por %p75, %p76
      %s79 = sadd.s32 %s78, 1
      %p82 = scmp.eq.s32.totalorder %s23, 1
      %p83 = scmp.ne.s32.totalorder %s78, %s80
      %p84 = scmp.eq.s32.totalorder %s23, 0
      %p85 = por %p83, %p84
      %p86 = scmp.ne.s32.totalorder %s78, %s80
      %p87 = scmp.eq.s32.totalorder %s28, 1
      %p88 = por %p86, %p87
      %p89 = scmp.ne.s32.totalorder %s80, %s81
      %p90 = scmp.eq.s32.totalorder %s28, 0
      %p91 = por %p89, %p90
      %p92 = scmp.ne.s32.totalorder %s80, %s81
      %p93 = scmp.eq.s32.totalorder %s29, 1
      %p94 = por %p92, %p93
      %p96 = scmp.ne.s32.totalorder %s81, %s95
      %p97 = scmp.eq.s32.totalorder %s29, 0
      %p98 = por %p96, %p97
      %s100 = sadd.s32 %s99, 1
      %p103 = scmp.eq.s32.totalorder %s23, 1
      %p104 = scmp.ne.s32.totalorder %s99, %s101
      %p105 = scmp.eq.s32.totalorder %s23, 0
      %p106 = por %p104, %p105
      %p107 = scmp.ne.s32.totalorder %s99, %s101
      %p108 = scmp.eq.s32.totalorder %s28, 1
      %p109 = por %p107, %p108
      %p110 = scmp.ne.s32.totalorder %s101, %s102
      %p111 = scmp.eq.s32.totalorder %s28, 0
      %p112 = por %p110, %p111
      %p113 = scmp.ne.s32.totalorder %s101, %s102
      %p114 = scmp.eq.s32.totalorder %s29, 1
      %p115 = por %p113, %p114
      %p117 = scmp.ne.s32.totalorder %s102, %s116
      %p118 = scmp.eq.s32.totalorder %s29, 0
      %p119 = por %p117, %p118
      %s121 = sadd.s32 %s120, 1
      %p124 = scmp.eq.s32.totalorder %s23, 1
      %p125 = scmp.ne.s32.totalorder %s120, %s122
      %p126 = scmp.eq.s32.totalorder %s23, 0
      %p127 = por %p125, %p126
      %p128 = scmp.ne.s32.totalorder %s120, %s122
      %p129 = scmp.eq.s32.totalorder %s28, 1
      %p130 = por %p128, %p129
      %p131 = scmp.ne.s32.totalorder %s122, %s123
      %p132 = scmp.eq.s32.totalorder %s28, 0
      %p133 = por %p131, %p132
      %p134 = scmp.ne.s32.totalorder %s122, %s123
      %p135 = scmp.eq.s32.totalorder %s29, 1
      %p136 = por %p134, %p135
      %p138 = scmp.ne.s32.totalorder %s123, %s137
      %p139 = scmp.eq.s32.totalorder %s29, 0
      %p140 = por %p138, %p139
      %s142 = sadd.s32 %s141, 1
      %p145 = scmp.eq.s32.totalorder %s23, 1
      %p146 = scmp.ne.s32.totalorder %s141, %s143
      %p147 = scmp.eq.s32.totalorder %s23, 0
      %p148 = por %p146, %p147
      %p149 = scmp.ne.s32.totalorder %s141, %s143
      %p150 = scmp.eq.s32.totalorder %s28, 1
      %p151 = por %p149, %p150
      %p152 = scmp.ne.s32.totalorder %s143, %s144
      %p153 = scmp.eq.s32.totalorder %s28, 0
      %p154 = por %p152, %p153
      %p155 = scmp.ne.s32.totalorder %s143, %s144
      %p156 = scmp.eq.s32.totalorder %s29, 1
      %p157 = por %p155, %p156
      %p159 = scmp.ne.s32.totalorder %s144, %s158
      %p160 = scmp.eq.s32.totalorder %s29, 0
      %p161 = por %p159, %p160
      %s163 = sadd.s32 %s162, 1
      %p166 = scmp.eq.s32.totalorder %s23, 1
      %p167 = scmp.ne.s32.totalorder %s162, %s164
      %p168 = scmp.eq.s32.totalorder %s23, 0
      %p169 = por %p167, %p168
      %p170 = scmp.ne.s32.totalorder %s162, %s164
      %p171 = scmp.eq.s32.totalorder %s28, 1
      %p172 = por %p170, %p171
      %p173 = scmp.ne.s32.totalorder %s164, %s165
      %p174 = scmp.eq.s32.totalorder %s28, 0
      %p175 = por %p173, %p174
      %p176 = scmp.ne.s32.totalorder %s164, %s165
      %p177 = scmp.eq.s32.totalorder %s29, 1
      %p178 = por %p176, %p177
      %p180 = scmp.ne.s32.totalorder %s165, %s179
      %p181 = scmp.eq.s32.totalorder %s29, 0
      %p182 = por %p180, %p181
      %s184 = sadd.s32 %s183, 1
      %p187 = scmp.eq.s32.totalorder %s23, 1
      %p188 = scmp.ne.s32.totalorder %s183, %s185
      %p189 = scmp.eq.s32.totalorder %s23, 0
      %p190 = por %p188, %p189
      %p191 = scmp.ne.s32.totalorder %s183, %s185
      %p192 = scmp.eq.s32.totalorder %s28, 1
      %p193 = por %p191, %p192
      %p194 = scmp.ne.s32.totalorder %s185, %s186
      %p195 = scmp.eq.s32.totalorder %s28, 0
      %p196 = por %p194, %p195
      %p197 = scmp.ne.s32.totalorder %s185, %s186
      %p198 = scmp.eq.s32.totalorder %s29, 1
      %p199 = por %p197, %p198
      %p201 = scmp.ne.s32.totalorder %s186, %s200
      %p202 = scmp.eq.s32.totalorder %s29, 0
      %p203 = por %p201, %p202
      %s205 = sadd.s32 %s204, 1
      %p208 = scmp.eq.s32.totalorder %s23, 1
      %p209 = scmp.ne.s32.totalorder %s204, %s206
      %p210 = scmp.eq.s32.totalorder %s23, 0
      %p211 = por %p209, %p210
      %p212 = scmp.ne.s32.totalorder %s204, %s206
      %p213 = scmp.eq.s32.totalorder %s28, 1
      %p214 = por %p212, %p213
      %p215 = scmp.ne.s32.totalorder %s206, %s207
      %p216 = scmp.eq.s32.totalorder %s28, 0
      %p217 = por %p215, %p216
      %p218 = scmp.ne.s32.totalorder %s206, %s207
      %p219 = scmp.eq.s32.totalorder %s29, 1
      %p220 = por %p218, %p219
      %p222 = scmp.ne.s32.totalorder %s207, %s221
      %p223 = scmp.eq.s32.totalorder %s29, 0
      %p224 = por %p222, %p223
      %s226 = sadd.s32 %s225, 1
      %p229 = scmp.eq.s32.totalorder %s23, 1
      %p230 = scmp.ne.s32.totalorder %s225, %s227
      %p231 = scmp.eq.s32.totalorder %s23, 0
      %p232 = por %p230, %p231
      %p233 = scmp.ne.s32.totalorder %s225, %s227
      %p234 = scmp.eq.s32.totalorder %s28, 1
      %p235 = por %p233, %p234
      %p236 = scmp.ne.s32.totalorder %s227, %s228
      %p237 = scmp.eq.s32.totalorder %s28, 0
      %p238 = por %p236, %p237
      %p239 = scmp.ne.s32.totalorder %s227, %s228
      %p240 = scmp.eq.s32.totalorder %s29, 1
      %p241 = por %p239, %p240
      %p243 = scmp.ne.s32.totalorder %s228, %s242
      %p244 = scmp.eq.s32.totalorder %s29, 0
      %p245 = por %p243, %p244
      %s247 = sadd.s32 %s246, 1
      %p250 = scmp.eq.s32.totalorder %s23, 1
      %p251 = scmp.ne.s32.totalorder %s246, %s248
      %p252 = scmp.eq.s32.totalorder %s23, 0
      %p253 = por %p251, %p252
      %p254 = scmp.ne.s32.totalorder %s246, %s248
      %p255 = scmp.eq.s32.totalorder %s28, 1
      %p256 = por %p254, %p255
      %p257 = scmp.ne.s32.totalorder %s248, %s249
      %p258 = scmp.eq.s32.totalorder %s28, 0
      %p259 = por %p257, %p258
      %p260 = scmp.ne.s32.totalorder %s248, %s249
      %p261 = scmp.eq.s32.totalorder %s29, 1
      %p262 = por %p260, %p261
      %p264 = scmp.ne.s32.totalorder %s249, %s263
      %p265 = scmp.eq.s32.totalorder %s29, 0
      %p266 = por %p264, %p265
      %s267 = ssub.s32 %s23, %s30
      %p268 = scmp.eq.s32.totalorder %s267, 0
      %s270 = sadd.s32 %s269, 1
      %s271 = scalar_select %p268, %s269, %s270
      %p274 = pneg %p268
      %p275 = scmp.eq.s32.totalorder %s23, 1
      %p276 = por %p274, %p275
      %p277 = scmp.ne.s32.totalorder %s269, %s272
      %p278 = scmp.eq.s32.totalorder %s23, 0
      %p279 = por %p277, %p278
      %p280 = scmp.ne.s32.totalorder %s269, %s272
      %p281 = scmp.eq.s32.totalorder %s28, 1
      %p282 = por %p280, %p281
      %p283 = scmp.ne.s32.totalorder %s272, %s273
      %p284 = scmp.eq.s32.totalorder %s28, 0
      %p285 = por %p283, %p284
      %p286 = scmp.ne.s32.totalorder %s272, %s273
      %p287 = scmp.eq.s32.totalorder %s29, 1
      %p288 = por %p286, %p287
      %p290 = scmp.ne.s32.totalorder %s273, %s289
      %p291 = scmp.eq.s32.totalorder %s29, 0
      %p292 = por %p290, %p291
      %p293 = scmp.le.s32.totalorder 1, %s23
      %p294 = scmp.lt.s32.totalorder %s23, 3
      %p295 = pnand %p293, %p294
      %p296 = pneg %p295
      // Predicated region
      $region9: #{tpu_custom_call.1} parent=5 // pred_check
        _
      $region10: #{tpu_custom_call.1} parent=5 // pred_check_branch
        %298 = sbr.rel (%p295) target = $region12
      $region11: #{tpu_custom_call.1} parent=5 // pred_region
        %s299 = ssub.s32 %s23, 1
        // Predicated region
        $region13: #{tpu_custom_call.1} parent=11 // pred_check
          %p300 = pneg %p70
        $region14: #{tpu_custom_call.1} parent=11 // pred_check_branch
          %302 = sbr.rel (%p300) target = $region16
        $region15: #{tpu_custom_call.1} parent=11 // pred_region
          _
        $region16: #{tpu_custom_call.1} parent=11 // pred_fallthru
          _
        // Predicated region
        $region17: #{tpu_custom_call.1} parent=11 // pred_check
          %p303 = pneg %p91
        $region18: #{tpu_custom_call.1} parent=11 // pred_check_branch
          %305 = sbr.rel (%p303) target = $region20
        $region19: #{tpu_custom_call.1} parent=11 // pred_region
          _
        $region20: #{tpu_custom_call.1} parent=11 // pred_fallthru
          _
        // Predicated region
        $region21: #{tpu_custom_call.1} parent=11 // pred_check
          %p306 = pneg %p112
        $region22: #{tpu_custom_call.1} parent=11 // pred_check_branch
          %308 = sbr.rel (%p306) target = $region24
        $region23: #{tpu_custom_call.1} parent=11 // pred_region
          _
        $region24: #{tpu_custom_call.1} parent=11 // pred_fallthru
          _
        // Predicated region
        $region25: #{tpu_custom_call.1} parent=11 // pred_check
          %p309 = pneg %p133
        $region26: #{tpu_custom_call.1} parent=11 // pred_check_branch
          %311 = sbr.rel (%p309) target = $region28
        $region27: #{tpu_custom_call.1} parent=11 // pred_region
          _
        $region28: #{tpu_custom_call.1} parent=11 // pred_fallthru
          _
        // Predicated region
        $region29: #{tpu_custom_call.1} parent=11 // pred_check
          %p312 = pneg %p154
        $region30: #{tpu_custom_call.1} parent=11 // pred_check_branch
          %314 = sbr.rel (%p312) target = $region32
        $region31: #{tpu_custom_call.1} parent=11 // pred_region
          _
        $region32: #{tpu_custom_call.1} parent=11 // pred_fallthru
          _
        // Predicated region
        $region33: #{tpu_custom_call.1} parent=11 // pred_check
          %p315 = pneg %p175
        $region34: #{tpu_custom_call.1} parent=11 // pred_check_branch
          %317 = sbr.rel (%p315) target = $region36
        $region35: #{tpu_custom_call.1} parent=11 // pred_region
          _
        $region36: #{tpu_custom_call.1} parent=11 // pred_fallthru
          _
        // Predicated region
        $region37: #{tpu_custom_call.1} parent=11 // pred_check
          %p318 = pneg %p196
        $region38: #{tpu_custom_call.1} parent=11 // pred_check_branch
          %320 = sbr.rel (%p318) target = $region40
        $region39: #{tpu_custom_call.1} parent=11 // pred_region
          _
        $region40: #{tpu_custom_call.1} parent=11 // pred_fallthru
          _
        // Predicated region
        $region41: #{tpu_custom_call.1} parent=11 // pred_check
          %p321 = pneg %p217
        $region42: #{tpu_custom_call.1} parent=11 // pred_check_branch
          %323 = sbr.rel (%p321) target = $region44
        $region43: #{tpu_custom_call.1} parent=11 // pred_region
          _
        $region44: #{tpu_custom_call.1} parent=11 // pred_fallthru
          _
        // Predicated region
        $region45: #{tpu_custom_call.1} parent=11 // pred_check
          %p324 = pneg %p238
        $region46: #{tpu_custom_call.1} parent=11 // pred_check_branch
          %326 = sbr.rel (%p324) target = $region48
        $region47: #{tpu_custom_call.1} parent=11 // pred_region
          _
        $region48: #{tpu_custom_call.1} parent=11 // pred_fallthru
          _
        // Predicated region
        $region49: #{tpu_custom_call.1} parent=11 // pred_check
          %p327 = pneg %p259
        $region50: #{tpu_custom_call.1} parent=11 // pred_check_branch
          %329 = sbr.rel (%p327) target = $region52
        $region51: #{tpu_custom_call.1} parent=11 // pred_region
          _
        $region52: #{tpu_custom_call.1} parent=11 // pred_fallthru
          _
      $region12: #{tpu_custom_call.1} parent=5 // pred_fallthru
        _
      %p330 = scmp.lt.s32.totalorder %s23, 2
      // Predicated region
      $region53: #{tpu_custom_call.1} parent=5 // pred_check
        %p331 = pneg %p330
      $region54: #{tpu_custom_call.1} parent=5 // pred_check_branch
        %333 = sbr.rel (%p331) target = $region56
      $region55: #{tpu_custom_call.1} parent=5 // pred_region
        // Predicated region
        $region57: #{tpu_custom_call.1} parent=55 // pred_check
          %p334 = pneg %p43
        $region58: #{tpu_custom_call.1} parent=55 // pred_check_branch
          %336 = sbr.rel (%p334) target = $region60
        $region59: #{tpu_custom_call.1} parent=55 // pred_region
          %s337 = sand.u32 %s33, 1
          %s338 = scalar_lea.sflag [#allocation6], %s337
          %s339 = sand.u32 %s33, 1
          %s340 = smul.addr %s339, 256
          %s341 = scalar_lea.vmem [#allocation5], %s340
          %s343 = ssub.s32 4096, 4096
          %344 = vsyncadd %s338, %s343
          %s345 = smul.addr %s23, 32
          %s346 = smul.addr %s345, 128
          %s347 = scalar_lea.hbm %s0, %s346
          %s348 = sshll.u32 %s341, 4
          %s349 = int_to_ptr.vmem [resolvable:$true] %s348
          %354 = dma.hbm_to_vmem [thread:$0]  %s347, 4096, %s349, %s338, 128, 128, 8
        $region60: #{tpu_custom_call.1} parent=55 // pred_fallthru
          _
      $region56: #{tpu_custom_call.1} parent=5 // pred_fallthru
        _
      %p355 = scmp.le.s32.totalorder 1, %s23
      %p356 = scmp.lt.s32.totalorder %s23, 3
      %p357 = pnand %p355, %p356
      %p358 = pneg %p357
      // Predicated region
      $region61: #{tpu_custom_call.1} parent=5 // pred_check
        _
      $region62: #{tpu_custom_call.1} parent=5 // pred_check_branch
        %360 = sbr.rel (%p357) target = $region64
      $region63: #{tpu_custom_call.1} parent=5 // pred_region
        %s361 = ssub.s32 %s23, 1
        %s362 = sand.u32 %s36, 1
        %s363 = scalar_lea.sflag [#allocation6], %s362
        %s364 = sand.u32 %s36, 1
        %s365 = smul.addr %s364, 256
        %s366 = scalar_lea.vmem [#allocation5], %s365
        // Predicated region
        $region65: #{tpu_custom_call.1} parent=63 // pred_check
          %p367 = pneg %p49
        $region66: #{tpu_custom_call.1} parent=63 // pred_check_branch
          %369 = sbr.rel (%p367) target = $region68
        $region67: #{tpu_custom_call.1} parent=63 // pred_region
          %370 = dma.done %s363, 4096
        $region68: #{tpu_custom_call.1} parent=63 // pred_fallthru
          _
        %s371 = sand.u32 %s36, 1
        %s372 = scalar_lea.sflag [#allocation6], %s371
        %s373 = sand.u32 %s36, 1
        %s374 = smul.addr %s373, 256
        %s375 = scalar_lea.vmem [#allocation5], %s374
        %p376 = pneg %p49
        %p377 = pneg %p46
        %p378 = pneg %p70
        %p379 = pneg %p67
        %p380 = pneg %p91
        %p381 = pneg %p88
        %p382 = pneg %p112
        %p383 = pneg %p109
        %p384 = pneg %p133
        %p385 = pneg %p130
        %p386 = pneg %p154
        %p387 = pneg %p151
        %p388 = pneg %p175
        %p389 = pneg %p172
        %p390 = pneg %p196
        %p391 = pneg %p193
        %p392 = pneg %p217
        %p393 = pneg %p214
        %p394 = pneg %p238
        %p395 = pneg %p235
        %p396 = pneg %p259
        %p397 = pneg %p256
        %p398 = pneg %p285
        %p399 = pneg %p282
        %s400 = sand.u32 %s272, 1
        %s401 = scalar_lea.sflag [#allocation7], %s400
        %s402 = sand.u32 %s272, 1
        %s403 = smul.addr %s402, 256
        %s404 = scalar_lea.vmem [#allocation8], %s403
        %vm406 = vcmask 27648
        %407 = vst.msk [vmem:[#allocation2] sm:$0xf] %vm406, 0
        %408 = vst.msk [vmem:[#allocation2 + $0x4] sm:$0xf] %vm406, 0
        %vm409 = vcmask 24576
        %410 = vst.msk [vmem:[#allocation2 + $0x8] sm:$0x1] %vm409, 0
        %s411 = scalar_lea.vmem [#allocation2], 204
        %412 = vst.msk [vmem:[%s411] sm:$0xf] %vm406, 0
        %413 = vst.msk [vmem:[%s411 + $0x4] sm:$0xf] %vm406, 0
        %414 = vst.msk [vmem:[%s411 + $0x8] sm:$0x1] %vm409, 0
        %vm415 = vcmask 24576
        %vm416 = vsmask.f32 256
        %vm417 = vmand %vm415, %vm416
        %v418 = vld [vmem:[#allocation2] sm:$0x1]
        %v419 = vsel %vm417, 0, %v418
        %420 = vst [vmem:[#allocation2] sm:$0x1] %v419
        %v421 = vld [vmem:[#allocation2 + $0xc] sm:$0x1]
        %v422 = vsel %vm417, 0, %v421
        %423 = vst [vmem:[#allocation2 + $0xc] sm:$0x1] %v422
        %v424 = vld [vmem:[#allocation2 + $0x18] sm:$0x1]
        %v425 = vsel %vm417, 0, %v424
        %426 = vst [vmem:[#allocation2 + $0x18] sm:$0x1] %v425
        %v427 = vld [vmem:[#allocation2 + $0x24] sm:$0x1]
        %v428 = vsel %vm417, 0, %v427
        %429 = vst [vmem:[#allocation2 + $0x24] sm:$0x1] %v428
        %v430 = vld [vmem:[#allocation2 + $0x30] sm:$0x1]
        %v431 = vsel %vm417, 0, %v430
        %432 = vst [vmem:[#allocation2 + $0x30] sm:$0x1] %v431
        %v433 = vld [vmem:[#allocation2 + $0x3c] sm:$0x1]
        %v434 = vsel %vm417, 0, %v433
        %435 = vst [vmem:[#allocation2 + $0x3c] sm:$0x1] %v434
        %v436 = vld [vmem:[#allocation2 + $0x48] sm:$0x1]
        %v437 = vsel %vm417, 0, %v436
        %438 = vst [vmem:[#allocation2 + $0x48] sm:$0x1] %v437
        %v439 = vld [vmem:[#allocation2 + $0x54] sm:$0x1]
        %v440 = vsel %vm417, 0, %v439
        %441 = vst [vmem:[#allocation2 + $0x54] sm:$0x1] %v440
        %v442 = vld [vmem:[#allocation2 + $0x60] sm:$0x1]
        %v443 = vsel %vm417, 0, %v442
        %444 = vst [vmem:[#allocation2 + $0x60] sm:$0x1] %v443
        %v445 = vld [vmem:[#allocation2 + $0x6c] sm:$0x1]
        %v446 = vsel %vm417, 0, %v445
        %447 = vst [vmem:[#allocation2 + $0x6c] sm:$0x1] %v446
        %v448 = vld [vmem:[#allocation2 + $0x78] sm:$0x1]
        %v449 = vsel %vm417, 0, %v448
        %450 = vst [vmem:[#allocation2 + $0x78] sm:$0x1] %v449
        %v451 = vld [vmem:[#allocation2 + $0x84] sm:$0x1]
        %v452 = vsel %vm417, 0, %v451
        %453 = vst [vmem:[#allocation2 + $0x84] sm:$0x1] %v452
        %v454 = vld [vmem:[#allocation2 + $0x90] sm:$0x1]
        %v455 = vsel %vm417, 0, %v454
        %456 = vst [vmem:[#allocation2 + $0x90] sm:$0x1] %v455
        %v457 = vld [vmem:[#allocation2 + $0x9c] sm:$0x1]
        %v458 = vsel %vm417, 0, %v457
        %459 = vst [vmem:[#allocation2 + $0x9c] sm:$0x1] %v458
        %v460 = vld [vmem:[#allocation2 + $0xa8] sm:$0x1]
        %v461 = vsel %vm417, 0, %v460
        %462 = vst [vmem:[#allocation2 + $0xa8] sm:$0x1] %v461
        %v463 = vld [vmem:[#allocation2 + $0xb4] sm:$0x1]
        %v464 = vsel %vm417, 0, %v463
        %465 = vst [vmem:[#allocation2 + $0xb4] sm:$0x1] %v464
        %v466 = vld [vmem:[#allocation2 + $0xc0] sm:$0x1]
        %v467 = vsel %vm417, 0, %v466
        %468 = vst [vmem:[#allocation2 + $0xc0] sm:$0x1] %v467
        %v469 = vld [vmem:[#allocation2 + $0xcc] sm:$0x1]
        %v470 = vsel %vm417, 0, %v469
        %471 = vst [vmem:[#allocation2 + $0xcc] sm:$0x1] %v470
        %vm472 = vsmask.f32 7938
        %vm473 = vmand %vm415, %vm472
        %v474 = vld [vmem:[#allocation2 + $0x8] sm:$0x1]
        %v475 = vsel %vm473, 0, %v474
        %476 = vst [vmem:[#allocation2 + $0x8] sm:$0x1] %v475
        %v477 = vld [vmem:[#allocation2 + $0x14] sm:$0x1]
        %v478 = vsel %vm473, 0, %v477
        %479 = vst [vmem:[#allocation2 + $0x14] sm:$0x1] %v478
        %v480 = vld [vmem:[#allocation2 + $0x20] sm:$0x1]
        %v481 = vsel %vm473, 0, %v480
        %482 = vst [vmem:[#allocation2 + $0x20] sm:$0x1] %v481
        %v483 = vld [vmem:[#allocation2 + $0x2c] sm:$0x1]
        %v484 = vsel %vm473, 0, %v483
        %485 = vst [vmem:[#allocation2 + $0x2c] sm:$0x1] %v484
        %v486 = vld [vmem:[#allocation2 + $0x38] sm:$0x1]
        %v487 = vsel %vm473, 0, %v486
        %488 = vst [vmem:[#allocation2 + $0x38] sm:$0x1] %v487
        %v489 = vld [vmem:[#allocation2 + $0x44] sm:$0x1]
        %v490 = vsel %vm473, 0, %v489
        %491 = vst [vmem:[#allocation2 + $0x44] sm:$0x1] %v490
        %v492 = vld [vmem:[#allocation2 + $0x50] sm:$0x1]
        %v493 = vsel %vm473, 0, %v492
        %494 = vst [vmem:[#allocation2 + $0x50] sm:$0x1] %v493
        %v495 = vld [vmem:[#allocation2 + $0x5c] sm:$0x1]
        %v496 = vsel %vm473, 0, %v495
        %497 = vst [vmem:[#allocation2 + $0x5c] sm:$0x1] %v496
        %v498 = vld [vmem:[#allocation2 + $0x68] sm:$0x1]
        %v499 = vsel %vm473, 0, %v498
        %500 = vst [vmem:[#allocation2 + $0x68] sm:$0x1] %v499
        %v501 = vld [vmem:[#allocation2 + $0x74] sm:$0x1]
        %v502 = vsel %vm473, 0, %v501
        %503 = vst [vmem:[#allocation2 + $0x74] sm:$0x1] %v502
        %v504 = vld [vmem:[#allocation2 + $0x80] sm:$0x1]
        %v505 = vsel %vm473, 0, %v504
        %506 = vst [vmem:[#allocation2 + $0x80] sm:$0x1] %v505
        %v507 = vld [vmem:[#allocation2 + $0x8c] sm:$0x1]
        %v508 = vsel %vm473, 0, %v507
        %509 = vst [vmem:[#allocation2 + $0x8c] sm:$0x1] %v508
        %v510 = vld [vmem:[#allocation2 + $0x98] sm:$0x1]
        %v511 = vsel %vm473, 0, %v510
        %512 = vst [vmem:[#allocation2 + $0x98] sm:$0x1] %v511
        %v513 = vld [vmem:[#allocation2 + $0xa4] sm:$0x1]
        %v514 = vsel %vm473, 0, %v513
        %515 = vst [vmem:[#allocation2 + $0xa4] sm:$0x1] %v514
        %v516 = vld [vmem:[#allocation2 + $0xb0] sm:$0x1]
        %v517 = vsel %vm473, 0, %v516
        %518 = vst [vmem:[#allocation2 + $0xb0] sm:$0x1] %v517
        %v519 = vld [vmem:[#allocation2 + $0xbc] sm:$0x1]
        %v520 = vsel %vm473, 0, %v519
        %521 = vst [vmem:[#allocation2 + $0xbc] sm:$0x1] %v520
        %v522 = vld [vmem:[#allocation2 + $0xc8] sm:$0x1]
        %v523 = vsel %vm473, 0, %v522
        %524 = vst [vmem:[#allocation2 + $0xc8] sm:$0x1] %v523
        %v525 = vld [vmem:[#allocation2 + $0xd4] sm:$0x1]
        %v526 = vsel %vm473, 0, %v525
        %527 = vst [vmem:[#allocation2 + $0xd4] sm:$0x1] %v526
        %528 = vst.msk [vmem:[#allocation3] sm:$0xf] %vm406, 0
        %529 = vst.msk [vmem:[#allocation3 + $0x4] sm:$0xf] %vm406, 0
        %530 = vst.msk [vmem:[#allocation3 + $0x8] sm:$0x1] %vm409, 0
        %s531 = scalar_lea.vmem [#allocation3], 204
        %532 = vst.msk [vmem:[%s531] sm:$0xf] %vm406, 0
        %533 = vst.msk [vmem:[%s531 + $0x4] sm:$0xf] %vm406, 0
        %534 = vst.msk [vmem:[%s531 + $0x8] sm:$0x1] %vm409, 0
        %v535 = vld [vmem:[#allocation3] sm:$0x1]
        %v536 = vsel %vm417, 0, %v535
        %537 = vst [vmem:[#allocation3] sm:$0x1] %v536
        %v538 = vld [vmem:[#allocation3 + $0xc] sm:$0x1]
        %v539 = vsel %vm417, 0, %v538
        %540 = vst [vmem:[#allocation3 + $0xc] sm:$0x1] %v539
        %v541 = vld [vmem:[#allocation3 + $0x18] sm:$0x1]
        %v542 = vsel %vm417, 0, %v541
        %543 = vst [vmem:[#allocation3 + $0x18] sm:$0x1] %v542
        %v544 = vld [vmem:[#allocation3 + $0x24] sm:$0x1]
        %v545 = vsel %vm417, 0, %v544
        %546 = vst [vmem:[#allocation3 + $0x24] sm:$0x1] %v545
        %v547 = vld [vmem:[#allocation3 + $0x30] sm:$0x1]
        %v548 = vsel %vm417, 0, %v547
        %549 = vst [vmem:[#allocation3 + $0x30] sm:$0x1] %v548
        %v550 = vld [vmem:[#allocation3 + $0x3c] sm:$0x1]
        %v551 = vsel %vm417, 0, %v550
        %552 = vst [vmem:[#allocation3 + $0x3c] sm:$0x1] %v551
        %v553 = vld [vmem:[#allocation3 + $0x48] sm:$0x1]
        %v554 = vsel %vm417, 0, %v553
        %555 = vst [vmem:[#allocation3 + $0x48] sm:$0x1] %v554
        %v556 = vld [vmem:[#allocation3 + $0x54] sm:$0x1]
        %v557 = vsel %vm417, 0, %v556
        %558 = vst [vmem:[#allocation3 + $0x54] sm:$0x1] %v557
        %v559 = vld [vmem:[#allocation3 + $0x60] sm:$0x1]
        %v560 = vsel %vm417, 0, %v559
        %561 = vst [vmem:[#allocation3 + $0x60] sm:$0x1] %v560
        %v562 = vld [vmem:[#allocation3 + $0x6c] sm:$0x1]
        %v563 = vsel %vm417, 0, %v562
        %564 = vst [vmem:[#allocation3 + $0x6c] sm:$0x1] %v563
        %v565 = vld [vmem:[#allocation3 + $0x78] sm:$0x1]
        %v566 = vsel %vm417, 0, %v565
        %567 = vst [vmem:[#allocation3 + $0x78] sm:$0x1] %v566
        %v568 = vld [vmem:[#allocation3 + $0x84] sm:$0x1]
        %v569 = vsel %vm417, 0, %v568
        %570 = vst [vmem:[#allocation3 + $0x84] sm:$0x1] %v569
        %v571 = vld [vmem:[#allocation3 + $0x90] sm:$0x1]
        %v572 = vsel %vm417, 0, %v571
        %573 = vst [vmem:[#allocation3 + $0x90] sm:$0x1] %v572
        %v574 = vld [vmem:[#allocation3 + $0x9c] sm:$0x1]
        %v575 = vsel %vm417, 0, %v574
        %576 = vst [vmem:[#allocation3 + $0x9c] sm:$0x1] %v575
        %v577 = vld [vmem:[#allocation3 + $0xa8] sm:$0x1]
        %v578 = vsel %vm417, 0, %v577
        %579 = vst [vmem:[#allocation3 + $0xa8] sm:$0x1] %v578
        %v580 = vld [vmem:[#allocation3 + $0xb4] sm:$0x1]
        %v581 = vsel %vm417, 0, %v580
        %582 = vst [vmem:[#allocation3 + $0xb4] sm:$0x1] %v581
        %v583 = vld [vmem:[#allocation3 + $0xc0] sm:$0x1]
        %v584 = vsel %vm417, 0, %v583
        %585 = vst [vmem:[#allocation3 + $0xc0] sm:$0x1] %v584
        %v586 = vld [vmem:[#allocation3 + $0xcc] sm:$0x1]
        %v587 = vsel %vm417, 0, %v586
        %588 = vst [vmem:[#allocation3 + $0xcc] sm:$0x1] %v587
        %v589 = vld [vmem:[#allocation3 + $0x8] sm:$0x1]
        %v590 = vsel %vm473, 0, %v589
        %591 = vst [vmem:[#allocation3 + $0x8] sm:$0x1] %v590
        %v592 = vld [vmem:[#allocation3 + $0x14] sm:$0x1]
        %v593 = vsel %vm473, 0, %v592
        %594 = vst [vmem:[#allocation3 + $0x14] sm:$0x1] %v593
        %v595 = vld [vmem:[#allocation3 + $0x20] sm:$0x1]
        %v596 = vsel %vm473, 0, %v595
        %597 = vst [vmem:[#allocation3 + $0x20] sm:$0x1] %v596
        %v598 = vld [vmem:[#allocation3 + $0x2c] sm:$0x1]
        %v599 = vsel %vm473, 0, %v598
        %600 = vst [vmem:[#allocation3 + $0x2c] sm:$0x1] %v599
        %v601 = vld [vmem:[#allocation3 + $0x38] sm:$0x1]
        %v602 = vsel %vm473, 0, %v601
        %603 = vst [vmem:[#allocation3 + $0x38] sm:$0x1] %v602
        %v604 = vld [vmem:[#allocation3 + $0x44] sm:$0x1]
        %v605 = vsel %vm473, 0, %v604
        %606 = vst [vmem:[#allocation3 + $0x44] sm:$0x1] %v605
        %v607 = vld [vmem:[#allocation3 + $0x50] sm:$0x1]
        %v608 = vsel %vm473, 0, %v607
        %609 = vst [vmem:[#allocation3 + $0x50] sm:$0x1] %v608
        %v610 = vld [vmem:[#allocation3 + $0x5c] sm:$0x1]
        %v611 = vsel %vm473, 0, %v610
        %612 = vst [vmem:[#allocation3 + $0x5c] sm:$0x1] %v611
        %v613 = vld [vmem:[#allocation3 + $0x68] sm:$0x1]
        %v614 = vsel %vm473, 0, %v613
        %615 = vst [vmem:[#allocation3 + $0x68] sm:$0x1] %v614
        %v616 = vld [vmem:[#allocation3 + $0x74] sm:$0x1]
        %v617 = vsel %vm473, 0, %v616
        %618 = vst [vmem:[#allocation3 + $0x74] sm:$0x1] %v617
        %v619 = vld [vmem:[#allocation3 + $0x80] sm:$0x1]
        %v620 = vsel %vm473, 0, %v619
        %621 = vst [vmem:[#allocation3 + $0x80] sm:$0x1] %v620
        %v622 = vld [vmem:[#allocation3 + $0x8c] sm:$0x1]
        %v623 = vsel %vm473, 0, %v622
        %624 = vst [vmem:[#allocation3 + $0x8c] sm:$0x1] %v623
        %v625 = vld [vmem:[#allocation3 + $0x98] sm:$0x1]
        %v626 = vsel %vm473, 0, %v625
        %627 = vst [vmem:[#allocation3 + $0x98] sm:$0x1] %v626
        %v628 = vld [vmem:[#allocation3 + $0xa4] sm:$0x1]
        %v629 = vsel %vm473, 0, %v628
        %630 = vst [vmem:[#allocation3 + $0xa4] sm:$0x1] %v629
        %v631 = vld [vmem:[#allocation3 + $0xb0] sm:$0x1]
        %v632 = vsel %vm473, 0, %v631
        %633 = vst [vmem:[#allocation3 + $0xb0] sm:$0x1] %v632
        %v634 = vld [vmem:[#allocation3 + $0xbc] sm:$0x1]
        %v635 = vsel %vm473, 0, %v634
        %636 = vst [vmem:[#allocation3 + $0xbc] sm:$0x1] %v635
        %v637 = vld [vmem:[#allocation3 + $0xc8] sm:$0x1]
        %v638 = vsel %vm473, 0, %v637
        %639 = vst [vmem:[#allocation3 + $0xc8] sm:$0x1] %v638
        %v640 = vld [vmem:[#allocation3 + $0xd4] sm:$0x1]
        %v641 = vsel %vm473, 0, %v640
        %642 = vst [vmem:[#allocation3 + $0xd4] sm:$0x1] %v641
        %vm643 = vcmask 26624
        %644 = vst.msk [vmem:[#allocation4] sm:$0x7] %vm643, 0
        %s645 = scalar_lea.vmem [#allocation4], 20
        %646 = vst.msk [vmem:[%s645] sm:$0x7] %vm643, 0
        %v647 = vld [vmem:[#allocation4] sm:$0x1]
        %v648 = vsel %vm417, 0, %v647
        %649 = vst [vmem:[#allocation4] sm:$0x1] %v648
        %v650 = vld [vmem:[#allocation4 + $0x4] sm:$0x1]
        %v651 = vsel %vm417, 0, %v650
        %652 = vst [vmem:[#allocation4 + $0x4] sm:$0x1] %v651
        %v653 = vld [vmem:[#allocation4 + $0x8] sm:$0x1]
        %v654 = vsel %vm417, 0, %v653
        %655 = vst [vmem:[#allocation4 + $0x8] sm:$0x1] %v654
        %v656 = vld [vmem:[#allocation4 + $0xc] sm:$0x1]
        %v657 = vsel %vm417, 0, %v656
        %658 = vst [vmem:[#allocation4 + $0xc] sm:$0x1] %v657
        %v659 = vld [vmem:[#allocation4 + $0x10] sm:$0x1]
        %v660 = vsel %vm417, 0, %v659
        %661 = vst [vmem:[#allocation4 + $0x10] sm:$0x1] %v660
        %v662 = vld [vmem:[#allocation4 + $0x14] sm:$0x1]
        %v663 = vsel %vm417, 0, %v662
        %664 = vst [vmem:[#allocation4 + $0x14] sm:$0x1] %v663
        %vm665 = vcmask 26626
        %vm666 = vsmask.f32 7946
        %vm667 = vmand %vm665, %vm666
        %v668 = vld [vmem:[#allocation4] sm:$0x4]
        %v669 = vsel %vm667, 0, %v668
        %670 = vst [vmem:[#allocation4] sm:$0x4] %v669
        %v671 = vld [vmem:[#allocation4 + $0x4] sm:$0x4]
        %v672 = vsel %vm667, 0, %v671
        %673 = vst [vmem:[#allocation4 + $0x4] sm:$0x4] %v672
        %v674 = vld [vmem:[#allocation4 + $0x8] sm:$0x4]
        %v675 = vsel %vm667, 0, %v674
        %676 = vst [vmem:[#allocation4 + $0x8] sm:$0x4] %v675
        %v677 = vld [vmem:[#allocation4 + $0xc] sm:$0x4]
        %v678 = vsel %vm667, 0, %v677
        %679 = vst [vmem:[#allocation4 + $0xc] sm:$0x4] %v678
        %v680 = vld [vmem:[#allocation4 + $0x10] sm:$0x4]
        %v681 = vsel %vm667, 0, %v680
        %682 = vst [vmem:[#allocation4 + $0x10] sm:$0x4] %v681
        %v683 = vld [vmem:[#allocation4 + $0x14] sm:$0x4]
        %v684 = vsel %vm667, 0, %v683
        %685 = vst [vmem:[#allocation4 + $0x14] sm:$0x4] %v684
        %v686 = vld [vmem:[%s366] sm:$0xff]
        %v687 = vld [vmem:[%s366 + $0x8] sm:$0xff]
        %v688 = vld [vmem:[%s366 + $0x10] sm:$0xff]
        %v689 = vld [vmem:[%s366 + $0x18] sm:$0xff]
        %v690 = vld [vmem:[%s366 + $0x20] sm:$0xff]
        %v691 = vld [vmem:[%s366 + $0x28] sm:$0xff]
        %v692 = vld [vmem:[%s366 + $0x30] sm:$0xff]
        %v693 = vld [vmem:[%s366 + $0x38] sm:$0xff]
        %v694 = vld [vmem:[%s366 + $0x40] sm:$0xff]
        %v695 = vld [vmem:[%s366 + $0x48] sm:$0xff]
        %v696 = vld [vmem:[%s366 + $0x50] sm:$0xff]
        %v697 = vld [vmem:[%s366 + $0x58] sm:$0xff]
        %v698 = vld [vmem:[%s366 + $0x60] sm:$0xff]
        %v699 = vld [vmem:[%s366 + $0x68] sm:$0xff]
        %v700 = vld [vmem:[%s366 + $0x70] sm:$0xff]
        %v701 = vld [vmem:[%s366 + $0x78] sm:$0xff]
        %v702 = vld [vmem:[%s366 + $0x80] sm:$0xff]
        %v703 = vld [vmem:[%s366 + $0x88] sm:$0xff]
        %v704 = vld [vmem:[%s366 + $0x90] sm:$0xff]
        %v705 = vld [vmem:[%s366 + $0x98] sm:$0xff]
        %v706 = vld [vmem:[%s366 + $0xa0] sm:$0xff]
        %v707 = vld [vmem:[%s366 + $0xa8] sm:$0xff]
        %v708 = vld [vmem:[%s366 + $0xb0] sm:$0xff]
        %v709 = vld [vmem:[%s366 + $0xb8] sm:$0xff]
        %v710 = vld [vmem:[%s366 + $0xc0] sm:$0xff]
        %v711 = vld [vmem:[%s366 + $0xc8] sm:$0xff]
        %v712 = vld [vmem:[%s366 + $0xd0] sm:$0xff]
        %v713 = vld [vmem:[%s366 + $0xd8] sm:$0xff]
        %v714 = vld [vmem:[%s366 + $0xe0] sm:$0xff]
        %v715 = vld [vmem:[%s366 + $0xe8] sm:$0xff]
        %v716 = vld [vmem:[%s366 + $0xf0] sm:$0xff]
        %v717 = vld [vmem:[%s366 + $0xf8] sm:$0xff]
        %v718 = vpack.c.bf16 %v687, %v686
        %v719 = vpack.c.bf16 %v689, %v688
        %v720 = vpack.c.bf16 %v691, %v690
        %v721 = vpack.c.bf16 %v693, %v692
        %v722 = vpack.c.bf16 %v695, %v694
        %v723 = vpack.c.bf16 %v697, %v696
        %v724 = vpack.c.bf16 %v699, %v698
        %v725 = vpack.c.bf16 %v701, %v700
        %v726 = vpack.c.bf16 %v703, %v702
        %v727 = vpack.c.bf16 %v705, %v704
        %v728 = vpack.c.bf16 %v707, %v706
        %v729 = vpack.c.bf16 %v709, %v708
        %v730 = vpack.c.bf16 %v711, %v710
        %v731 = vpack.c.bf16 %v713, %v712
        %v732 = vpack.c.bf16 %v715, %v714
        %v733 = vpack.c.bf16 %v717, %v716
        %v734 = vld [vmem:[%s1] sm:$0xf]
        %v735 = vld [vmem:[%s1 + $0x4] sm:$0xf]
        %v736 = vld [vmem:[%s2] sm:$0x1]
        %v738 = vlaneseq
        %v739 = vshrl.u32 %v738, 7
        %v740 = vsub.s32 0, %v739
        %v741 = vrot.slane %v736, %v740
        %v745 = vunpack.c.l.b16 %v734
        %v746 = vunpack.c.l.b16 %v735
        %v747 = vpack.c.b16 %v746, %v745
        %vm749 = vcmask 130048
        %v751 = vsel %vm749, %v718, 0
        %v754 = vsel %vm749, %v719, 0
        %v757 = vsel %vm749, %v720, 0
        %v760 = vsel %vm749, %v721, 0
        %v763 = vsel %vm749, %v722, 0
        %v766 = vsel %vm749, %v723, 0
        %v769 = vsel %vm749, %v724, 0
        %v772 = vsel %vm749, %v725, 0
        %v775 = vsel %vm749, %v726, 0
        %v778 = vsel %vm749, %v727, 0
        %v781 = vsel %vm749, %v728, 0
        %v784 = vsel %vm749, %v729, 0
        %v787 = vsel %vm749, %v730, 0
        %v790 = vsel %vm749, %v731, 0
        %v793 = vsel %vm749, %v732, 0
        %v796 = vsel %vm749, %v733, 0
        %798 = vmatprep.subr.bf16.mxu0 0
        %799 = vmatpush1.bf16.msra.mxu0 %v747
        %800 = vmatprep.subr.bf16.mxu0 0
        %801 = vmatpush1.bf16.msra.mxu0 0
        %802 = vmatprep.subr.bf16.mxu0 0
        %803 = vmatpush1.bf16.msra.mxu0 0
        %804 = vmatprep.subr.bf16.mxu0 0
        %805 = vmatpush1.bf16.msra.mxu0 0
        %806 = vmatprep.subr.bf16.mxu0 0
        %807 = vmatpush1.bf16.msra.mxu0 0
        %808 = vmatprep.subr.bf16.mxu0 0
        %809 = vmatpush1.bf16.msra.mxu0 0
        %810 = vmatprep.subr.bf16.mxu0 0
        %811 = vmatpush1.bf16.msra.mxu0 0
        %812 = vmatprep.subr.bf16.mxu0 0
        %813 = vmatpush1.bf16.msra.mxu0 0
        %814 = vmatprep.subr.bf16.mxu0 0
        %815 = vmatpush1.bf16.msra.mxu0 0
        %816 = vmatprep.subr.bf16.mxu0 0
        %817 = vmatpush1.bf16.msra.mxu0 0
        %818 = vmatprep.subr.bf16.mxu0 0
        %819 = vmatpush1.bf16.msra.mxu0 0
        %820 = vmatprep.subr.bf16.mxu0 0
        %821 = vmatpush1.bf16.msra.mxu0 0
        %822 = vmatprep.subr.bf16.mxu0 0
        %823 = vmatpush1.bf16.msra.mxu0 0
        %824 = vmatprep.subr.bf16.mxu0 0
        %825 = vmatpush1.bf16.msra.mxu0 0
        %826 = vmatprep.subr.bf16.mxu0 0
        %827 = vmatpush1.bf16.msra.mxu0 0
        %828 = vmatprep.subr.bf16.mxu0 0
        %829 = vmatpush1.bf16.msra.mxu0 0
        %830 = vmatprep.mubr.bf16.mxu0 0
        %831 = vmatmul.mubr.bf16.gmra.mrb[0].mxu0 %v751
        %v832 = vpop.f32.mrb[0].mxu0
        %v833 = vadd.f32 %v741, %v832
        %v834 = vpop.f32.mrb[0].mxu0
        %v835 = vpop.f32.mrb[0].mxu0
        %v836 = vadd.f32 %v741, %v835
        %v837 = vpop.f32.mrb[0].mxu0
        %838 = vmatprep.mubr.bf16.mxu0 0
        %839 = vmatmul.mubr.bf16.gmra.mrb[0].mxu0 %v754
        %v840 = vpop.f32.mrb[0].mxu0
        %v841 = vadd.f32 %v741, %v840
        %v842 = vpop.f32.mrb[0].mxu0
        %v843 = vpop.f32.mrb[0].mxu0
        %v844 = vadd.f32 %v741, %v843
        %v845 = vpop.f32.mrb[0].mxu0
        %846 = vmatprep.mubr.bf16.mxu0 0
        %847 = vmatmul.mubr.bf16.gmra.mrb[0].mxu0 %v757
        %v848 = vpop.f32.mrb[0].mxu0
        %v849 = vadd.f32 %v741, %v848
        %v850 = vpop.f32.mrb[0].mxu0
        %v851 = vpop.f32.mrb[0].mxu0
        %v852 = vadd.f32 %v741, %v851
        %v853 = vpop.f32.mrb[0].mxu0
        %854 = vmatprep.mubr.bf16.mxu0 0
        %855 = vmatmul.mubr.bf16.gmra.mrb[0].mxu0 %v760
        %v856 = vpop.f32.mrb[0].mxu0
        %v857 = vadd.f32 %v741, %v856
        %v858 = vpop.f32.mrb[0].mxu0
        %v859 = vpop.f32.mrb[0].mxu0
        %v860 = vadd.f32 %v741, %v859
        %v861 = vpop.f32.mrb[0].mxu0
        %862 = vmatprep.mubr.bf16.mxu0 0
        %863 = vmatmul.mubr.bf16.gmra.mrb[0].mxu0 %v763
        %v864 = vpop.f32.mrb[0].mxu0
        %v865 = vadd.f32 %v741, %v864
        %v866 = vpop.f32.mrb[0].mxu0
        %v867 = vpop.f32.mrb[0].mxu0
        %v868 = vadd.f32 %v741, %v867
        %v869 = vpop.f32.mrb[0].mxu0
        %870 = vmatprep.mubr.bf16.mxu0 0
        %871 = vmatmul.mubr.bf16.gmra.mrb[0].mxu0 %v766
        %v872 = vpop.f32.mrb[0].mxu0
        %v873 = vadd.f32 %v741, %v872
        %v874 = vpop.f32.mrb[0].mxu0
        %v875 = vpop.f32.mrb[0].mxu0
        %v876 = vadd.f32 %v741, %v875
        %v877 = vpop.f32.mrb[0].mxu0
        %878 = vmatprep.mubr.bf16.mxu0 0
        %879 = vmatmul.mubr.bf16.gmra.mrb[0].mxu0 %v769
        %v880 = vpop.f32.mrb[0].mxu0
        %v881 = vadd.f32 %v741, %v880
        %v882 = vpop.f32.mrb[0].mxu0
        %v883 = vpop.f32.mrb[0].mxu0
        %v884 = vadd.f32 %v741, %v883
        %v885 = vpop.f32.mrb[0].mxu0
        %886 = vmatprep.mubr.bf16.mxu0 0
        %887 = vmatmul.mubr.bf16.gmra.mrb[0].mxu0 %v772
        %v888 = vpop.f32.mrb[0].mxu0
        %v889 = vadd.f32 %v741, %v888
        %v890 = vpop.f32.mrb[0].mxu0
        %v891 = vpop.f32.mrb[0].mxu0
        %v892 = vadd.f32 %v741, %v891
        %v893 = vpop.f32.mrb[0].mxu0
        %894 = vmatprep.mubr.bf16.mxu0 0
        %895 = vmatmul.mubr.bf16.gmra.mrb[0].mxu0 %v775
        %v896 = vpop.f32.mrb[0].mxu0
        %v897 = vadd.f32 %v741, %v896
        %v898 = vpop.f32.mrb[0].mxu0
        %v899 = vpop.f32.mrb[0].mxu0
        %v900 = vadd.f32 %v741, %v899
        %v901 = vpop.f32.mrb[0].mxu0
        %902 = vmatprep.mubr.bf16.mxu0 0
        %903 = vmatmul.mubr.bf16.gmra.mrb[0].mxu0 %v778
        %v904 = vpop.f32.mrb[0].mxu0
        %v905 = vadd.f32 %v741, %v904
        %v906 = vpop.f32.mrb[0].mxu0
        %v907 = vpop.f32.mrb[0].mxu0
        %v908 = vadd.f32 %v741, %v907
        %v909 = vpop.f32.mrb[0].mxu0
        %910 = vmatprep.mubr.bf16.mxu0 0
        %911 = vmatmul.mubr.bf16.gmra.mrb[0].mxu0 %v781
        %v912 = vpop.f32.mrb[0].mxu0
        %v913 = vadd.f32 %v741, %v912
        %v914 = vpop.f32.mrb[0].mxu0
        %v915 = vpop.f32.mrb[0].mxu0
        %v916 = vadd.f32 %v741, %v915
        %v917 = vpop.f32.mrb[0].mxu0
        %918 = vmatprep.mubr.bf16.mxu0 0
        %919 = vmatmul.mubr.bf16.gmra.mrb[0].mxu0 %v784
        %v920 = vpop.f32.mrb[0].mxu0
        %v921 = vadd.f32 %v741, %v920
        %v922 = vpop.f32.mrb[0].mxu0
        %v923 = vpop.f32.mrb[0].mxu0
        %v924 = vadd.f32 %v741, %v923
        %v925 = vpop.f32.mrb[0].mxu0
        %926 = vmatprep.mubr.bf16.mxu0 0
        %927 = vmatmul.mubr.bf16.gmra.mrb[0].mxu0 %v787
        %v928 = vpop.f32.mrb[0].mxu0
        %v929 = vadd.f32 %v741, %v928
        %v930 = vpop.f32.mrb[0].mxu0
        %v931 = vpop.f32.mrb[0].mxu0
        %v932 = vadd.f32 %v741, %v931
        %v933 = vpop.f32.mrb[0].mxu0
        %934 = vmatprep.mubr.bf16.mxu0 0
        %935 = vmatmul.mubr.bf16.gmra.mrb[0].mxu0 %v790
        %v936 = vpop.f32.mrb[0].mxu0
        %v937 = vadd.f32 %v741, %v936
        %v938 = vpop.f32.mrb[0].mxu0
        %v939 = vpop.f32.mrb[0].mxu0
        %v940 = vadd.f32 %v741, %v939
        %v941 = vpop.f32.mrb[0].mxu0
        %942 = vmatprep.mubr.bf16.mxu0 0
        %943 = vmatmul.mubr.bf16.gmra.mrb[0].mxu0 %v793
        %v944 = vpop.f32.mrb[0].mxu0
        %v945 = vadd.f32 %v741, %v944
        %v946 = vpop.f32.mrb[0].mxu0
        %v947 = vpop.f32.mrb[0].mxu0
        %v948 = vadd.f32 %v741, %v947
        %v949 = vpop.f32.mrb[0].mxu0
        %950 = vmatprep.mubr.bf16.mxu0 0
        %951 = vmatmul.mubr.bf16.gmra.mrb[0].mxu0 %v796
        %v952 = vpop.f32.mrb[0].mxu0
        %v953 = vadd.f32 %v741, %v952
        %v954 = vpop.f32.mrb[0].mxu0
        %v955 = vpop.f32.mrb[0].mxu0
        %v956 = vadd.f32 %v741, %v955
        %v957 = vpop.f32.mrb[0].mxu0
        %958 = vdwg.mxu0
        %v959 = vmax.f32 %v833, 0.0
        %v960 = vmax.f32 %v836, 0.0
        %v961 = vmax.f32 %v841, 0.0
        %v962 = vmax.f32 %v844, 0.0
        %v963 = vmax.f32 %v849, 0.0
        %v964 = vmax.f32 %v852, 0.0
        %v965 = vmax.f32 %v857, 0.0
        %v966 = vmax.f32 %v860, 0.0
        %v967 = vmax.f32 %v865, 0.0
        %v968 = vmax.f32 %v868, 0.0
        %v969 = vmax.f32 %v873, 0.0
        %v970 = vmax.f32 %v876, 0.0
        %v971 = vmax.f32 %v881, 0.0
        %v972 = vmax.f32 %v884, 0.0
        %v973 = vmax.f32 %v889, 0.0
        %v974 = vmax.f32 %v892, 0.0
        %v975 = vmax.f32 %v897, 0.0
        %v976 = vmax.f32 %v900, 0.0
        %v977 = vmax.f32 %v905, 0.0
        %v978 = vmax.f32 %v908, 0.0
        %v979 = vmax.f32 %v913, 0.0
        %v980 = vmax.f32 %v916, 0.0
        %v981 = vmax.f32 %v921, 0.0
        %v982 = vmax.f32 %v924, 0.0
        %v983 = vmax.f32 %v929, 0.0
        %v984 = vmax.f32 %v932, 0.0
        %v985 = vmax.f32 %v937, 0.0
        %v986 = vmax.f32 %v940, 0.0
        %v987 = vmax.f32 %v945, 0.0
        %v988 = vmax.f32 %v948, 0.0
        %v989 = vmax.f32 %v953, 0.0
        %v990 = vmax.f32 %v956, 0.0
        %v991 = vpack.c.bf16 %v960, %v959
        %v992 = vpack.c.bf16 %v962, %v961
        %v993 = vpack.c.bf16 %v964, %v963
        %v994 = vpack.c.bf16 %v966, %v965
        %v995 = vpack.c.bf16 %v968, %v967
        %v996 = vpack.c.bf16 %v970, %v969
        %v997 = vpack.c.bf16 %v972, %v971
        %v998 = vpack.c.bf16 %v974, %v973
        %v999 = vpack.c.bf16 %v976, %v975
        %v1000 = vpack.c.bf16 %v978, %v977
        %v1001 = vpack.c.bf16 %v980, %v979
        %v1002 = vpack.c.bf16 %v982, %v981
        %v1003 = vpack.c.bf16 %v984, %v983
        %v1004 = vpack.c.bf16 %v986, %v985
        %v1005 = vpack.c.bf16 %v988, %v987
        %v1006 = vpack.c.bf16 %v990, %v989
        %v1023 = vunpack.c.l.b16 %v991
        %v1024 = vunpack.c.h.b16 %v991
        %v1025 = vunpack.c.l.b16 %v992
        %v1026 = vunpack.c.h.b16 %v992
        %v1027 = vunpack.c.l.b16 %v993
        %v1028 = vunpack.c.h.b16 %v993
        %v1029 = vunpack.c.l.b16 %v994
        %v1030 = vunpack.c.h.b16 %v994
        %v1031 = vunpack.c.l.b16 %v995
        %v1032 = vunpack.c.h.b16 %v995
        %v1033 = vunpack.c.l.b16 %v996
        %v1034 = vunpack.c.h.b16 %v996
        %v1035 = vunpack.c.l.b16 %v997
        %v1036 = vunpack.c.h.b16 %v997
        %v1037 = vunpack.c.l.b16 %v998
        %v1038 = vunpack.c.h.b16 %v998
        %v1039 = vunpack.c.l.b16 %v999
        %v1040 = vunpack.c.h.b16 %v999
        %v1041 = vunpack.c.l.b16 %v1000
        %v1042 = vunpack.c.h.b16 %v1000
        %v1043 = vunpack.c.l.b16 %v1001
        %v1044 = vunpack.c.h.b16 %v1001
        %v1045 = vunpack.c.l.b16 %v1002
        %v1046 = vunpack.c.h.b16 %v1002
        %v1047 = vunpack.c.l.b16 %v1003
        %v1048 = vunpack.c.h.b16 %v1003
        %v1049 = vunpack.c.l.b16 %v1004
        %v1050 = vunpack.c.h.b16 %v1004
        %v1051 = vunpack.c.l.b16 %v1005
        %v1052 = vunpack.c.h.b16 %v1005
        %v1053 = vunpack.c.l.b16 %v1006
        %v1054 = vunpack.c.h.b16 %v1006
        %v1055 = vpack.c.b16 %v1023, %v1023
        %v1056 = vpack.c.b16 %v1024, %v1024
        %v1057 = vpack.c.b16 %v1025, %v1025
        %v1058 = vpack.c.b16 %v1026, %v1026
        %v1059 = vpack.c.b16 %v1027, %v1027
        %v1060 = vpack.c.b16 %v1028, %v1028
        %v1061 = vpack.c.b16 %v1029, %v1029
        %v1062 = vpack.c.b16 %v1030, %v1030
        %v1063 = vpack.c.b16 %v1031, %v1031
        %v1064 = vpack.c.b16 %v1032, %v1032
        %v1065 = vpack.c.b16 %v1033, %v1033
        %v1066 = vpack.c.b16 %v1034, %v1034
        %v1067 = vpack.c.b16 %v1035, %v1035
        %v1068 = vpack.c.b16 %v1036, %v1036
        %v1069 = vpack.c.b16 %v1037, %v1037
        %v1070 = vpack.c.b16 %v1038, %v1038
        %v1071 = vpack.c.b16 %v1039, %v1039
        %v1072 = vpack.c.b16 %v1040, %v1040
        %v1073 = vpack.c.b16 %v1041, %v1041
        %v1074 = vpack.c.b16 %v1042, %v1042
        %v1075 = vpack.c.b16 %v1043, %v1043
        %v1076 = vpack.c.b16 %v1044, %v1044
        %v1077 = vpack.c.b16 %v1045, %v1045
        %v1078 = vpack.c.b16 %v1046, %v1046
        %v1079 = vpack.c.b16 %v1047, %v1047
        %v1080 = vpack.c.b16 %v1048, %v1048
        %v1081 = vpack.c.b16 %v1049, %v1049
        %v1082 = vpack.c.b16 %v1050, %v1050
        %v1083 = vpack.c.b16 %v1051, %v1051
        %v1084 = vpack.c.b16 %v1052, %v1052
        %v1085 = vpack.c.b16 %v1053, %v1053
        %v1086 = vpack.c.b16 %v1054, %v1054
        %vm1087 = vsmask.f32 4368
        %vm1088 = vmor %vm416, %vm1087
        %v1090 = vshrl.u32 %v1055, 16
        %v1092 = vrot.slane %v1090, 7
        %v1093 = vshll.u32 %v1055, 16
        %v1095 = vor.u32 %v1092, %v1093
        %v1096 = vrot.slane %v1092, 4
        %v1098 = vshrl.u32 %v1056, 16
        %v1100 = vrot.slane %v1098, 7
        %v1101 = vshll.u32 %v1056, 16
        %v1103 = vor.u32 %v1100, %v1101
        %v1104 = vsel %vm1088, %v1096, %v1103
        %v1105 = vrot.slane %v1100, 4
        %v1107 = vshrl.u32 %v1057, 16
        %v1109 = vrot.slane %v1107, 7
        %v1110 = vshll.u32 %v1057, 16
        %v1112 = vor.u32 %v1109, %v1110
        %v1113 = vrot.slane %v1109, 4
        %v1115 = vshrl.u32 %v1058, 16
        %v1117 = vrot.slane %v1115, 7
        %v1118 = vshll.u32 %v1058, 16
        %v1120 = vor.u32 %v1117, %v1118
        %v1121 = vsel %vm1088, %v1113, %v1120
        %v1122 = vrot.slane %v1117, 4
        %v1124 = vshrl.u32 %v1059, 16
        %v1126 = vrot.slane %v1124, 7
        %v1127 = vshll.u32 %v1059, 16
        %v1129 = vor.u32 %v1126, %v1127
        %v1130 = vrot.slane %v1126, 4
        %v1132 = vshrl.u32 %v1060, 16
        %v1134 = vrot.slane %v1132, 7
        %v1135 = vshll.u32 %v1060, 16
        %v1137 = vor.u32 %v1134, %v1135
        %v1138 = vsel %vm1088, %v1130, %v1137
        %v1139 = vrot.slane %v1134, 4
        %v1141 = vshrl.u32 %v1061, 16
        %v1143 = vrot.slane %v1141, 7
        %v1144 = vshll.u32 %v1061, 16
        %v1146 = vor.u32 %v1143, %v1144
        %v1147 = vrot.slane %v1143, 4
        %v1149 = vshrl.u32 %v1062, 16
        %v1151 = vrot.slane %v1149, 7
        %v1152 = vshll.u32 %v1062, 16
        %v1154 = vor.u32 %v1151, %v1152
        %v1155 = vsel %vm1088, %v1147, %v1154
        %v1156 = vrot.slane %v1151, 4
        %v1158 = vshrl.u32 %v1063, 16
        %v1160 = vrot.slane %v1158, 7
        %v1161 = vshll.u32 %v1063, 16
        %v1163 = vor.u32 %v1160, %v1161
        %v1164 = vrot.slane %v1160, 4
        %v1166 = vshrl.u32 %v1064, 16
        %v1168 = vrot.slane %v1166, 7
        %v1169 = vshll.u32 %v1064, 16
        %v1171 = vor.u32 %v1168, %v1169
        %v1172 = vsel %vm1088, %v1164, %v1171
        %v1173 = vrot.slane %v1168, 4
        %v1175 = vshrl.u32 %v1065, 16
        %v1177 = vrot.slane %v1175, 7
        %v1178 = vshll.u32 %v1065, 16
        %v1180 = vor.u32 %v1177, %v1178
        %v1181 = vrot.slane %v1177, 4
        %v1183 = vshrl.u32 %v1066, 16
        %v1185 = vrot.slane %v1183, 7
        %v1186 = vshll.u32 %v1066, 16
        %v1188 = vor.u32 %v1185, %v1186
        %v1189 = vsel %vm1088, %v1181, %v1188
        %v1190 = vrot.slane %v1185, 4
        %v1192 = vshrl.u32 %v1067, 16
        %v1194 = vrot.slane %v1192, 7
        %v1195 = vshll.u32 %v1067, 16
        %v1197 = vor.u32 %v1194, %v1195
        %v1198 = vrot.slane %v1194, 4
        %v1200 = vshrl.u32 %v1068, 16
        %v1202 = vrot.slane %v1200, 7
        %v1203 = vshll.u32 %v1068, 16
        %v1205 = vor.u32 %v1202, %v1203
        %v1206 = vsel %vm1088, %v1198, %v1205
        %v1207 = vrot.slane %v1202, 4
        %v1209 = vshrl.u32 %v1069, 16
        %v1211 = vrot.slane %v1209, 7
        %v1212 = vshll.u32 %v1069, 16
        %v1214 = vor.u32 %v1211, %v1212
        %v1215 = vrot.slane %v1211, 4
        %v1217 = vshrl.u32 %v1070, 16
        %v1219 = vrot.slane %v1217, 7
        %v1220 = vshll.u32 %v1070, 16
        %v1222 = vor.u32 %v1219, %v1220
        %v1223 = vsel %vm1088, %v1215, %v1222
        %v1224 = vrot.slane %v1219, 4
        %v1226 = vshrl.u32 %v1071, 16
        %v1228 = vrot.slane %v1226, 7
        %v1229 = vshll.u32 %v1071, 16
        %v1231 = vor.u32 %v1228, %v1229
        %v1232 = vrot.slane %v1228, 4
        %v1234 = vshrl.u32 %v1072, 16
        %v1236 = vrot.slane %v1234, 7
        %v1237 = vshll.u32 %v1072, 16
        %v1239 = vor.u32 %v1236, %v1237
        %v1240 = vsel %vm1088, %v1232, %v1239
        %v1241 = vrot.slane %v1236, 4
        %v1243 = vshrl.u32 %v1073, 16
        %v1245 = vrot.slane %v1243, 7
        %v1246 = vshll.u32 %v1073, 16
        %v1248 = vor.u32 %v1245, %v1246
        %v1249 = vrot.slane %v1245, 4
        %v1251 = vshrl.u32 %v1074, 16
        %v1253 = vrot.slane %v1251, 7
        %v1254 = vshll.u32 %v1074, 16
        %v1256 = vor.u32 %v1253, %v1254
        %v1257 = vsel %vm1088, %v1249, %v1256
        %v1258 = vrot.slane %v1253, 4
        %v1260 = vshrl.u32 %v1075, 16
        %v1262 = vrot.slane %v1260, 7
        %v1263 = vshll.u32 %v1075, 16
        %v1265 = vor.u32 %v1262, %v1263
        %v1266 = vrot.slane %v1262, 4
        %v1268 = vshrl.u32 %v1076, 16
        %v1270 = vrot.slane %v1268, 7
        %v1271 = vshll.u32 %v1076, 16
        %v1273 = vor.u32 %v1270, %v1271
        %v1274 = vsel %vm1088, %v1266, %v1273
        %v1275 = vrot.slane %v1270, 4
        %v1277 = vshrl.u32 %v1077, 16
        %v1279 = vrot.slane %v1277, 7
        %v1280 = vshll.u32 %v1077, 16
        %v1282 = vor.u32 %v1279, %v1280
        %v1283 = vrot.slane %v1279, 4
        %v1285 = vshrl.u32 %v1078, 16
        %v1287 = vrot.slane %v1285, 7
        %v1288 = vshll.u32 %v1078, 16
        %v1290 = vor.u32 %v1287, %v1288
        %v1291 = vsel %vm1088, %v1283, %v1290
        %v1292 = vrot.slane %v1287, 4
        %v1294 = vshrl.u32 %v1079, 16
        %v1296 = vrot.slane %v1294, 7
        %v1297 = vshll.u32 %v1079, 16
        %v1299 = vor.u32 %v1296, %v1297
        %v1300 = vrot.slane %v1296, 4
        %v1302 = vshrl.u32 %v1080, 16
        %v1304 = vrot.slane %v1302, 7
        %v1305 = vshll.u32 %v1080, 16
        %v1307 = vor.u32 %v1304, %v1305
        %v1308 = vsel %vm1088, %v1300, %v1307
        %v1309 = vrot.slane %v1304, 4
        %v1311 = vshrl.u32 %v1081, 16
        %v1313 = vrot.slane %v1311, 7
        %v1314 = vshll.u32 %v1081, 16
        %v1316 = vor.u32 %v1313, %v1314
        %v1317 = vrot.slane %v1313, 4
        %v1319 = vshrl.u32 %v1082, 16
        %v1321 = vrot.slane %v1319, 7
        %v1322 = vshll.u32 %v1082, 16
        %v1324 = vor.u32 %v1321, %v1322
        %v1325 = vsel %vm1088, %v1317, %v1324
        %v1326 = vrot.slane %v1321, 4
        %v1328 = vshrl.u32 %v1083, 16
        %v1330 = vrot.slane %v1328, 7
        %v1331 = vshll.u32 %v1083, 16
        %v1333 = vor.u32 %v1330, %v1331
        %v1334 = vrot.slane %v1330, 4
        %v1336 = vshrl.u32 %v1084, 16
        %v1338 = vrot.slane %v1336, 7
        %v1339 = vshll.u32 %v1084, 16
        %v1341 = vor.u32 %v1338, %v1339
        %v1342 = vsel %vm1088, %v1334, %v1341
        %v1343 = vrot.slane %v1338, 4
        %v1345 = vshrl.u32 %v1085, 16
        %v1347 = vrot.slane %v1345, 7
        %v1348 = vshll.u32 %v1085, 16
        %v1350 = vor.u32 %v1347, %v1348
        %v1351 = vrot.slane %v1347, 4
        %v1353 = vshrl.u32 %v1086, 16
        %v1355 = vrot.slane %v1353, 7
        %v1356 = vshll.u32 %v1086, 16
        %v1358 = vor.u32 %v1355, %v1356
        %v1359 = vsel %vm1088, %v1351, %v1358
        %v1360 = vrot.slane %v1355, 4
        %s1409 = scalar_lea.vmem [#allocation2], 12
        %vm1410 = vcmask 27648
        %vm1411 = vmand %vm1410, %vm472
        %v1412 = vld [vmem:[%s1409] sm:$0xf]
        %v1413 = vsel %vm1411, %v1095, %v1412
        %1414 = vst [vmem:[%s1409] sm:$0xf] %v1413
        %1415 = vst.msk [vmem:[%s1409 + $0x4] sm:$0xf] %vm406, %v1104
        %v1416 = vld [vmem:[%s1409 + $0x8] sm:$0x1]
        %v1417 = vsel %vm417, %v1105, %v1416
        %1418 = vst [vmem:[%s1409 + $0x8] sm:$0x1] %v1417
        %v1419 = vld [vmem:[%s1409 + $0xc] sm:$0xf]
        %v1420 = vsel %vm1411, %v1112, %v1419
        %1421 = vst [vmem:[%s1409 + $0xc] sm:$0xf] %v1420
        %1422 = vst.msk [vmem:[%s1409 + $0x10] sm:$0xf] %vm406, %v1121
        %v1423 = vld [vmem:[%s1409 + $0x14] sm:$0x1]
        %v1424 = vsel %vm417, %v1122, %v1423
        %1425 = vst [vmem:[%s1409 + $0x14] sm:$0x1] %v1424
        %v1426 = vld [vmem:[%s1409 + $0x18] sm:$0xf]
        %v1427 = vsel %vm1411, %v1129, %v1426
        %1428 = vst [vmem:[%s1409 + $0x18] sm:$0xf] %v1427
        %1429 = vst.msk [vmem:[%s1409 + $0x1c] sm:$0xf] %vm406, %v1138
        %v1430 = vld [vmem:[%s1409 + $0x20] sm:$0x1]
        %v1431 = vsel %vm417, %v1139, %v1430
        %1432 = vst [vmem:[%s1409 + $0x20] sm:$0x1] %v1431
        %v1433 = vld [vmem:[%s1409 + $0x24] sm:$0xf]
        %v1434 = vsel %vm1411, %v1146, %v1433
        %1435 = vst [vmem:[%s1409 + $0x24] sm:$0xf] %v1434
        %1436 = vst.msk [vmem:[%s1409 + $0x28] sm:$0xf] %vm406, %v1155
        %v1437 = vld [vmem:[%s1409 + $0x2c] sm:$0x1]
        %v1438 = vsel %vm417, %v1156, %v1437
        %1439 = vst [vmem:[%s1409 + $0x2c] sm:$0x1] %v1438
        %v1440 = vld [vmem:[%s1409 + $0x30] sm:$0xf]
        %v1441 = vsel %vm1411, %v1163, %v1440
        %1442 = vst [vmem:[%s1409 + $0x30] sm:$0xf] %v1441
        %1443 = vst.msk [vmem:[%s1409 + $0x34] sm:$0xf] %vm406, %v1172
        %v1444 = vld [vmem:[%s1409 + $0x38] sm:$0x1]
        %v1445 = vsel %vm417, %v1173, %v1444
        %1446 = vst [vmem:[%s1409 + $0x38] sm:$0x1] %v1445
        %v1447 = vld [vmem:[%s1409 + $0x3c] sm:$0xf]
        %v1448 = vsel %vm1411, %v1180, %v1447
        %1449 = vst [vmem:[%s1409 + $0x3c] sm:$0xf] %v1448
        %1450 = vst.msk [vmem:[%s1409 + $0x40] sm:$0xf] %vm406, %v1189
        %v1451 = vld [vmem:[%s1409 + $0x44] sm:$0x1]
        %v1452 = vsel %vm417, %v1190, %v1451
        %1453 = vst [vmem:[%s1409 + $0x44] sm:$0x1] %v1452
        %v1454 = vld [vmem:[%s1409 + $0x48] sm:$0xf]
        %v1455 = vsel %vm1411, %v1197, %v1454
        %1456 = vst [vmem:[%s1409 + $0x48] sm:$0xf] %v1455
        %1457 = vst.msk [vmem:[%s1409 + $0x4c] sm:$0xf] %vm406, %v1206
        %v1458 = vld [vmem:[%s1409 + $0x50] sm:$0x1]
        %v1459 = vsel %vm417, %v1207, %v1458
        %1460 = vst [vmem:[%s1409 + $0x50] sm:$0x1] %v1459
        %v1461 = vld [vmem:[%s1409 + $0x54] sm:$0xf]
        %v1462 = vsel %vm1411, %v1214, %v1461
        %1463 = vst [vmem:[%s1409 + $0x54] sm:$0xf] %v1462
        %1464 = vst.msk [vmem:[%s1409 + $0x58] sm:$0xf] %vm406, %v1223
        %v1465 = vld [vmem:[%s1409 + $0x5c] sm:$0x1]
        %v1466 = vsel %vm417, %v1224, %v1465
        %1467 = vst [vmem:[%s1409 + $0x5c] sm:$0x1] %v1466
        %v1468 = vld [vmem:[%s1409 + $0x60] sm:$0xf]
        %v1469 = vsel %vm1411, %v1231, %v1468
        %1470 = vst [vmem:[%s1409 + $0x60] sm:$0xf] %v1469
        %1471 = vst.msk [vmem:[%s1409 + $0x64] sm:$0xf] %vm406, %v1240
        %v1472 = vld [vmem:[%s1409 + $0x68] sm:$0x1]
        %v1473 = vsel %vm417, %v1241, %v1472
        %1474 = vst [vmem:[%s1409 + $0x68] sm:$0x1] %v1473
        %v1475 = vld [vmem:[%s1409 + $0x6c] sm:$0xf]
        %v1476 = vsel %vm1411, %v1248, %v1475
        %1477 = vst [vmem:[%s1409 + $0x6c] sm:$0xf] %v1476
        %1478 = vst.msk [vmem:[%s1409 + $0x70] sm:$0xf] %vm406, %v1257
        %v1479 = vld [vmem:[%s1409 + $0x74] sm:$0x1]
        %v1480 = vsel %vm417, %v1258, %v1479
        %1481 = vst [vmem:[%s1409 + $0x74] sm:$0x1] %v1480
        %v1482 = vld [vmem:[%s1409 + $0x78] sm:$0xf]
        %v1483 = vsel %vm1411, %v1265, %v1482
        %1484 = vst [vmem:[%s1409 + $0x78] sm:$0xf] %v1483
        %1485 = vst.msk [vmem:[%s1409 + $0x7c] sm:$0xf] %vm406, %v1274
        %v1486 = vld [vmem:[%s1409 + $0x80] sm:$0x1]
        %v1487 = vsel %vm417, %v1275, %v1486
        %1488 = vst [vmem:[%s1409 + $0x80] sm:$0x1] %v1487
        %v1489 = vld [vmem:[%s1409 + $0x84] sm:$0xf]
        %v1490 = vsel %vm1411, %v1282, %v1489
        %1491 = vst [vmem:[%s1409 + $0x84] sm:$0xf] %v1490
        %1492 = vst.msk [vmem:[%s1409 + $0x88] sm:$0xf] %vm406, %v1291
        %v1493 = vld [vmem:[%s1409 + $0x8c] sm:$0x1]
        %v1494 = vsel %vm417, %v1292, %v1493
        %1495 = vst [vmem:[%s1409 + $0x8c] sm:$0x1] %v1494
        %v1496 = vld [vmem:[%s1409 + $0x90] sm:$0xf]
        %v1497 = vsel %vm1411, %v1299, %v1496
        %1498 = vst [vmem:[%s1409 + $0x90] sm:$0xf] %v1497
        %1499 = vst.msk [vmem:[%s1409 + $0x94] sm:$0xf] %vm406, %v1308
        %v1500 = vld [vmem:[%s1409 + $0x98] sm:$0x1]
        %v1501 = vsel %vm417, %v1309, %v1500
        %1502 = vst [vmem:[%s1409 + $0x98] sm:$0x1] %v1501
        %v1503 = vld [vmem:[%s1409 + $0x9c] sm:$0xf]
        %v1504 = vsel %vm1411, %v1316, %v1503
        %1505 = vst [vmem:[%s1409 + $0x9c] sm:$0xf] %v1504
        %1506 = vst.msk [vmem:[%s1409 + $0xa0] sm:$0xf] %vm406, %v1325
        %v1507 = vld [vmem:[%s1409 + $0xa4] sm:$0x1]
        %v1508 = vsel %vm417, %v1326, %v1507
        %1509 = vst [vmem:[%s1409 + $0xa4] sm:$0x1] %v1508
        %v1510 = vld [vmem:[%s1409 + $0xa8] sm:$0xf]
        %v1511 = vsel %vm1411, %v1333, %v1510
        %1512 = vst [vmem:[%s1409 + $0xa8] sm:$0xf] %v1511
        %1513 = vst.msk [vmem:[%s1409 + $0xac] sm:$0xf] %vm406, %v1342
        %v1514 = vld [vmem:[%s1409 + $0xb0] sm:$0x1]
        %v1515 = vsel %vm417, %v1343, %v1514
        %1516 = vst [vmem:[%s1409 + $0xb0] sm:$0x1] %v1515
        %v1517 = vld [vmem:[%s1409 + $0xb4] sm:$0xf]
        %v1518 = vsel %vm1411, %v1350, %v1517
        %1519 = vst [vmem:[%s1409 + $0xb4] sm:$0xf] %v1518
        %1520 = vst.msk [vmem:[%s1409 + $0xb8] sm:$0xf] %vm406, %v1359
        %v1521 = vld [vmem:[%s1409 + $0xbc] sm:$0x1]
        %v1522 = vsel %vm417, %v1360, %v1521
        %1523 = vst [vmem:[%s1409 + $0xbc] sm:$0x1] %v1522
        %v1524 = vadd.f32 %v959, %v961
        %v1525 = vadd.f32 %v960, %v962
        %v1526 = vadd.f32 %v967, %v969
        %v1527 = vadd.f32 %v968, %v970
        %v1528 = vadd.f32 %v975, %v977
        %v1529 = vadd.f32 %v976, %v978
        %v1530 = vadd.f32 %v983, %v985
        %v1531 = vadd.f32 %v984, %v986
        %v1532 = vadd.f32 %v1524, %v963
        %v1533 = vadd.f32 %v1525, %v964
        %v1534 = vadd.f32 %v1526, %v971
        %v1535 = vadd.f32 %v1527, %v972
        %v1536 = vadd.f32 %v1528, %v979
        %v1537 = vadd.f32 %v1529, %v980
        %v1538 = vadd.f32 %v1530, %v987
        %v1539 = vadd.f32 %v1531, %v988
        %v1540 = vadd.f32 %v1532, %v965
        %v1541 = vadd.f32 %v1533, %v966
        %v1542 = vadd.f32 %v1534, %v973
        %v1543 = vadd.f32 %v1535, %v974
        %v1544 = vadd.f32 %v1536, %v981
        %v1545 = vadd.f32 %v1537, %v982
        %v1546 = vadd.f32 %v1538, %v989
        %v1547 = vadd.f32 %v1539, %v990
        %v1556 = vcombine.high %v1540, %v1540
        %v1557 = vcombine.high %v1541, %v1541
        %v1558 = vcombine.high %v1542, %v1542
        %v1559 = vcombine.high %v1543, %v1543
        %v1560 = vcombine.high %v1544, %v1544
        %v1561 = vcombine.high %v1545, %v1545
        %v1562 = vcombine.high %v1546, %v1546
        %v1563 = vcombine.high %v1547, %v1547
        %v1572 = vsel %vm406, %v1540, 0.0
        %v1573 = vrot.slane %v1572, 4
        %v1574 = vadd.f32 %v1572, %v1573
        %v1575 = vrot.slane %v1574, 2
        %v1576 = vadd.f32 %v1574, %v1575
        %v1577 = vrot.slane %v1576, 1
        %v1578 = vadd.f32 %v1576, %v1577
        %v1579 = vsel %vm406, %v1556, 0.0
        %v1580 = vrot.slane %v1579, 4
        %v1581 = vadd.f32 %v1579, %v1580
        %v1582 = vrot.slane %v1581, 2
        %v1583 = vadd.f32 %v1581, %v1582
        %v1584 = vrot.slane %v1583, 1
        %v1585 = vadd.f32 %v1583, %v1584
        %v1586 = vsel %vm406, %v1541, 0.0
        %v1587 = vrot.slane %v1586, 4
        %v1588 = vadd.f32 %v1586, %v1587
        %v1589 = vrot.slane %v1588, 2
        %v1590 = vadd.f32 %v1588, %v1589
        %v1591 = vrot.slane %v1590, 1
        %v1592 = vadd.f32 %v1590, %v1591
        %v1593 = vsel %vm406, %v1557, 0.0
        %v1594 = vrot.slane %v1593, 4
        %v1595 = vadd.f32 %v1593, %v1594
        %v1596 = vrot.slane %v1595, 2
        %v1597 = vadd.f32 %v1595, %v1596
        %v1598 = vrot.slane %v1597, 1
        %v1599 = vadd.f32 %v1597, %v1598
        %v1600 = vsel %vm406, %v1542, 0.0
        %v1601 = vrot.slane %v1600, 4
        %v1602 = vadd.f32 %v1600, %v1601
        %v1603 = vrot.slane %v1602, 2
        %v1604 = vadd.f32 %v1602, %v1603
        %v1605 = vrot.slane %v1604, 1
        %v1606 = vadd.f32 %v1604, %v1605
        %v1607 = vsel %vm406, %v1558, 0.0
        %v1608 = vrot.slane %v1607, 4
        %v1609 = vadd.f32 %v1607, %v1608
        %v1610 = vrot.slane %v1609, 2
        %v1611 = vadd.f32 %v1609, %v1610
        %v1612 = vrot.slane %v1611, 1
        %v1613 = vadd.f32 %v1611, %v1612
        %v1614 = vsel %vm406, %v1543, 0.0
        %v1615 = vrot.slane %v1614, 4
        %v1616 = vadd.f32 %v1614, %v1615
        %v1617 = vrot.slane %v1616, 2
        %v1618 = vadd.f32 %v1616, %v1617
        %v1619 = vrot.slane %v1618, 1
        %v1620 = vadd.f32 %v1618, %v1619
        %v1621 = vsel %vm406, %v1559, 0.0
        %v1622 = vrot.slane %v1621, 4
        %v1623 = vadd.f32 %v1621, %v1622
        %v1624 = vrot.slane %v1623, 2
        %v1625 = vadd.f32 %v1623, %v1624
        %v1626 = vrot.slane %v1625, 1
        %v1627 = vadd.f32 %v1625, %v1626
        %v1628 = vsel %vm406, %v1544, 0.0
        %v1629 = vrot.slane %v1628, 4
        %v1630 = vadd.f32 %v1628, %v1629
        %v1631 = vrot.slane %v1630, 2
        %v1632 = vadd.f32 %v1630, %v1631
        %v1633 = vrot.slane %v1632, 1
        %v1634 = vadd.f32 %v1632, %v1633
        %v1635 = vsel %vm406, %v1560, 0.0
        %v1636 = vrot.slane %v1635, 4
        %v1637 = vadd.f32 %v1635, %v1636
        %v1638 = vrot.slane %v1637, 2
        %v1639 = vadd.f32 %v1637, %v1638
        %v1640 = vrot.slane %v1639, 1
        %v1641 = vadd.f32 %v1639, %v1640
        %v1642 = vsel %vm406, %v1545, 0.0
        %v1643 = vrot.slane %v1642, 4
        %v1644 = vadd.f32 %v1642, %v1643
        %v1645 = vrot.slane %v1644, 2
        %v1646 = vadd.f32 %v1644, %v1645
        %v1647 = vrot.slane %v1646, 1
        %v1648 = vadd.f32 %v1646, %v1647
        %v1649 = vsel %vm406, %v1561, 0.0
        %v1650 = vrot.slane %v1649, 4
        %v1651 = vadd.f32 %v1649, %v1650
        %v1652 = vrot.slane %v1651, 2
        %v1653 = vadd.f32 %v1651, %v1652
        %v1654 = vrot.slane %v1653, 1
        %v1655 = vadd.f32 %v1653, %v1654
        %v1656 = vsel %vm406, %v1546, 0.0
        %v1657 = vrot.slane %v1656, 4
        %v1658 = vadd.f32 %v1656, %v1657
        %v1659 = vrot.slane %v1658, 2
        %v1660 = vadd.f32 %v1658, %v1659
        %v1661 = vrot.slane %v1660, 1
        %v1662 = vadd.f32 %v1660, %v1661
        %v1663 = vsel %vm406, %v1562, 0.0
        %v1664 = vrot.slane %v1663, 4
        %v1665 = vadd.f32 %v1663, %v1664
        %v1666 = vrot.slane %v1665, 2
        %v1667 = vadd.f32 %v1665, %v1666
        %v1668 = vrot.slane %v1667, 1
        %v1669 = vadd.f32 %v1667, %v1668
        %v1670 = vsel %vm406, %v1547, 0.0
        %v1671 = vrot.slane %v1670, 4
        %v1672 = vadd.f32 %v1670, %v1671
        %v1673 = vrot.slane %v1672, 2
        %v1674 = vadd.f32 %v1672, %v1673
        %v1675 = vrot.slane %v1674, 1
        %v1676 = vadd.f32 %v1674, %v1675
        %v1677 = vsel %vm406, %v1563, 0.0
        %v1678 = vrot.slane %v1677, 4
        %v1679 = vadd.f32 %v1677, %v1678
        %v1680 = vrot.slane %v1679, 2
        %v1681 = vadd.f32 %v1679, %v1680
        %v1682 = vrot.slane %v1681, 1
        %v1683 = vadd.f32 %v1681, %v1682
        %v1684 = vmul.f32 %v1578, 0.0625
        %v1685 = vmul.f32 %v1585, 0.0625
        %v1686 = vmul.f32 %v1592, 0.0625
        %v1687 = vmul.f32 %v1599, 0.0625
        %v1688 = vmul.f32 %v1606, 0.0625
        %v1689 = vmul.f32 %v1613, 0.0625
        %v1690 = vmul.f32 %v1620, 0.0625
        %v1691 = vmul.f32 %v1627, 0.0625
        %v1692 = vmul.f32 %v1634, 0.0625
        %v1693 = vmul.f32 %v1641, 0.0625
        %v1694 = vmul.f32 %v1648, 0.0625
        %v1695 = vmul.f32 %v1655, 0.0625
        %v1696 = vmul.f32 %v1662, 0.0625
        %v1697 = vmul.f32 %v1669, 0.0625
        %v1698 = vmul.f32 %v1676, 0.0625
        %v1699 = vmul.f32 %v1683, 0.0625
        %v1700 = vpack.c.bf16 %v1684, %v1684
        %v1701 = vpack.c.bf16 %v1685, %v1685
        %v1702 = vpack.c.bf16 %v1686, %v1686
        %v1703 = vpack.c.bf16 %v1687, %v1687
        %v1704 = vpack.c.bf16 %v1688, %v1688
        %v1705 = vpack.c.bf16 %v1689, %v1689
        %v1706 = vpack.c.bf16 %v1690, %v1690
        %v1707 = vpack.c.bf16 %v1691, %v1691
        %v1708 = vpack.c.bf16 %v1692, %v1692
        %v1709 = vpack.c.bf16 %v1693, %v1693
        %v1710 = vpack.c.bf16 %v1694, %v1694
        %v1711 = vpack.c.bf16 %v1695, %v1695
        %v1712 = vpack.c.bf16 %v1696, %v1696
        %v1713 = vpack.c.bf16 %v1697, %v1697
        %v1714 = vpack.c.bf16 %v1698, %v1698
        %v1715 = vpack.c.bf16 %v1699, %v1699
        %v1732 = vunpack.c.l.b16 %v1700
        %v1733 = vunpack.c.l.b16 %v1701
        %v1734 = vunpack.c.l.b16 %v1702
        %v1735 = vunpack.c.l.b16 %v1703
        %v1736 = vunpack.c.l.b16 %v1704
        %v1737 = vunpack.c.l.b16 %v1705
        %v1738 = vunpack.c.l.b16 %v1706
        %v1739 = vunpack.c.l.b16 %v1707
        %v1740 = vunpack.c.l.b16 %v1708
        %v1741 = vunpack.c.l.b16 %v1709
        %v1742 = vunpack.c.l.b16 %v1710
        %v1743 = vunpack.c.l.b16 %v1711
        %v1744 = vunpack.c.l.b16 %v1712
        %v1745 = vunpack.c.l.b16 %v1713
        %v1746 = vunpack.c.l.b16 %v1714
        %v1747 = vunpack.c.l.b16 %v1715
        %v1748 = vpack.c.b16 %v1732, %v1732
        %v1749 = vpack.c.b16 %v1733, %v1733
        %v1750 = vpack.c.b16 %v1734, %v1734
        %v1751 = vpack.c.b16 %v1735, %v1735
        %v1752 = vpack.c.b16 %v1736, %v1736
        %v1753 = vpack.c.b16 %v1737, %v1737
        %v1754 = vpack.c.b16 %v1738, %v1738
        %v1755 = vpack.c.b16 %v1739, %v1739
        %v1756 = vpack.c.b16 %v1740, %v1740
        %v1757 = vpack.c.b16 %v1741, %v1741
        %v1758 = vpack.c.b16 %v1742, %v1742
        %v1759 = vpack.c.b16 %v1743, %v1743
        %v1760 = vpack.c.b16 %v1744, %v1744
        %v1761 = vpack.c.b16 %v1745, %v1745
        %v1762 = vpack.c.b16 %v1746, %v1746
        %v1763 = vpack.c.b16 %v1747, %v1747
        %v1764 = vunpack.c.l.b16 %v1748
        %v1765 = vunpack.c.l.b16 %v1749
        %v1766 = vunpack.c.l.b16 %v1750
        %v1767 = vunpack.c.l.b16 %v1751
        %v1768 = vunpack.c.l.b16 %v1752
        %v1769 = vunpack.c.l.b16 %v1753
        %v1770 = vunpack.c.l.b16 %v1754
        %v1771 = vunpack.c.l.b16 %v1755
        %v1772 = vunpack.c.l.b16 %v1756
        %v1773 = vunpack.c.l.b16 %v1757
        %v1774 = vunpack.c.l.b16 %v1758
        %v1775 = vunpack.c.l.b16 %v1759
        %v1776 = vunpack.c.l.b16 %v1760
        %v1777 = vunpack.c.l.b16 %v1761
        %v1778 = vunpack.c.l.b16 %v1762
        %v1779 = vunpack.c.l.b16 %v1763
        %vm1780 = vcmask 1042434
        %v1781 = vsel %vm1780, %v1765, %v1764
        %vm1782 = vcmask 1043459
        %v1783 = vsel %vm1782, %v1766, %v1781
        %vm1784 = vcmask 1044484
        %v1785 = vsel %vm1784, %v1767, %v1783
        %v1786 = vsel %vm1780, %v1769, %v1768
        %v1787 = vsel %vm1782, %v1770, %v1786
        %v1788 = vsel %vm1784, %v1771, %v1787
        %v1789 = vsel %vm1780, %v1773, %v1772
        %v1790 = vsel %vm1782, %v1774, %v1789
        %v1791 = vsel %vm1784, %v1775, %v1790
        %v1792 = vsel %vm1780, %v1777, %v1776
        %v1793 = vsel %vm1782, %v1778, %v1792
        %v1794 = vsel %vm1784, %v1779, %v1793
        %v1795 = vpack.c.b16 %v1785, %v1785
        %v1796 = vpack.c.b16 %v1788, %v1788
        %v1797 = vpack.c.b16 %v1791, %v1791
        %v1798 = vpack.c.b16 %v1794, %v1794
        %s1803 = scalar_lea.vmem [#allocation4], 4
        %vm1804 = vcmask 26624
        %vm1805 = vsmask.f32 2306
        %vm1806 = vmand %vm1804, %vm1805
        %v1807 = vld [vmem:[%s1803] sm:$0x7]
        %v1808 = vsel %vm1806, %v1795, %v1807
        %1809 = vst [vmem:[%s1803] sm:$0x7] %v1808
        %v1810 = vld [vmem:[%s1803 + $0x4] sm:$0x7]
        %v1811 = vsel %vm1806, %v1796, %v1810
        %1812 = vst [vmem:[%s1803 + $0x4] sm:$0x7] %v1811
        %v1813 = vld [vmem:[%s1803 + $0x8] sm:$0x7]
        %v1814 = vsel %vm1806, %v1797, %v1813
        %1815 = vst [vmem:[%s1803 + $0x8] sm:$0x7] %v1814
        %v1816 = vld [vmem:[%s1803 + $0xc] sm:$0x7]
        %v1817 = vsel %vm1806, %v1798, %v1816
        %1818 = vst [vmem:[%s1803 + $0xc] sm:$0x7] %v1817
        %v1819 = vld [vmem:[#allocation2] sm:$0xf]
        %v1820 = vld [vmem:[#allocation2 + $0x4] sm:$0xf]
        %v1821 = vld [vmem:[#allocation2 + $0xc] sm:$0xf]
        %v1822 = vld [vmem:[#allocation2 + $0x10] sm:$0xf]
        %v1823 = vld [vmem:[#allocation2 + $0x18] sm:$0xf]
        %v1824 = vld [vmem:[#allocation2 + $0x1c] sm:$0xf]
        %v1825 = vld [vmem:[#allocation2 + $0x24] sm:$0xf]
        %v1826 = vld [vmem:[#allocation2 + $0x28] sm:$0xf]
        %v1827 = vld [vmem:[#allocation2 + $0x30] sm:$0xf]
        %v1828 = vld [vmem:[#allocation2 + $0x34] sm:$0xf]
        %v1829 = vld [vmem:[#allocation2 + $0x3c] sm:$0xf]
        %v1830 = vld [vmem:[#allocation2 + $0x40] sm:$0xf]
        %v1831 = vld [vmem:[#allocation2 + $0x48] sm:$0xf]
        %v1832 = vld [vmem:[#allocation2 + $0x4c] sm:$0xf]
        %v1833 = vld [vmem:[#allocation2 + $0x54] sm:$0xf]
        %v1834 = vld [vmem:[#allocation2 + $0x58] sm:$0xf]
        %v1835 = vld [vmem:[#allocation2 + $0x60] sm:$0xf]
        %v1836 = vld [vmem:[#allocation2 + $0x64] sm:$0xf]
        %v1837 = vld [vmem:[#allocation2 + $0x6c] sm:$0xf]
        %v1838 = vld [vmem:[#allocation2 + $0x70] sm:$0xf]
        %v1839 = vld [vmem:[#allocation2 + $0x78] sm:$0xf]
        %v1840 = vld [vmem:[#allocation2 + $0x7c] sm:$0xf]
        %v1841 = vld [vmem:[#allocation2 + $0x84] sm:$0xf]
        %v1842 = vld [vmem:[#allocation2 + $0x88] sm:$0xf]
        %v1843 = vld [vmem:[#allocation2 + $0x90] sm:$0xf]
        %v1844 = vld [vmem:[#allocation2 + $0x94] sm:$0xf]
        %v1845 = vld [vmem:[#allocation2 + $0x9c] sm:$0xf]
        %v1846 = vld [vmem:[#allocation2 + $0xa0] sm:$0xf]
        %v1847 = vld [vmem:[#allocation2 + $0xa8] sm:$0xf]
        %v1848 = vld [vmem:[#allocation2 + $0xac] sm:$0xf]
        %v1849 = vld [vmem:[#allocation2 + $0xb4] sm:$0xf]
        %v1850 = vld [vmem:[#allocation2 + $0xb8] sm:$0xf]
        %v1851 = vld [vmem:[#allocation2 + $0xc0] sm:$0xf]
        %v1852 = vld [vmem:[#allocation2 + $0xc4] sm:$0xf]
        %v1853 = vld [vmem:[#allocation2 + $0xcc] sm:$0xf]
        %v1854 = vld [vmem:[#allocation2 + $0xd0] sm:$0xf]
        %v1855 = vld [vmem:[%s5] sm:$0x3]
        %s1856 = scalar_lea.vmem %s5, 6
        %v1857 = vld [vmem:[%s1856] sm:$0x3]
        %v1890 = vunpack.c.l.b16 %v1821
        %v1891 = vunpack.c.l.b16 %v1822
        %v1892 = vunpack.c.l.b16 %v1823
        %v1893 = vunpack.c.l.b16 %v1824
        %v1894 = vunpack.c.l.b16 %v1825
        %v1895 = vunpack.c.l.b16 %v1826
        %v1896 = vunpack.c.l.b16 %v1827
        %v1897 = vunpack.c.l.b16 %v1828
        %v1898 = vunpack.c.l.b16 %v1829
        %v1899 = vunpack.c.l.b16 %v1830
        %v1900 = vunpack.c.l.b16 %v1831
        %v1901 = vunpack.c.l.b16 %v1832
        %v1902 = vunpack.c.l.b16 %v1833
        %v1903 = vunpack.c.l.b16 %v1834
        %v1904 = vunpack.c.l.b16 %v1835
        %v1905 = vunpack.c.l.b16 %v1836
        %v1906 = vunpack.c.l.b16 %v1837
        %v1907 = vunpack.c.l.b16 %v1838
        %v1908 = vunpack.c.l.b16 %v1839
        %v1909 = vunpack.c.l.b16 %v1840
        %v1910 = vunpack.c.l.b16 %v1841
        %v1911 = vunpack.c.l.b16 %v1842
        %v1912 = vunpack.c.l.b16 %v1843
        %v1913 = vunpack.c.l.b16 %v1844
        %v1914 = vunpack.c.l.b16 %v1845
        %v1915 = vunpack.c.l.b16 %v1846
        %v1916 = vunpack.c.l.b16 %v1847
        %v1917 = vunpack.c.l.b16 %v1848
        %v1918 = vunpack.c.l.b16 %v1849
        %v1919 = vunpack.c.l.b16 %v1850
        %v1920 = vunpack.c.l.b16 %v1851
        %v1921 = vunpack.c.l.b16 %v1852
        %v1922 = vpack.c.b16 %v1891, %v1890
        %v1923 = vpack.c.b16 %v1893, %v1892
        %v1924 = vpack.c.b16 %v1895, %v1894
        %v1925 = vpack.c.b16 %v1897, %v1896
        %v1926 = vpack.c.b16 %v1899, %v1898
        %v1927 = vpack.c.b16 %v1901, %v1900
        %v1928 = vpack.c.b16 %v1903, %v1902
        %v1929 = vpack.c.b16 %v1905, %v1904
        %v1930 = vpack.c.b16 %v1907, %v1906
        %v1931 = vpack.c.b16 %v1909, %v1908
        %v1932 = vpack.c.b16 %v1911, %v1910
        %v1933 = vpack.c.b16 %v1913, %v1912
        %v1934 = vpack.c.b16 %v1915, %v1914
        %v1935 = vpack.c.b16 %v1917, %v1916
        %v1936 = vpack.c.b16 %v1919, %v1918
        %v1937 = vpack.c.b16 %v1921, %v1920
        %vm1938 = vcmask 31744
        %v1940 = vsel %vm1938, %v1922, 0
        %v1943 = vsel %vm1938, %v1923, 0
        %v1946 = vsel %vm1938, %v1924, 0
        %v1949 = vsel %vm1938, %v1925, 0
        %v1952 = vsel %vm1938, %v1926, 0
        %v1955 = vsel %vm1938, %v1927, 0
        %v1958 = vsel %vm1938, %v1928, 0
        %v1961 = vsel %vm1938, %v1929, 0
        %v1964 = vsel %vm1938, %v1930, 0
        %v1967 = vsel %vm1938, %v1931, 0
        %v1970 = vsel %vm1938, %v1932, 0
        %v1973 = vsel %vm1938, %v1933, 0
        %v1976 = vsel %vm1938, %v1934, 0
        %v1979 = vsel %vm1938, %v1935, 0
        %v1982 = vsel %vm1938, %v1936, 0
        %v1985 = vsel %vm1938, %v1937, 0
        %vm1987 = vcmask 1041408
        %v1989 = vsel %vm1987, %v1857, 0
        %1991 = vmatprep.subr.bf16.mxu0 0
        %1992 = vmatpush1.bf16.msra.mxu0 %v1989
        %1993 = vmatprep.subr.bf16.mxu0 0
        %1994 = vmatpush1.bf16.msra.mxu0 0
        %1995 = vmatprep.subr.bf16.mxu0 0
        %1996 = vmatpush1.bf16.msra.mxu0 0
        %1997 = vmatprep.subr.bf16.mxu0 0
        %1998 = vmatpush1.bf16.msra.mxu0 0
        %1999 = vmatprep.subr.bf16.mxu0 0
        %2000 = vmatpush1.bf16.msra.mxu0 0
        %2001 = vmatprep.subr.bf16.mxu0 0
        %2002 = vmatpush1.bf16.msra.mxu0 0
        %2003 = vmatprep.subr.bf16.mxu0 0
        %2004 = vmatpush1.bf16.msra.mxu0 0
        %2005 = vmatprep.subr.bf16.mxu0 0
        %2006 = vmatpush1.bf16.msra.mxu0 0
        %2007 = vmatprep.subr.bf16.mxu0 0
        %2008 = vmatpush1.bf16.msra.mxu0 0
        %2009 = vmatprep.subr.bf16.mxu0 0
        %2010 = vmatpush1.bf16.msra.mxu0 0
        %2011 = vmatprep.subr.bf16.mxu0 0
        %2012 = vmatpush1.bf16.msra.mxu0 0
        %2013 = vmatprep.subr.bf16.mxu0 0
        %2014 = vmatpush1.bf16.msra.mxu0 0
        %2015 = vmatprep.subr.bf16.mxu0 0
        %2016 = vmatpush1.bf16.msra.mxu0 0
        %2017 = vmatprep.subr.bf16.mxu0 0
        %2018 = vmatpush1.bf16.msra.mxu0 0
        %2019 = vmatprep.subr.bf16.mxu0 0
        %2020 = vmatpush1.bf16.msra.mxu0 0
        %2021 = vmatprep.subr.bf16.mxu0 0
        %2022 = vmatpush1.bf16.msra.mxu0 0
        %2023 = vmatprep.mubr.bf16.mxu0 0
        %2024 = vmatmul.mubr.bf16.gmra.mrb[0].mxu0 %v1940
        %v2025 = vpop.f32.mrb[0].mxu0
        %v2026 = vadd.f32 0.0, %v2025
        %v2027 = vpop.f32.mrb[0].mxu0
        %v2028 = vpop.f32.mrb[0].mxu0
        %v2029 = vadd.f32 0.0, %v2028
        %v2030 = vpop.f32.mrb[0].mxu0
        %2031 = vmatprep.mubr.bf16.mxu0 0
        %2032 = vmatmul.mubr.bf16.gmra.mrb[0].mxu0 %v1943
        %v2033 = vpop.f32.mrb[0].mxu0
        %v2034 = vadd.f32 0.0, %v2033
        %v2035 = vpop.f32.mrb[0].mxu0
        %v2036 = vpop.f32.mrb[0].mxu0
        %v2037 = vadd.f32 0.0, %v2036
        %v2038 = vpop.f32.mrb[0].mxu0
        %2039 = vmatprep.mubr.bf16.mxu0 0
        %2040 = vmatmul.mubr.bf16.gmra.mrb[0].mxu0 %v1946
        %v2041 = vpop.f32.mrb[0].mxu0
        %v2042 = vadd.f32 0.0, %v2041
        %v2043 = vpop.f32.mrb[0].mxu0
        %v2044 = vpop.f32.mrb[0].mxu0
        %v2045 = vadd.f32 0.0, %v2044
        %v2046 = vpop.f32.mrb[0].mxu0
        %2047 = vmatprep.mubr.bf16.mxu0 0
        %2048 = vmatmul.mubr.bf16.gmra.mrb[0].mxu0 %v1949
        %v2049 = vpop.f32.mrb[0].mxu0
        %v2050 = vadd.f32 0.0, %v2049
        %v2051 = vpop.f32.mrb[0].mxu0
        %v2052 = vpop.f32.mrb[0].mxu0
        %v2053 = vadd.f32 0.0, %v2052
        %v2054 = vpop.f32.mrb[0].mxu0
        %2055 = vmatprep.mubr.bf16.mxu0 0
        %2056 = vmatmul.mubr.bf16.gmra.mrb[0].mxu0 %v1952
        %v2057 = vpop.f32.mrb[0].mxu0
        %v2058 = vadd.f32 0.0, %v2057
        %v2059 = vpop.f32.mrb[0].mxu0
        %v2060 = vpop.f32.mrb[0].mxu0
        %v2061 = vadd.f32 0.0, %v2060
        %v2062 = vpop.f32.mrb[0].mxu0
        %2063 = vmatprep.mubr.bf16.mxu0 0
        %2064 = vmatmul.mubr.bf16.gmra.mrb[0].mxu0 %v1955
        %v2065 = vpop.f32.mrb[0].mxu0
        %v2066 = vadd.f32 0.0, %v2065
        %v2067 = vpop.f32.mrb[0].mxu0
        %v2068 = vpop.f32.mrb[0].mxu0
        %v2069 = vadd.f32 0.0, %v2068
        %v2070 = vpop.f32.mrb[0].mxu0
        %2071 = vmatprep.mubr.bf16.mxu0 0
        %2072 = vmatmul.mubr.bf16.gmra.mrb[0].mxu0 %v1958
        %v2073 = vpop.f32.mrb[0].mxu0
        %v2074 = vadd.f32 0.0, %v2073
        %v2075 = vpop.f32.mrb[0].mxu0
        %v2076 = vpop.f32.mrb[0].mxu0
        %v2077 = vadd.f32 0.0, %v2076
        %v2078 = vpop.f32.mrb[0].mxu0
        %2079 = vmatprep.mubr.bf16.mxu0 0
        %2080 = vmatmul.mubr.bf16.gmra.mrb[0].mxu0 %v1961
        %v2081 = vpop.f32.mrb[0].mxu0
        %v2082 = vadd.f32 0.0, %v2081
        %v2083 = vpop.f32.mrb[0].mxu0
        %v2084 = vpop.f32.mrb[0].mxu0
        %v2085 = vadd.f32 0.0, %v2084
        %v2086 = vpop.f32.mrb[0].mxu0
        %2087 = vmatprep.mubr.bf16.mxu0 0
        %2088 = vmatmul.mubr.bf16.gmra.mrb[0].mxu0 %v1964
        %v2089 = vpop.f32.mrb[0].mxu0
        %v2090 = vadd.f32 0.0, %v2089
        %v2091 = vpop.f32.mrb[0].mxu0
        %v2092 = vpop.f32.mrb[0].mxu0
        %v2093 = vadd.f32 0.0, %v2092
        %v2094 = vpop.f32.mrb[0].mxu0
        %2095 = vmatprep.mubr.bf16.mxu0 0
        %2096 = vmatmul.mubr.bf16.gmra.mrb[0].mxu0 %v1967
        %v2097 = vpop.f32.mrb[0].mxu0
        %v2098 = vadd.f32 0.0, %v2097
        %v2099 = vpop.f32.mrb[0].mxu0
        %v2100 = vpop.f32.mrb[0].mxu0
        %v2101 = vadd.f32 0.0, %v2100
        %v2102 = vpop.f32.mrb[0].mxu0
        %2103 = vmatprep.mubr.bf16.mxu0 0
        %2104 = vmatmul.mubr.bf16.gmra.mrb[0].mxu0 %v1970
        %v2105 = vpop.f32.mrb[0].mxu0
        %v2106 = vadd.f32 0.0, %v2105
        %v2107 = vpop.f32.mrb[0].mxu0
        %v2108 = vpop.f32.mrb[0].mxu0
        %v2109 = vadd.f32 0.0, %v2108
        %v2110 = vpop.f32.mrb[0].mxu0
        %2111 = vmatprep.mubr.bf16.mxu0 0
        %2112 = vmatmul.mubr.bf16.gmra.mrb[0].mxu0 %v1973
        %v2113 = vpop.f32.mrb[0].mxu0
        %v2114 = vadd.f32 0.0, %v2113
        %v2115 = vpop.f32.mrb[0].mxu0
        %v2116 = vpop.f32.mrb[0].mxu0
        %v2117 = vadd.f32 0.0, %v2116
        %v2118 = vpop.f32.mrb[0].mxu0
        %2119 = vmatprep.mubr.bf16.mxu0 0
        %2120 = vmatmul.mubr.bf16.gmra.mrb[0].mxu0 %v1976
        %v2121 = vpop.f32.mrb[0].mxu0
        %v2122 = vadd.f32 0.0, %v2121
        %v2123 = vpop.f32.mrb[0].mxu0
        %v2124 = vpop.f32.mrb[0].mxu0
        %v2125 = vadd.f32 0.0, %v2124
        %v2126 = vpop.f32.mrb[0].mxu0
        %2127 = vmatprep.mubr.bf16.mxu0 0
        %2128 = vmatmul.mubr.bf16.gmra.mrb[0].mxu0 %v1979
        %v2129 = vpop.f32.mrb[0].mxu0
        %v2130 = vadd.f32 0.0, %v2129
        %v2131 = vpop.f32.mrb[0].mxu0
        %v2132 = vpop.f32.mrb[0].mxu0
        %v2133 = vadd.f32 0.0, %v2132
        %v2134 = vpop.f32.mrb[0].mxu0
        %2135 = vmatprep.mubr.bf16.mxu0 0
        %2136 = vmatmul.mubr.bf16.gmra.mrb[0].mxu0 %v1982
        %v2137 = vpop.f32.mrb[0].mxu0
        %v2138 = vadd.f32 0.0, %v2137
        %v2139 = vpop.f32.mrb[0].mxu0
        %v2140 = vpop.f32.mrb[0].mxu0
        %v2141 = vadd.f32 0.0, %v2140
        %v2142 = vpop.f32.mrb[0].mxu0
        %2143 = vmatprep.mubr.bf16.mxu0 0
        %2144 = vmatmul.mubr.bf16.gmra.mrb[0].mxu0 %v1985
        %v2145 = vpop.f32.mrb[0].mxu0
        %v2146 = vadd.f32 0.0, %v2145
        %v2147 = vpop.f32.mrb[0].mxu0
        %v2148 = vpop.f32.mrb[0].mxu0
        %v2149 = vadd.f32 0.0, %v2148
        %v2150 = vpop.f32.mrb[0].mxu0
        %2151 = vdwg.mxu0
        %v2154 = vunpack.c.l.b16 %v1819
        %v2155 = vunpack.c.l.b16 %v1820
        %v2156 = vpack.c.b16 %v2155, %v2154
        %v2158 = vsel %vm1938, %v2156, 0
        %v2161 = vsel %vm1987, %v1855, 0
        %2163 = vmatprep.subr.bf16.mxu0 0
        %2164 = vmatpush1.bf16.msra.mxu0 %v2161
        %2165 = vmatprep.subr.bf16.mxu0 0
        %2166 = vmatpush1.bf16.msra.mxu0 0
        %2167 = vmatprep.subr.bf16.mxu0 0
        %2168 = vmatpush1.bf16.msra.mxu0 0
        %2169 = vmatprep.subr.bf16.mxu0 0
        %2170 = vmatpush1.bf16.msra.mxu0 0
        %2171 = vmatprep.subr.bf16.mxu0 0
        %2172 = vmatpush1.bf16.msra.mxu0 0
        %2173 = vmatprep.subr.bf16.mxu0 0
        %2174 = vmatpush1.bf16.msra.mxu0 0
        %2175 = vmatprep.subr.bf16.mxu0 0
        %2176 = vmatpush1.bf16.msra.mxu0 0
        %2177 = vmatprep.subr.bf16.mxu0 0
        %2178 = vmatpush1.bf16.msra.mxu0 0
        %2179 = vmatprep.subr.bf16.mxu0 0
        %2180 = vmatpush1.bf16.msra.mxu0 0
        %2181 = vmatprep.subr.bf16.mxu0 0
        %2182 = vmatpush1.bf16.msra.mxu0 0
        %2183 = vmatprep.subr.bf16.mxu0 0
        %2184 = vmatpush1.bf16.msra.mxu0 0
        %2185 = vmatprep.subr.bf16.mxu0 0
        %2186 = vmatpush1.bf16.msra.mxu0 0
        %2187 = vmatprep.subr.bf16.mxu0 0
        %2188 = vmatpush1.bf16.msra.mxu0 0
        %2189 = vmatprep.subr.bf16.mxu0 0
        %2190 = vmatpush1.bf16.msra.mxu0 0
        %2191 = vmatprep.subr.bf16.mxu0 0
        %2192 = vmatpush1.bf16.msra.mxu0 0
        %2193 = vmatprep.subr.bf16.mxu0 0
        %2194 = vmatpush1.bf16.msra.mxu0 0
        %2195 = vmatprep.mubr.bf16.mxu0 0
        %2196 = vmatmul.mubr.bf16.gmra.mrb[0].mxu0 %v2158
        %v2197 = vpop.f32.mrb[0].mxu0
        %v2198 = vadd.f32 %v2026, %v2197
        %v2199 = vpop.f32.mrb[0].mxu0
        %v2200 = vpop.f32.mrb[0].mxu0
        %v2201 = vadd.f32 %v2029, %v2200
        %v2202 = vpop.f32.mrb[0].mxu0
        %2203 = vmatprep.mubr.bf16.mxu0 0
        %2204 = vmatmul.mubr.bf16.gmra.mrb[0].mxu0 %v1940
        %v2205 = vpop.f32.mrb[0].mxu0
        %v2206 = vadd.f32 %v2034, %v2205
        %v2207 = vpop.f32.mrb[0].mxu0
        %v2208 = vpop.f32.mrb[0].mxu0
        %v2209 = vadd.f32 %v2037, %v2208
        %v2210 = vpop.f32.mrb[0].mxu0
        %2211 = vmatprep.mubr.bf16.mxu0 0
        %2212 = vmatmul.mubr.bf16.gmra.mrb[0].mxu0 %v1943
        %v2213 = vpop.f32.mrb[0].mxu0
        %v2214 = vadd.f32 %v2042, %v2213
        %v2215 = vpop.f32.mrb[0].mxu0
        %v2216 = vpop.f32.mrb[0].mxu0
        %v2217 = vadd.f32 %v2045, %v2216
        %v2218 = vpop.f32.mrb[0].mxu0
        %2219 = vmatprep.mubr.bf16.mxu0 0
        %2220 = vmatmul.mubr.bf16.gmra.mrb[0].mxu0 %v1946
        %v2221 = vpop.f32.mrb[0].mxu0
        %v2222 = vadd.f32 %v2050, %v2221
        %v2223 = vpop.f32.mrb[0].mxu0
        %v2224 = vpop.f32.mrb[0].mxu0
        %v2225 = vadd.f32 %v2053, %v2224
        %v2226 = vpop.f32.mrb[0].mxu0
        %2227 = vmatprep.mubr.bf16.mxu0 0
        %2228 = vmatmul.mubr.bf16.gmra.mrb[0].mxu0 %v1949
        %v2229 = vpop.f32.mrb[0].mxu0
        %v2230 = vadd.f32 %v2058, %v2229
        %v2231 = vpop.f32.mrb[0].mxu0
        %v2232 = vpop.f32.mrb[0].mxu0
        %v2233 = vadd.f32 %v2061, %v2232
        %v2234 = vpop.f32.mrb[0].mxu0
        %2235 = vmatprep.mubr.bf16.mxu0 0
        %2236 = vmatmul.mubr.bf16.gmra.mrb[0].mxu0 %v1952
        %v2237 = vpop.f32.mrb[0].mxu0
        %v2238 = vadd.f32 %v2066, %v2237
        %v2239 = vpop.f32.mrb[0].mxu0
        %v2240 = vpop.f32.mrb[0].mxu0
        %v2241 = vadd.f32 %v2069, %v2240
        %v2242 = vpop.f32.mrb[0].mxu0
        %2243 = vmatprep.mubr.bf16.mxu0 0
        %2244 = vmatmul.mubr.bf16.gmra.mrb[0].mxu0 %v1955
        %v2245 = vpop.f32.mrb[0].mxu0
        %v2246 = vadd.f32 %v2074, %v2245
        %v2247 = vpop.f32.mrb[0].mxu0
        %v2248 = vpop.f32.mrb[0].mxu0
        %v2249 = vadd.f32 %v2077, %v2248
        %v2250 = vpop.f32.mrb[0].mxu0
        %2251 = vmatprep.mubr.bf16.mxu0 0
        %2252 = vmatmul.mubr.bf16.gmra.mrb[0].mxu0 %v1958
        %v2253 = vpop.f32.mrb[0].mxu0
        %v2254 = vadd.f32 %v2082, %v2253
        %v2255 = vpop.f32.mrb[0].mxu0
        %v2256 = vpop.f32.mrb[0].mxu0
        %v2257 = vadd.f32 %v2085, %v2256
        %v2258 = vpop.f32.mrb[0].mxu0
        %2259 = vmatprep.mubr.bf16.mxu0 0
        %2260 = vmatmul.mubr.bf16.gmra.mrb[0].mxu0 %v1961
        %v2261 = vpop.f32.mrb[0].mxu0
        %v2262 = vadd.f32 %v2090, %v2261
        %v2263 = vpop.f32.mrb[0].mxu0
        %v2264 = vpop.f32.mrb[0].mxu0
        %v2265 = vadd.f32 %v2093, %v2264
        %v2266 = vpop.f32.mrb[0].mxu0
        %2267 = vmatprep.mubr.bf16.mxu0 0
        %2268 = vmatmul.mubr.bf16.gmra.mrb[0].mxu0 %v1964
        %v2269 = vpop.f32.mrb[0].mxu0
        %v2270 = vadd.f32 %v2098, %v2269
        %v2271 = vpop.f32.mrb[0].mxu0
        %v2272 = vpop.f32.mrb[0].mxu0
        %v2273 = vadd.f32 %v2101, %v2272
        %v2274 = vpop.f32.mrb[0].mxu0
        %2275 = vmatprep.mubr.bf16.mxu0 0
        %2276 = vmatmul.mubr.bf16.gmra.mrb[0].mxu0 %v1967
        %v2277 = vpop.f32.mrb[0].mxu0
        %v2278 = vadd.f32 %v2106, %v2277
        %v2279 = vpop.f32.mrb[0].mxu0
        %v2280 = vpop.f32.mrb[0].mxu0
        %v2281 = vadd.f32 %v2109, %v2280
        %v2282 = vpop.f32.mrb[0].mxu0
        %2283 = vmatprep.mubr.bf16.mxu0 0
        %2284 = vmatmul.mubr.bf16.gmra.mrb[0].mxu0 %v1970
        %v2285 = vpop.f32.mrb[0].mxu0
        %v2286 = vadd.f32 %v2114, %v2285
        %v2287 = vpop.f32.mrb[0].mxu0
        %v2288 = vpop.f32.mrb[0].mxu0
        %v2289 = vadd.f32 %v2117, %v2288
        %v2290 = vpop.f32.mrb[0].mxu0
        %2291 = vmatprep.mubr.bf16.mxu0 0
        %2292 = vmatmul.mubr.bf16.gmra.mrb[0].mxu0 %v1973
        %v2293 = vpop.f32.mrb[0].mxu0
        %v2294 = vadd.f32 %v2122, %v2293
        %v2295 = vpop.f32.mrb[0].mxu0
        %v2296 = vpop.f32.mrb[0].mxu0
        %v2297 = vadd.f32 %v2125, %v2296
        %v2298 = vpop.f32.mrb[0].mxu0
        %2299 = vmatprep.mubr.bf16.mxu0 0
        %2300 = vmatmul.mubr.bf16.gmra.mrb[0].mxu0 %v1976
        %v2301 = vpop.f32.mrb[0].mxu0
        %v2302 = vadd.f32 %v2130, %v2301
        %v2303 = vpop.f32.mrb[0].mxu0
        %v2304 = vpop.f32.mrb[0].mxu0
        %v2305 = vadd.f32 %v2133, %v2304
        %v2306 = vpop.f32.mrb[0].mxu0
        %2307 = vmatprep.mubr.bf16.mxu0 0
        %2308 = vmatmul.mubr.bf16.gmra.mrb[0].mxu0 %v1979
        %v2309 = vpop.f32.mrb[0].mxu0
        %v2310 = vadd.f32 %v2138, %v2309
        %v2311 = vpop.f32.mrb[0].mxu0
        %v2312 = vpop.f32.mrb[0].mxu0
        %v2313 = vadd.f32 %v2141, %v2312
        %v2314 = vpop.f32.mrb[0].mxu0
        %2315 = vmatprep.mubr.bf16.mxu0 0
        %2316 = vmatmul.mubr.bf16.gmra.mrb[0].mxu0 %v1982
        %v2317 = vpop.f32.mrb[0].mxu0
        %v2318 = vadd.f32 %v2146, %v2317
        %v2319 = vpop.f32.mrb[0].mxu0
        %v2320 = vpop.f32.mrb[0].mxu0
        %v2321 = vadd.f32 %v2149, %v2320
        %v2322 = vpop.f32.mrb[0].mxu0
        %2323 = vdwg.mxu0
        %s2324 = scalar_lea.vmem %s5, 12
        %v2325 = vld [vmem:[%s2324] sm:$0x3]
        %v2328 = vunpack.c.l.b16 %v1853
        %v2329 = vunpack.c.l.b16 %v1854
        %v2330 = vpack.c.b16 %v2329, %v2328
        %v2332 = vsel %vm1938, %v2330, 0
        %v2335 = vsel %vm1987, %v2325, 0
        %2337 = vmatprep.subr.bf16.mxu0 0
        %2338 = vmatpush1.bf16.msra.mxu0 %v2335
        %2339 = vmatprep.subr.bf16.mxu0 0
        %2340 = vmatpush1.bf16.msra.mxu0 0
        %2341 = vmatprep.subr.bf16.mxu0 0
        %2342 = vmatpush1.bf16.msra.mxu0 0
        %2343 = vmatprep.subr.bf16.mxu0 0
        %2344 = vmatpush1.bf16.msra.mxu0 0
        %2345 = vmatprep.subr.bf16.mxu0 0
        %2346 = vmatpush1.bf16.msra.mxu0 0
        %2347 = vmatprep.subr.bf16.mxu0 0
        %2348 = vmatpush1.bf16.msra.mxu0 0
        %2349 = vmatprep.subr.bf16.mxu0 0
        %2350 = vmatpush1.bf16.msra.mxu0 0
        %2351 = vmatprep.subr.bf16.mxu0 0
        %2352 = vmatpush1.bf16.msra.mxu0 0
        %2353 = vmatprep.subr.bf16.mxu0 0
        %2354 = vmatpush1.bf16.msra.mxu0 0
        %2355 = vmatprep.subr.bf16.mxu0 0
        %2356 = vmatpush1.bf16.msra.mxu0 0
        %2357 = vmatprep.subr.bf16.mxu0 0
        %2358 = vmatpush1.bf16.msra.mxu0 0
        %2359 = vmatprep.subr.bf16.mxu0 0
        %2360 = vmatpush1.bf16.msra.mxu0 0
        %2361 = vmatprep.subr.bf16.mxu0 0
        %2362 = vmatpush1.bf16.msra.mxu0 0
        %2363 = vmatprep.subr.bf16.mxu0 0
        %2364 = vmatpush1.bf16.msra.mxu0 0
        %2365 = vmatprep.subr.bf16.mxu0 0
        %2366 = vmatpush1.bf16.msra.mxu0 0
        %2367 = vmatprep.subr.bf16.mxu0 0
        %2368 = vmatpush1.bf16.msra.mxu0 0
        %2369 = vmatprep.mubr.bf16.mxu0 0
        %2370 = vmatmul.mubr.bf16.gmra.mrb[0].mxu0 %v1943
        %v2371 = vpop.f32.mrb[0].mxu0
        %v2372 = vadd.f32 0.0, %v2371
        %v2373 = vpop.f32.mrb[0].mxu0
        %v2374 = vpop.f32.mrb[0].mxu0
        %v2375 = vadd.f32 0.0, %v2374
        %v2376 = vpop.f32.mrb[0].mxu0
        %2377 = vmatprep.mubr.bf16.mxu0 0
        %2378 = vmatmul.mubr.bf16.gmra.mrb[0].mxu0 %v1946
        %v2379 = vpop.f32.mrb[0].mxu0
        %v2380 = vadd.f32 0.0, %v2379
        %v2381 = vpop.f32.mrb[0].mxu0
        %v2382 = vpop.f32.mrb[0].mxu0
        %v2383 = vadd.f32 0.0, %v2382
        %v2384 = vpop.f32.mrb[0].mxu0
        %2385 = vmatprep.mubr.bf16.mxu0 0
        %2386 = vmatmul.mubr.bf16.gmra.mrb[0].mxu0 %v1949
        %v2387 = vpop.f32.mrb[0].mxu0
        %v2388 = vadd.f32 0.0, %v2387
        %v2389 = vpop.f32.mrb[0].mxu0
        %v2390 = vpop.f32.mrb[0].mxu0
        %v2391 = vadd.f32 0.0, %v2390
        %v2392 = vpop.f32.mrb[0].mxu0
        %2393 = vmatprep.mubr.bf16.mxu0 0
        %2394 = vmatmul.mubr.bf16.gmra.mrb[0].mxu0 %v1952
        %v2395 = vpop.f32.mrb[0].mxu0
        %v2396 = vadd.f32 0.0, %v2395
        %v2397 = vpop.f32.mrb[0].mxu0
        %v2398 = vpop.f32.mrb[0].mxu0
        %v2399 = vadd.f32 0.0, %v2398
        %v2400 = vpop.f32.mrb[0].mxu0
        %2401 = vmatprep.mubr.bf16.mxu0 0
        %2402 = vmatmul.mubr.bf16.gmra.mrb[0].mxu0 %v1955
        %v2403 = vpop.f32.mrb[0].mxu0
        %v2404 = vadd.f32 0.0, %v2403
        %v2405 = vpop.f32.mrb[0].mxu0
        %v2406 = vpop.f32.mrb[0].mxu0
        %v2407 = vadd.f32 0.0, %v2406
        %v2408 = vpop.f32.mrb[0].mxu0
        %2409 = vmatprep.mubr.bf16.mxu0 0
        %2410 = vmatmul.mubr.bf16.gmra.mrb[0].mxu0 %v1958
        %v2411 = vpop.f32.mrb[0].mxu0
        %v2412 = vadd.f32 0.0, %v2411
        %v2413 = vpop.f32.mrb[0].mxu0
        %v2414 = vpop.f32.mrb[0].mxu0
        %v2415 = vadd.f32 0.0, %v2414
        %v2416 = vpop.f32.mrb[0].mxu0
        %2417 = vmatprep.mubr.bf16.mxu0 0
        %2418 = vmatmul.mubr.bf16.gmra.mrb[0].mxu0 %v1961
        %v2419 = vpop.f32.mrb[0].mxu0
        %v2420 = vadd.f32 0.0, %v2419
        %v2421 = vpop.f32.mrb[0].mxu0
        %v2422 = vpop.f32.mrb[0].mxu0
        %v2423 = vadd.f32 0.0, %v2422
        %v2424 = vpop.f32.mrb[0].mxu0
        %2425 = vmatprep.mubr.bf16.mxu0 0
        %2426 = vmatmul.mubr.bf16.gmra.mrb[0].mxu0 %v1964
        %v2427 = vpop.f32.mrb[0].mxu0
        %v2428 = vadd.f32 0.0, %v2427
        %v2429 = vpop.f32.mrb[0].mxu0
        %v2430 = vpop.f32.mrb[0].mxu0
        %v2431 = vadd.f32 0.0, %v2430
        %v2432 = vpop.f32.mrb[0].mxu0
        %2433 = vmatprep.mubr.bf16.mxu0 0
        %2434 = vmatmul.mubr.bf16.gmra.mrb[0].mxu0 %v1967
        %v2435 = vpop.f32.mrb[0].mxu0
        %v2436 = vadd.f32 0.0, %v2435
        %v2437 = vpop.f32.mrb[0].mxu0
        %v2438 = vpop.f32.mrb[0].mxu0
        %v2439 = vadd.f32 0.0, %v2438
        %v2440 = vpop.f32.mrb[0].mxu0
        %2441 = vmatprep.mubr.bf16.mxu0 0
        %2442 = vmatmul.mubr.bf16.gmra.mrb[0].mxu0 %v1970
        %v2443 = vpop.f32.mrb[0].mxu0
        %v2444 = vadd.f32 0.0, %v2443
        %v2445 = vpop.f32.mrb[0].mxu0
        %v2446 = vpop.f32.mrb[0].mxu0
        %v2447 = vadd.f32 0.0, %v2446
        %v2448 = vpop.f32.mrb[0].mxu0
        %2449 = vmatprep.mubr.bf16.mxu0 0
        %2450 = vmatmul.mubr.bf16.gmra.mrb[0].mxu0 %v1973
        %v2451 = vpop.f32.mrb[0].mxu0
        %v2452 = vadd.f32 0.0, %v2451
        %v2453 = vpop.f32.mrb[0].mxu0
        %v2454 = vpop.f32.mrb[0].mxu0
        %v2455 = vadd.f32 0.0, %v2454
        %v2456 = vpop.f32.mrb[0].mxu0
        %2457 = vmatprep.mubr.bf16.mxu0 0
        %2458 = vmatmul.mubr.bf16.gmra.mrb[0].mxu0 %v1976
        %v2459 = vpop.f32.mrb[0].mxu0
        %v2460 = vadd.f32 0.0, %v2459
        %v2461 = vpop.f32.mrb[0].mxu0
        %v2462 = vpop.f32.mrb[0].mxu0
        %v2463 = vadd.f32 0.0, %v2462
        %v2464 = vpop.f32.mrb[0].mxu0
        %2465 = vmatprep.mubr.bf16.mxu0 0
        %2466 = vmatmul.mubr.bf16.gmra.mrb[0].mxu0 %v1979
        %v2467 = vpop.f32.mrb[0].mxu0
        %v2468 = vadd.f32 0.0, %v2467
        %v2469 = vpop.f32.mrb[0].mxu0
        %v2470 = vpop.f32.mrb[0].mxu0
        %v2471 = vadd.f32 0.0, %v2470
        %v2472 = vpop.f32.mrb[0].mxu0
        %2473 = vmatprep.mubr.bf16.mxu0 0
        %2474 = vmatmul.mubr.bf16.gmra.mrb[0].mxu0 %v1982
        %v2475 = vpop.f32.mrb[0].mxu0
        %v2476 = vadd.f32 0.0, %v2475
        %v2477 = vpop.f32.mrb[0].mxu0
        %v2478 = vpop.f32.mrb[0].mxu0
        %v2479 = vadd.f32 0.0, %v2478
        %v2480 = vpop.f32.mrb[0].mxu0
        %2481 = vmatprep.mubr.bf16.mxu0 0
        %2482 = vmatmul.mubr.bf16.gmra.mrb[0].mxu0 %v1985
        %v2483 = vpop.f32.mrb[0].mxu0
        %v2484 = vadd.f32 0.0, %v2483
        %v2485 = vpop.f32.mrb[0].mxu0
        %v2486 = vpop.f32.mrb[0].mxu0
        %v2487 = vadd.f32 0.0, %v2486
        %v2488 = vpop.f32.mrb[0].mxu0
        %2489 = vmatprep.mubr.bf16.mxu0 0
        %2490 = vmatmul.mubr.bf16.gmra.mrb[0].mxu0 %v2332
        %v2491 = vpop.f32.mrb[0].mxu0
        %v2492 = vadd.f32 0.0, %v2491
        %v2493 = vpop.f32.mrb[0].mxu0
        %v2494 = vpop.f32.mrb[0].mxu0
        %v2495 = vadd.f32 0.0, %v2494
        %v2496 = vpop.f32.mrb[0].mxu0
        %2497 = vdwg.mxu0
        %v2498 = vadd.f32 %v2198, %v2372
        %v2499 = vadd.f32 %v2201, %v2375
        %v2500 = vadd.f32 %v2206, %v2380
        %v2501 = vadd.f32 %v2209, %v2383
        %v2502 = vadd.f32 %v2214, %v2388
        %v2503 = vadd.f32 %v2217, %v2391
        %v2504 = vadd.f32 %v2222, %v2396
        %v2505 = vadd.f32 %v2225, %v2399
        %v2506 = vadd.f32 %v2230, %v2404
        %v2507 = vadd.f32 %v2233, %v2407
        %v2508 = vadd.f32 %v2238, %v2412
        %v2509 = vadd.f32 %v2241, %v2415
        %v2510 = vadd.f32 %v2246, %v2420
        %v2511 = vadd.f32 %v2249, %v2423
        %v2512 = vadd.f32 %v2254, %v2428
        %v2513 = vadd.f32 %v2257, %v2431
        %v2514 = vadd.f32 %v2262, %v2436
        %v2515 = vadd.f32 %v2265, %v2439
        %v2516 = vadd.f32 %v2270, %v2444
        %v2517 = vadd.f32 %v2273, %v2447
        %v2518 = vadd.f32 %v2278, %v2452
        %v2519 = vadd.f32 %v2281, %v2455
        %v2520 = vadd.f32 %v2286, %v2460
        %v2521 = vadd.f32 %v2289, %v2463
        %v2522 = vadd.f32 %v2294, %v2468
        %v2523 = vadd.f32 %v2297, %v2471
        %v2524 = vadd.f32 %v2302, %v2476
        %v2525 = vadd.f32 %v2305, %v2479
        %v2526 = vadd.f32 %v2310, %v2484
        %v2527 = vadd.f32 %v2313, %v2487
        %v2528 = vadd.f32 %v2318, %v2492
        %v2529 = vadd.f32 %v2321, %v2495
        %v2530 = vld [vmem:[#allocation2] sm:$0xf]
        %v2531 = vld [vmem:[#allocation2 + $0x4] sm:$0xf]
        %v2532 = vld [vmem:[#allocation2 + $0x8] sm:$0x1]
        %v2533 = vld [vmem:[#allocation2 + $0xc] sm:$0xf]
        %v2534 = vld [vmem:[#allocation2 + $0x10] sm:$0xf]
        %v2535 = vld [vmem:[#allocation2 + $0x14] sm:$0x1]
        %v2536 = vld [vmem:[#allocation2 + $0x18] sm:$0xf]
        %v2537 = vld [vmem:[#allocation2 + $0x1c] sm:$0xf]
        %v2538 = vld [vmem:[#allocation2 + $0x20] sm:$0x1]
        %v2539 = vld [vmem:[#allocation2 + $0x24] sm:$0xf]
        %v2540 = vld [vmem:[#allocation2 + $0x28] sm:$0xf]
        %v2541 = vld [vmem:[#allocation2 + $0x2c] sm:$0x1]
        %v2542 = vld [vmem:[#allocation2 + $0x30] sm:$0xf]
        %v2543 = vld [vmem:[#allocation2 + $0x34] sm:$0xf]
        %v2544 = vld [vmem:[#allocation2 + $0x38] sm:$0x1]
        %v2545 = vld [vmem:[#allocation2 + $0x3c] sm:$0xf]
        %v2546 = vld [vmem:[#allocation2 + $0x40] sm:$0xf]
        %v2547 = vld [vmem:[#allocation2 + $0x44] sm:$0x1]
        %v2548 = vld [vmem:[#allocation2 + $0x48] sm:$0xf]
        %v2549 = vld [vmem:[#allocation2 + $0x4c] sm:$0xf]
        %v2550 = vld [vmem:[#allocation2 + $0x50] sm:$0x1]
        %v2551 = vld [vmem:[#allocation2 + $0x54] sm:$0xf]
        %v2552 = vld [vmem:[#allocation2 + $0x58] sm:$0xf]
        %v2553 = vld [vmem:[#allocation2 + $0x5c] sm:$0x1]
        %v2554 = vld [vmem:[#allocation2 + $0x60] sm:$0xf]
        %v2555 = vld [vmem:[#allocation2 + $0x64] sm:$0xf]
        %v2556 = vld [vmem:[#allocation2 + $0x68] sm:$0x1]
        %v2557 = vld [vmem:[#allocation2 + $0x6c] sm:$0xf]
        %v2558 = vld [vmem:[#allocation2 + $0x70] sm:$0xf]
        %v2559 = vld [vmem:[#allocation2 + $0x74] sm:$0x1]
        %v2560 = vld [vmem:[#allocation2 + $0x78] sm:$0xf]
        %v2561 = vld [vmem:[#allocation2 + $0x7c] sm:$0xf]
        %v2562 = vld [vmem:[#allocation2 + $0x80] sm:$0x1]
        %v2563 = vld [vmem:[#allocation2 + $0x84] sm:$0xf]
        %v2564 = vld [vmem:[#allocation2 + $0x88] sm:$0xf]
        %v2565 = vld [vmem:[#allocation2 + $0x8c] sm:$0x1]
        %v2566 = vld [vmem:[#allocation2 + $0x90] sm:$0xf]
        %v2567 = vld [vmem:[#allocation2 + $0x94] sm:$0xf]
        %v2568 = vld [vmem:[#allocation2 + $0x98] sm:$0x1]
        %v2569 = vld [vmem:[#allocation2 + $0x9c] sm:$0xf]
        %v2570 = vld [vmem:[#allocation2 + $0xa0] sm:$0xf]
        %v2571 = vld [vmem:[#allocation2 + $0xa4] sm:$0x1]
        %v2572 = vld [vmem:[#allocation2 + $0xa8] sm:$0xf]
        %v2573 = vld [vmem:[#allocation2 + $0xac] sm:$0xf]
        %v2574 = vld [vmem:[#allocation2 + $0xb0] sm:$0x1]
        %v2575 = vld [vmem:[#allocation2 + $0xb4] sm:$0xf]
        %v2576 = vld [vmem:[#allocation2 + $0xb8] sm:$0xf]
        %v2577 = vld [vmem:[#allocation2 + $0xbc] sm:$0x1]
        %v2578 = vld [vmem:[#allocation2 + $0xc0] sm:$0xf]
        %v2579 = vld [vmem:[#allocation2 + $0xc4] sm:$0xf]
        %v2580 = vld [vmem:[#allocation2 + $0xc8] sm:$0x1]
        %v2581 = vld [vmem:[#allocation2 + $0xcc] sm:$0xf]
        %v2582 = vld [vmem:[#allocation2 + $0xd0] sm:$0xf]
        %v2583 = vld [vmem:[#allocation2 + $0xd4] sm:$0x1]
        %vm2584 = vsmask.f32 3328
        %vm2585 = vsmask.f32 7440
        %vm2586 = vmor %vm2584, %vm2585
        %v2588 = vshrl.u32 %v2530, 16
        %v2590 = vrot.slane %v2588, 4
        %v2591 = vshll.u32 %v2530, 16
        %v2593 = vrot.slane %v2591, 5
        %v2594 = vor.u32 %v2590, %v2593
        %v2595 = vrot.slane %v2594, 4
        %v2597 = vshll.u32 %v2531, 16
        %v2599 = vrot.slane %v2597, 5
        %v2600 = vsel %vm2586, %v2595, %v2599
        %v2601 = vshrl.u32 %v2531, 16
        %v2603 = vrot.slane %v2601, 4
        %v2604 = vor.u32 %v2603, %v2599
        %v2605 = vrot.slane %v2604, 4
        %v2607 = vshll.u32 %v2532, 16
        %v2609 = vrot.slane %v2607, 5
        %v2610 = vsel %vm2586, %v2605, %v2609
        %v2612 = vshrl.u32 %v2533, 16
        %v2614 = vrot.slane %v2612, 4
        %v2615 = vshll.u32 %v2533, 16
        %v2617 = vrot.slane %v2615, 5
        %v2618 = vor.u32 %v2614, %v2617
        %v2619 = vrot.slane %v2618, 4
        %v2621 = vshll.u32 %v2534, 16
        %v2623 = vrot.slane %v2621, 5
        %v2624 = vsel %vm2586, %v2619, %v2623
        %v2625 = vshrl.u32 %v2534, 16
        %v2627 = vrot.slane %v2625, 4
        %v2628 = vor.u32 %v2627, %v2623
        %v2629 = vrot.slane %v2628, 4
        %v2631 = vshll.u32 %v2535, 16
        %v2633 = vrot.slane %v2631, 5
        %v2634 = vsel %vm2586, %v2629, %v2633
        %v2636 = vshrl.u32 %v2536, 16
        %v2638 = vrot.slane %v2636, 4
        %v2639 = vshll.u32 %v2536, 16
        %v2641 = vrot.slane %v2639, 5
        %v2642 = vor.u32 %v2638, %v2641
        %v2643 = vrot.slane %v2642, 4
        %v2645 = vshll.u32 %v2537, 16
        %v2647 = vrot.slane %v2645, 5
        %v2648 = vsel %vm2586, %v2643, %v2647
        %v2649 = vshrl.u32 %v2537, 16
        %v2651 = vrot.slane %v2649, 4
        %v2652 = vor.u32 %v2651, %v2647
        %v2653 = vrot.slane %v2652, 4
        %v2655 = vshll.u32 %v2538, 16
        %v2657 = vrot.slane %v2655, 5
        %v2658 = vsel %vm2586, %v2653, %v2657
        %v2660 = vshrl.u32 %v2539, 16
        %v2662 = vrot.slane %v2660, 4
        %v2663 = vshll.u32 %v2539, 16
        %v2665 = vrot.slane %v2663, 5
        %v2666 = vor.u32 %v2662, %v2665
        %v2667 = vrot.slane %v2666, 4
        %v2669 = vshll.u32 %v2540, 16
        %v2671 = vrot.slane %v2669, 5
        %v2672 = vsel %vm2586, %v2667, %v2671
        %v2673 = vshrl.u32 %v2540, 16
        %v2675 = vrot.slane %v2673, 4
        %v2676 = vor.u32 %v2675, %v2671
        %v2677 = vrot.slane %v2676, 4
        %v2679 = vshll.u32 %v2541, 16
        %v2681 = vrot.slane %v2679, 5
        %v2682 = vsel %vm2586, %v2677, %v2681
        %v2684 = vshrl.u32 %v2542, 16
        %v2686 = vrot.slane %v2684, 4
        %v2687 = vshll.u32 %v2542, 16
        %v2689 = vrot.slane %v2687, 5
        %v2690 = vor.u32 %v2686, %v2689
        %v2691 = vrot.slane %v2690, 4
        %v2693 = vshll.u32 %v2543, 16
        %v2695 = vrot.slane %v2693, 5
        %v2696 = vsel %vm2586, %v2691, %v2695
        %v2697 = vshrl.u32 %v2543, 16
        %v2699 = vrot.slane %v2697, 4
        %v2700 = vor.u32 %v2699, %v2695
        %v2701 = vrot.slane %v2700, 4
        %v2703 = vshll.u32 %v2544, 16
        %v2705 = vrot.slane %v2703, 5
        %v2706 = vsel %vm2586, %v2701, %v2705
        %v2708 = vshrl.u32 %v2545, 16
        %v2710 = vrot.slane %v2708, 4
        %v2711 = vshll.u32 %v2545, 16
        %v2713 = vrot.slane %v2711, 5
        %v2714 = vor.u32 %v2710, %v2713
        %v2715 = vrot.slane %v2714, 4
        %v2717 = vshll.u32 %v2546, 16
        %v2719 = vrot.slane %v2717, 5
        %v2720 = vsel %vm2586, %v2715, %v2719
        %v2721 = vshrl.u32 %v2546, 16
        %v2723 = vrot.slane %v2721, 4
        %v2724 = vor.u32 %v2723, %v2719
        %v2725 = vrot.slane %v2724, 4
        %v2727 = vshll.u32 %v2547, 16
        %v2729 = vrot.slane %v2727, 5
        %v2730 = vsel %vm2586, %v2725, %v2729
        %v2732 = vshrl.u32 %v2548, 16
        %v2734 = vrot.slane %v2732, 4
        %v2735 = vshll.u32 %v2548, 16
        %v2737 = vrot.slane %v2735, 5
        %v2738 = vor.u32 %v2734, %v2737
        %v2739 = vrot.slane %v2738, 4
        %v2741 = vshll.u32 %v2549, 16
        %v2743 = vrot.slane %v2741, 5
        %v2744 = vsel %vm2586, %v2739, %v2743
        %v2745 = vshrl.u32 %v2549, 16
        %v2747 = vrot.slane %v2745, 4
        %v2748 = vor.u32 %v2747, %v2743
        %v2749 = vrot.slane %v2748, 4
        %v2751 = vshll.u32 %v2550, 16
        %v2753 = vrot.slane %v2751, 5
        %v2754 = vsel %vm2586, %v2749, %v2753
        %v2756 = vshrl.u32 %v2551, 16
        %v2758 = vrot.slane %v2756, 4
        %v2759 = vshll.u32 %v2551, 16
        %v2761 = vrot.slane %v2759, 5
        %v2762 = vor.u32 %v2758, %v2761
        %v2763 = vrot.slane %v2762, 4
        %v2765 = vshll.u32 %v2552, 16
        %v2767 = vrot.slane %v2765, 5
        %v2768 = vsel %vm2586, %v2763, %v2767
        %v2769 = vshrl.u32 %v2552, 16
        %v2771 = vrot.slane %v2769, 4
        %v2772 = vor.u32 %v2771, %v2767
        %v2773 = vrot.slane %v2772, 4
        %v2775 = vshll.u32 %v2553, 16
        %v2777 = vrot.slane %v2775, 5
        %v2778 = vsel %vm2586, %v2773, %v2777
        %v2780 = vshrl.u32 %v2554, 16
        %v2782 = vrot.slane %v2780, 4
        %v2783 = vshll.u32 %v2554, 16
        %v2785 = vrot.slane %v2783, 5
        %v2786 = vor.u32 %v2782, %v2785
        %v2787 = vrot.slane %v2786, 4
        %v2789 = vshll.u32 %v2555, 16
        %v2791 = vrot.slane %v2789, 5
        %v2792 = vsel %vm2586, %v2787, %v2791
        %v2793 = vshrl.u32 %v2555, 16
        %v2795 = vrot.slane %v2793, 4
        %v2796 = vor.u32 %v2795, %v2791
        %v2797 = vrot.slane %v2796, 4
        %v2799 = vshll.u32 %v2556, 16
        %v2801 = vrot.slane %v2799, 5
        %v2802 = vsel %vm2586, %v2797, %v2801
        %v2804 = vshrl.u32 %v2557, 16
        %v2806 = vrot.slane %v2804, 4
        %v2807 = vshll.u32 %v2557, 16
        %v2809 = vrot.slane %v2807, 5
        %v2810 = vor.u32 %v2806, %v2809
        %v2811 = vrot.slane %v2810, 4
        %v2813 = vshll.u32 %v2558, 16
        %v2815 = vrot.slane %v2813, 5
        %v2816 = vsel %vm2586, %v2811, %v2815
        %v2817 = vshrl.u32 %v2558, 16
        %v2819 = vrot.slane %v2817, 4
        %v2820 = vor.u32 %v2819, %v2815
        %v2821 = vrot.slane %v2820, 4
        %v2823 = vshll.u32 %v2559, 16
        %v2825 = vrot.slane %v2823, 5
        %v2826 = vsel %vm2586, %v2821, %v2825
        %v2828 = vshrl.u32 %v2560, 16
        %v2830 = vrot.slane %v2828, 4
        %v2831 = vshll.u32 %v2560, 16
        %v2833 = vrot.slane %v2831, 5
        %v2834 = vor.u32 %v2830, %v2833
        %v2835 = vrot.slane %v2834, 4
        %v2837 = vshll.u32 %v2561, 16
        %v2839 = vrot.slane %v2837, 5
        %v2840 = vsel %vm2586, %v2835, %v2839
        %v2841 = vshrl.u32 %v2561, 16
        %v2843 = vrot.slane %v2841, 4
        %v2844 = vor.u32 %v2843, %v2839
        %v2845 = vrot.slane %v2844, 4
        %v2847 = vshll.u32 %v2562, 16
        %v2849 = vrot.slane %v2847, 5
        %v2850 = vsel %vm2586, %v2845, %v2849
        %v2852 = vshrl.u32 %v2563, 16
        %v2854 = vrot.slane %v2852, 4
        %v2855 = vshll.u32 %v2563, 16
        %v2857 = vrot.slane %v2855, 5
        %v2858 = vor.u32 %v2854, %v2857
        %v2859 = vrot.slane %v2858, 4
        %v2861 = vshll.u32 %v2564, 16
        %v2863 = vrot.slane %v2861, 5
        %v2864 = vsel %vm2586, %v2859, %v2863
        %v2865 = vshrl.u32 %v2564, 16
        %v2867 = vrot.slane %v2865, 4
        %v2868 = vor.u32 %v2867, %v2863
        %v2869 = vrot.slane %v2868, 4
        %v2871 = vshll.u32 %v2565, 16
        %v2873 = vrot.slane %v2871, 5
        %v2874 = vsel %vm2586, %v2869, %v2873
        %v2876 = vshrl.u32 %v2566, 16
        %v2878 = vrot.slane %v2876, 4
        %v2879 = vshll.u32 %v2566, 16
        %v2881 = vrot.slane %v2879, 5
        %v2882 = vor.u32 %v2878, %v2881
        %v2883 = vrot.slane %v2882, 4
        %v2885 = vshll.u32 %v2567, 16
        %v2887 = vrot.slane %v2885, 5
        %v2888 = vsel %vm2586, %v2883, %v2887
        %v2889 = vshrl.u32 %v2567, 16
        %v2891 = vrot.slane %v2889, 4
        %v2892 = vor.u32 %v2891, %v2887
        %v2893 = vrot.slane %v2892, 4
        %v2895 = vshll.u32 %v2568, 16
        %v2897 = vrot.slane %v2895, 5
        %v2898 = vsel %vm2586, %v2893, %v2897
        %v2900 = vshrl.u32 %v2569, 16
        %v2902 = vrot.slane %v2900, 4
        %v2903 = vshll.u32 %v2569, 16
        %v2905 = vrot.slane %v2903, 5
        %v2906 = vor.u32 %v2902, %v2905
        %v2907 = vrot.slane %v2906, 4
        %v2909 = vshll.u32 %v2570, 16
        %v2911 = vrot.slane %v2909, 5
        %v2912 = vsel %vm2586, %v2907, %v2911
        %v2913 = vshrl.u32 %v2570, 16
        %v2915 = vrot.slane %v2913, 4
        %v2916 = vor.u32 %v2915, %v2911
        %v2917 = vrot.slane %v2916, 4
        %v2919 = vshll.u32 %v2571, 16
        %v2921 = vrot.slane %v2919, 5
        %v2922 = vsel %vm2586, %v2917, %v2921
        %v2924 = vshrl.u32 %v2572, 16
        %v2926 = vrot.slane %v2924, 4
        %v2927 = vshll.u32 %v2572, 16
        %v2929 = vrot.slane %v2927, 5
        %v2930 = vor.u32 %v2926, %v2929
        %v2931 = vrot.slane %v2930, 4
        %v2933 = vshll.u32 %v2573, 16
        %v2935 = vrot.slane %v2933, 5
        %v2936 = vsel %vm2586, %v2931, %v2935
        %v2937 = vshrl.u32 %v2573, 16
        %v2939 = vrot.slane %v2937, 4
        %v2940 = vor.u32 %v2939, %v2935
        %v2941 = vrot.slane %v2940, 4
        %v2943 = vshll.u32 %v2574, 16
        %v2945 = vrot.slane %v2943, 5
        %v2946 = vsel %vm2586, %v2941, %v2945
        %v2948 = vshrl.u32 %v2575, 16
        %v2950 = vrot.slane %v2948, 4
        %v2951 = vshll.u32 %v2575, 16
        %v2953 = vrot.slane %v2951, 5
        %v2954 = vor.u32 %v2950, %v2953
        %v2955 = vrot.slane %v2954, 4
        %v2957 = vshll.u32 %v2576, 16
        %v2959 = vrot.slane %v2957, 5
        %v2960 = vsel %vm2586, %v2955, %v2959
        %v2961 = vshrl.u32 %v2576, 16
        %v2963 = vrot.slane %v2961, 4
        %v2964 = vor.u32 %v2963, %v2959
        %v2965 = vrot.slane %v2964, 4
        %v2967 = vshll.u32 %v2577, 16
        %v2969 = vrot.slane %v2967, 5
        %v2970 = vsel %vm2586, %v2965, %v2969
        %s2971 = scalar_lea.vmem %s5, 2
        %v2972 = vld [vmem:[%s2971] sm:$0x3]
        %v2973 = vunpack.c.l.b16 %v2600
        %v2974 = vunpack.c.l.b16 %v2610
        %v2975 = vunpack.c.l.b16 %v2624
        %v2976 = vunpack.c.l.b16 %v2634
        %v2977 = vunpack.c.l.b16 %v2648
        %v2978 = vunpack.c.l.b16 %v2658
        %v2979 = vunpack.c.l.b16 %v2672
        %v2980 = vunpack.c.l.b16 %v2682
        %v2981 = vunpack.c.l.b16 %v2696
        %v2982 = vunpack.c.l.b16 %v2706
        %v2983 = vunpack.c.l.b16 %v2720
        %v2984 = vunpack.c.l.b16 %v2730
        %v2985 = vunpack.c.l.b16 %v2744
        %v2986 = vunpack.c.l.b16 %v2754
        %v2987 = vunpack.c.l.b16 %v2768
        %v2988 = vunpack.c.l.b16 %v2778
        %v2989 = vunpack.c.l.b16 %v2792
        %v2990 = vunpack.c.l.b16 %v2802
        %v2991 = vunpack.c.l.b16 %v2816
        %v2992 = vunpack.c.l.b16 %v2826
        %v2993 = vunpack.c.l.b16 %v2840
        %v2994 = vunpack.c.l.b16 %v2850
        %v2995 = vunpack.c.l.b16 %v2864
        %v2996 = vunpack.c.l.b16 %v2874
        %v2997 = vunpack.c.l.b16 %v2888
        %v2998 = vunpack.c.l.b16 %v2898
        %v2999 = vunpack.c.l.b16 %v2912
        %v3000 = vunpack.c.l.b16 %v2922
        %v3001 = vunpack.c.l.b16 %v2936
        %v3002 = vunpack.c.l.b16 %v2946
        %v3003 = vunpack.c.l.b16 %v2960
        %v3004 = vunpack.c.l.b16 %v2970
        %v3005 = vpack.c.b16 %v2974, %v2973
        %v3006 = vpack.c.b16 %v2976, %v2975
        %v3007 = vpack.c.b16 %v2978, %v2977
        %v3008 = vpack.c.b16 %v2980, %v2979
        %v3009 = vpack.c.b16 %v2982, %v2981
        %v3010 = vpack.c.b16 %v2984, %v2983
        %v3011 = vpack.c.b16 %v2986, %v2985
        %v3012 = vpack.c.b16 %v2988, %v2987
        %v3013 = vpack.c.b16 %v2990, %v2989
        %v3014 = vpack.c.b16 %v2992, %v2991
        %v3015 = vpack.c.b16 %v2994, %v2993
        %v3016 = vpack.c.b16 %v2996, %v2995
        %v3017 = vpack.c.b16 %v2998, %v2997
        %v3018 = vpack.c.b16 %v3000, %v2999
        %v3019 = vpack.c.b16 %v3002, %v3001
        %v3020 = vpack.c.b16 %v3004, %v3003
        %v3022 = vsel %vm1938, %v3005, 0
        %v3025 = vsel %vm1938, %v3006, 0
        %v3028 = vsel %vm1938, %v3007, 0
        %v3031 = vsel %vm1938, %v3008, 0
        %v3034 = vsel %vm1938, %v3009, 0
        %v3037 = vsel %vm1938, %v3010, 0
        %v3040 = vsel %vm1938, %v3011, 0
        %v3043 = vsel %vm1938, %v3012, 0
        %v3046 = vsel %vm1938, %v3013, 0
        %v3049 = vsel %vm1938, %v3014, 0
        %v3052 = vsel %vm1938, %v3015, 0
        %v3055 = vsel %vm1938, %v3016, 0
        %v3058 = vsel %vm1938, %v3017, 0
        %v3061 = vsel %vm1938, %v3018, 0
        %v3064 = vsel %vm1938, %v3019, 0
        %v3067 = vsel %vm1938, %v3020, 0
        %v3070 = vsel %vm1987, %v2972, 0
        %3072 = vmatprep.subr.bf16.mxu0 0
        %3073 = vmatpush1.bf16.msra.mxu0 %v3070
        %3074 = vmatprep.subr.bf16.mxu0 0
        %3075 = vmatpush1.bf16.msra.mxu0 0
        %3076 = vmatprep.subr.bf16.mxu0 0
        %3077 = vmatpush1.bf16.msra.mxu0 0
        %3078 = vmatprep.subr.bf16.mxu0 0
        %3079 = vmatpush1.bf16.msra.mxu0 0
        %3080 = vmatprep.subr.bf16.mxu0 0
        %3081 = vmatpush1.bf16.msra.mxu0 0
        %3082 = vmatprep.subr.bf16.mxu0 0
        %3083 = vmatpush1.bf16.msra.mxu0 0
        %3084 = vmatprep.subr.bf16.mxu0 0
        %3085 = vmatpush1.bf16.msra.mxu0 0
        %3086 = vmatprep.subr.bf16.mxu0 0
        %3087 = vmatpush1.bf16.msra.mxu0 0
        %3088 = vmatprep.subr.bf16.mxu0 0
        %3089 = vmatpush1.bf16.msra.mxu0 0
        %3090 = vmatprep.subr.bf16.mxu0 0
        %3091 = vmatpush1.bf16.msra.mxu0 0
        %3092 = vmatprep.subr.bf16.mxu0 0
        %3093 = vmatpush1.bf16.msra.mxu0 0
        %3094 = vmatprep.subr.bf16.mxu0 0
        %3095 = vmatpush1.bf16.msra.mxu0 0
        %3096 = vmatprep.subr.bf16.mxu0 0
        %3097 = vmatpush1.bf16.msra.mxu0 0
        %3098 = vmatprep.subr.bf16.mxu0 0
        %3099 = vmatpush1.bf16.msra.mxu0 0
        %3100 = vmatprep.subr.bf16.mxu0 0
        %3101 = vmatpush1.bf16.msra.mxu0 0
        %3102 = vmatprep.subr.bf16.mxu0 0
        %3103 = vmatpush1.bf16.msra.mxu0 0
        %3104 = vmatprep.mubr.bf16.mxu0 0
        %3105 = vmatmul.mubr.bf16.gmra.mrb[0].mxu0 %v3022
        %v3106 = vpop.f32.mrb[0].mxu0
        %v3107 = vadd.f32 0.0, %v3106
        %v3108 = vpop.f32.mrb[0].mxu0
        %v3109 = vpop.f32.mrb[0].mxu0
        %v3110 = vadd.f32 0.0, %v3109
        %v3111 = vpop.f32.mrb[0].mxu0
        %3112 = vmatprep.mubr.bf16.mxu0 0
        %3113 = vmatmul.mubr.bf16.gmra.mrb[0].mxu0 %v3025
        %v3114 = vpop.f32.mrb[0].mxu0
        %v3115 = vadd.f32 0.0, %v3114
        %v3116 = vpop.f32.mrb[0].mxu0
        %v3117 = vpop.f32.mrb[0].mxu0
        %v3118 = vadd.f32 0.0, %v3117
        %v3119 = vpop.f32.mrb[0].mxu0
        %3120 = vmatprep.mubr.bf16.mxu0 0
        %3121 = vmatmul.mubr.bf16.gmra.mrb[0].mxu0 %v3028
        %v3122 = vpop.f32.mrb[0].mxu0
        %v3123 = vadd.f32 0.0, %v3122
        %v3124 = vpop.f32.mrb[0].mxu0
        %v3125 = vpop.f32.mrb[0].mxu0
        %v3126 = vadd.f32 0.0, %v3125
        %v3127 = vpop.f32.mrb[0].mxu0
        %3128 = vmatprep.mubr.bf16.mxu0 0
        %3129 = vmatmul.mubr.bf16.gmra.mrb[0].mxu0 %v3031
        %v3130 = vpop.f32.mrb[0].mxu0
        %v3131 = vadd.f32 0.0, %v3130
        %v3132 = vpop.f32.mrb[0].mxu0
        %v3133 = vpop.f32.mrb[0].mxu0
        %v3134 = vadd.f32 0.0, %v3133
        %v3135 = vpop.f32.mrb[0].mxu0
        %3136 = vmatprep.mubr.bf16.mxu0 0
        %3137 = vmatmul.mubr.bf16.gmra.mrb[0].mxu0 %v3034
        %v3138 = vpop.f32.mrb[0].mxu0
        %v3139 = vadd.f32 0.0, %v3138
        %v3140 = vpop.f32.mrb[0].mxu0
        %v3141 = vpop.f32.mrb[0].mxu0
        %v3142 = vadd.f32 0.0, %v3141
        %v3143 = vpop.f32.mrb[0].mxu0
        %3144 = vmatprep.mubr.bf16.mxu0 0
        %3145 = vmatmul.mubr.bf16.gmra.mrb[0].mxu0 %v3037
        %v3146 = vpop.f32.mrb[0].mxu0
        %v3147 = vadd.f32 0.0, %v3146
        %v3148 = vpop.f32.mrb[0].mxu0
        %v3149 = vpop.f32.mrb[0].mxu0
        %v3150 = vadd.f32 0.0, %v3149
        %v3151 = vpop.f32.mrb[0].mxu0
        %3152 = vmatprep.mubr.bf16.mxu0 0
        %3153 = vmatmul.mubr.bf16.gmra.mrb[0].mxu0 %v3040
        %v3154 = vpop.f32.mrb[0].mxu0
        %v3155 = vadd.f32 0.0, %v3154
        %v3156 = vpop.f32.mrb[0].mxu0
        %v3157 = vpop.f32.mrb[0].mxu0
        %v3158 = vadd.f32 0.0, %v3157
        %v3159 = vpop.f32.mrb[0].mxu0
        %3160 = vmatprep.mubr.bf16.mxu0 0
        %3161 = vmatmul.mubr.bf16.gmra.mrb[0].mxu0 %v3043
        %v3162 = vpop.f32.mrb[0].mxu0
        %v3163 = vadd.f32 0.0, %v3162
        %v3164 = vpop.f32.mrb[0].mxu0
        %v3165 = vpop.f32.mrb[0].mxu0
        %v3166 = vadd.f32 0.0, %v3165
        %v3167 = vpop.f32.mrb[0].mxu0
        %3168 = vmatprep.mubr.bf16.mxu0 0
        %3169 = vmatmul.mubr.bf16.gmra.mrb[0].mxu0 %v3046
        %v3170 = vpop.f32.mrb[0].mxu0
        %v3171 = vadd.f32 0.0, %v3170
        %v3172 = vpop.f32.mrb[0].mxu0
        %v3173 = vpop.f32.mrb[0].mxu0
        %v3174 = vadd.f32 0.0, %v3173
        %v3175 = vpop.f32.mrb[0].mxu0
        %3176 = vmatprep.mubr.bf16.mxu0 0
        %3177 = vmatmul.mubr.bf16.gmra.mrb[0].mxu0 %v3049
        %v3178 = vpop.f32.mrb[0].mxu0
        %v3179 = vadd.f32 0.0, %v3178
        %v3180 = vpop.f32.mrb[0].mxu0
        %v3181 = vpop.f32.mrb[0].mxu0
        %v3182 = vadd.f32 0.0, %v3181
        %v3183 = vpop.f32.mrb[0].mxu0
        %3184 = vmatprep.mubr.bf16.mxu0 0
        %3185 = vmatmul.mubr.bf16.gmra.mrb[0].mxu0 %v3052
        %v3186 = vpop.f32.mrb[0].mxu0
        %v3187 = vadd.f32 0.0, %v3186
        %v3188 = vpop.f32.mrb[0].mxu0
        %v3189 = vpop.f32.mrb[0].mxu0
        %v3190 = vadd.f32 0.0, %v3189
        %v3191 = vpop.f32.mrb[0].mxu0
        %3192 = vmatprep.mubr.bf16.mxu0 0
        %3193 = vmatmul.mubr.bf16.gmra.mrb[0].mxu0 %v3055
        %v3194 = vpop.f32.mrb[0].mxu0
        %v3195 = vadd.f32 0.0, %v3194
        %v3196 = vpop.f32.mrb[0].mxu0
        %v3197 = vpop.f32.mrb[0].mxu0
        %v3198 = vadd.f32 0.0, %v3197
        %v3199 = vpop.f32.mrb[0].mxu0
        %3200 = vmatprep.mubr.bf16.mxu0 0
        %3201 = vmatmul.mubr.bf16.gmra.mrb[0].mxu0 %v3058
        %v3202 = vpop.f32.mrb[0].mxu0
        %v3203 = vadd.f32 0.0, %v3202
        %v3204 = vpop.f32.mrb[0].mxu0
        %v3205 = vpop.f32.mrb[0].mxu0
        %v3206 = vadd.f32 0.0, %v3205
        %v3207 = vpop.f32.mrb[0].mxu0
        %3208 = vmatprep.mubr.bf16.mxu0 0
        %3209 = vmatmul.mubr.bf16.gmra.mrb[0].mxu0 %v3061
        %v3210 = vpop.f32.mrb[0].mxu0
        %v3211 = vadd.f32 0.0, %v3210
        %v3212 = vpop.f32.mrb[0].mxu0
        %v3213 = vpop.f32.mrb[0].mxu0
        %v3214 = vadd.f32 0.0, %v3213
        %v3215 = vpop.f32.mrb[0].mxu0
        %3216 = vmatprep.mubr.bf16.mxu0 0
        %3217 = vmatmul.mubr.bf16.gmra.mrb[0].mxu0 %v3064
        %v3218 = vpop.f32.mrb[0].mxu0
        %v3219 = vadd.f32 0.0, %v3218
        %v3220 = vpop.f32.mrb[0].mxu0
        %v3221 = vpop.f32.mrb[0].mxu0
        %v3222 = vadd.f32 0.0, %v3221
        %v3223 = vpop.f32.mrb[0].mxu0
        %3224 = vmatprep.mubr.bf16.mxu0 0
        %3225 = vmatmul.mubr.bf16.gmra.mrb[0].mxu0 %v3067
        %v3226 = vpop.f32.mrb[0].mxu0
        %v3227 = vadd.f32 0.0, %v3226
        %v3228 = vpop.f32.mrb[0].mxu0
        %v3229 = vpop.f32.mrb[0].mxu0
        %v3230 = vadd.f32 0.0, %v3229
        %v3231 = vpop.f32.mrb[0].mxu0
        %3232 = vdwg.mxu0
        %v3233 = vadd.f32 %v2498, %v3107
        %v3234 = vadd.f32 %v2499, %v3110
        %v3235 = vadd.f32 %v2500, %v3115
        %v3236 = vadd.f32 %v2501, %v3118
        %v3237 = vadd.f32 %v2502, %v3123
        %v3238 = vadd.f32 %v2503, %v3126
        %v3239 = vadd.f32 %v2504, %v3131
        %v3240 = vadd.f32 %v2505, %v3134
        %v3241 = vadd.f32 %v2506, %v3139
        %v3242 = vadd.f32 %v2507, %v3142
        %v3243 = vadd.f32 %v2508, %v3147
        %v3244 = vadd.f32 %v2509, %v3150
        %v3245 = vadd.f32 %v2510, %v3155
        %v3246 = vadd.f32 %v2511, %v3158
        %v3247 = vadd.f32 %v2512, %v3163
        %v3248 = vadd.f32 %v2513, %v3166
        %v3249 = vadd.f32 %v2514, %v3171
        %v3250 = vadd.f32 %v2515, %v3174
        %v3251 = vadd.f32 %v2516, %v3179
        %v3252 = vadd.f32 %v2517, %v3182
        %v3253 = vadd.f32 %v2518, %v3187
        %v3254 = vadd.f32 %v2519, %v3190
        %v3255 = vadd.f32 %v2520, %v3195
        %v3256 = vadd.f32 %v2521, %v3198
        %v3257 = vadd.f32 %v2522, %v3203
        %v3258 = vadd.f32 %v2523, %v3206
        %v3259 = vadd.f32 %v2524, %v3211
        %v3260 = vadd.f32 %v2525, %v3214
        %v3261 = vadd.f32 %v2526, %v3219
        %v3262 = vadd.f32 %v2527, %v3222
        %v3263 = vadd.f32 %v2528, %v3227
        %v3264 = vadd.f32 %v2529, %v3230
        %v3266 = vshrl.u32 %v2578, 16
        %v3268 = vrot.slane %v3266, 4
        %v3269 = vshll.u32 %v2578, 16
        %v3271 = vrot.slane %v3269, 5
        %v3272 = vor.u32 %v3268, %v3271
        %v3273 = vrot.slane %v3272, 4
        %v3275 = vshll.u32 %v2579, 16
        %v3277 = vrot.slane %v3275, 5
        %v3278 = vsel %vm2586, %v3273, %v3277
        %v3279 = vshrl.u32 %v2579, 16
        %v3281 = vrot.slane %v3279, 4
        %v3282 = vor.u32 %v3281, %v3277
        %v3283 = vrot.slane %v3282, 4
        %v3285 = vshll.u32 %v2580, 16
        %v3287 = vrot.slane %v3285, 5
        %v3288 = vsel %vm2586, %v3283, %v3287
        %s3289 = scalar_lea.vmem %s5, 8
        %v3290 = vld [vmem:[%s3289] sm:$0x3]
        %v3291 = vunpack.c.l.b16 %v3278
        %v3292 = vunpack.c.l.b16 %v3288
        %v3293 = vpack.c.b16 %v3292, %v3291
        %v3295 = vsel %vm1938, %v3293, 0
        %v3298 = vsel %vm1987, %v3290, 0
        %3300 = vmatprep.subr.bf16.mxu0 0
        %3301 = vmatpush1.bf16.msra.mxu0 %v3298
        %3302 = vmatprep.subr.bf16.mxu0 0
        %3303 = vmatpush1.bf16.msra.mxu0 0
        %3304 = vmatprep.subr.bf16.mxu0 0
        %3305 = vmatpush1.bf16.msra.mxu0 0
        %3306 = vmatprep.subr.bf16.mxu0 0
        %3307 = vmatpush1.bf16.msra.mxu0 0
        %3308 = vmatprep.subr.bf16.mxu0 0
        %3309 = vmatpush1.bf16.msra.mxu0 0
        %3310 = vmatprep.subr.bf16.mxu0 0
        %3311 = vmatpush1.bf16.msra.mxu0 0
        %3312 = vmatprep.subr.bf16.mxu0 0
        %3313 = vmatpush1.bf16.msra.mxu0 0
        %3314 = vmatprep.subr.bf16.mxu0 0
        %3315 = vmatpush1.bf16.msra.mxu0 0
        %3316 = vmatprep.subr.bf16.mxu0 0
        %3317 = vmatpush1.bf16.msra.mxu0 0
        %3318 = vmatprep.subr.bf16.mxu0 0
        %3319 = vmatpush1.bf16.msra.mxu0 0
        %3320 = vmatprep.subr.bf16.mxu0 0
        %3321 = vmatpush1.bf16.msra.mxu0 0
        %3322 = vmatprep.subr.bf16.mxu0 0
        %3323 = vmatpush1.bf16.msra.mxu0 0
        %3324 = vmatprep.subr.bf16.mxu0 0
        %3325 = vmatpush1.bf16.msra.mxu0 0
        %3326 = vmatprep.subr.bf16.mxu0 0
        %3327 = vmatpush1.bf16.msra.mxu0 0
        %3328 = vmatprep.subr.bf16.mxu0 0
        %3329 = vmatpush1.bf16.msra.mxu0 0
        %3330 = vmatprep.subr.bf16.mxu0 0
        %3331 = vmatpush1.bf16.msra.mxu0 0
        %3332 = vmatprep.mubr.bf16.mxu0 0
        %3333 = vmatmul.mubr.bf16.gmra.mrb[0].mxu0 %v3025
        %v3334 = vpop.f32.mrb[0].mxu0
        %v3335 = vadd.f32 0.0, %v3334
        %v3336 = vpop.f32.mrb[0].mxu0
        %v3337 = vpop.f32.mrb[0].mxu0
        %v3338 = vadd.f32 0.0, %v3337
        %v3339 = vpop.f32.mrb[0].mxu0
        %3340 = vmatprep.mubr.bf16.mxu0 0
        %3341 = vmatmul.mubr.bf16.gmra.mrb[0].mxu0 %v3028
        %v3342 = vpop.f32.mrb[0].mxu0
        %v3343 = vadd.f32 0.0, %v3342
        %v3344 = vpop.f32.mrb[0].mxu0
        %v3345 = vpop.f32.mrb[0].mxu0
        %v3346 = vadd.f32 0.0, %v3345
        %v3347 = vpop.f32.mrb[0].mxu0
        %3348 = vmatprep.mubr.bf16.mxu0 0
        %3349 = vmatmul.mubr.bf16.gmra.mrb[0].mxu0 %v3031
        %v3350 = vpop.f32.mrb[0].mxu0
        %v3351 = vadd.f32 0.0, %v3350
        %v3352 = vpop.f32.mrb[0].mxu0
        %v3353 = vpop.f32.mrb[0].mxu0
        %v3354 = vadd.f32 0.0, %v3353
        %v3355 = vpop.f32.mrb[0].mxu0
        %3356 = vmatprep.mubr.bf16.mxu0 0
        %3357 = vmatmul.mubr.bf16.gmra.mrb[0].mxu0 %v3034
        %v3358 = vpop.f32.mrb[0].mxu0
        %v3359 = vadd.f32 0.0, %v3358
        %v3360 = vpop.f32.mrb[0].mxu0
        %v3361 = vpop.f32.mrb[0].mxu0
        %v3362 = vadd.f32 0.0, %v3361
        %v3363 = vpop.f32.mrb[0].mxu0
        %3364 = vmatprep.mubr.bf16.mxu0 0
        %3365 = vmatmul.mubr.bf16.gmra.mrb[0].mxu0 %v3037
        %v3366 = vpop.f32.mrb[0].mxu0
        %v3367 = vadd.f32 0.0, %v3366
        %v3368 = vpop.f32.mrb[0].mxu0
        %v3369 = vpop.f32.mrb[0].mxu0
        %v3370 = vadd.f32 0.0, %v3369
        %v3371 = vpop.f32.mrb[0].mxu0
        %3372 = vmatprep.mubr.bf16.mxu0 0
        %3373 = vmatmul.mubr.bf16.gmra.mrb[0].mxu0 %v3040
        %v3374 = vpop.f32.mrb[0].mxu0
        %v3375 = vadd.f32 0.0, %v3374
        %v3376 = vpop.f32.mrb[0].mxu0
        %v3377 = vpop.f32.mrb[0].mxu0
        %v3378 = vadd.f32 0.0, %v3377
        %v3379 = vpop.f32.mrb[0].mxu0
        %3380 = vmatprep.mubr.bf16.mxu0 0
        %3381 = vmatmul.mubr.bf16.gmra.mrb[0].mxu0 %v3043
        %v3382 = vpop.f32.mrb[0].mxu0
        %v3383 = vadd.f32 0.0, %v3382
        %v3384 = vpop.f32.mrb[0].mxu0
        %v3385 = vpop.f32.mrb[0].mxu0
        %v3386 = vadd.f32 0.0, %v3385
        %v3387 = vpop.f32.mrb[0].mxu0
        %3388 = vmatprep.mubr.bf16.mxu0 0
        %3389 = vmatmul.mubr.bf16.gmra.mrb[0].mxu0 %v3046
        %v3390 = vpop.f32.mrb[0].mxu0
        %v3391 = vadd.f32 0.0, %v3390
        %v3392 = vpop.f32.mrb[0].mxu0
        %v3393 = vpop.f32.mrb[0].mxu0
        %v3394 = vadd.f32 0.0, %v3393
        %v3395 = vpop.f32.mrb[0].mxu0
        %3396 = vmatprep.mubr.bf16.mxu0 0
        %3397 = vmatmul.mubr.bf16.gmra.mrb[0].mxu0 %v3049
        %v3398 = vpop.f32.mrb[0].mxu0
        %v3399 = vadd.f32 0.0, %v3398
        %v3400 = vpop.f32.mrb[0].mxu0
        %v3401 = vpop.f32.mrb[0].mxu0
        %v3402 = vadd.f32 0.0, %v3401
        %v3403 = vpop.f32.mrb[0].mxu0
        %3404 = vmatprep.mubr.bf16.mxu0 0
        %3405 = vmatmul.mubr.bf16.gmra.mrb[0].mxu0 %v3052
        %v3406 = vpop.f32.mrb[0].mxu0
        %v3407 = vadd.f32 0.0, %v3406
        %v3408 = vpop.f32.mrb[0].mxu0
        %v3409 = vpop.f32.mrb[0].mxu0
        %v3410 = vadd.f32 0.0, %v3409
        %v3411 = vpop.f32.mrb[0].mxu0
        %3412 = vmatprep.mubr.bf16.mxu0 0
        %3413 = vmatmul.mubr.bf16.gmra.mrb[0].mxu0 %v3055
        %v3414 = vpop.f32.mrb[0].mxu0
        %v3415 = vadd.f32 0.0, %v3414
        %v3416 = vpop.f32.mrb[0].mxu0
        %v3417 = vpop.f32.mrb[0].mxu0
        %v3418 = vadd.f32 0.0, %v3417
        %v3419 = vpop.f32.mrb[0].mxu0
        %3420 = vmatprep.mubr.bf16.mxu0 0
        %3421 = vmatmul.mubr.bf16.gmra.mrb[0].mxu0 %v3058
        %v3422 = vpop.f32.mrb[0].mxu0
        %v3423 = vadd.f32 0.0, %v3422
        %v3424 = vpop.f32.mrb[0].mxu0
        %v3425 = vpop.f32.mrb[0].mxu0
        %v3426 = vadd.f32 0.0, %v3425
        %v3427 = vpop.f32.mrb[0].mxu0
        %3428 = vmatprep.mubr.bf16.mxu0 0
        %3429 = vmatmul.mubr.bf16.gmra.mrb[0].mxu0 %v3061
        %v3430 = vpop.f32.mrb[0].mxu0
        %v3431 = vadd.f32 0.0, %v3430
        %v3432 = vpop.f32.mrb[0].mxu0
        %v3433 = vpop.f32.mrb[0].mxu0
        %v3434 = vadd.f32 0.0, %v3433
        %v3435 = vpop.f32.mrb[0].mxu0
        %3436 = vmatprep.mubr.bf16.mxu0 0
        %3437 = vmatmul.mubr.bf16.gmra.mrb[0].mxu0 %v3064
        %v3438 = vpop.f32.mrb[0].mxu0
        %v3439 = vadd.f32 0.0, %v3438
        %v3440 = vpop.f32.mrb[0].mxu0
        %v3441 = vpop.f32.mrb[0].mxu0
        %v3442 = vadd.f32 0.0, %v3441
        %v3443 = vpop.f32.mrb[0].mxu0
        %3444 = vmatprep.mubr.bf16.mxu0 0
        %3445 = vmatmul.mubr.bf16.gmra.mrb[0].mxu0 %v3067
        %v3446 = vpop.f32.mrb[0].mxu0
        %v3447 = vadd.f32 0.0, %v3446
        %v3448 = vpop.f32.mrb[0].mxu0
        %v3449 = vpop.f32.mrb[0].mxu0
        %v3450 = vadd.f32 0.0, %v3449
        %v3451 = vpop.f32.mrb[0].mxu0
        %3452 = vmatprep.mubr.bf16.mxu0 0
        %3453 = vmatmul.mubr.bf16.gmra.mrb[0].mxu0 %v3295
        %v3454 = vpop.f32.mrb[0].mxu0
        %v3455 = vadd.f32 0.0, %v3454
        %v3456 = vpop.f32.mrb[0].mxu0
        %v3457 = vpop.f32.mrb[0].mxu0
        %v3458 = vadd.f32 0.0, %v3457
        %v3459 = vpop.f32.mrb[0].mxu0
        %3460 = vdwg.mxu0
        %v3461 = vadd.f32 %v3233, %v3335
        %v3462 = vadd.f32 %v3234, %v3338
        %v3463 = vadd.f32 %v3235, %v3343
        %v3464 = vadd.f32 %v3236, %v3346
        %v3465 = vadd.f32 %v3237, %v3351
        %v3466 = vadd.f32 %v3238, %v3354
        %v3467 = vadd.f32 %v3239, %v3359
        %v3468 = vadd.f32 %v3240, %v3362
        %v3469 = vadd.f32 %v3241, %v3367
        %v3470 = vadd.f32 %v3242, %v3370
        %v3471 = vadd.f32 %v3243, %v3375
        %v3472 = vadd.f32 %v3244, %v3378
        %v3473 = vadd.f32 %v3245, %v3383
        %v3474 = vadd.f32 %v3246, %v3386
        %v3475 = vadd.f32 %v3247, %v3391
        %v3476 = vadd.f32 %v3248, %v3394
        %v3477 = vadd.f32 %v3249, %v3399
        %v3478 = vadd.f32 %v3250, %v3402
        %v3479 = vadd.f32 %v3251, %v3407
        %v3480 = vadd.f32 %v3252, %v3410
        %v3481 = vadd.f32 %v3253, %v3415
        %v3482 = vadd.f32 %v3254, %v3418
        %v3483 = vadd.f32 %v3255, %v3423
        %v3484 = vadd.f32 %v3256, %v3426
        %v3485 = vadd.f32 %v3257, %v3431
        %v3486 = vadd.f32 %v3258, %v3434
        %v3487 = vadd.f32 %v3259, %v3439
        %v3488 = vadd.f32 %v3260, %v3442
        %v3489 = vadd.f32 %v3261, %v3447
        %v3490 = vadd.f32 %v3262, %v3450
        %v3491 = vadd.f32 %v3263, %v3455
        %v3492 = vadd.f32 %v3264, %v3458
        %v3494 = vshrl.u32 %v2581, 16
        %v3496 = vrot.slane %v3494, 4
        %v3497 = vshll.u32 %v2581, 16
        %v3499 = vrot.slane %v3497, 5
        %v3500 = vor.u32 %v3496, %v3499
        %v3501 = vrot.slane %v3500, 4
        %v3503 = vshll.u32 %v2582, 16
        %v3505 = vrot.slane %v3503, 5
        %v3506 = vsel %vm2586, %v3501, %v3505
        %v3507 = vshrl.u32 %v2582, 16
        %v3509 = vrot.slane %v3507, 4
        %v3510 = vor.u32 %v3509, %v3505
        %v3511 = vrot.slane %v3510, 4
        %v3513 = vshll.u32 %v2583, 16
        %v3515 = vrot.slane %v3513, 5
        %v3516 = vsel %vm2586, %v3511, %v3515
        %s3517 = scalar_lea.vmem %s5, 14
        %v3518 = vld [vmem:[%s3517] sm:$0x3]
        %v3519 = vunpack.c.l.b16 %v3506
        %v3520 = vunpack.c.l.b16 %v3516
        %v3521 = vpack.c.b16 %v3520, %v3519
        %v3523 = vsel %vm1938, %v3521, 0
        %v3526 = vsel %vm1987, %v3518, 0
        %3528 = vmatprep.subr.bf16.mxu0 0
        %3529 = vmatpush1.bf16.msra.mxu0 %v3526
        %3530 = vmatprep.subr.bf16.mxu0 0
        %3531 = vmatpush1.bf16.msra.mxu0 0
        %3532 = vmatprep.subr.bf16.mxu0 0
        %3533 = vmatpush1.bf16.msra.mxu0 0
        %3534 = vmatprep.subr.bf16.mxu0 0
        %3535 = vmatpush1.bf16.msra.mxu0 0
        %3536 = vmatprep.subr.bf16.mxu0 0
        %3537 = vmatpush1.bf16.msra.mxu0 0
        %3538 = vmatprep.subr.bf16.mxu0 0
        %3539 = vmatpush1.bf16.msra.mxu0 0
        %3540 = vmatprep.subr.bf16.mxu0 0
        %3541 = vmatpush1.bf16.msra.mxu0 0
        %3542 = vmatprep.subr.bf16.mxu0 0
        %3543 = vmatpush1.bf16.msra.mxu0 0
        %3544 = vmatprep.subr.bf16.mxu0 0
        %3545 = vmatpush1.bf16.msra.mxu0 0
        %3546 = vmatprep.subr.bf16.mxu0 0
        %3547 = vmatpush1.bf16.msra.mxu0 0
        %3548 = vmatprep.subr.bf16.mxu0 0
        %3549 = vmatpush1.bf16.msra.mxu0 0
        %3550 = vmatprep.subr.bf16.mxu0 0
        %3551 = vmatpush1.bf16.msra.mxu0 0
        %3552 = vmatprep.subr.bf16.mxu0 0
        %3553 = vmatpush1.bf16.msra.mxu0 0
        %3554 = vmatprep.subr.bf16.mxu0 0
        %3555 = vmatpush1.bf16.msra.mxu0 0
        %3556 = vmatprep.subr.bf16.mxu0 0
        %3557 = vmatpush1.bf16.msra.mxu0 0
        %3558 = vmatprep.subr.bf16.mxu0 0
        %3559 = vmatpush1.bf16.msra.mxu0 0
        %3560 = vmatprep.mubr.bf16.mxu0 0
        %3561 = vmatmul.mubr.bf16.gmra.mrb[0].mxu0 %v3028
        %v3562 = vpop.f32.mrb[0].mxu0
        %v3563 = vadd.f32 0.0, %v3562
        %v3564 = vpop.f32.mrb[0].mxu0
        %v3565 = vpop.f32.mrb[0].mxu0
        %v3566 = vadd.f32 0.0, %v3565
        %v3567 = vpop.f32.mrb[0].mxu0
        %3568 = vmatprep.mubr.bf16.mxu0 0
        %3569 = vmatmul.mubr.bf16.gmra.mrb[0].mxu0 %v3031
        %v3570 = vpop.f32.mrb[0].mxu0
        %v3571 = vadd.f32 0.0, %v3570
        %v3572 = vpop.f32.mrb[0].mxu0
        %v3573 = vpop.f32.mrb[0].mxu0
        %v3574 = vadd.f32 0.0, %v3573
        %v3575 = vpop.f32.mrb[0].mxu0
        %3576 = vmatprep.mubr.bf16.mxu0 0
        %3577 = vmatmul.mubr.bf16.gmra.mrb[0].mxu0 %v3034
        %v3578 = vpop.f32.mrb[0].mxu0
        %v3579 = vadd.f32 0.0, %v3578
        %v3580 = vpop.f32.mrb[0].mxu0
        %v3581 = vpop.f32.mrb[0].mxu0
        %v3582 = vadd.f32 0.0, %v3581
        %v3583 = vpop.f32.mrb[0].mxu0
        %3584 = vmatprep.mubr.bf16.mxu0 0
        %3585 = vmatmul.mubr.bf16.gmra.mrb[0].mxu0 %v3037
        %v3586 = vpop.f32.mrb[0].mxu0
        %v3587 = vadd.f32 0.0, %v3586
        %v3588 = vpop.f32.mrb[0].mxu0
        %v3589 = vpop.f32.mrb[0].mxu0
        %v3590 = vadd.f32 0.0, %v3589
        %v3591 = vpop.f32.mrb[0].mxu0
        %3592 = vmatprep.mubr.bf16.mxu0 0
        %3593 = vmatmul.mubr.bf16.gmra.mrb[0].mxu0 %v3040
        %v3594 = vpop.f32.mrb[0].mxu0
        %v3595 = vadd.f32 0.0, %v3594
        %v3596 = vpop.f32.mrb[0].mxu0
        %v3597 = vpop.f32.mrb[0].mxu0
        %v3598 = vadd.f32 0.0, %v3597
        %v3599 = vpop.f32.mrb[0].mxu0
        %3600 = vmatprep.mubr.bf16.mxu0 0
        %3601 = vmatmul.mubr.bf16.gmra.mrb[0].mxu0 %v3043
        %v3602 = vpop.f32.mrb[0].mxu0
        %v3603 = vadd.f32 0.0, %v3602
        %v3604 = vpop.f32.mrb[0].mxu0
        %v3605 = vpop.f32.mrb[0].mxu0
        %v3606 = vadd.f32 0.0, %v3605
        %v3607 = vpop.f32.mrb[0].mxu0
        %3608 = vmatprep.mubr.bf16.mxu0 0
        %3609 = vmatmul.mubr.bf16.gmra.mrb[0].mxu0 %v3046
        %v3610 = vpop.f32.mrb[0].mxu0
        %v3611 = vadd.f32 0.0, %v3610
        %v3612 = vpop.f32.mrb[0].mxu0
        %v3613 = vpop.f32.mrb[0].mxu0
        %v3614 = vadd.f32 0.0, %v3613
        %v3615 = vpop.f32.mrb[0].mxu0
        %3616 = vmatprep.mubr.bf16.mxu0 0
        %3617 = vmatmul.mubr.bf16.gmra.mrb[0].mxu0 %v3049
        %v3618 = vpop.f32.mrb[0].mxu0
        %v3619 = vadd.f32 0.0, %v3618
        %v3620 = vpop.f32.mrb[0].mxu0
        %v3621 = vpop.f32.mrb[0].mxu0
        %v3622 = vadd.f32 0.0, %v3621
        %v3623 = vpop.f32.mrb[0].mxu0
        %3624 = vmatprep.mubr.bf16.mxu0 0
        %3625 = vmatmul.mubr.bf16.gmra.mrb[0].mxu0 %v3052
        %v3626 = vpop.f32.mrb[0].mxu0
        %v3627 = vadd.f32 0.0, %v3626
        %v3628 = vpop.f32.mrb[0].mxu0
        %v3629 = vpop.f32.mrb[0].mxu0
        %v3630 = vadd.f32 0.0, %v3629
        %v3631 = vpop.f32.mrb[0].mxu0
        %3632 = vmatprep.mubr.bf16.mxu0 0
        %3633 = vmatmul.mubr.bf16.gmra.mrb[0].mxu0 %v3055
        %v3634 = vpop.f32.mrb[0].mxu0
        %v3635 = vadd.f32 0.0, %v3634
        %v3636 = vpop.f32.mrb[0].mxu0
        %v3637 = vpop.f32.mrb[0].mxu0
        %v3638 = vadd.f32 0.0, %v3637
        %v3639 = vpop.f32.mrb[0].mxu0
        %3640 = vmatprep.mubr.bf16.mxu0 0
        %3641 = vmatmul.mubr.bf16.gmra.mrb[0].mxu0 %v3058
        %v3642 = vpop.f32.mrb[0].mxu0
        %v3643 = vadd.f32 0.0, %v3642
        %v3644 = vpop.f32.mrb[0].mxu0
        %v3645 = vpop.f32.mrb[0].mxu0
        %v3646 = vadd.f32 0.0, %v3645
        %v3647 = vpop.f32.mrb[0].mxu0
        %3648 = vmatprep.mubr.bf16.mxu0 0
        %3649 = vmatmul.mubr.bf16.gmra.mrb[0].mxu0 %v3061
        %v3650 = vpop.f32.mrb[0].mxu0
        %v3651 = vadd.f32 0.0, %v3650
        %v3652 = vpop.f32.mrb[0].mxu0
        %v3653 = vpop.f32.mrb[0].mxu0
        %v3654 = vadd.f32 0.0, %v3653
        %v3655 = vpop.f32.mrb[0].mxu0
        %3656 = vmatprep.mubr.bf16.mxu0 0
        %3657 = vmatmul.mubr.bf16.gmra.mrb[0].mxu0 %v3064
        %v3658 = vpop.f32.mrb[0].mxu0
        %v3659 = vadd.f32 0.0, %v3658
        %v3660 = vpop.f32.mrb[0].mxu0
        %v3661 = vpop.f32.mrb[0].mxu0
        %v3662 = vadd.f32 0.0, %v3661
        %v3663 = vpop.f32.mrb[0].mxu0
        %3664 = vmatprep.mubr.bf16.mxu0 0
        %3665 = vmatmul.mubr.bf16.gmra.mrb[0].mxu0 %v3067
        %v3666 = vpop.f32.mrb[0].mxu0
        %v3667 = vadd.f32 0.0, %v3666
        %v3668 = vpop.f32.mrb[0].mxu0
        %v3669 = vpop.f32.mrb[0].mxu0
        %v3670 = vadd.f32 0.0, %v3669
        %v3671 = vpop.f32.mrb[0].mxu0
        %3672 = vmatprep.mubr.bf16.mxu0 0
        %3673 = vmatmul.mubr.bf16.gmra.mrb[0].mxu0 %v3295
        %v3674 = vpop.f32.mrb[0].mxu0
        %v3675 = vadd.f32 0.0, %v3674
        %v3676 = vpop.f32.mrb[0].mxu0
        %v3677 = vpop.f32.mrb[0].mxu0
        %v3678 = vadd.f32 0.0, %v3677
        %v3679 = vpop.f32.mrb[0].mxu0
        %3680 = vmatprep.mubr.bf16.mxu0 0
        %3681 = vmatmul.mubr.bf16.gmra.mrb[0].mxu0 %v3523
        %v3682 = vpop.f32.mrb[0].mxu0
        %v3683 = vadd.f32 0.0, %v3682
        %v3684 = vpop.f32.mrb[0].mxu0
        %v3685 = vpop.f32.mrb[0].mxu0
        %v3686 = vadd.f32 0.0, %v3685
        %v3687 = vpop.f32.mrb[0].mxu0
        %3688 = vdwg.mxu0
        %v3689 = vadd.f32 %v3461, %v3563
        %v3690 = vadd.f32 %v3462, %v3566
        %v3691 = vadd.f32 %v3463, %v3571
        %v3692 = vadd.f32 %v3464, %v3574
        %v3693 = vadd.f32 %v3465, %v3579
        %v3694 = vadd.f32 %v3466, %v3582
        %v3695 = vadd.f32 %v3467, %v3587
        %v3696 = vadd.f32 %v3468, %v3590
        %v3697 = vadd.f32 %v3469, %v3595
        %v3698 = vadd.f32 %v3470, %v3598
        %v3699 = vadd.f32 %v3471, %v3603
        %v3700 = vadd.f32 %v3472, %v3606
        %v3701 = vadd.f32 %v3473, %v3611
        %v3702 = vadd.f32 %v3474, %v3614
        %v3703 = vadd.f32 %v3475, %v3619
        %v3704 = vadd.f32 %v3476, %v3622
        %v3705 = vadd.f32 %v3477, %v3627
        %v3706 = vadd.f32 %v3478, %v3630
        %v3707 = vadd.f32 %v3479, %v3635
        %v3708 = vadd.f32 %v3480, %v3638
        %v3709 = vadd.f32 %v3481, %v3643
        %v3710 = vadd.f32 %v3482, %v3646
        %v3711 = vadd.f32 %v3483, %v3651
        %v3712 = vadd.f32 %v3484, %v3654
        %v3713 = vadd.f32 %v3485, %v3659
        %v3714 = vadd.f32 %v3486, %v3662
        %v3715 = vadd.f32 %v3487, %v3667
        %v3716 = vadd.f32 %v3488, %v3670
        %v3717 = vadd.f32 %v3489, %v3675
        %v3718 = vadd.f32 %v3490, %v3678
        %v3719 = vadd.f32 %v3491, %v3683
        %v3720 = vadd.f32 %v3492, %v3686
        %v3721 = vld [vmem:[#allocation2] sm:$0xe]
        %v3722 = vld [vmem:[#allocation2 + $0xc] sm:$0xe]
        %v3723 = vld [vmem:[#allocation2 + $0x18] sm:$0xe]
        %v3724 = vld [vmem:[#allocation2 + $0x24] sm:$0xe]
        %v3725 = vld [vmem:[#allocation2 + $0x30] sm:$0xe]
        %v3726 = vld [vmem:[#allocation2 + $0x3c] sm:$0xe]
        %v3727 = vld [vmem:[#allocation2 + $0x48] sm:$0xe]
        %v3728 = vld [vmem:[#allocation2 + $0x54] sm:$0xe]
        %v3729 = vld [vmem:[#allocation2 + $0x60] sm:$0xe]
        %v3730 = vld [vmem:[#allocation2 + $0x6c] sm:$0xe]
        %v3731 = vld [vmem:[#allocation2 + $0x78] sm:$0xe]
        %v3732 = vld [vmem:[#allocation2 + $0x84] sm:$0xe]
        %v3733 = vld [vmem:[#allocation2 + $0x90] sm:$0xe]
        %v3734 = vld [vmem:[#allocation2 + $0x9c] sm:$0xe]
        %v3735 = vld [vmem:[#allocation2 + $0xa8] sm:$0xe]
        %v3736 = vld [vmem:[#allocation2 + $0xb4] sm:$0xe]
        %v3737 = vld [vmem:[#allocation2 + $0xc0] sm:$0xe]
        %v3738 = vld [vmem:[#allocation2 + $0xcc] sm:$0xe]
        %vm3787 = vcmask 1042432
        %vm3788 = vcmask 1046532
        %vm3789 = vmor %vm3787, %vm3788
        %v3790 = vrot.slane %v3721, 5
        %v3791 = vrot.slane %v3790, 4
        %v3792 = vrot.slane %v2531, 5
        %v3793 = vsel %vm3789, %v3791, %v3792
        %v3794 = vrot.slane %v3792, 4
        %v3795 = vrot.slane %v2532, 5
        %v3796 = vsel %vm3789, %v3794, %v3795
        %v3797 = vrot.slane %v3722, 5
        %v3798 = vrot.slane %v3797, 4
        %v3799 = vrot.slane %v2534, 5
        %v3800 = vsel %vm3789, %v3798, %v3799
        %v3801 = vrot.slane %v3799, 4
        %v3802 = vrot.slane %v2535, 5
        %v3803 = vsel %vm3789, %v3801, %v3802
        %v3804 = vrot.slane %v3723, 5
        %v3805 = vrot.slane %v3804, 4
        %v3806 = vrot.slane %v2537, 5
        %v3807 = vsel %vm3789, %v3805, %v3806
        %v3808 = vrot.slane %v3806, 4
        %v3809 = vrot.slane %v2538, 5
        %v3810 = vsel %vm3789, %v3808, %v3809
        %v3811 = vrot.slane %v3724, 5
        %v3812 = vrot.slane %v3811, 4
        %v3813 = vrot.slane %v2540, 5
        %v3814 = vsel %vm3789, %v3812, %v3813
        %v3815 = vrot.slane %v3813, 4
        %v3816 = vrot.slane %v2541, 5
        %v3817 = vsel %vm3789, %v3815, %v3816
        %v3818 = vrot.slane %v3725, 5
        %v3819 = vrot.slane %v3818, 4
        %v3820 = vrot.slane %v2543, 5
        %v3821 = vsel %vm3789, %v3819, %v3820
        %v3822 = vrot.slane %v3820, 4
        %v3823 = vrot.slane %v2544, 5
        %v3824 = vsel %vm3789, %v3822, %v3823
        %v3825 = vrot.slane %v3726, 5
        %v3826 = vrot.slane %v3825, 4
        %v3827 = vrot.slane %v2546, 5
        %v3828 = vsel %vm3789, %v3826, %v3827
        %v3829 = vrot.slane %v3827, 4
        %v3830 = vrot.slane %v2547, 5
        %v3831 = vsel %vm3789, %v3829, %v3830
        %v3832 = vrot.slane %v3727, 5
        %v3833 = vrot.slane %v3832, 4
        %v3834 = vrot.slane %v2549, 5
        %v3835 = vsel %vm3789, %v3833, %v3834
        %v3836 = vrot.slane %v3834, 4
        %v3837 = vrot.slane %v2550, 5
        %v3838 = vsel %vm3789, %v3836, %v3837
        %v3839 = vrot.slane %v3728, 5
        %v3840 = vrot.slane %v3839, 4
        %v3841 = vrot.slane %v2552, 5
        %v3842 = vsel %vm3789, %v3840, %v3841
        %v3843 = vrot.slane %v3841, 4
        %v3844 = vrot.slane %v2553, 5
        %v3845 = vsel %vm3789, %v3843, %v3844
        %v3846 = vrot.slane %v3729, 5
        %v3847 = vrot.slane %v3846, 4
        %v3848 = vrot.slane %v2555, 5
        %v3849 = vsel %vm3789, %v3847, %v3848
        %v3850 = vrot.slane %v3848, 4
        %v3851 = vrot.slane %v2556, 5
        %v3852 = vsel %vm3789, %v3850, %v3851
        %v3853 = vrot.slane %v3730, 5
        %v3854 = vrot.slane %v3853, 4
        %v3855 = vrot.slane %v2558, 5
        %v3856 = vsel %vm3789, %v3854, %v3855
        %v3857 = vrot.slane %v3855, 4
        %v3858 = vrot.slane %v2559, 5
        %v3859 = vsel %vm3789, %v3857, %v3858
        %v3860 = vrot.slane %v3731, 5
        %v3861 = vrot.slane %v3860, 4
        %v3862 = vrot.slane %v2561, 5
        %v3863 = vsel %vm3789, %v3861, %v3862
        %v3864 = vrot.slane %v3862, 4
        %v3865 = vrot.slane %v2562, 5
        %v3866 = vsel %vm3789, %v3864, %v3865
        %v3867 = vrot.slane %v3732, 5
        %v3868 = vrot.slane %v3867, 4
        %v3869 = vrot.slane %v2564, 5
        %v3870 = vsel %vm3789, %v3868, %v3869
        %v3871 = vrot.slane %v3869, 4
        %v3872 = vrot.slane %v2565, 5
        %v3873 = vsel %vm3789, %v3871, %v3872
        %v3874 = vrot.slane %v3733, 5
        %v3875 = vrot.slane %v3874, 4
        %v3876 = vrot.slane %v2567, 5
        %v3877 = vsel %vm3789, %v3875, %v3876
        %v3878 = vrot.slane %v3876, 4
        %v3879 = vrot.slane %v2568, 5
        %v3880 = vsel %vm3789, %v3878, %v3879
        %v3881 = vrot.slane %v3734, 5
        %v3882 = vrot.slane %v3881, 4
        %v3883 = vrot.slane %v2570, 5
        %v3884 = vsel %vm3789, %v3882, %v3883
        %v3885 = vrot.slane %v3883, 4
        %v3886 = vrot.slane %v2571, 5
        %v3887 = vsel %vm3789, %v3885, %v3886
        %v3888 = vrot.slane %v3735, 5
        %v3889 = vrot.slane %v3888, 4
        %v3890 = vrot.slane %v2573, 5
        %v3891 = vsel %vm3789, %v3889, %v3890
        %v3892 = vrot.slane %v3890, 4
        %v3893 = vrot.slane %v2574, 5
        %v3894 = vsel %vm3789, %v3892, %v3893
        %v3895 = vrot.slane %v3736, 5
        %v3896 = vrot.slane %v3895, 4
        %v3897 = vrot.slane %v2576, 5
        %v3898 = vsel %vm3789, %v3896, %v3897
        %v3899 = vrot.slane %v3897, 4
        %v3900 = vrot.slane %v2577, 5
        %v3901 = vsel %vm3789, %v3899, %v3900
        %s3902 = scalar_lea.vmem %s5, 4
        %v3903 = vld [vmem:[%s3902] sm:$0x3]
        %v3904 = vunpack.c.l.b16 %v3793
        %v3905 = vunpack.c.l.b16 %v3796
        %v3906 = vunpack.c.l.b16 %v3800
        %v3907 = vunpack.c.l.b16 %v3803
        %v3908 = vunpack.c.l.b16 %v3807
        %v3909 = vunpack.c.l.b16 %v3810
        %v3910 = vunpack.c.l.b16 %v3814
        %v3911 = vunpack.c.l.b16 %v3817
        %v3912 = vunpack.c.l.b16 %v3821
        %v3913 = vunpack.c.l.b16 %v3824
        %v3914 = vunpack.c.l.b16 %v3828
        %v3915 = vunpack.c.l.b16 %v3831
        %v3916 = vunpack.c.l.b16 %v3835
        %v3917 = vunpack.c.l.b16 %v3838
        %v3918 = vunpack.c.l.b16 %v3842
        %v3919 = vunpack.c.l.b16 %v3845
        %v3920 = vunpack.c.l.b16 %v3849
        %v3921 = vunpack.c.l.b16 %v3852
        %v3922 = vunpack.c.l.b16 %v3856
        %v3923 = vunpack.c.l.b16 %v3859
        %v3924 = vunpack.c.l.b16 %v3863
        %v3925 = vunpack.c.l.b16 %v3866
        %v3926 = vunpack.c.l.b16 %v3870
        %v3927 = vunpack.c.l.b16 %v3873
        %v3928 = vunpack.c.l.b16 %v3877
        %v3929 = vunpack.c.l.b16 %v3880
        %v3930 = vunpack.c.l.b16 %v3884
        %v3931 = vunpack.c.l.b16 %v3887
        %v3932 = vunpack.c.l.b16 %v3891
        %v3933 = vunpack.c.l.b16 %v3894
        %v3934 = vunpack.c.l.b16 %v3898
        %v3935 = vunpack.c.l.b16 %v3901
        %v3936 = vpack.c.b16 %v3905, %v3904
        %v3937 = vpack.c.b16 %v3907, %v3906
        %v3938 = vpack.c.b16 %v3909, %v3908
        %v3939 = vpack.c.b16 %v3911, %v3910
        %v3940 = vpack.c.b16 %v3913, %v3912
        %v3941 = vpack.c.b16 %v3915, %v3914
        %v3942 = vpack.c.b16 %v3917, %v3916
        %v3943 = vpack.c.b16 %v3919, %v3918
        %v3944 = vpack.c.b16 %v3921, %v3920
        %v3945 = vpack.c.b16 %v3923, %v3922
        %v3946 = vpack.c.b16 %v3925, %v3924
        %v3947 = vpack.c.b16 %v3927, %v3926
        %v3948 = vpack.c.b16 %v3929, %v3928
        %v3949 = vpack.c.b16 %v3931, %v3930
        %v3950 = vpack.c.b16 %v3933, %v3932
        %v3951 = vpack.c.b16 %v3935, %v3934
        %v3953 = vsel %vm1938, %v3936, 0
        %v3956 = vsel %vm1938, %v3937, 0
        %v3959 = vsel %vm1938, %v3938, 0
        %v3962 = vsel %vm1938, %v3939, 0
        %v3965 = vsel %vm1938, %v3940, 0
        %v3968 = vsel %vm1938, %v3941, 0
        %v3971 = vsel %vm1938, %v3942, 0
        %v3974 = vsel %vm1938, %v3943, 0
        %v3977 = vsel %vm1938, %v3944, 0
        %v3980 = vsel %vm1938, %v3945, 0
        %v3983 = vsel %vm1938, %v3946, 0
        %v3986 = vsel %vm1938, %v3947, 0
        %v3989 = vsel %vm1938, %v3948, 0
        %v3992 = vsel %vm1938, %v3949, 0
        %v3995 = vsel %vm1938, %v3950, 0
        %v3998 = vsel %vm1938, %v3951, 0
        %v4001 = vsel %vm1987, %v3903, 0
        %4003 = vmatprep.subr.bf16.mxu0 0
        %4004 = vmatpush1.bf16.msra.mxu0 %v4001
        %4005 = vmatprep.subr.bf16.mxu0 0
        %4006 = vmatpush1.bf16.msra.mxu0 0
        %4007 = vmatprep.subr.bf16.mxu0 0
        %4008 = vmatpush1.bf16.msra.mxu0 0
        %4009 = vmatprep.subr.bf16.mxu0 0
        %4010 = vmatpush1.bf16.msra.mxu0 0
        %4011 = vmatprep.subr.bf16.mxu0 0
        %4012 = vmatpush1.bf16.msra.mxu0 0
        %4013 = vmatprep.subr.bf16.mxu0 0
        %4014 = vmatpush1.bf16.msra.mxu0 0
        %4015 = vmatprep.subr.bf16.mxu0 0
        %4016 = vmatpush1.bf16.msra.mxu0 0
        %4017 = vmatprep.subr.bf16.mxu0 0
        %4018 = vmatpush1.bf16.msra.mxu0 0
        %4019 = vmatprep.subr.bf16.mxu0 0
        %4020 = vmatpush1.bf16.msra.mxu0 0
        %4021 = vmatprep.subr.bf16.mxu0 0
        %4022 = vmatpush1.bf16.msra.mxu0 0
        %4023 = vmatprep.subr.bf16.mxu0 0
        %4024 = vmatpush1.bf16.msra.mxu0 0
        %4025 = vmatprep.subr.bf16.mxu0 0
        %4026 = vmatpush1.bf16.msra.mxu0 0
        %4027 = vmatprep.subr.bf16.mxu0 0
        %4028 = vmatpush1.bf16.msra.mxu0 0
        %4029 = vmatprep.subr.bf16.mxu0 0
        %4030 = vmatpush1.bf16.msra.mxu0 0
        %4031 = vmatprep.subr.bf16.mxu0 0
        %4032 = vmatpush1.bf16.msra.mxu0 0
        %4033 = vmatprep.subr.bf16.mxu0 0
        %4034 = vmatpush1.bf16.msra.mxu0 0
        %4035 = vmatprep.mubr.bf16.mxu0 0
        %4036 = vmatmul.mubr.bf16.gmra.mrb[0].mxu0 %v3953
        %v4037 = vpop.f32.mrb[0].mxu0
        %v4038 = vadd.f32 0.0, %v4037
        %v4039 = vpop.f32.mrb[0].mxu0
        %v4040 = vpop.f32.mrb[0].mxu0
        %v4041 = vadd.f32 0.0, %v4040
        %v4042 = vpop.f32.mrb[0].mxu0
        %4043 = vmatprep.mubr.bf16.mxu0 0
        %4044 = vmatmul.mubr.bf16.gmra.mrb[0].mxu0 %v3956
        %v4045 = vpop.f32.mrb[0].mxu0
        %v4046 = vadd.f32 0.0, %v4045
        %v4047 = vpop.f32.mrb[0].mxu0
        %v4048 = vpop.f32.mrb[0].mxu0
        %v4049 = vadd.f32 0.0, %v4048
        %v4050 = vpop.f32.mrb[0].mxu0
        %4051 = vmatprep.mubr.bf16.mxu0 0
        %4052 = vmatmul.mubr.bf16.gmra.mrb[0].mxu0 %v3959
        %v4053 = vpop.f32.mrb[0].mxu0
        %v4054 = vadd.f32 0.0, %v4053
        %v4055 = vpop.f32.mrb[0].mxu0
        %v4056 = vpop.f32.mrb[0].mxu0
        %v4057 = vadd.f32 0.0, %v4056
        %v4058 = vpop.f32.mrb[0].mxu0
        %4059 = vmatprep.mubr.bf16.mxu0 0
        %4060 = vmatmul.mubr.bf16.gmra.mrb[0].mxu0 %v3962
        %v4061 = vpop.f32.mrb[0].mxu0
        %v4062 = vadd.f32 0.0, %v4061
        %v4063 = vpop.f32.mrb[0].mxu0
        %v4064 = vpop.f32.mrb[0].mxu0
        %v4065 = vadd.f32 0.0, %v4064
        %v4066 = vpop.f32.mrb[0].mxu0
        %4067 = vmatprep.mubr.bf16.mxu0 0
        %4068 = vmatmul.mubr.bf16.gmra.mrb[0].mxu0 %v3965
        %v4069 = vpop.f32.mrb[0].mxu0
        %v4070 = vadd.f32 0.0, %v4069
        %v4071 = vpop.f32.mrb[0].mxu0
        %v4072 = vpop.f32.mrb[0].mxu0
        %v4073 = vadd.f32 0.0, %v4072
        %v4074 = vpop.f32.mrb[0].mxu0
        %4075 = vmatprep.mubr.bf16.mxu0 0
        %4076 = vmatmul.mubr.bf16.gmra.mrb[0].mxu0 %v3968
        %v4077 = vpop.f32.mrb[0].mxu0
        %v4078 = vadd.f32 0.0, %v4077
        %v4079 = vpop.f32.mrb[0].mxu0
        %v4080 = vpop.f32.mrb[0].mxu0
        %v4081 = vadd.f32 0.0, %v4080
        %v4082 = vpop.f32.mrb[0].mxu0
        %4083 = vmatprep.mubr.bf16.mxu0 0
        %4084 = vmatmul.mubr.bf16.gmra.mrb[0].mxu0 %v3971
        %v4085 = vpop.f32.mrb[0].mxu0
        %v4086 = vadd.f32 0.0, %v4085
        %v4087 = vpop.f32.mrb[0].mxu0
        %v4088 = vpop.f32.mrb[0].mxu0
        %v4089 = vadd.f32 0.0, %v4088
        %v4090 = vpop.f32.mrb[0].mxu0
        %4091 = vmatprep.mubr.bf16.mxu0 0
        %4092 = vmatmul.mubr.bf16.gmra.mrb[0].mxu0 %v3974
        %v4093 = vpop.f32.mrb[0].mxu0
        %v4094 = vadd.f32 0.0, %v4093
        %v4095 = vpop.f32.mrb[0].mxu0
        %v4096 = vpop.f32.mrb[0].mxu0
        %v4097 = vadd.f32 0.0, %v4096
        %v4098 = vpop.f32.mrb[0].mxu0
        %4099 = vmatprep.mubr.bf16.mxu0 0
        %4100 = vmatmul.mubr.bf16.gmra.mrb[0].mxu0 %v3977
        %v4101 = vpop.f32.mrb[0].mxu0
        %v4102 = vadd.f32 0.0, %v4101
        %v4103 = vpop.f32.mrb[0].mxu0
        %v4104 = vpop.f32.mrb[0].mxu0
        %v4105 = vadd.f32 0.0, %v4104
        %v4106 = vpop.f32.mrb[0].mxu0
        %4107 = vmatprep.mubr.bf16.mxu0 0
        %4108 = vmatmul.mubr.bf16.gmra.mrb[0].mxu0 %v3980
        %v4109 = vpop.f32.mrb[0].mxu0
        %v4110 = vadd.f32 0.0, %v4109
        %v4111 = vpop.f32.mrb[0].mxu0
        %v4112 = vpop.f32.mrb[0].mxu0
        %v4113 = vadd.f32 0.0, %v4112
        %v4114 = vpop.f32.mrb[0].mxu0
        %4115 = vmatprep.mubr.bf16.mxu0 0
        %4116 = vmatmul.mubr.bf16.gmra.mrb[0].mxu0 %v3983
        %v4117 = vpop.f32.mrb[0].mxu0
        %v4118 = vadd.f32 0.0, %v4117
        %v4119 = vpop.f32.mrb[0].mxu0
        %v4120 = vpop.f32.mrb[0].mxu0
        %v4121 = vadd.f32 0.0, %v4120
        %v4122 = vpop.f32.mrb[0].mxu0
        %4123 = vmatprep.mubr.bf16.mxu0 0
        %4124 = vmatmul.mubr.bf16.gmra.mrb[0].mxu0 %v3986
        %v4125 = vpop.f32.mrb[0].mxu0
        %v4126 = vadd.f32 0.0, %v4125
        %v4127 = vpop.f32.mrb[0].mxu0
        %v4128 = vpop.f32.mrb[0].mxu0
        %v4129 = vadd.f32 0.0, %v4128
        %v4130 = vpop.f32.mrb[0].mxu0
        %4131 = vmatprep.mubr.bf16.mxu0 0
        %4132 = vmatmul.mubr.bf16.gmra.mrb[0].mxu0 %v3989
        %v4133 = vpop.f32.mrb[0].mxu0
        %v4134 = vadd.f32 0.0, %v4133
        %v4135 = vpop.f32.mrb[0].mxu0
        %v4136 = vpop.f32.mrb[0].mxu0
        %v4137 = vadd.f32 0.0, %v4136
        %v4138 = vpop.f32.mrb[0].mxu0
        %4139 = vmatprep.mubr.bf16.mxu0 0
        %4140 = vmatmul.mubr.bf16.gmra.mrb[0].mxu0 %v3992
        %v4141 = vpop.f32.mrb[0].mxu0
        %v4142 = vadd.f32 0.0, %v4141
        %v4143 = vpop.f32.mrb[0].mxu0
        %v4144 = vpop.f32.mrb[0].mxu0
        %v4145 = vadd.f32 0.0, %v4144
        %v4146 = vpop.f32.mrb[0].mxu0
        %4147 = vmatprep.mubr.bf16.mxu0 0
        %4148 = vmatmul.mubr.bf16.gmra.mrb[0].mxu0 %v3995
        %v4149 = vpop.f32.mrb[0].mxu0
        %v4150 = vadd.f32 0.0, %v4149
        %v4151 = vpop.f32.mrb[0].mxu0
        %v4152 = vpop.f32.mrb[0].mxu0
        %v4153 = vadd.f32 0.0, %v4152
        %v4154 = vpop.f32.mrb[0].mxu0
        %4155 = vmatprep.mubr.bf16.mxu0 0
        %4156 = vmatmul.mubr.bf16.gmra.mrb[0].mxu0 %v3998
        %v4157 = vpop.f32.mrb[0].mxu0
        %v4158 = vadd.f32 0.0, %v4157
        %v4159 = vpop.f32.mrb[0].mxu0
        %v4160 = vpop.f32.mrb[0].mxu0
        %v4161 = vadd.f32 0.0, %v4160
        %v4162 = vpop.f32.mrb[0].mxu0
        %4163 = vdwg.mxu0
        %v4164 = vadd.f32 %v3689, %v4038
        %v4165 = vadd.f32 %v3690, %v4041
        %v4166 = vadd.f32 %v3691, %v4046
        %v4167 = vadd.f32 %v3692, %v4049
        %v4168 = vadd.f32 %v3693, %v4054
        %v4169 = vadd.f32 %v3694, %v4057
        %v4170 = vadd.f32 %v3695, %v4062
        %v4171 = vadd.f32 %v3696, %v4065
        %v4172 = vadd.f32 %v3697, %v4070
        %v4173 = vadd.f32 %v3698, %v4073
        %v4174 = vadd.f32 %v3699, %v4078
        %v4175 = vadd.f32 %v3700, %v4081
        %v4176 = vadd.f32 %v3701, %v4086
        %v4177 = vadd.f32 %v3702, %v4089
        %v4178 = vadd.f32 %v3703, %v4094
        %v4179 = vadd.f32 %v3704, %v4097
        %v4180 = vadd.f32 %v3705, %v4102
        %v4181 = vadd.f32 %v3706, %v4105
        %v4182 = vadd.f32 %v3707, %v4110
        %v4183 = vadd.f32 %v3708, %v4113
        %v4184 = vadd.f32 %v3709, %v4118
        %v4185 = vadd.f32 %v3710, %v4121
        %v4186 = vadd.f32 %v3711, %v4126
        %v4187 = vadd.f32 %v3712, %v4129
        %v4188 = vadd.f32 %v3713, %v4134
        %v4189 = vadd.f32 %v3714, %v4137
        %v4190 = vadd.f32 %v3715, %v4142
        %v4191 = vadd.f32 %v3716, %v4145
        %v4192 = vadd.f32 %v3717, %v4150
        %v4193 = vadd.f32 %v3718, %v4153
        %v4194 = vadd.f32 %v3719, %v4158
        %v4195 = vadd.f32 %v3720, %v4161
        %v4199 = vrot.slane %v3737, 5
        %v4200 = vrot.slane %v4199, 4
        %v4201 = vrot.slane %v2579, 5
        %v4202 = vsel %vm3789, %v4200, %v4201
        %v4203 = vrot.slane %v4201, 4
        %v4204 = vrot.slane %v2580, 5
        %v4205 = vsel %vm3789, %v4203, %v4204
        %s4206 = scalar_lea.vmem %s5, 10
        %v4207 = vld [vmem:[%s4206] sm:$0x3]
        %v4208 = vunpack.c.l.b16 %v4202
        %v4209 = vunpack.c.l.b16 %v4205
        %v4210 = vpack.c.b16 %v4209, %v4208
        %v4212 = vsel %vm1938, %v4210, 0
        %v4215 = vsel %vm1987, %v4207, 0
        %4217 = vmatprep.subr.bf16.mxu0 0
        %4218 = vmatpush1.bf16.msra.mxu0 %v4215
        %4219 = vmatprep.subr.bf16.mxu0 0
        %4220 = vmatpush1.bf16.msra.mxu0 0
        %4221 = vmatprep.subr.bf16.mxu0 0
        %4222 = vmatpush1.bf16.msra.mxu0 0
        %4223 = vmatprep.subr.bf16.mxu0 0
        %4224 = vmatpush1.bf16.msra.mxu0 0
        %4225 = vmatprep.subr.bf16.mxu0 0
        %4226 = vmatpush1.bf16.msra.mxu0 0
        %4227 = vmatprep.subr.bf16.mxu0 0
        %4228 = vmatpush1.bf16.msra.mxu0 0
        %4229 = vmatprep.subr.bf16.mxu0 0
        %4230 = vmatpush1.bf16.msra.mxu0 0
        %4231 = vmatprep.subr.bf16.mxu0 0
        %4232 = vmatpush1.bf16.msra.mxu0 0
        %4233 = vmatprep.subr.bf16.mxu0 0
        %4234 = vmatpush1.bf16.msra.mxu0 0
        %4235 = vmatprep.subr.bf16.mxu0 0
        %4236 = vmatpush1.bf16.msra.mxu0 0
        %4237 = vmatprep.subr.bf16.mxu0 0
        %4238 = vmatpush1.bf16.msra.mxu0 0
        %4239 = vmatprep.subr.bf16.mxu0 0
        %4240 = vmatpush1.bf16.msra.mxu0 0
        %4241 = vmatprep.subr.bf16.mxu0 0
        %4242 = vmatpush1.bf16.msra.mxu0 0
        %4243 = vmatprep.subr.bf16.mxu0 0
        %4244 = vmatpush1.bf16.msra.mxu0 0
        %4245 = vmatprep.subr.bf16.mxu0 0
        %4246 = vmatpush1.bf16.msra.mxu0 0
        %4247 = vmatprep.subr.bf16.mxu0 0
        %4248 = vmatpush1.bf16.msra.mxu0 0
        %4249 = vmatprep.mubr.bf16.mxu0 0
        %4250 = vmatmul.mubr.bf16.gmra.mrb[0].mxu0 %v3956
        %v4251 = vpop.f32.mrb[0].mxu0
        %v4252 = vadd.f32 0.0, %v4251
        %v4253 = vpop.f32.mrb[0].mxu0
        %v4254 = vpop.f32.mrb[0].mxu0
        %v4255 = vadd.f32 0.0, %v4254
        %v4256 = vpop.f32.mrb[0].mxu0
        %4257 = vmatprep.mubr.bf16.mxu0 0
        %4258 = vmatmul.mubr.bf16.gmra.mrb[0].mxu0 %v3959
        %v4259 = vpop.f32.mrb[0].mxu0
        %v4260 = vadd.f32 0.0, %v4259
        %v4261 = vpop.f32.mrb[0].mxu0
        %v4262 = vpop.f32.mrb[0].mxu0
        %v4263 = vadd.f32 0.0, %v4262
        %v4264 = vpop.f32.mrb[0].mxu0
        %4265 = vmatprep.mubr.bf16.mxu0 0
        %4266 = vmatmul.mubr.bf16.gmra.mrb[0].mxu0 %v3962
        %v4267 = vpop.f32.mrb[0].mxu0
        %v4268 = vadd.f32 0.0, %v4267
        %v4269 = vpop.f32.mrb[0].mxu0
        %v4270 = vpop.f32.mrb[0].mxu0
        %v4271 = vadd.f32 0.0, %v4270
        %v4272 = vpop.f32.mrb[0].mxu0
        %4273 = vmatprep.mubr.bf16.mxu0 0
        %4274 = vmatmul.mubr.bf16.gmra.mrb[0].mxu0 %v3965
        %v4275 = vpop.f32.mrb[0].mxu0
        %v4276 = vadd.f32 0.0, %v4275
        %v4277 = vpop.f32.mrb[0].mxu0
        %v4278 = vpop.f32.mrb[0].mxu0
        %v4279 = vadd.f32 0.0, %v4278
        %v4280 = vpop.f32.mrb[0].mxu0
        %4281 = vmatprep.mubr.bf16.mxu0 0
        %4282 = vmatmul.mubr.bf16.gmra.mrb[0].mxu0 %v3968
        %v4283 = vpop.f32.mrb[0].mxu0
        %v4284 = vadd.f32 0.0, %v4283
        %v4285 = vpop.f32.mrb[0].mxu0
        %v4286 = vpop.f32.mrb[0].mxu0
        %v4287 = vadd.f32 0.0, %v4286
        %v4288 = vpop.f32.mrb[0].mxu0
        %4289 = vmatprep.mubr.bf16.mxu0 0
        %4290 = vmatmul.mubr.bf16.gmra.mrb[0].mxu0 %v3971
        %v4291 = vpop.f32.mrb[0].mxu0
        %v4292 = vadd.f32 0.0, %v4291
        %v4293 = vpop.f32.mrb[0].mxu0
        %v4294 = vpop.f32.mrb[0].mxu0
        %v4295 = vadd.f32 0.0, %v4294
        %v4296 = vpop.f32.mrb[0].mxu0
        %4297 = vmatprep.mubr.bf16.mxu0 0
        %4298 = vmatmul.mubr.bf16.gmra.mrb[0].mxu0 %v3974
        %v4299 = vpop.f32.mrb[0].mxu0
        %v4300 = vadd.f32 0.0, %v4299
        %v4301 = vpop.f32.mrb[0].mxu0
        %v4302 = vpop.f32.mrb[0].mxu0
        %v4303 = vadd.f32 0.0, %v4302
        %v4304 = vpop.f32.mrb[0].mxu0
        %4305 = vmatprep.mubr.bf16.mxu0 0
        %4306 = vmatmul.mubr.bf16.gmra.mrb[0].mxu0 %v3977
        %v4307 = vpop.f32.mrb[0].mxu0
        %v4308 = vadd.f32 0.0, %v4307
        %v4309 = vpop.f32.mrb[0].mxu0
        %v4310 = vpop.f32.mrb[0].mxu0
        %v4311 = vadd.f32 0.0, %v4310
        %v4312 = vpop.f32.mrb[0].mxu0
        %4313 = vmatprep.mubr.bf16.mxu0 0
        %4314 = vmatmul.mubr.bf16.gmra.mrb[0].mxu0 %v3980
        %v4315 = vpop.f32.mrb[0].mxu0
        %v4316 = vadd.f32 0.0, %v4315
        %v4317 = vpop.f32.mrb[0].mxu0
        %v4318 = vpop.f32.mrb[0].mxu0
        %v4319 = vadd.f32 0.0, %v4318
        %v4320 = vpop.f32.mrb[0].mxu0
        %4321 = vmatprep.mubr.bf16.mxu0 0
        %4322 = vmatmul.mubr.bf16.gmra.mrb[0].mxu0 %v3983
        %v4323 = vpop.f32.mrb[0].mxu0
        %v4324 = vadd.f32 0.0, %v4323
        %v4325 = vpop.f32.mrb[0].mxu0
        %v4326 = vpop.f32.mrb[0].mxu0
        %v4327 = vadd.f32 0.0, %v4326
        %v4328 = vpop.f32.mrb[0].mxu0
        %4329 = vmatprep.mubr.bf16.mxu0 0
        %4330 = vmatmul.mubr.bf16.gmra.mrb[0].mxu0 %v3986
        %v4331 = vpop.f32.mrb[0].mxu0
        %v4332 = vadd.f32 0.0, %v4331
        %v4333 = vpop.f32.mrb[0].mxu0
        %v4334 = vpop.f32.mrb[0].mxu0
        %v4335 = vadd.f32 0.0, %v4334
        %v4336 = vpop.f32.mrb[0].mxu0
        %4337 = vmatprep.mubr.bf16.mxu0 0
        %4338 = vmatmul.mubr.bf16.gmra.mrb[0].mxu0 %v3989
        %v4339 = vpop.f32.mrb[0].mxu0
        %v4340 = vadd.f32 0.0, %v4339
        %v4341 = vpop.f32.mrb[0].mxu0
        %v4342 = vpop.f32.mrb[0].mxu0
        %v4343 = vadd.f32 0.0, %v4342
        %v4344 = vpop.f32.mrb[0].mxu0
        %4345 = vmatprep.mubr.bf16.mxu0 0
        %4346 = vmatmul.mubr.bf16.gmra.mrb[0].mxu0 %v3992
        %v4347 = vpop.f32.mrb[0].mxu0
        %v4348 = vadd.f32 0.0, %v4347
        %v4349 = vpop.f32.mrb[0].mxu0
        %v4350 = vpop.f32.mrb[0].mxu0
        %v4351 = vadd.f32 0.0, %v4350
        %v4352 = vpop.f32.mrb[0].mxu0
        %4353 = vmatprep.mubr.bf16.mxu0 0
        %4354 = vmatmul.mubr.bf16.gmra.mrb[0].mxu0 %v3995
        %v4355 = vpop.f32.mrb[0].mxu0
        %v4356 = vadd.f32 0.0, %v4355
        %v4357 = vpop.f32.mrb[0].mxu0
        %v4358 = vpop.f32.mrb[0].mxu0
        %v4359 = vadd.f32 0.0, %v4358
        %v4360 = vpop.f32.mrb[0].mxu0
        %4361 = vmatprep.mubr.bf16.mxu0 0
        %4362 = vmatmul.mubr.bf16.gmra.mrb[0].mxu0 %v3998
        %v4363 = vpop.f32.mrb[0].mxu0
        %v4364 = vadd.f32 0.0, %v4363
        %v4365 = vpop.f32.mrb[0].mxu0
        %v4366 = vpop.f32.mrb[0].mxu0
        %v4367 = vadd.f32 0.0, %v4366
        %v4368 = vpop.f32.mrb[0].mxu0
        %4369 = vmatprep.mubr.bf16.mxu0 0
        %4370 = vmatmul.mubr.bf16.gmra.mrb[0].mxu0 %v4212
        %v4371 = vpop.f32.mrb[0].mxu0
        %v4372 = vadd.f32 0.0, %v4371
        %v4373 = vpop.f32.mrb[0].mxu0
        %v4374 = vpop.f32.mrb[0].mxu0
        %v4375 = vadd.f32 0.0, %v4374
        %v4376 = vpop.f32.mrb[0].mxu0
        %4377 = vdwg.mxu0
        %v4378 = vadd.f32 %v4164, %v4252
        %v4379 = vadd.f32 %v4165, %v4255
        %v4380 = vadd.f32 %v4166, %v4260
        %v4381 = vadd.f32 %v4167, %v4263
        %v4382 = vadd.f32 %v4168, %v4268
        %v4383 = vadd.f32 %v4169, %v4271
        %v4384 = vadd.f32 %v4170, %v4276
        %v4385 = vadd.f32 %v4171, %v4279
        %v4386 = vadd.f32 %v4172, %v4284
        %v4387 = vadd.f32 %v4173, %v4287
        %v4388 = vadd.f32 %v4174, %v4292
        %v4389 = vadd.f32 %v4175, %v4295
        %v4390 = vadd.f32 %v4176, %v4300
        %v4391 = vadd.f32 %v4177, %v4303
        %v4392 = vadd.f32 %v4178, %v4308
        %v4393 = vadd.f32 %v4179, %v4311
        %v4394 = vadd.f32 %v4180, %v4316
        %v4395 = vadd.f32 %v4181, %v4319
        %v4396 = vadd.f32 %v4182, %v4324
        %v4397 = vadd.f32 %v4183, %v4327
        %v4398 = vadd.f32 %v4184, %v4332
        %v4399 = vadd.f32 %v4185, %v4335
        %v4400 = vadd.f32 %v4186, %v4340
        %v4401 = vadd.f32 %v4187, %v4343
        %v4402 = vadd.f32 %v4188, %v4348
        %v4403 = vadd.f32 %v4189, %v4351
        %v4404 = vadd.f32 %v4190, %v4356
        %v4405 = vadd.f32 %v4191, %v4359
        %v4406 = vadd.f32 %v4192, %v4364
        %v4407 = vadd.f32 %v4193, %v4367
        %v4408 = vadd.f32 %v4194, %v4372
        %v4409 = vadd.f32 %v4195, %v4375
        %v4413 = vrot.slane %v3738, 5
        %v4414 = vrot.slane %v4413, 4
        %v4415 = vrot.slane %v2582, 5
        %v4416 = vsel %vm3789, %v4414, %v4415
        %v4417 = vrot.slane %v4415, 4
        %v4418 = vrot.slane %v2583, 5
        %v4419 = vsel %vm3789, %v4417, %v4418
        %s4420 = scalar_lea.vmem %s5, 16
        %v4421 = vld [vmem:[%s4420] sm:$0x3]
        %v4422 = vunpack.c.l.b16 %v4416
        %v4423 = vunpack.c.l.b16 %v4419
        %v4424 = vpack.c.b16 %v4423, %v4422
        %v4426 = vsel %vm1938, %v4424, 0
        %v4429 = vsel %vm1987, %v4421, 0
        %4431 = vmatprep.subr.bf16.mxu0 0
        %4432 = vmatpush1.bf16.msra.mxu0 %v4429
        %4433 = vmatprep.subr.bf16.mxu0 0
        %4434 = vmatpush1.bf16.msra.mxu0 0
        %4435 = vmatprep.subr.bf16.mxu0 0
        %4436 = vmatpush1.bf16.msra.mxu0 0
        %4437 = vmatprep.subr.bf16.mxu0 0
        %4438 = vmatpush1.bf16.msra.mxu0 0
        %4439 = vmatprep.subr.bf16.mxu0 0
        %4440 = vmatpush1.bf16.msra.mxu0 0
        %4441 = vmatprep.subr.bf16.mxu0 0
        %4442 = vmatpush1.bf16.msra.mxu0 0
        %4443 = vmatprep.subr.bf16.mxu0 0
        %4444 = vmatpush1.bf16.msra.mxu0 0
        %4445 = vmatprep.subr.bf16.mxu0 0
        %4446 = vmatpush1.bf16.msra.mxu0 0
        %4447 = vmatprep.subr.bf16.mxu0 0
        %4448 = vmatpush1.bf16.msra.mxu0 0
        %4449 = vmatprep.subr.bf16.mxu0 0
        %4450 = vmatpush1.bf16.msra.mxu0 0
        %4451 = vmatprep.subr.bf16.mxu0 0
        %4452 = vmatpush1.bf16.msra.mxu0 0
        %4453 = vmatprep.subr.bf16.mxu0 0
        %4454 = vmatpush1.bf16.msra.mxu0 0
        %4455 = vmatprep.subr.bf16.mxu0 0
        %4456 = vmatpush1.bf16.msra.mxu0 0
        %4457 = vmatprep.subr.bf16.mxu0 0
        %4458 = vmatpush1.bf16.msra.mxu0 0
        %4459 = vmatprep.subr.bf16.mxu0 0
        %4460 = vmatpush1.bf16.msra.mxu0 0
        %4461 = vmatprep.subr.bf16.mxu0 0
        %4462 = vmatpush1.bf16.msra.mxu0 0
        %4463 = vmatprep.mubr.bf16.mxu0 0
        %4464 = vmatmul.mubr.bf16.gmra.mrb[0].mxu0 %v3959
        %v4465 = vpop.f32.mrb[0].mxu0
        %v4466 = vadd.f32 0.0, %v4465
        %v4467 = vpop.f32.mrb[0].mxu0
        %v4468 = vpop.f32.mrb[0].mxu0
        %v4469 = vadd.f32 0.0, %v4468
        %v4470 = vpop.f32.mrb[0].mxu0
        %4471 = vmatprep.mubr.bf16.mxu0 0
        %4472 = vmatmul.mubr.bf16.gmra.mrb[0].mxu0 %v3962
        %v4473 = vpop.f32.mrb[0].mxu0
        %v4474 = vadd.f32 0.0, %v4473
        %v4475 = vpop.f32.mrb[0].mxu0
        %v4476 = vpop.f32.mrb[0].mxu0
        %v4477 = vadd.f32 0.0, %v4476
        %v4478 = vpop.f32.mrb[0].mxu0
        %4479 = vmatprep.mubr.bf16.mxu0 0
        %4480 = vmatmul.mubr.bf16.gmra.mrb[0].mxu0 %v3965
        %v4481 = vpop.f32.mrb[0].mxu0
        %v4482 = vadd.f32 0.0, %v4481
        %v4483 = vpop.f32.mrb[0].mxu0
        %v4484 = vpop.f32.mrb[0].mxu0
        %v4485 = vadd.f32 0.0, %v4484
        %v4486 = vpop.f32.mrb[0].mxu0
        %4487 = vmatprep.mubr.bf16.mxu0 0
        %4488 = vmatmul.mubr.bf16.gmra.mrb[0].mxu0 %v3968
        %v4489 = vpop.f32.mrb[0].mxu0
        %v4490 = vadd.f32 0.0, %v4489
        %v4491 = vpop.f32.mrb[0].mxu0
        %v4492 = vpop.f32.mrb[0].mxu0
        %v4493 = vadd.f32 0.0, %v4492
        %v4494 = vpop.f32.mrb[0].mxu0
        %4495 = vmatprep.mubr.bf16.mxu0 0
        %4496 = vmatmul.mubr.bf16.gmra.mrb[0].mxu0 %v3971
        %v4497 = vpop.f32.mrb[0].mxu0
        %v4498 = vadd.f32 0.0, %v4497
        %v4499 = vpop.f32.mrb[0].mxu0
        %v4500 = vpop.f32.mrb[0].mxu0
        %v4501 = vadd.f32 0.0, %v4500
        %v4502 = vpop.f32.mrb[0].mxu0
        %4503 = vmatprep.mubr.bf16.mxu0 0
        %4504 = vmatmul.mubr.bf16.gmra.mrb[0].mxu0 %v3974
        %v4505 = vpop.f32.mrb[0].mxu0
        %v4506 = vadd.f32 0.0, %v4505
        %v4507 = vpop.f32.mrb[0].mxu0
        %v4508 = vpop.f32.mrb[0].mxu0
        %v4509 = vadd.f32 0.0, %v4508
        %v4510 = vpop.f32.mrb[0].mxu0
        %4511 = vmatprep.mubr.bf16.mxu0 0
        %4512 = vmatmul.mubr.bf16.gmra.mrb[0].mxu0 %v3977
        %v4513 = vpop.f32.mrb[0].mxu0
        %v4514 = vadd.f32 0.0, %v4513
        %v4515 = vpop.f32.mrb[0].mxu0
        %v4516 = vpop.f32.mrb[0].mxu0
        %v4517 = vadd.f32 0.0, %v4516
        %v4518 = vpop.f32.mrb[0].mxu0
        %4519 = vmatprep.mubr.bf16.mxu0 0
        %4520 = vmatmul.mubr.bf16.gmra.mrb[0].mxu0 %v3980
        %v4521 = vpop.f32.mrb[0].mxu0
        %v4522 = vadd.f32 0.0, %v4521
        %v4523 = vpop.f32.mrb[0].mxu0
        %v4524 = vpop.f32.mrb[0].mxu0
        %v4525 = vadd.f32 0.0, %v4524
        %v4526 = vpop.f32.mrb[0].mxu0
        %4527 = vmatprep.mubr.bf16.mxu0 0
        %4528 = vmatmul.mubr.bf16.gmra.mrb[0].mxu0 %v3983
        %v4529 = vpop.f32.mrb[0].mxu0
        %v4530 = vadd.f32 0.0, %v4529
        %v4531 = vpop.f32.mrb[0].mxu0
        %v4532 = vpop.f32.mrb[0].mxu0
        %v4533 = vadd.f32 0.0, %v4532
        %v4534 = vpop.f32.mrb[0].mxu0
        %4535 = vmatprep.mubr.bf16.mxu0 0
        %4536 = vmatmul.mubr.bf16.gmra.mrb[0].mxu0 %v3986
        %v4537 = vpop.f32.mrb[0].mxu0
        %v4538 = vadd.f32 0.0, %v4537
        %v4539 = vpop.f32.mrb[0].mxu0
        %v4540 = vpop.f32.mrb[0].mxu0
        %v4541 = vadd.f32 0.0, %v4540
        %v4542 = vpop.f32.mrb[0].mxu0
        %4543 = vmatprep.mubr.bf16.mxu0 0
        %4544 = vmatmul.mubr.bf16.gmra.mrb[0].mxu0 %v3989
        %v4545 = vpop.f32.mrb[0].mxu0
        %v4546 = vadd.f32 0.0, %v4545
        %v4547 = vpop.f32.mrb[0].mxu0
        %v4548 = vpop.f32.mrb[0].mxu0
        %v4549 = vadd.f32 0.0, %v4548
        %v4550 = vpop.f32.mrb[0].mxu0
        %4551 = vmatprep.mubr.bf16.mxu0 0
        %4552 = vmatmul.mubr.bf16.gmra.mrb[0].mxu0 %v3992
        %v4553 = vpop.f32.mrb[0].mxu0
        %v4554 = vadd.f32 0.0, %v4553
        %v4555 = vpop.f32.mrb[0].mxu0
        %v4556 = vpop.f32.mrb[0].mxu0
        %v4557 = vadd.f32 0.0, %v4556
        %v4558 = vpop.f32.mrb[0].mxu0
        %4559 = vmatprep.mubr.bf16.mxu0 0
        %4560 = vmatmul.mubr.bf16.gmra.mrb[0].mxu0 %v3995
        %v4561 = vpop.f32.mrb[0].mxu0
        %v4562 = vadd.f32 0.0, %v4561
        %v4563 = vpop.f32.mrb[0].mxu0
        %v4564 = vpop.f32.mrb[0].mxu0
        %v4565 = vadd.f32 0.0, %v4564
        %v4566 = vpop.f32.mrb[0].mxu0
        %4567 = vmatprep.mubr.bf16.mxu0 0
        %4568 = vmatmul.mubr.bf16.gmra.mrb[0].mxu0 %v3998
        %v4569 = vpop.f32.mrb[0].mxu0
        %v4570 = vadd.f32 0.0, %v4569
        %v4571 = vpop.f32.mrb[0].mxu0
        %v4572 = vpop.f32.mrb[0].mxu0
        %v4573 = vadd.f32 0.0, %v4572
        %v4574 = vpop.f32.mrb[0].mxu0
        %4575 = vmatprep.mubr.bf16.mxu0 0
        %4576 = vmatmul.mubr.bf16.gmra.mrb[0].mxu0 %v4212
        %v4577 = vpop.f32.mrb[0].mxu0
        %v4578 = vadd.f32 0.0, %v4577
        %v4579 = vpop.f32.mrb[0].mxu0
        %v4580 = vpop.f32.mrb[0].mxu0
        %v4581 = vadd.f32 0.0, %v4580
        %v4582 = vpop.f32.mrb[0].mxu0
        %4583 = vmatprep.mubr.bf16.mxu0 0
        %4584 = vmatmul.mubr.bf16.gmra.mrb[0].mxu0 %v4426
        %v4585 = vpop.f32.mrb[0].mxu0
        %v4586 = vadd.f32 0.0, %v4585
        %v4587 = vpop.f32.mrb[0].mxu0
        %v4588 = vpop.f32.mrb[0].mxu0
        %v4589 = vadd.f32 0.0, %v4588
        %v4590 = vpop.f32.mrb[0].mxu0
        %4591 = vdwg.mxu0
        %v4592 = vadd.f32 %v4378, %v4466
        %v4593 = vadd.f32 %v4379, %v4469
        %v4594 = vadd.f32 %v4380, %v4474
        %v4595 = vadd.f32 %v4381, %v4477
        %v4596 = vadd.f32 %v4382, %v4482
        %v4597 = vadd.f32 %v4383, %v4485
        %v4598 = vadd.f32 %v4384, %v4490
        %v4599 = vadd.f32 %v4385, %v4493
        %v4600 = vadd.f32 %v4386, %v4498
        %v4601 = vadd.f32 %v4387, %v4501
        %v4602 = vadd.f32 %v4388, %v4506
        %v4603 = vadd.f32 %v4389, %v4509
        %v4604 = vadd.f32 %v4390, %v4514
        %v4605 = vadd.f32 %v4391, %v4517
        %v4606 = vadd.f32 %v4392, %v4522
        %v4607 = vadd.f32 %v4393, %v4525
        %v4608 = vadd.f32 %v4394, %v4530
        %v4609 = vadd.f32 %v4395, %v4533
        %v4610 = vadd.f32 %v4396, %v4538
        %v4611 = vadd.f32 %v4397, %v4541
        %v4612 = vadd.f32 %v4398, %v4546
        %v4613 = vadd.f32 %v4399, %v4549
        %v4614 = vadd.f32 %v4400, %v4554
        %v4615 = vadd.f32 %v4401, %v4557
        %v4616 = vadd.f32 %v4402, %v4562
        %v4617 = vadd.f32 %v4403, %v4565
        %v4618 = vadd.f32 %v4404, %v4570
        %v4619 = vadd.f32 %v4405, %v4573
        %v4620 = vadd.f32 %v4406, %v4578
        %v4621 = vadd.f32 %v4407, %v4581
        %v4622 = vadd.f32 %v4408, %v4586
        %v4623 = vadd.f32 %v4409, %v4589
        %v4624 = vld [vmem:[%s6] sm:$0x1]
        %v4626 = vlaneseq
        %v4627 = vshrl.u32 %v4626, 7
        %v4628 = vsub.s32 0, %v4627
        %v4629 = vrot.slane %v4624, %v4628
        %v4631 = vadd.f32 %v4592, %v4629
        %v4632 = vadd.f32 %v4593, %v4629
        %v4633 = vadd.f32 %v4594, %v4629
        %v4634 = vadd.f32 %v4595, %v4629
        %v4635 = vadd.f32 %v4596, %v4629
        %v4636 = vadd.f32 %v4597, %v4629
        %v4637 = vadd.f32 %v4598, %v4629
        %v4638 = vadd.f32 %v4599, %v4629
        %v4639 = vadd.f32 %v4600, %v4629
        %v4640 = vadd.f32 %v4601, %v4629
        %v4641 = vadd.f32 %v4602, %v4629
        %v4642 = vadd.f32 %v4603, %v4629
        %v4643 = vadd.f32 %v4604, %v4629
        %v4644 = vadd.f32 %v4605, %v4629
        %v4645 = vadd.f32 %v4606, %v4629
        %v4646 = vadd.f32 %v4607, %v4629
        %v4647 = vadd.f32 %v4608, %v4629
        %v4648 = vadd.f32 %v4609, %v4629
        %v4649 = vadd.f32 %v4610, %v4629
        %v4650 = vadd.f32 %v4611, %v4629
        %v4651 = vadd.f32 %v4612, %v4629
        %v4652 = vadd.f32 %v4613, %v4629
        %v4653 = vadd.f32 %v4614, %v4629
        %v4654 = vadd.f32 %v4615, %v4629
        %v4655 = vadd.f32 %v4616, %v4629
        %v4656 = vadd.f32 %v4617, %v4629
        %v4657 = vadd.f32 %v4618, %v4629
        %v4658 = vadd.f32 %v4619, %v4629
        %v4659 = vadd.f32 %v4620, %v4629
        %v4660 = vadd.f32 %v4621, %v4629
        %v4661 = vadd.f32 %v4622, %v4629
        %v4662 = vadd.f32 %v4623, %v4629
        %v4663 = vld [vmem:[#allocation4] sm:$0x3]
        %v4664 = vld [vmem:[#allocation4 + $0x4] sm:$0x3]
        %v4665 = vld [vmem:[#allocation4 + $0x8] sm:$0x3]
        %v4666 = vld [vmem:[#allocation4 + $0xc] sm:$0x3]
        %v4667 = vld [vmem:[#allocation4 + $0x10] sm:$0x3]
        %v4668 = vld [vmem:[#allocation4 + $0x14] sm:$0x3]
        %v4669 = vld [vmem:[%s3] sm:$0x3]
        %s4670 = scalar_lea.vmem %s3, 6
        %v4671 = vld [vmem:[%s4670] sm:$0x3]
        %v4676 = vcombine.low %v4664, %v4665
        %v4677 = vcombine.low %v4666, %v4667
        %v4679 = vunpack.c.l.s4 1983009808
        %v4680 = vunpack.c.0.s8 %v4679
        %v4681 = vlaneseq
        %v4682 = vshrl.u32 %v4681, 7
        %v4683 = vsub.s32 %v4680, %v4682
        %v4684 = vrot.slane %v4676, %v4683
        %v4686 = vunpack.c.l.s4 1983009808
        %v4687 = vunpack.c.0.s8 %v4686
        %v4688 = vlaneseq
        %v4689 = vshrl.u32 %v4688, 7
        %v4690 = vsub.s32 %v4687, %v4689
        %v4691 = vrot.slane %v4677, %v4690
        %v4692 = vcombine.low %v4684, %v4691
        %v4694 = vsel %vm1938, %v4692, 0
        %v4697 = vsel %vm1987, %v4671, 0
        %4699 = vmatprep.subr.bf16.mxu0 0
        %4700 = vmatpush1.bf16.msra.mxu0 %v4697
        %4701 = vmatprep.subr.bf16.mxu0 0
        %4702 = vmatpush1.bf16.msra.mxu0 0
        %4703 = vmatprep.subr.bf16.mxu0 0
        %4704 = vmatpush1.bf16.msra.mxu0 0
        %4705 = vmatprep.subr.bf16.mxu0 0
        %4706 = vmatpush1.bf16.msra.mxu0 0
        %4707 = vmatprep.subr.bf16.mxu0 0
        %4708 = vmatpush1.bf16.msra.mxu0 0
        %4709 = vmatprep.subr.bf16.mxu0 0
        %4710 = vmatpush1.bf16.msra.mxu0 0
        %4711 = vmatprep.subr.bf16.mxu0 0
        %4712 = vmatpush1.bf16.msra.mxu0 0
        %4713 = vmatprep.subr.bf16.mxu0 0
        %4714 = vmatpush1.bf16.msra.mxu0 0
        %4715 = vmatprep.subr.bf16.mxu0 0
        %4716 = vmatpush1.bf16.msra.mxu0 0
        %4717 = vmatprep.subr.bf16.mxu0 0
        %4718 = vmatpush1.bf16.msra.mxu0 0
        %4719 = vmatprep.subr.bf16.mxu0 0
        %4720 = vmatpush1.bf16.msra.mxu0 0
        %4721 = vmatprep.subr.bf16.mxu0 0
        %4722 = vmatpush1.bf16.msra.mxu0 0
        %4723 = vmatprep.subr.bf16.mxu0 0
        %4724 = vmatpush1.bf16.msra.mxu0 0
        %4725 = vmatprep.subr.bf16.mxu0 0
        %4726 = vmatpush1.bf16.msra.mxu0 0
        %4727 = vmatprep.subr.bf16.mxu0 0
        %4728 = vmatpush1.bf16.msra.mxu0 0
        %4729 = vmatprep.subr.bf16.mxu0 0
        %4730 = vmatpush1.bf16.msra.mxu0 0
        %4731 = vmatprep.mubr.bf16.mxu0 0
        %4732 = vmatmul.mubr.bf16.gmra.mrb[0].mxu0 %v4694
        %v4733 = vpop.f32.mrb[0].mxu0
        %v4734 = vadd.f32 0.0, %v4733
        %v4735 = vpop.f32.mrb[0].mxu0
        %v4736 = vpop.f32.mrb[0].mxu0
        %v4737 = vadd.f32 0.0, %v4736
        %v4738 = vpop.f32.mrb[0].mxu0
        %4739 = vdwg.mxu0
        %v4741 = vcombine.low %v4663, %v4664
        %v4742 = vcombine.low %v4665, %v4666
        %v4744 = vunpack.c.l.s4 1983009808
        %v4745 = vunpack.c.0.s8 %v4744
        %v4746 = vlaneseq
        %v4747 = vshrl.u32 %v4746, 7
        %v4748 = vsub.s32 %v4745, %v4747
        %v4749 = vrot.slane %v4741, %v4748
        %v4751 = vunpack.c.l.s4 1983009808
        %v4752 = vunpack.c.0.s8 %v4751
        %v4753 = vlaneseq
        %v4754 = vshrl.u32 %v4753, 7
        %v4755 = vsub.s32 %v4752, %v4754
        %v4756 = vrot.slane %v4742, %v4755
        %v4757 = vcombine.low %v4749, %v4756
        %v4759 = vsel %vm1938, %v4757, 0
        %v4762 = vsel %vm1987, %v4669, 0
        %4764 = vmatprep.subr.bf16.mxu0 0
        %4765 = vmatpush1.bf16.msra.mxu0 %v4762
        %4766 = vmatprep.subr.bf16.mxu0 0
        %4767 = vmatpush1.bf16.msra.mxu0 0
        %4768 = vmatprep.subr.bf16.mxu0 0
        %4769 = vmatpush1.bf16.msra.mxu0 0
        %4770 = vmatprep.subr.bf16.mxu0 0
        %4771 = vmatpush1.bf16.msra.mxu0 0
        %4772 = vmatprep.subr.bf16.mxu0 0
        %4773 = vmatpush1.bf16.msra.mxu0 0
        %4774 = vmatprep.subr.bf16.mxu0 0
        %4775 = vmatpush1.bf16.msra.mxu0 0
        %4776 = vmatprep.subr.bf16.mxu0 0
        %4777 = vmatpush1.bf16.msra.mxu0 0
        %4778 = vmatprep.subr.bf16.mxu0 0
        %4779 = vmatpush1.bf16.msra.mxu0 0
        %4780 = vmatprep.subr.bf16.mxu0 0
        %4781 = vmatpush1.bf16.msra.mxu0 0
        %4782 = vmatprep.subr.bf16.mxu0 0
        %4783 = vmatpush1.bf16.msra.mxu0 0
        %4784 = vmatprep.subr.bf16.mxu0 0
        %4785 = vmatpush1.bf16.msra.mxu0 0
        %4786 = vmatprep.subr.bf16.mxu0 0
        %4787 = vmatpush1.bf16.msra.mxu0 0
        %4788 = vmatprep.subr.bf16.mxu0 0
        %4789 = vmatpush1.bf16.msra.mxu0 0
        %4790 = vmatprep.subr.bf16.mxu0 0
        %4791 = vmatpush1.bf16.msra.mxu0 0
        %4792 = vmatprep.subr.bf16.mxu0 0
        %4793 = vmatpush1.bf16.msra.mxu0 0
        %4794 = vmatprep.subr.bf16.mxu0 0
        %4795 = vmatpush1.bf16.msra.mxu0 0
        %4796 = vmatprep.mubr.bf16.mxu0 0
        %4797 = vmatmul.mubr.bf16.gmra.mrb[0].mxu0 %v4759
        %v4798 = vpop.f32.mrb[0].mxu0
        %v4799 = vadd.f32 %v4734, %v4798
        %v4800 = vpop.f32.mrb[0].mxu0
        %v4801 = vpop.f32.mrb[0].mxu0
        %v4802 = vadd.f32 %v4737, %v4801
        %v4803 = vpop.f32.mrb[0].mxu0
        %4804 = vdwg.mxu0
        %s4805 = scalar_lea.vmem %s3, 12
        %v4806 = vld [vmem:[%s4805] sm:$0x3]
        %v4808 = vcombine.low %v4667, %v4668
        %v4810 = vunpack.c.l.s4 1983009808
        %v4811 = vunpack.c.0.s8 %v4810
        %v4812 = vlaneseq
        %v4813 = vshrl.u32 %v4812, 7
        %v4814 = vsub.s32 %v4811, %v4813
        %v4815 = vrot.slane %v4808, %v4814
        %v4816 = vcombine.low %v4756, %v4815
        %v4818 = vsel %vm1938, %v4816, 0
        %v4821 = vsel %vm1987, %v4806, 0
        %4823 = vmatprep.subr.bf16.mxu0 0
        %4824 = vmatpush1.bf16.msra.mxu0 %v4821
        %4825 = vmatprep.subr.bf16.mxu0 0
        %4826 = vmatpush1.bf16.msra.mxu0 0
        %4827 = vmatprep.subr.bf16.mxu0 0
        %4828 = vmatpush1.bf16.msra.mxu0 0
        %4829 = vmatprep.subr.bf16.mxu0 0
        %4830 = vmatpush1.bf16.msra.mxu0 0
        %4831 = vmatprep.subr.bf16.mxu0 0
        %4832 = vmatpush1.bf16.msra.mxu0 0
        %4833 = vmatprep.subr.bf16.mxu0 0
        %4834 = vmatpush1.bf16.msra.mxu0 0
        %4835 = vmatprep.subr.bf16.mxu0 0
        %4836 = vmatpush1.bf16.msra.mxu0 0
        %4837 = vmatprep.subr.bf16.mxu0 0
        %4838 = vmatpush1.bf16.msra.mxu0 0
        %4839 = vmatprep.subr.bf16.mxu0 0
        %4840 = vmatpush1.bf16.msra.mxu0 0
        %4841 = vmatprep.subr.bf16.mxu0 0
        %4842 = vmatpush1.bf16.msra.mxu0 0
        %4843 = vmatprep.subr.bf16.mxu0 0
        %4844 = vmatpush1.bf16.msra.mxu0 0
        %4845 = vmatprep.subr.bf16.mxu0 0
        %4846 = vmatpush1.bf16.msra.mxu0 0
        %4847 = vmatprep.subr.bf16.mxu0 0
        %4848 = vmatpush1.bf16.msra.mxu0 0
        %4849 = vmatprep.subr.bf16.mxu0 0
        %4850 = vmatpush1.bf16.msra.mxu0 0
        %4851 = vmatprep.subr.bf16.mxu0 0
        %4852 = vmatpush1.bf16.msra.mxu0 0
        %4853 = vmatprep.subr.bf16.mxu0 0
        %4854 = vmatpush1.bf16.msra.mxu0 0
        %4855 = vmatprep.mubr.bf16.mxu0 0
        %4856 = vmatmul.mubr.bf16.gmra.mrb[0].mxu0 %v4818
        %v4857 = vpop.f32.mrb[0].mxu0
        %v4858 = vadd.f32 0.0, %v4857
        %v4859 = vpop.f32.mrb[0].mxu0
        %v4860 = vpop.f32.mrb[0].mxu0
        %v4861 = vadd.f32 0.0, %v4860
        %v4862 = vpop.f32.mrb[0].mxu0
        %4863 = vdwg.mxu0
        %v4864 = vadd.f32 %v4799, %v4858
        %v4865 = vadd.f32 %v4802, %v4861
        %v4866 = vld [vmem:[#allocation4] sm:$0x7]
        %v4867 = vld [vmem:[#allocation4 + $0x4] sm:$0x7]
        %v4868 = vld [vmem:[#allocation4 + $0x8] sm:$0x7]
        %v4869 = vld [vmem:[#allocation4 + $0xc] sm:$0x7]
        %v4870 = vld [vmem:[#allocation4 + $0x10] sm:$0x7]
        %v4871 = vld [vmem:[#allocation4 + $0x14] sm:$0x7]
        %v4877 = vunpack.c.l.s4 1983009808
        %v4878 = vunpack.c.0.s8 %v4877
        %v4879 = vlaneseq
        %v4880 = vshrl.u32 %v4879, 7
        %v4881 = vsub.s32 %v4878, %v4880
        %v4882 = vrot.slane %v4866, %v4881
        %v4883 = vcombine.high %v4882, %v4882
        %v4885 = vunpack.c.l.s4 1983009808
        %v4886 = vunpack.c.0.s8 %v4885
        %v4887 = vlaneseq
        %v4888 = vshrl.u32 %v4887, 7
        %v4889 = vsub.s32 %v4886, %v4888
        %v4890 = vrot.slane %v4867, %v4889
        %v4891 = vcombine.high %v4890, %v4890
        %v4893 = vunpack.c.l.s4 1983009808
        %v4894 = vunpack.c.0.s8 %v4893
        %v4895 = vlaneseq
        %v4896 = vshrl.u32 %v4895, 7
        %v4897 = vsub.s32 %v4894, %v4896
        %v4898 = vrot.slane %v4868, %v4897
        %v4899 = vcombine.high %v4898, %v4898
        %v4901 = vunpack.c.l.s4 1983009808
        %v4902 = vunpack.c.0.s8 %v4901
        %v4903 = vlaneseq
        %v4904 = vshrl.u32 %v4903, 7
        %v4905 = vsub.s32 %v4902, %v4904
        %v4906 = vrot.slane %v4869, %v4905
        %v4907 = vcombine.high %v4906, %v4906
        %vm4908 = vsmask.f32 1280
        %vm4909 = vsmask.f32 3336
        %vm4910 = vmor %vm4908, %vm4909
        %vm4911 = vsmask.f32 5392
        %vm4912 = vmor %vm4910, %vm4911
        %vm4913 = vsmask.f32 7448
        %vm4914 = vmor %vm4912, %vm4913
        %v4916 = vshrl.u32 %v4882, 16
        %v4918 = vrot.slane %v4916, 6
        %v4919 = vshll.u32 %v4882, 16
        %v4921 = vrot.slane %v4919, 7
        %v4922 = vor.u32 %v4918, %v4921
        %v4923 = vrot.slane %v4922, 2
        %v4925 = vshll.u32 %v4883, 16
        %v4927 = vrot.slane %v4925, 7
        %v4928 = vsel %vm4914, %v4923, %v4927
        %v4930 = vshrl.u32 %v4890, 16
        %v4932 = vrot.slane %v4930, 6
        %v4933 = vshll.u32 %v4890, 16
        %v4935 = vrot.slane %v4933, 7
        %v4936 = vor.u32 %v4932, %v4935
        %v4937 = vrot.slane %v4936, 2
        %v4939 = vshll.u32 %v4891, 16
        %v4941 = vrot.slane %v4939, 7
        %v4942 = vsel %vm4914, %v4937, %v4941
        %v4944 = vshrl.u32 %v4898, 16
        %v4946 = vrot.slane %v4944, 6
        %v4947 = vshll.u32 %v4898, 16
        %v4949 = vrot.slane %v4947, 7
        %v4950 = vor.u32 %v4946, %v4949
        %v4951 = vrot.slane %v4950, 2
        %v4953 = vshll.u32 %v4899, 16
        %v4955 = vrot.slane %v4953, 7
        %v4956 = vsel %vm4914, %v4951, %v4955
        %v4958 = vshrl.u32 %v4906, 16
        %v4960 = vrot.slane %v4958, 6
        %v4961 = vshll.u32 %v4906, 16
        %v4963 = vrot.slane %v4961, 7
        %v4964 = vor.u32 %v4960, %v4963
        %v4965 = vrot.slane %v4964, 2
        %v4967 = vshll.u32 %v4907, 16
        %v4969 = vrot.slane %v4967, 7
        %v4970 = vsel %vm4914, %v4965, %v4969
        %s4971 = scalar_lea.vmem %s3, 2
        %v4972 = vld [vmem:[%s4971] sm:$0x3]
        %v4973 = vcombine.low %v4928, %v4942
        %v4974 = vcombine.low %v4956, %v4970
        %v4976 = vunpack.c.l.s4 1983009808
        %v4977 = vunpack.c.0.s8 %v4976
        %v4978 = vlaneseq
        %v4979 = vshrl.u32 %v4978, 7
        %v4980 = vsub.s32 %v4977, %v4979
        %v4981 = vrot.slane %v4973, %v4980
        %v4983 = vunpack.c.l.s4 1983009808
        %v4984 = vunpack.c.0.s8 %v4983
        %v4985 = vlaneseq
        %v4986 = vshrl.u32 %v4985, 7
        %v4987 = vsub.s32 %v4984, %v4986
        %v4988 = vrot.slane %v4974, %v4987
        %v4989 = vcombine.low %v4981, %v4988
        %v4991 = vsel %vm1938, %v4989, 0
        %v4994 = vsel %vm1987, %v4972, 0
        %4996 = vmatprep.subr.bf16.mxu0 0
        %4997 = vmatpush1.bf16.msra.mxu0 %v4994
        %4998 = vmatprep.subr.bf16.mxu0 0
        %4999 = vmatpush1.bf16.msra.mxu0 0
        %5000 = vmatprep.subr.bf16.mxu0 0
        %5001 = vmatpush1.bf16.msra.mxu0 0
        %5002 = vmatprep.subr.bf16.mxu0 0
        %5003 = vmatpush1.bf16.msra.mxu0 0
        %5004 = vmatprep.subr.bf16.mxu0 0
        %5005 = vmatpush1.bf16.msra.mxu0 0
        %5006 = vmatprep.subr.bf16.mxu0 0
        %5007 = vmatpush1.bf16.msra.mxu0 0
        %5008 = vmatprep.subr.bf16.mxu0 0
        %5009 = vmatpush1.bf16.msra.mxu0 0
        %5010 = vmatprep.subr.bf16.mxu0 0
        %5011 = vmatpush1.bf16.msra.mxu0 0
        %5012 = vmatprep.subr.bf16.mxu0 0
        %5013 = vmatpush1.bf16.msra.mxu0 0
        %5014 = vmatprep.subr.bf16.mxu0 0
        %5015 = vmatpush1.bf16.msra.mxu0 0
        %5016 = vmatprep.subr.bf16.mxu0 0
        %5017 = vmatpush1.bf16.msra.mxu0 0
        %5018 = vmatprep.subr.bf16.mxu0 0
        %5019 = vmatpush1.bf16.msra.mxu0 0
        %5020 = vmatprep.subr.bf16.mxu0 0
        %5021 = vmatpush1.bf16.msra.mxu0 0
        %5022 = vmatprep.subr.bf16.mxu0 0
        %5023 = vmatpush1.bf16.msra.mxu0 0
        %5024 = vmatprep.subr.bf16.mxu0 0
        %5025 = vmatpush1.bf16.msra.mxu0 0
        %5026 = vmatprep.subr.bf16.mxu0 0
        %5027 = vmatpush1.bf16.msra.mxu0 0
        %5028 = vmatprep.mubr.bf16.mxu0 0
        %5029 = vmatmul.mubr.bf16.gmra.mrb[0].mxu0 %v4991
        %v5030 = vpop.f32.mrb[0].mxu0
        %v5031 = vadd.f32 0.0, %v5030
        %v5032 = vpop.f32.mrb[0].mxu0
        %v5033 = vpop.f32.mrb[0].mxu0
        %v5034 = vadd.f32 0.0, %v5033
        %v5035 = vpop.f32.mrb[0].mxu0
        %5036 = vdwg.mxu0
        %v5037 = vadd.f32 %v4864, %v5031
        %v5038 = vadd.f32 %v4865, %v5034
        %v5041 = vunpack.c.l.s4 1983009808
        %v5042 = vunpack.c.0.s8 %v5041
        %v5043 = vlaneseq
        %v5044 = vshrl.u32 %v5043, 7
        %v5045 = vsub.s32 %v5042, %v5044
        %v5046 = vrot.slane %v4870, %v5045
        %v5047 = vcombine.high %v5046, %v5046
        %v5049 = vshrl.u32 %v5046, 16
        %v5051 = vrot.slane %v5049, 6
        %v5052 = vshll.u32 %v5046, 16
        %v5054 = vrot.slane %v5052, 7
        %v5055 = vor.u32 %v5051, %v5054
        %v5056 = vrot.slane %v5055, 2
        %v5058 = vshll.u32 %v5047, 16
        %v5060 = vrot.slane %v5058, 7
        %v5061 = vsel %vm4914, %v5056, %v5060
        %s5062 = scalar_lea.vmem %s3, 8
        %v5063 = vld [vmem:[%s5062] sm:$0x3]
        %v5064 = vcombine.low %v4942, %v4956
        %v5065 = vcombine.low %v4970, %v5061
        %v5067 = vunpack.c.l.s4 1983009808
        %v5068 = vunpack.c.0.s8 %v5067
        %v5069 = vlaneseq
        %v5070 = vshrl.u32 %v5069, 7
        %v5071 = vsub.s32 %v5068, %v5070
        %v5072 = vrot.slane %v5064, %v5071
        %v5074 = vunpack.c.l.s4 1983009808
        %v5075 = vunpack.c.0.s8 %v5074
        %v5076 = vlaneseq
        %v5077 = vshrl.u32 %v5076, 7
        %v5078 = vsub.s32 %v5075, %v5077
        %v5079 = vrot.slane %v5065, %v5078
        %v5080 = vcombine.low %v5072, %v5079
        %v5082 = vsel %vm1938, %v5080, 0
        %v5085 = vsel %vm1987, %v5063, 0
        %5087 = vmatprep.subr.bf16.mxu0 0
        %5088 = vmatpush1.bf16.msra.mxu0 %v5085
        %5089 = vmatprep.subr.bf16.mxu0 0
        %5090 = vmatpush1.bf16.msra.mxu0 0
        %5091 = vmatprep.subr.bf16.mxu0 0
        %5092 = vmatpush1.bf16.msra.mxu0 0
        %5093 = vmatprep.subr.bf16.mxu0 0
        %5094 = vmatpush1.bf16.msra.mxu0 0
        %5095 = vmatprep.subr.bf16.mxu0 0
        %5096 = vmatpush1.bf16.msra.mxu0 0
        %5097 = vmatprep.subr.bf16.mxu0 0
        %5098 = vmatpush1.bf16.msra.mxu0 0
        %5099 = vmatprep.subr.bf16.mxu0 0
        %5100 = vmatpush1.bf16.msra.mxu0 0
        %5101 = vmatprep.subr.bf16.mxu0 0
        %5102 = vmatpush1.bf16.msra.mxu0 0
        %5103 = vmatprep.subr.bf16.mxu0 0
        %5104 = vmatpush1.bf16.msra.mxu0 0
        %5105 = vmatprep.subr.bf16.mxu0 0
        %5106 = vmatpush1.bf16.msra.mxu0 0
        %5107 = vmatprep.subr.bf16.mxu0 0
        %5108 = vmatpush1.bf16.msra.mxu0 0
        %5109 = vmatprep.subr.bf16.mxu0 0
        %5110 = vmatpush1.bf16.msra.mxu0 0
        %5111 = vmatprep.subr.bf16.mxu0 0
        %5112 = vmatpush1.bf16.msra.mxu0 0
        %5113 = vmatprep.subr.bf16.mxu0 0
        %5114 = vmatpush1.bf16.msra.mxu0 0
        %5115 = vmatprep.subr.bf16.mxu0 0
        %5116 = vmatpush1.bf16.msra.mxu0 0
        %5117 = vmatprep.subr.bf16.mxu0 0
        %5118 = vmatpush1.bf16.msra.mxu0 0
        %5119 = vmatprep.mubr.bf16.mxu0 0
        %5120 = vmatmul.mubr.bf16.gmra.mrb[0].mxu0 %v5082
        %v5121 = vpop.f32.mrb[0].mxu0
        %v5122 = vadd.f32 0.0, %v5121
        %v5123 = vpop.f32.mrb[0].mxu0
        %v5124 = vpop.f32.mrb[0].mxu0
        %v5125 = vadd.f32 0.0, %v5124
        %v5126 = vpop.f32.mrb[0].mxu0
        %5127 = vdwg.mxu0
        %v5128 = vadd.f32 %v5037, %v5122
        %v5129 = vadd.f32 %v5038, %v5125
        %v5132 = vunpack.c.l.s4 1983009808
        %v5133 = vunpack.c.0.s8 %v5132
        %v5134 = vlaneseq
        %v5135 = vshrl.u32 %v5134, 7
        %v5136 = vsub.s32 %v5133, %v5135
        %v5137 = vrot.slane %v4871, %v5136
        %v5138 = vcombine.high %v5137, %v5137
        %v5140 = vshrl.u32 %v5137, 16
        %v5142 = vrot.slane %v5140, 6
        %v5143 = vshll.u32 %v5137, 16
        %v5145 = vrot.slane %v5143, 7
        %v5146 = vor.u32 %v5142, %v5145
        %v5147 = vrot.slane %v5146, 2
        %v5149 = vshll.u32 %v5138, 16
        %v5151 = vrot.slane %v5149, 7
        %v5152 = vsel %vm4914, %v5147, %v5151
        %s5153 = scalar_lea.vmem %s3, 14
        %v5154 = vld [vmem:[%s5153] sm:$0x3]
        %v5155 = vcombine.low %v5061, %v5152
        %v5157 = vunpack.c.l.s4 1983009808
        %v5158 = vunpack.c.0.s8 %v5157
        %v5159 = vlaneseq
        %v5160 = vshrl.u32 %v5159, 7
        %v5161 = vsub.s32 %v5158, %v5160
        %v5162 = vrot.slane %v5155, %v5161
        %v5163 = vcombine.low %v4988, %v5162
        %v5165 = vsel %vm1938, %v5163, 0
        %v5168 = vsel %vm1987, %v5154, 0
        %5170 = vmatprep.subr.bf16.mxu0 0
        %5171 = vmatpush1.bf16.msra.mxu0 %v5168
        %5172 = vmatprep.subr.bf16.mxu0 0
        %5173 = vmatpush1.bf16.msra.mxu0 0
        %5174 = vmatprep.subr.bf16.mxu0 0
        %5175 = vmatpush1.bf16.msra.mxu0 0
        %5176 = vmatprep.subr.bf16.mxu0 0
        %5177 = vmatpush1.bf16.msra.mxu0 0
        %5178 = vmatprep.subr.bf16.mxu0 0
        %5179 = vmatpush1.bf16.msra.mxu0 0
        %5180 = vmatprep.subr.bf16.mxu0 0
        %5181 = vmatpush1.bf16.msra.mxu0 0
        %5182 = vmatprep.subr.bf16.mxu0 0
        %5183 = vmatpush1.bf16.msra.mxu0 0
        %5184 = vmatprep.subr.bf16.mxu0 0
        %5185 = vmatpush1.bf16.msra.mxu0 0
        %5186 = vmatprep.subr.bf16.mxu0 0
        %5187 = vmatpush1.bf16.msra.mxu0 0
        %5188 = vmatprep.subr.bf16.mxu0 0
        %5189 = vmatpush1.bf16.msra.mxu0 0
        %5190 = vmatprep.subr.bf16.mxu0 0
        %5191 = vmatpush1.bf16.msra.mxu0 0
        %5192 = vmatprep.subr.bf16.mxu0 0
        %5193 = vmatpush1.bf16.msra.mxu0 0
        %5194 = vmatprep.subr.bf16.mxu0 0
        %5195 = vmatpush1.bf16.msra.mxu0 0
        %5196 = vmatprep.subr.bf16.mxu0 0
        %5197 = vmatpush1.bf16.msra.mxu0 0
        %5198 = vmatprep.subr.bf16.mxu0 0
        %5199 = vmatpush1.bf16.msra.mxu0 0
        %5200 = vmatprep.subr.bf16.mxu0 0
        %5201 = vmatpush1.bf16.msra.mxu0 0
        %5202 = vmatprep.mubr.bf16.mxu0 0
        %5203 = vmatmul.mubr.bf16.gmra.mrb[0].mxu0 %v5165
        %v5204 = vpop.f32.mrb[0].mxu0
        %v5205 = vadd.f32 0.0, %v5204
        %v5206 = vpop.f32.mrb[0].mxu0
        %v5207 = vpop.f32.mrb[0].mxu0
        %v5208 = vadd.f32 0.0, %v5207
        %v5209 = vpop.f32.mrb[0].mxu0
        %5210 = vdwg.mxu0
        %v5211 = vadd.f32 %v5128, %v5205
        %v5212 = vadd.f32 %v5129, %v5208
        %v5213 = vld [vmem:[#allocation4] sm:$0x6]
        %v5214 = vld [vmem:[#allocation4 + $0x4] sm:$0x6]
        %v5215 = vld [vmem:[#allocation4 + $0x8] sm:$0x6]
        %v5216 = vld [vmem:[#allocation4 + $0xc] sm:$0x6]
        %v5217 = vld [vmem:[#allocation4 + $0x10] sm:$0x6]
        %v5218 = vld [vmem:[#allocation4 + $0x14] sm:$0x6]
        %v5224 = vunpack.c.l.s4 1983009808
        %v5225 = vunpack.c.0.s8 %v5224
        %v5226 = vlaneseq
        %v5227 = vshrl.u32 %v5226, 7
        %v5228 = vsub.s32 %v5225, %v5227
        %v5229 = vrot.slane %v5213, %v5228
        %v5230 = vcombine.high %v5229, %v5229
        %v5232 = vunpack.c.l.s4 1983009808
        %v5233 = vunpack.c.0.s8 %v5232
        %v5234 = vlaneseq
        %v5235 = vshrl.u32 %v5234, 7
        %v5236 = vsub.s32 %v5233, %v5235
        %v5237 = vrot.slane %v5214, %v5236
        %v5238 = vcombine.high %v5237, %v5237
        %v5240 = vunpack.c.l.s4 1983009808
        %v5241 = vunpack.c.0.s8 %v5240
        %v5242 = vlaneseq
        %v5243 = vshrl.u32 %v5242, 7
        %v5244 = vsub.s32 %v5241, %v5243
        %v5245 = vrot.slane %v5215, %v5244
        %v5246 = vcombine.high %v5245, %v5245
        %v5248 = vunpack.c.l.s4 1983009808
        %v5249 = vunpack.c.0.s8 %v5248
        %v5250 = vlaneseq
        %v5251 = vshrl.u32 %v5250, 7
        %v5252 = vsub.s32 %v5249, %v5251
        %v5253 = vrot.slane %v5216, %v5252
        %v5254 = vcombine.high %v5253, %v5253
        %vm5255 = vcmask 1040384
        %vm5256 = vcmask 1042434
        %vm5257 = vmor %vm5255, %vm5256
        %vm5258 = vcmask 1044484
        %vm5259 = vmor %vm5257, %vm5258
        %vm5260 = vcmask 1046534
        %vm5261 = vmor %vm5259, %vm5260
        %v5262 = vrot.slane %v5229, 7
        %v5263 = vrot.slane %v5262, 2
        %v5264 = vrot.slane %v5230, 7
        %v5265 = vsel %vm5261, %v5263, %v5264
        %v5266 = vrot.slane %v5237, 7
        %v5267 = vrot.slane %v5266, 2
        %v5268 = vrot.slane %v5238, 7
        %v5269 = vsel %vm5261, %v5267, %v5268
        %v5270 = vrot.slane %v5245, 7
        %v5271 = vrot.slane %v5270, 2
        %v5272 = vrot.slane %v5246, 7
        %v5273 = vsel %vm5261, %v5271, %v5272
        %v5274 = vrot.slane %v5253, 7
        %v5275 = vrot.slane %v5274, 2
        %v5276 = vrot.slane %v5254, 7
        %v5277 = vsel %vm5261, %v5275, %v5276
        %s5278 = scalar_lea.vmem %s3, 4
        %v5279 = vld [vmem:[%s5278] sm:$0x3]
        %v5280 = vcombine.low %v5265, %v5269
        %v5281 = vcombine.low %v5273, %v5277
        %v5283 = vunpack.c.l.s4 1983009808
        %v5284 = vunpack.c.0.s8 %v5283
        %v5285 = vlaneseq
        %v5286 = vshrl.u32 %v5285, 7
        %v5287 = vsub.s32 %v5284, %v5286
        %v5288 = vrot.slane %v5280, %v5287
        %v5290 = vunpack.c.l.s4 1983009808
        %v5291 = vunpack.c.0.s8 %v5290
        %v5292 = vlaneseq
        %v5293 = vshrl.u32 %v5292, 7
        %v5294 = vsub.s32 %v5291, %v5293
        %v5295 = vrot.slane %v5281, %v5294
        %v5296 = vcombine.low %v5288, %v5295
        %v5298 = vsel %vm1938, %v5296, 0
        %v5301 = vsel %vm1987, %v5279, 0
        %5303 = vmatprep.subr.bf16.mxu0 0
        %5304 = vmatpush1.bf16.msra.mxu0 %v5301
        %5305 = vmatprep.subr.bf16.mxu0 0
        %5306 = vmatpush1.bf16.msra.mxu0 0
        %5307 = vmatprep.subr.bf16.mxu0 0
        %5308 = vmatpush1.bf16.msra.mxu0 0
        %5309 = vmatprep.subr.bf16.mxu0 0
        %5310 = vmatpush1.bf16.msra.mxu0 0
        %5311 = vmatprep.subr.bf16.mxu0 0
        %5312 = vmatpush1.bf16.msra.mxu0 0
        %5313 = vmatprep.subr.bf16.mxu0 0
        %5314 = vmatpush1.bf16.msra.mxu0 0
        %5315 = vmatprep.subr.bf16.mxu0 0
        %5316 = vmatpush1.bf16.msra.mxu0 0
        %5317 = vmatprep.subr.bf16.mxu0 0
        %5318 = vmatpush1.bf16.msra.mxu0 0
        %5319 = vmatprep.subr.bf16.mxu0 0
        %5320 = vmatpush1.bf16.msra.mxu0 0
        %5321 = vmatprep.subr.bf16.mxu0 0
        %5322 = vmatpush1.bf16.msra.mxu0 0
        %5323 = vmatprep.subr.bf16.mxu0 0
        %5324 = vmatpush1.bf16.msra.mxu0 0
        %5325 = vmatprep.subr.bf16.mxu0 0
        %5326 = vmatpush1.bf16.msra.mxu0 0
        %5327 = vmatprep.subr.bf16.mxu0 0
        %5328 = vmatpush1.bf16.msra.mxu0 0
        %5329 = vmatprep.subr.bf16.mxu0 0
        %5330 = vmatpush1.bf16.msra.mxu0 0
        %5331 = vmatprep.subr.bf16.mxu0 0
        %5332 = vmatpush1.bf16.msra.mxu0 0
        %5333 = vmatprep.subr.bf16.mxu0 0
        %5334 = vmatpush1.bf16.msra.mxu0 0
        %5335 = vmatprep.mubr.bf16.mxu0 0
        %5336 = vmatmul.mubr.bf16.gmra.mrb[0].mxu0 %v5298
        %v5337 = vpop.f32.mrb[0].mxu0
        %v5338 = vadd.f32 0.0, %v5337
        %v5339 = vpop.f32.mrb[0].mxu0
        %v5340 = vpop.f32.mrb[0].mxu0
        %v5341 = vadd.f32 0.0, %v5340
        %v5342 = vpop.f32.mrb[0].mxu0
        %5343 = vdwg.mxu0
        %v5344 = vadd.f32 %v5211, %v5338
        %v5345 = vadd.f32 %v5212, %v5341
        %v5348 = vunpack.c.l.s4 1983009808
        %v5349 = vunpack.c.0.s8 %v5348
        %v5350 = vlaneseq
        %v5351 = vshrl.u32 %v5350, 7
        %v5352 = vsub.s32 %v5349, %v5351
        %v5353 = vrot.slane %v5217, %v5352
        %v5354 = vcombine.high %v5353, %v5353
        %v5355 = vrot.slane %v5353, 7
        %v5356 = vrot.slane %v5355, 2
        %v5357 = vrot.slane %v5354, 7
        %v5358 = vsel %vm5261, %v5356, %v5357
        %s5359 = scalar_lea.vmem %s3, 10
        %v5360 = vld [vmem:[%s5359] sm:$0x3]
        %v5361 = vcombine.low %v5269, %v5273
        %v5362 = vcombine.low %v5277, %v5358
        %v5364 = vunpack.c.l.s4 1983009808
        %v5365 = vunpack.c.0.s8 %v5364
        %v5366 = vlaneseq
        %v5367 = vshrl.u32 %v5366, 7
        %v5368 = vsub.s32 %v5365, %v5367
        %v5369 = vrot.slane %v5361, %v5368
        %v5371 = vunpack.c.l.s4 1983009808
        %v5372 = vunpack.c.0.s8 %v5371
        %v5373 = vlaneseq
        %v5374 = vshrl.u32 %v5373, 7
        %v5375 = vsub.s32 %v5372, %v5374
        %v5376 = vrot.slane %v5362, %v5375
        %v5377 = vcombine.low %v5369, %v5376
        %v5379 = vsel %vm1938, %v5377, 0
        %v5382 = vsel %vm1987, %v5360, 0
        %5384 = vmatprep.subr.bf16.mxu0 0
        %5385 = vmatpush1.bf16.msra.mxu0 %v5382
        %5386 = vmatprep.subr.bf16.mxu0 0
        %5387 = vmatpush1.bf16.msra.mxu0 0
        %5388 = vmatprep.subr.bf16.mxu0 0
        %5389 = vmatpush1.bf16.msra.mxu0 0
        %5390 = vmatprep.subr.bf16.mxu0 0
        %5391 = vmatpush1.bf16.msra.mxu0 0
        %5392 = vmatprep.subr.bf16.mxu0 0
        %5393 = vmatpush1.bf16.msra.mxu0 0
        %5394 = vmatprep.subr.bf16.mxu0 0
        %5395 = vmatpush1.bf16.msra.mxu0 0
        %5396 = vmatprep.subr.bf16.mxu0 0
        %5397 = vmatpush1.bf16.msra.mxu0 0
        %5398 = vmatprep.subr.bf16.mxu0 0
        %5399 = vmatpush1.bf16.msra.mxu0 0
        %5400 = vmatprep.subr.bf16.mxu0 0
        %5401 = vmatpush1.bf16.msra.mxu0 0
        %5402 = vmatprep.subr.bf16.mxu0 0
        %5403 = vmatpush1.bf16.msra.mxu0 0
        %5404 = vmatprep.subr.bf16.mxu0 0
        %5405 = vmatpush1.bf16.msra.mxu0 0
        %5406 = vmatprep.subr.bf16.mxu0 0
        %5407 = vmatpush1.bf16.msra.mxu0 0
        %5408 = vmatprep.subr.bf16.mxu0 0
        %5409 = vmatpush1.bf16.msra.mxu0 0
        %5410 = vmatprep.subr.bf16.mxu0 0
        %5411 = vmatpush1.bf16.msra.mxu0 0
        %5412 = vmatprep.subr.bf16.mxu0 0
        %5413 = vmatpush1.bf16.msra.mxu0 0
        %5414 = vmatprep.subr.bf16.mxu0 0
        %5415 = vmatpush1.bf16.msra.mxu0 0
        %5416 = vmatprep.mubr.bf16.mxu0 0
        %5417 = vmatmul.mubr.bf16.gmra.mrb[0].mxu0 %v5379
        %v5418 = vpop.f32.mrb[0].mxu0
        %v5419 = vadd.f32 0.0, %v5418
        %v5420 = vpop.f32.mrb[0].mxu0
        %v5421 = vpop.f32.mrb[0].mxu0
        %v5422 = vadd.f32 0.0, %v5421
        %v5423 = vpop.f32.mrb[0].mxu0
        %5424 = vdwg.mxu0
        %v5425 = vadd.f32 %v5344, %v5419
        %v5426 = vadd.f32 %v5345, %v5422
        %v5429 = vunpack.c.l.s4 1983009808
        %v5430 = vunpack.c.0.s8 %v5429
        %v5431 = vlaneseq
        %v5432 = vshrl.u32 %v5431, 7
        %v5433 = vsub.s32 %v5430, %v5432
        %v5434 = vrot.slane %v5218, %v5433
        %v5435 = vcombine.high %v5434, %v5434
        %v5436 = vrot.slane %v5434, 7
        %v5437 = vrot.slane %v5436, 2
        %v5438 = vrot.slane %v5435, 7
        %v5439 = vsel %vm5261, %v5437, %v5438
        %s5440 = scalar_lea.vmem %s3, 16
        %v5441 = vld [vmem:[%s5440] sm:$0x3]
        %v5442 = vcombine.low %v5358, %v5439
        %v5444 = vunpack.c.l.s4 1983009808
        %v5445 = vunpack.c.0.s8 %v5444
        %v5446 = vlaneseq
        %v5447 = vshrl.u32 %v5446, 7
        %v5448 = vsub.s32 %v5445, %v5447
        %v5449 = vrot.slane %v5442, %v5448
        %v5450 = vcombine.low %v5295, %v5449
        %v5452 = vsel %vm1938, %v5450, 0
        %v5455 = vsel %vm1987, %v5441, 0
        %5457 = vmatprep.subr.bf16.mxu0 0
        %5458 = vmatpush1.bf16.msra.mxu0 %v5455
        %5459 = vmatprep.subr.bf16.mxu0 0
        %5460 = vmatpush1.bf16.msra.mxu0 0
        %5461 = vmatprep.subr.bf16.mxu0 0
        %5462 = vmatpush1.bf16.msra.mxu0 0
        %5463 = vmatprep.subr.bf16.mxu0 0
        %5464 = vmatpush1.bf16.msra.mxu0 0
        %5465 = vmatprep.subr.bf16.mxu0 0
        %5466 = vmatpush1.bf16.msra.mxu0 0
        %5467 = vmatprep.subr.bf16.mxu0 0
        %5468 = vmatpush1.bf16.msra.mxu0 0
        %5469 = vmatprep.subr.bf16.mxu0 0
        %5470 = vmatpush1.bf16.msra.mxu0 0
        %5471 = vmatprep.subr.bf16.mxu0 0
        %5472 = vmatpush1.bf16.msra.mxu0 0
        %5473 = vmatprep.subr.bf16.mxu0 0
        %5474 = vmatpush1.bf16.msra.mxu0 0
        %5475 = vmatprep.subr.bf16.mxu0 0
        %5476 = vmatpush1.bf16.msra.mxu0 0
        %5477 = vmatprep.subr.bf16.mxu0 0
        %5478 = vmatpush1.bf16.msra.mxu0 0
        %5479 = vmatprep.subr.bf16.mxu0 0
        %5480 = vmatpush1.bf16.msra.mxu0 0
        %5481 = vmatprep.subr.bf16.mxu0 0
        %5482 = vmatpush1.bf16.msra.mxu0 0
        %5483 = vmatprep.subr.bf16.mxu0 0
        %5484 = vmatpush1.bf16.msra.mxu0 0
        %5485 = vmatprep.subr.bf16.mxu0 0
        %5486 = vmatpush1.bf16.msra.mxu0 0
        %5487 = vmatprep.subr.bf16.mxu0 0
        %5488 = vmatpush1.bf16.msra.mxu0 0
        %5489 = vmatprep.mubr.bf16.mxu0 0
        %5490 = vmatmul.mubr.bf16.gmra.mrb[0].mxu0 %v5452
        %v5491 = vpop.f32.mrb[0].mxu0
        %v5492 = vadd.f32 0.0, %v5491
        %v5493 = vpop.f32.mrb[0].mxu0
        %v5494 = vpop.f32.mrb[0].mxu0
        %v5495 = vadd.f32 0.0, %v5494
        %v5496 = vpop.f32.mrb[0].mxu0
        %5497 = vdwg.mxu0
        %v5498 = vadd.f32 %v5425, %v5492
        %v5499 = vadd.f32 %v5426, %v5495
        %v5500 = vld [vmem:[%s4] sm:$0x1]
        %v5502 = vlaneseq
        %v5503 = vshrl.u32 %v5502, 7
        %v5504 = vsub.s32 0, %v5503
        %v5505 = vrot.slane %v5500, %v5504
        %v5507 = vadd.f32 %v5498, %v5505
        %v5508 = vadd.f32 %v5499, %v5505
        %v5511 = vcombine.high %v5507, %v5507
        %v5513 = vunpack.c.l.s4 1966171168
        %v5514 = vunpack.c.0.s8 %v5513
        %v5515 = vlaneseq
        %v5516 = vshrl.u32 %v5515, 7
        %v5517 = vsub.s32 %v5514, %v5516
        %v5518 = vrot.slane %v5507, %v5517
        %v5520 = vunpack.c.l.s4 1966171168
        %v5521 = vunpack.c.0.s8 %v5520
        %v5522 = vlaneseq
        %v5523 = vshrl.u32 %v5522, 7
        %v5524 = vsub.s32 %v5521, %v5523
        %v5525 = vrot.slane %v5511, %v5524
        %v5526 = vcombine.high %v5518, %v5518
        %v5527 = vcombine.high %v5525, %v5525
        %v5529 = vunpack.c.l.s4 1966171168
        %v5530 = vunpack.c.0.s8 %v5529
        %v5531 = vlaneseq
        %v5532 = vshrl.u32 %v5531, 7
        %v5533 = vsub.s32 %v5530, %v5532
        %v5534 = vrot.slane %v5518, %v5533
        %v5536 = vunpack.c.l.s4 1966171168
        %v5537 = vunpack.c.0.s8 %v5536
        %v5538 = vlaneseq
        %v5539 = vshrl.u32 %v5538, 7
        %v5540 = vsub.s32 %v5537, %v5539
        %v5541 = vrot.slane %v5525, %v5540
        %v5543 = vunpack.c.l.s4 1966171168
        %v5544 = vunpack.c.0.s8 %v5543
        %v5545 = vlaneseq
        %v5546 = vshrl.u32 %v5545, 7
        %v5547 = vsub.s32 %v5544, %v5546
        %v5548 = vrot.slane %v5526, %v5547
        %v5550 = vunpack.c.l.s4 1966171168
        %v5551 = vunpack.c.0.s8 %v5550
        %v5552 = vlaneseq
        %v5553 = vshrl.u32 %v5552, 7
        %v5554 = vsub.s32 %v5551, %v5553
        %v5555 = vrot.slane %v5527, %v5554
        %v5556 = vcombine.high %v5534, %v5534
        %v5557 = vcombine.high %v5541, %v5541
        %v5558 = vcombine.high %v5548, %v5548
        %v5559 = vcombine.high %v5555, %v5555
        %v5560 = vcombine.high %v5508, %v5508
        %v5562 = vunpack.c.l.s4 1966171168
        %v5563 = vunpack.c.0.s8 %v5562
        %v5564 = vlaneseq
        %v5565 = vshrl.u32 %v5564, 7
        %v5566 = vsub.s32 %v5563, %v5565
        %v5567 = vrot.slane %v5508, %v5566
        %v5569 = vunpack.c.l.s4 1966171168
        %v5570 = vunpack.c.0.s8 %v5569
        %v5571 = vlaneseq
        %v5572 = vshrl.u32 %v5571, 7
        %v5573 = vsub.s32 %v5570, %v5572
        %v5574 = vrot.slane %v5560, %v5573
        %v5575 = vcombine.high %v5567, %v5567
        %v5576 = vcombine.high %v5574, %v5574
        %v5578 = vunpack.c.l.s4 1966171168
        %v5579 = vunpack.c.0.s8 %v5578
        %v5580 = vlaneseq
        %v5581 = vshrl.u32 %v5580, 7
        %v5582 = vsub.s32 %v5579, %v5581
        %v5583 = vrot.slane %v5567, %v5582
        %v5585 = vunpack.c.l.s4 1966171168
        %v5586 = vunpack.c.0.s8 %v5585
        %v5587 = vlaneseq
        %v5588 = vshrl.u32 %v5587, 7
        %v5589 = vsub.s32 %v5586, %v5588
        %v5590 = vrot.slane %v5574, %v5589
        %v5592 = vunpack.c.l.s4 1966171168
        %v5593 = vunpack.c.0.s8 %v5592
        %v5594 = vlaneseq
        %v5595 = vshrl.u32 %v5594, 7
        %v5596 = vsub.s32 %v5593, %v5595
        %v5597 = vrot.slane %v5575, %v5596
        %v5599 = vunpack.c.l.s4 1966171168
        %v5600 = vunpack.c.0.s8 %v5599
        %v5601 = vlaneseq
        %v5602 = vshrl.u32 %v5601, 7
        %v5603 = vsub.s32 %v5600, %v5602
        %v5604 = vrot.slane %v5576, %v5603
        %v5605 = vcombine.high %v5583, %v5583
        %v5606 = vcombine.high %v5590, %v5590
        %v5607 = vcombine.high %v5597, %v5597
        %v5608 = vcombine.high %v5604, %v5604
        %v5609 = vlaneseq
        %v5610 = vshrl.u32 %v5609, 7
        %v5611 = vsub.s32 0, %v5610
        %v5612 = vrot.slane %v5534, %v5611
        %v5613 = vlaneseq
        %v5614 = vshrl.u32 %v5613, 7
        %v5615 = vsub.s32 0, %v5614
        %v5616 = vrot.slane %v5548, %v5615
        %v5617 = vlaneseq
        %v5618 = vshrl.u32 %v5617, 7
        %v5619 = vsub.s32 0, %v5618
        %v5620 = vrot.slane %v5556, %v5619
        %v5621 = vlaneseq
        %v5622 = vshrl.u32 %v5621, 7
        %v5623 = vsub.s32 0, %v5622
        %v5624 = vrot.slane %v5558, %v5623
        %v5625 = vlaneseq
        %v5626 = vshrl.u32 %v5625, 7
        %v5627 = vsub.s32 0, %v5626
        %v5628 = vrot.slane %v5541, %v5627
        %v5629 = vlaneseq
        %v5630 = vshrl.u32 %v5629, 7
        %v5631 = vsub.s32 0, %v5630
        %v5632 = vrot.slane %v5555, %v5631
        %v5633 = vlaneseq
        %v5634 = vshrl.u32 %v5633, 7
        %v5635 = vsub.s32 0, %v5634
        %v5636 = vrot.slane %v5557, %v5635
        %v5637 = vlaneseq
        %v5638 = vshrl.u32 %v5637, 7
        %v5639 = vsub.s32 0, %v5638
        %v5640 = vrot.slane %v5559, %v5639
        %v5641 = vlaneseq
        %v5642 = vshrl.u32 %v5641, 7
        %v5643 = vsub.s32 0, %v5642
        %v5644 = vrot.slane %v5583, %v5643
        %v5645 = vlaneseq
        %v5646 = vshrl.u32 %v5645, 7
        %v5647 = vsub.s32 0, %v5646
        %v5648 = vrot.slane %v5597, %v5647
        %v5649 = vlaneseq
        %v5650 = vshrl.u32 %v5649, 7
        %v5651 = vsub.s32 0, %v5650
        %v5652 = vrot.slane %v5605, %v5651
        %v5653 = vlaneseq
        %v5654 = vshrl.u32 %v5653, 7
        %v5655 = vsub.s32 0, %v5654
        %v5656 = vrot.slane %v5607, %v5655
        %v5657 = vlaneseq
        %v5658 = vshrl.u32 %v5657, 7
        %v5659 = vsub.s32 0, %v5658
        %v5660 = vrot.slane %v5590, %v5659
        %v5661 = vlaneseq
        %v5662 = vshrl.u32 %v5661, 7
        %v5663 = vsub.s32 0, %v5662
        %v5664 = vrot.slane %v5604, %v5663
        %v5665 = vlaneseq
        %v5666 = vshrl.u32 %v5665, 7
        %v5667 = vsub.s32 0, %v5666
        %v5668 = vrot.slane %v5606, %v5667
        %v5669 = vlaneseq
        %v5670 = vshrl.u32 %v5669, 7
        %v5671 = vsub.s32 0, %v5670
        %v5672 = vrot.slane %v5608, %v5671
        %v5673 = vcombine.low %v5612, %v5616
        %v5674 = vcombine.low %v5620, %v5624
        %v5675 = vcombine.low %v5628, %v5632
        %v5676 = vcombine.low %v5636, %v5640
        %v5677 = vcombine.low %v5644, %v5648
        %v5678 = vcombine.low %v5652, %v5656
        %v5679 = vcombine.low %v5660, %v5664
        %v5680 = vcombine.low %v5668, %v5672
        %v5689 = vadd.f32 %v959, %v5673
        %v5690 = vadd.f32 %v960, %v5674
        %v5691 = vadd.f32 %v961, %v5673
        %v5692 = vadd.f32 %v962, %v5674
        %v5693 = vadd.f32 %v963, %v5673
        %v5694 = vadd.f32 %v964, %v5674
        %v5695 = vadd.f32 %v965, %v5673
        %v5696 = vadd.f32 %v966, %v5674
        %v5697 = vadd.f32 %v967, %v5675
        %v5698 = vadd.f32 %v968, %v5676
        %v5699 = vadd.f32 %v969, %v5675
        %v5700 = vadd.f32 %v970, %v5676
        %v5701 = vadd.f32 %v971, %v5675
        %v5702 = vadd.f32 %v972, %v5676
        %v5703 = vadd.f32 %v973, %v5675
        %v5704 = vadd.f32 %v974, %v5676
        %v5705 = vadd.f32 %v975, %v5677
        %v5706 = vadd.f32 %v976, %v5678
        %v5707 = vadd.f32 %v977, %v5677
        %v5708 = vadd.f32 %v978, %v5678
        %v5709 = vadd.f32 %v979, %v5677
        %v5710 = vadd.f32 %v980, %v5678
        %v5711 = vadd.f32 %v981, %v5677
        %v5712 = vadd.f32 %v982, %v5678
        %v5713 = vadd.f32 %v983, %v5679
        %v5714 = vadd.f32 %v984, %v5680
        %v5715 = vadd.f32 %v985, %v5679
        %v5716 = vadd.f32 %v986, %v5680
        %v5717 = vadd.f32 %v987, %v5679
        %v5718 = vadd.f32 %v988, %v5680
        %v5719 = vadd.f32 %v989, %v5679
        %v5720 = vadd.f32 %v990, %v5680
        %v5721 = vxor.u32 %v5689, 2147483648
        %v5722 = vxor.u32 %v5690, 2147483648
        %v5723 = vxor.u32 %v5691, 2147483648
        %v5724 = vxor.u32 %v5692, 2147483648
        %v5725 = vxor.u32 %v5693, 2147483648
        %v5726 = vxor.u32 %v5694, 2147483648
        %v5727 = vxor.u32 %v5695, 2147483648
        %v5728 = vxor.u32 %v5696, 2147483648
        %v5729 = vxor.u32 %v5697, 2147483648
        %v5730 = vxor.u32 %v5698, 2147483648
        %v5731 = vxor.u32 %v5699, 2147483648
        %v5732 = vxor.u32 %v5700, 2147483648
        %v5733 = vxor.u32 %v5701, 2147483648
        %v5734 = vxor.u32 %v5702, 2147483648
        %v5735 = vxor.u32 %v5703, 2147483648
        %v5736 = vxor.u32 %v5704, 2147483648
        %v5737 = vxor.u32 %v5705, 2147483648
        %v5738 = vxor.u32 %v5706, 2147483648
        %v5739 = vxor.u32 %v5707, 2147483648
        %v5740 = vxor.u32 %v5708, 2147483648
        %v5741 = vxor.u32 %v5709, 2147483648
        %v5742 = vxor.u32 %v5710, 2147483648
        %v5743 = vxor.u32 %v5711, 2147483648
        %v5744 = vxor.u32 %v5712, 2147483648
        %v5745 = vxor.u32 %v5713, 2147483648
        %v5746 = vxor.u32 %v5714, 2147483648
        %v5747 = vxor.u32 %v5715, 2147483648
        %v5748 = vxor.u32 %v5716, 2147483648
        %v5749 = vxor.u32 %v5717, 2147483648
        %v5750 = vxor.u32 %v5718, 2147483648
        %v5751 = vxor.u32 %v5719, 2147483648
        %v5752 = vxor.u32 %v5720, 2147483648
        %v5753 = vmul.f32 %v5721, 1.442695
        %v5754 = vpow.pop %v5753
        %v5755 = vmul.f32 %v5722, 1.442695
        %v5756 = vpow.pop %v5755
        %v5757 = vmul.f32 %v5723, 1.442695
        %v5758 = vpow.pop %v5757
        %v5759 = vmul.f32 %v5724, 1.442695
        %v5760 = vpow.pop %v5759
        %v5761 = vmul.f32 %v5725, 1.442695
        %v5762 = vpow.pop %v5761
        %v5763 = vmul.f32 %v5726, 1.442695
        %v5764 = vpow.pop %v5763
        %v5765 = vmul.f32 %v5727, 1.442695
        %v5766 = vpow.pop %v5765
        %v5767 = vmul.f32 %v5728, 1.442695
        %v5768 = vpow.pop %v5767
        %v5769 = vmul.f32 %v5729, 1.442695
        %v5770 = vpow.pop %v5769
        %v5771 = vmul.f32 %v5730, 1.442695
        %v5772 = vpow.pop %v5771
        %v5773 = vmul.f32 %v5731, 1.442695
        %v5774 = vpow.pop %v5773
        %v5775 = vmul.f32 %v5732, 1.442695
        %v5776 = vpow.pop %v5775
        %v5777 = vmul.f32 %v5733, 1.442695
        %v5778 = vpow.pop %v5777
        %v5779 = vmul.f32 %v5734, 1.442695
        %v5780 = vpow.pop %v5779
        %v5781 = vmul.f32 %v5735, 1.442695
        %v5782 = vpow.pop %v5781
        %v5783 = vmul.f32 %v5736, 1.442695
        %v5784 = vpow.pop %v5783
        %v5785 = vmul.f32 %v5737, 1.442695
        %v5786 = vpow.pop %v5785
        %v5787 = vmul.f32 %v5738, 1.442695
        %v5788 = vpow.pop %v5787
        %v5789 = vmul.f32 %v5739, 1.442695
        %v5790 = vpow.pop %v5789
        %v5791 = vmul.f32 %v5740, 1.442695
        %v5792 = vpow.pop %v5791
        %v5793 = vmul.f32 %v5741, 1.442695
        %v5794 = vpow.pop %v5793
        %v5795 = vmul.f32 %v5742, 1.442695
        %v5796 = vpow.pop %v5795
        %v5797 = vmul.f32 %v5743, 1.442695
        %v5798 = vpow.pop %v5797
        %v5799 = vmul.f32 %v5744, 1.442695
        %v5800 = vpow.pop %v5799
        %v5801 = vmul.f32 %v5745, 1.442695
        %v5802 = vpow.pop %v5801
        %v5803 = vmul.f32 %v5746, 1.442695
        %v5804 = vpow.pop %v5803
        %v5805 = vmul.f32 %v5747, 1.442695
        %v5806 = vpow.pop %v5805
        %v5807 = vmul.f32 %v5748, 1.442695
        %v5808 = vpow.pop %v5807
        %v5809 = vmul.f32 %v5749, 1.442695
        %v5810 = vpow.pop %v5809
        %v5811 = vmul.f32 %v5750, 1.442695
        %v5812 = vpow.pop %v5811
        %v5813 = vmul.f32 %v5751, 1.442695
        %v5814 = vpow.pop %v5813
        %v5815 = vmul.f32 %v5752, 1.442695
        %v5816 = vpow.pop %v5815
        %v5817 = vadd.f32 %v5754, 1.0
        %v5818 = vadd.f32 %v5756, 1.0
        %v5819 = vadd.f32 %v5758, 1.0
        %v5820 = vadd.f32 %v5760, 1.0
        %v5821 = vadd.f32 %v5762, 1.0
        %v5822 = vadd.f32 %v5764, 1.0
        %v5823 = vadd.f32 %v5766, 1.0
        %v5824 = vadd.f32 %v5768, 1.0
        %v5825 = vadd.f32 %v5770, 1.0
        %v5826 = vadd.f32 %v5772, 1.0
        %v5827 = vadd.f32 %v5774, 1.0
        %v5828 = vadd.f32 %v5776, 1.0
        %v5829 = vadd.f32 %v5778, 1.0
        %v5830 = vadd.f32 %v5780, 1.0
        %v5831 = vadd.f32 %v5782, 1.0
        %v5832 = vadd.f32 %v5784, 1.0
        %v5833 = vadd.f32 %v5786, 1.0
        %v5834 = vadd.f32 %v5788, 1.0
        %v5835 = vadd.f32 %v5790, 1.0
        %v5836 = vadd.f32 %v5792, 1.0
        %v5837 = vadd.f32 %v5794, 1.0
        %v5838 = vadd.f32 %v5796, 1.0
        %v5839 = vadd.f32 %v5798, 1.0
        %v5840 = vadd.f32 %v5800, 1.0
        %v5841 = vadd.f32 %v5802, 1.0
        %v5842 = vadd.f32 %v5804, 1.0
        %v5843 = vadd.f32 %v5806, 1.0
        %v5844 = vadd.f32 %v5808, 1.0
        %v5845 = vadd.f32 %v5810, 1.0
        %v5846 = vadd.f32 %v5812, 1.0
        %v5847 = vadd.f32 %v5814, 1.0
        %v5848 = vadd.f32 %v5816, 1.0
        %v5849 = vrcp.pop %v5817
        %v5850 = vmul.f32 1.0, %v5849
        %v5851 = vrcp.pop %v5818
        %v5852 = vmul.f32 1.0, %v5851
        %v5853 = vrcp.pop %v5819
        %v5854 = vmul.f32 1.0, %v5853
        %v5855 = vrcp.pop %v5820
        %v5856 = vmul.f32 1.0, %v5855
        %v5857 = vrcp.pop %v5821
        %v5858 = vmul.f32 1.0, %v5857
        %v5859 = vrcp.pop %v5822
        %v5860 = vmul.f32 1.0, %v5859
        %v5861 = vrcp.pop %v5823
        %v5862 = vmul.f32 1.0, %v5861
        %v5863 = vrcp.pop %v5824
        %v5864 = vmul.f32 1.0, %v5863
        %v5865 = vrcp.pop %v5825
        %v5866 = vmul.f32 1.0, %v5865
        %v5867 = vrcp.pop %v5826
        %v5868 = vmul.f32 1.0, %v5867
        %v5869 = vrcp.pop %v5827
        %v5870 = vmul.f32 1.0, %v5869
        %v5871 = vrcp.pop %v5828
        %v5872 = vmul.f32 1.0, %v5871
        %v5873 = vrcp.pop %v5829
        %v5874 = vmul.f32 1.0, %v5873
        %v5875 = vrcp.pop %v5830
        %v5876 = vmul.f32 1.0, %v5875
        %v5877 = vrcp.pop %v5831
        %v5878 = vmul.f32 1.0, %v5877
        %v5879 = vrcp.pop %v5832
        %v5880 = vmul.f32 1.0, %v5879
        %v5881 = vrcp.pop %v5833
        %v5882 = vmul.f32 1.0, %v5881
        %v5883 = vrcp.pop %v5834
        %v5884 = vmul.f32 1.0, %v5883
        %v5885 = vrcp.pop %v5835
        %v5886 = vmul.f32 1.0, %v5885
        %v5887 = vrcp.pop %v5836
        %v5888 = vmul.f32 1.0, %v5887
        %v5889 = vrcp.pop %v5837
        %v5890 = vmul.f32 1.0, %v5889
        %v5891 = vrcp.pop %v5838
        %v5892 = vmul.f32 1.0, %v5891
        %v5893 = vrcp.pop %v5839
        %v5894 = vmul.f32 1.0, %v5893
        %v5895 = vrcp.pop %v5840
        %v5896 = vmul.f32 1.0, %v5895
        %v5897 = vrcp.pop %v5841
        %v5898 = vmul.f32 1.0, %v5897
        %v5899 = vrcp.pop %v5842
        %v5900 = vmul.f32 1.0, %v5899
        %v5901 = vrcp.pop %v5843
        %v5902 = vmul.f32 1.0, %v5901
        %v5903 = vrcp.pop %v5844
        %v5904 = vmul.f32 1.0, %v5903
        %v5905 = vrcp.pop %v5845
        %v5906 = vmul.f32 1.0, %v5905
        %v5907 = vrcp.pop %v5846
        %v5908 = vmul.f32 1.0, %v5907
        %v5909 = vrcp.pop %v5847
        %v5910 = vmul.f32 1.0, %v5909
        %v5911 = vrcp.pop %v5848
        %v5912 = vmul.f32 1.0, %v5911
        %v5913 = vmul.f32 %v4631, %v5850
        %v5914 = vmul.f32 %v4632, %v5852
        %v5915 = vmul.f32 %v4633, %v5854
        %v5916 = vmul.f32 %v4634, %v5856
        %v5917 = vmul.f32 %v4635, %v5858
        %v5918 = vmul.f32 %v4636, %v5860
        %v5919 = vmul.f32 %v4637, %v5862
        %v5920 = vmul.f32 %v4638, %v5864
        %v5921 = vmul.f32 %v4639, %v5866
        %v5922 = vmul.f32 %v4640, %v5868
        %v5923 = vmul.f32 %v4641, %v5870
        %v5924 = vmul.f32 %v4642, %v5872
        %v5925 = vmul.f32 %v4643, %v5874
        %v5926 = vmul.f32 %v4644, %v5876
        %v5927 = vmul.f32 %v4645, %v5878
        %v5928 = vmul.f32 %v4646, %v5880
        %v5929 = vmul.f32 %v4647, %v5882
        %v5930 = vmul.f32 %v4648, %v5884
        %v5931 = vmul.f32 %v4649, %v5886
        %v5932 = vmul.f32 %v4650, %v5888
        %v5933 = vmul.f32 %v4651, %v5890
        %v5934 = vmul.f32 %v4652, %v5892
        %v5935 = vmul.f32 %v4653, %v5894
        %v5936 = vmul.f32 %v4654, %v5896
        %v5937 = vmul.f32 %v4655, %v5898
        %v5938 = vmul.f32 %v4656, %v5900
        %v5939 = vmul.f32 %v4657, %v5902
        %v5940 = vmul.f32 %v4658, %v5904
        %v5941 = vmul.f32 %v4659, %v5906
        %v5942 = vmul.f32 %v4660, %v5908
        %v5943 = vmul.f32 %v4661, %v5910
        %v5944 = vmul.f32 %v4662, %v5912
        %v5945 = vpack.c.bf16 %v5914, %v5913
        %v5946 = vpack.c.bf16 %v5916, %v5915
        %v5947 = vpack.c.bf16 %v5918, %v5917
        %v5948 = vpack.c.bf16 %v5920, %v5919
        %v5949 = vpack.c.bf16 %v5922, %v5921
        %v5950 = vpack.c.bf16 %v5924, %v5923
        %v5951 = vpack.c.bf16 %v5926, %v5925
        %v5952 = vpack.c.bf16 %v5928, %v5927
        %v5953 = vpack.c.bf16 %v5930, %v5929
        %v5954 = vpack.c.bf16 %v5932, %v5931
        %v5955 = vpack.c.bf16 %v5934, %v5933
        %v5956 = vpack.c.bf16 %v5936, %v5935
        %v5957 = vpack.c.bf16 %v5938, %v5937
        %v5958 = vpack.c.bf16 %v5940, %v5939
        %v5959 = vpack.c.bf16 %v5942, %v5941
        %v5960 = vpack.c.bf16 %v5944, %v5943
        %v5977 = vunpack.c.l.b16 %v5945
        %v5978 = vunpack.c.h.b16 %v5945
        %v5979 = vunpack.c.l.b16 %v5946
        %v5980 = vunpack.c.h.b16 %v5946
        %v5981 = vunpack.c.l.b16 %v5947
        %v5982 = vunpack.c.h.b16 %v5947
        %v5983 = vunpack.c.l.b16 %v5948
        %v5984 = vunpack.c.h.b16 %v5948
        %v5985 = vunpack.c.l.b16 %v5949
        %v5986 = vunpack.c.h.b16 %v5949
        %v5987 = vunpack.c.l.b16 %v5950
        %v5988 = vunpack.c.h.b16 %v5950
        %v5989 = vunpack.c.l.b16 %v5951
        %v5990 = vunpack.c.h.b16 %v5951
        %v5991 = vunpack.c.l.b16 %v5952
        %v5992 = vunpack.c.h.b16 %v5952
        %v5993 = vunpack.c.l.b16 %v5953
        %v5994 = vunpack.c.h.b16 %v5953
        %v5995 = vunpack.c.l.b16 %v5954
        %v5996 = vunpack.c.h.b16 %v5954
        %v5997 = vunpack.c.l.b16 %v5955
        %v5998 = vunpack.c.h.b16 %v5955
        %v5999 = vunpack.c.l.b16 %v5956
        %v6000 = vunpack.c.h.b16 %v5956
        %v6001 = vunpack.c.l.b16 %v5957
        %v6002 = vunpack.c.h.b16 %v5957
        %v6003 = vunpack.c.l.b16 %v5958
        %v6004 = vunpack.c.h.b16 %v5958
        %v6005 = vunpack.c.l.b16 %v5959
        %v6006 = vunpack.c.h.b16 %v5959
        %v6007 = vunpack.c.l.b16 %v5960
        %v6008 = vunpack.c.h.b16 %v5960
        %v6009 = vpack.c.b16 %v5977, %v5977
        %v6010 = vpack.c.b16 %v5978, %v5978
        %v6011 = vpack.c.b16 %v5979, %v5979
        %v6012 = vpack.c.b16 %v5980, %v5980
        %v6013 = vpack.c.b16 %v5981, %v5981
        %v6014 = vpack.c.b16 %v5982, %v5982
        %v6015 = vpack.c.b16 %v5983, %v5983
        %v6016 = vpack.c.b16 %v5984, %v5984
        %v6017 = vpack.c.b16 %v5985, %v5985
        %v6018 = vpack.c.b16 %v5986, %v5986
        %v6019 = vpack.c.b16 %v5987, %v5987
        %v6020 = vpack.c.b16 %v5988, %v5988
        %v6021 = vpack.c.b16 %v5989, %v5989
        %v6022 = vpack.c.b16 %v5990, %v5990
        %v6023 = vpack.c.b16 %v5991, %v5991
        %v6024 = vpack.c.b16 %v5992, %v5992
        %v6025 = vpack.c.b16 %v5993, %v5993
        %v6026 = vpack.c.b16 %v5994, %v5994
        %v6027 = vpack.c.b16 %v5995, %v5995
        %v6028 = vpack.c.b16 %v5996, %v5996
        %v6029 = vpack.c.b16 %v5997, %v5997
        %v6030 = vpack.c.b16 %v5998, %v5998
        %v6031 = vpack.c.b16 %v5999, %v5999
        %v6032 = vpack.c.b16 %v6000, %v6000
        %v6033 = vpack.c.b16 %v6001, %v6001
        %v6034 = vpack.c.b16 %v6002, %v6002
        %v6035 = vpack.c.b16 %v6003, %v6003
        %v6036 = vpack.c.b16 %v6004, %v6004
        %v6037 = vpack.c.b16 %v6005, %v6005
        %v6038 = vpack.c.b16 %v6006, %v6006
        %v6039 = vpack.c.b16 %v6007, %v6007
        %v6040 = vpack.c.b16 %v6008, %v6008
        %v6042 = vshrl.u32 %v6009, 16
        %v6044 = vrot.slane %v6042, 7
        %v6045 = vshll.u32 %v6009, 16
        %v6047 = vor.u32 %v6044, %v6045
        %v6048 = vrot.slane %v6044, 4
        %v6050 = vshrl.u32 %v6010, 16
        %v6052 = vrot.slane %v6050, 7
        %v6053 = vshll.u32 %v6010, 16
        %v6055 = vor.u32 %v6052, %v6053
        %v6056 = vsel %vm1088, %v6048, %v6055
        %v6057 = vrot.slane %v6052, 4
        %v6059 = vshrl.u32 %v6011, 16
        %v6061 = vrot.slane %v6059, 7
        %v6062 = vshll.u32 %v6011, 16
        %v6064 = vor.u32 %v6061, %v6062
        %v6065 = vrot.slane %v6061, 4
        %v6067 = vshrl.u32 %v6012, 16
        %v6069 = vrot.slane %v6067, 7
        %v6070 = vshll.u32 %v6012, 16
        %v6072 = vor.u32 %v6069, %v6070
        %v6073 = vsel %vm1088, %v6065, %v6072
        %v6074 = vrot.slane %v6069, 4
        %v6076 = vshrl.u32 %v6013, 16
        %v6078 = vrot.slane %v6076, 7
        %v6079 = vshll.u32 %v6013, 16
        %v6081 = vor.u32 %v6078, %v6079
        %v6082 = vrot.slane %v6078, 4
        %v6084 = vshrl.u32 %v6014, 16
        %v6086 = vrot.slane %v6084, 7
        %v6087 = vshll.u32 %v6014, 16
        %v6089 = vor.u32 %v6086, %v6087
        %v6090 = vsel %vm1088, %v6082, %v6089
        %v6091 = vrot.slane %v6086, 4
        %v6093 = vshrl.u32 %v6015, 16
        %v6095 = vrot.slane %v6093, 7
        %v6096 = vshll.u32 %v6015, 16
        %v6098 = vor.u32 %v6095, %v6096
        %v6099 = vrot.slane %v6095, 4
        %v6101 = vshrl.u32 %v6016, 16
        %v6103 = vrot.slane %v6101, 7
        %v6104 = vshll.u32 %v6016, 16
        %v6106 = vor.u32 %v6103, %v6104
        %v6107 = vsel %vm1088, %v6099, %v6106
        %v6108 = vrot.slane %v6103, 4
        %v6110 = vshrl.u32 %v6017, 16
        %v6112 = vrot.slane %v6110, 7
        %v6113 = vshll.u32 %v6017, 16
        %v6115 = vor.u32 %v6112, %v6113
        %v6116 = vrot.slane %v6112, 4
        %v6118 = vshrl.u32 %v6018, 16
        %v6120 = vrot.slane %v6118, 7
        %v6121 = vshll.u32 %v6018, 16
        %v6123 = vor.u32 %v6120, %v6121
        %v6124 = vsel %vm1088, %v6116, %v6123
        %v6125 = vrot.slane %v6120, 4
        %v6127 = vshrl.u32 %v6019, 16
        %v6129 = vrot.slane %v6127, 7
        %v6130 = vshll.u32 %v6019, 16
        %v6132 = vor.u32 %v6129, %v6130
        %v6133 = vrot.slane %v6129, 4
        %v6135 = vshrl.u32 %v6020, 16
        %v6137 = vrot.slane %v6135, 7
        %v6138 = vshll.u32 %v6020, 16
        %v6140 = vor.u32 %v6137, %v6138
        %v6141 = vsel %vm1088, %v6133, %v6140
        %v6142 = vrot.slane %v6137, 4
        %v6144 = vshrl.u32 %v6021, 16
        %v6146 = vrot.slane %v6144, 7
        %v6147 = vshll.u32 %v6021, 16
        %v6149 = vor.u32 %v6146, %v6147
        %v6150 = vrot.slane %v6146, 4
        %v6152 = vshrl.u32 %v6022, 16
        %v6154 = vrot.slane %v6152, 7
        %v6155 = vshll.u32 %v6022, 16
        %v6157 = vor.u32 %v6154, %v6155
        %v6158 = vsel %vm1088, %v6150, %v6157
        %v6159 = vrot.slane %v6154, 4
        %v6161 = vshrl.u32 %v6023, 16
        %v6163 = vrot.slane %v6161, 7
        %v6164 = vshll.u32 %v6023, 16
        %v6166 = vor.u32 %v6163, %v6164
        %v6167 = vrot.slane %v6163, 4
        %v6169 = vshrl.u32 %v6024, 16
        %v6171 = vrot.slane %v6169, 7
        %v6172 = vshll.u32 %v6024, 16
        %v6174 = vor.u32 %v6171, %v6172
        %v6175 = vsel %vm1088, %v6167, %v6174
        %v6176 = vrot.slane %v6171, 4
        %v6178 = vshrl.u32 %v6025, 16
        %v6180 = vrot.slane %v6178, 7
        %v6181 = vshll.u32 %v6025, 16
        %v6183 = vor.u32 %v6180, %v6181
        %v6184 = vrot.slane %v6180, 4
        %v6186 = vshrl.u32 %v6026, 16
        %v6188 = vrot.slane %v6186, 7
        %v6189 = vshll.u32 %v6026, 16
        %v6191 = vor.u32 %v6188, %v6189
        %v6192 = vsel %vm1088, %v6184, %v6191
        %v6193 = vrot.slane %v6188, 4
        %v6195 = vshrl.u32 %v6027, 16
        %v6197 = vrot.slane %v6195, 7
        %v6198 = vshll.u32 %v6027, 16
        %v6200 = vor.u32 %v6197, %v6198
        %v6201 = vrot.slane %v6197, 4
        %v6203 = vshrl.u32 %v6028, 16
        %v6205 = vrot.slane %v6203, 7
        %v6206 = vshll.u32 %v6028, 16
        %v6208 = vor.u32 %v6205, %v6206
        %v6209 = vsel %vm1088, %v6201, %v6208
        %v6210 = vrot.slane %v6205, 4
        %v6212 = vshrl.u32 %v6029, 16
        %v6214 = vrot.slane %v6212, 7
        %v6215 = vshll.u32 %v6029, 16
        %v6217 = vor.u32 %v6214, %v6215
        %v6218 = vrot.slane %v6214, 4
        %v6220 = vshrl.u32 %v6030, 16
        %v6222 = vrot.slane %v6220, 7
        %v6223 = vshll.u32 %v6030, 16
        %v6225 = vor.u32 %v6222, %v6223
        %v6226 = vsel %vm1088, %v6218, %v6225
        %v6227 = vrot.slane %v6222, 4
        %v6229 = vshrl.u32 %v6031, 16
        %v6231 = vrot.slane %v6229, 7
        %v6232 = vshll.u32 %v6031, 16
        %v6234 = vor.u32 %v6231, %v6232
        %v6235 = vrot.slane %v6231, 4
        %v6237 = vshrl.u32 %v6032, 16
        %v6239 = vrot.slane %v6237, 7
        %v6240 = vshll.u32 %v6032, 16
        %v6242 = vor.u32 %v6239, %v6240
        %v6243 = vsel %vm1088, %v6235, %v6242
        %v6244 = vrot.slane %v6239, 4
        %v6246 = vshrl.u32 %v6033, 16
        %v6248 = vrot.slane %v6246, 7
        %v6249 = vshll.u32 %v6033, 16
        %v6251 = vor.u32 %v6248, %v6249
        %v6252 = vrot.slane %v6248, 4
        %v6254 = vshrl.u32 %v6034, 16
        %v6256 = vrot.slane %v6254, 7
        %v6257 = vshll.u32 %v6034, 16
        %v6259 = vor.u32 %v6256, %v6257
        %v6260 = vsel %vm1088, %v6252, %v6259
        %v6261 = vrot.slane %v6256, 4
        %v6263 = vshrl.u32 %v6035, 16
        %v6265 = vrot.slane %v6263, 7
        %v6266 = vshll.u32 %v6035, 16
        %v6268 = vor.u32 %v6265, %v6266
        %v6269 = vrot.slane %v6265, 4
        %v6271 = vshrl.u32 %v6036, 16
        %v6273 = vrot.slane %v6271, 7
        %v6274 = vshll.u32 %v6036, 16
        %v6276 = vor.u32 %v6273, %v6274
        %v6277 = vsel %vm1088, %v6269, %v6276
        %v6278 = vrot.slane %v6273, 4
        %v6280 = vshrl.u32 %v6037, 16
        %v6282 = vrot.slane %v6280, 7
        %v6283 = vshll.u32 %v6037, 16
        %v6285 = vor.u32 %v6282, %v6283
        %v6286 = vrot.slane %v6282, 4
        %v6288 = vshrl.u32 %v6038, 16
        %v6290 = vrot.slane %v6288, 7
        %v6291 = vshll.u32 %v6038, 16
        %v6293 = vor.u32 %v6290, %v6291
        %v6294 = vsel %vm1088, %v6286, %v6293
        %v6295 = vrot.slane %v6290, 4
        %v6297 = vshrl.u32 %v6039, 16
        %v6299 = vrot.slane %v6297, 7
        %v6300 = vshll.u32 %v6039, 16
        %v6302 = vor.u32 %v6299, %v6300
        %v6303 = vrot.slane %v6299, 4
        %v6305 = vshrl.u32 %v6040, 16
        %v6307 = vrot.slane %v6305, 7
        %v6308 = vshll.u32 %v6040, 16
        %v6310 = vor.u32 %v6307, %v6308
        %v6311 = vsel %vm1088, %v6303, %v6310
        %v6312 = vrot.slane %v6307, 4
        %s6361 = scalar_lea.vmem [#allocation3], 12
        %v6362 = vld [vmem:[%s6361] sm:$0xf]
        %v6363 = vsel %vm1411, %v6047, %v6362
        %6364 = vst [vmem:[%s6361] sm:$0xf] %v6363
        %6365 = vst.msk [vmem:[%s6361 + $0x4] sm:$0xf] %vm406, %v6056
        %v6366 = vld [vmem:[%s6361 + $0x8] sm:$0x1]
        %v6367 = vsel %vm417, %v6057, %v6366
        %6368 = vst [vmem:[%s6361 + $0x8] sm:$0x1] %v6367
        %v6369 = vld [vmem:[%s6361 + $0xc] sm:$0xf]
        %v6370 = vsel %vm1411, %v6064, %v6369
        %6371 = vst [vmem:[%s6361 + $0xc] sm:$0xf] %v6370
        %6372 = vst.msk [vmem:[%s6361 + $0x10] sm:$0xf] %vm406, %v6073
        %v6373 = vld [vmem:[%s6361 + $0x14] sm:$0x1]
        %v6374 = vsel %vm417, %v6074, %v6373
        %6375 = vst [vmem:[%s6361 + $0x14] sm:$0x1] %v6374
        %v6376 = vld [vmem:[%s6361 + $0x18] sm:$0xf]
        %v6377 = vsel %vm1411, %v6081, %v6376
        %6378 = vst [vmem:[%s6361 + $0x18] sm:$0xf] %v6377
        %6379 = vst.msk [vmem:[%s6361 + $0x1c] sm:$0xf] %vm406, %v6090
        %v6380 = vld [vmem:[%s6361 + $0x20] sm:$0x1]
        %v6381 = vsel %vm417, %v6091, %v6380
        %6382 = vst [vmem:[%s6361 + $0x20] sm:$0x1] %v6381
        %v6383 = vld [vmem:[%s6361 + $0x24] sm:$0xf]
        %v6384 = vsel %vm1411, %v6098, %v6383
        %6385 = vst [vmem:[%s6361 + $0x24] sm:$0xf] %v6384
        %6386 = vst.msk [vmem:[%s6361 + $0x28] sm:$0xf] %vm406, %v6107
        %v6387 = vld [vmem:[%s6361 + $0x2c] sm:$0x1]
        %v6388 = vsel %vm417, %v6108, %v6387
        %6389 = vst [vmem:[%s6361 + $0x2c] sm:$0x1] %v6388
        %v6390 = vld [vmem:[%s6361 + $0x30] sm:$0xf]
        %v6391 = vsel %vm1411, %v6115, %v6390
        %6392 = vst [vmem:[%s6361 + $0x30] sm:$0xf] %v6391
        %6393 = vst.msk [vmem:[%s6361 + $0x34] sm:$0xf] %vm406, %v6124
        %v6394 = vld [vmem:[%s6361 + $0x38] sm:$0x1]
        %v6395 = vsel %vm417, %v6125, %v6394
        %6396 = vst [vmem:[%s6361 + $0x38] sm:$0x1] %v6395
        %v6397 = vld [vmem:[%s6361 + $0x3c] sm:$0xf]
        %v6398 = vsel %vm1411, %v6132, %v6397
        %6399 = vst [vmem:[%s6361 + $0x3c] sm:$0xf] %v6398
        %6400 = vst.msk [vmem:[%s6361 + $0x40] sm:$0xf] %vm406, %v6141
        %v6401 = vld [vmem:[%s6361 + $0x44] sm:$0x1]
        %v6402 = vsel %vm417, %v6142, %v6401
        %6403 = vst [vmem:[%s6361 + $0x44] sm:$0x1] %v6402
        %v6404 = vld [vmem:[%s6361 + $0x48] sm:$0xf]
        %v6405 = vsel %vm1411, %v6149, %v6404
        %6406 = vst [vmem:[%s6361 + $0x48] sm:$0xf] %v6405
        %6407 = vst.msk [vmem:[%s6361 + $0x4c] sm:$0xf] %vm406, %v6158
        %v6408 = vld [vmem:[%s6361 + $0x50] sm:$0x1]
        %v6409 = vsel %vm417, %v6159, %v6408
        %6410 = vst [vmem:[%s6361 + $0x50] sm:$0x1] %v6409
        %v6411 = vld [vmem:[%s6361 + $0x54] sm:$0xf]
        %v6412 = vsel %vm1411, %v6166, %v6411
        %6413 = vst [vmem:[%s6361 + $0x54] sm:$0xf] %v6412
        %6414 = vst.msk [vmem:[%s6361 + $0x58] sm:$0xf] %vm406, %v6175
        %v6415 = vld [vmem:[%s6361 + $0x5c] sm:$0x1]
        %v6416 = vsel %vm417, %v6176, %v6415
        %6417 = vst [vmem:[%s6361 + $0x5c] sm:$0x1] %v6416
        %v6418 = vld [vmem:[%s6361 + $0x60] sm:$0xf]
        %v6419 = vsel %vm1411, %v6183, %v6418
        %6420 = vst [vmem:[%s6361 + $0x60] sm:$0xf] %v6419
        %6421 = vst.msk [vmem:[%s6361 + $0x64] sm:$0xf] %vm406, %v6192
        %v6422 = vld [vmem:[%s6361 + $0x68] sm:$0x1]
        %v6423 = vsel %vm417, %v6193, %v6422
        %6424 = vst [vmem:[%s6361 + $0x68] sm:$0x1] %v6423
        %v6425 = vld [vmem:[%s6361 + $0x6c] sm:$0xf]
        %v6426 = vsel %vm1411, %v6200, %v6425
        %6427 = vst [vmem:[%s6361 + $0x6c] sm:$0xf] %v6426
        %6428 = vst.msk [vmem:[%s6361 + $0x70] sm:$0xf] %vm406, %v6209
        %v6429 = vld [vmem:[%s6361 + $0x74] sm:$0x1]
        %v6430 = vsel %vm417, %v6210, %v6429
        %6431 = vst [vmem:[%s6361 + $0x74] sm:$0x1] %v6430
        %v6432 = vld [vmem:[%s6361 + $0x78] sm:$0xf]
        %v6433 = vsel %vm1411, %v6217, %v6432
        %6434 = vst [vmem:[%s6361 + $0x78] sm:$0xf] %v6433
        %6435 = vst.msk [vmem:[%s6361 + $0x7c] sm:$0xf] %vm406, %v6226
        %v6436 = vld [vmem:[%s6361 + $0x80] sm:$0x1]
        %v6437 = vsel %vm417, %v6227, %v6436
        %6438 = vst [vmem:[%s6361 + $0x80] sm:$0x1] %v6437
        %v6439 = vld [vmem:[%s6361 + $0x84] sm:$0xf]
        %v6440 = vsel %vm1411, %v6234, %v6439
        %6441 = vst [vmem:[%s6361 + $0x84] sm:$0xf] %v6440
        %6442 = vst.msk [vmem:[%s6361 + $0x88] sm:$0xf] %vm406, %v6243
        %v6443 = vld [vmem:[%s6361 + $0x8c] sm:$0x1]
        %v6444 = vsel %vm417, %v6244, %v6443
        %6445 = vst [vmem:[%s6361 + $0x8c] sm:$0x1] %v6444
        %v6446 = vld [vmem:[%s6361 + $0x90] sm:$0xf]
        %v6447 = vsel %vm1411, %v6251, %v6446
        %6448 = vst [vmem:[%s6361 + $0x90] sm:$0xf] %v6447
        %6449 = vst.msk [vmem:[%s6361 + $0x94] sm:$0xf] %vm406, %v6260
        %v6450 = vld [vmem:[%s6361 + $0x98] sm:$0x1]
        %v6451 = vsel %vm417, %v6261, %v6450
        %6452 = vst [vmem:[%s6361 + $0x98] sm:$0x1] %v6451
        %v6453 = vld [vmem:[%s6361 + $0x9c] sm:$0xf]
        %v6454 = vsel %vm1411, %v6268, %v6453
        %6455 = vst [vmem:[%s6361 + $0x9c] sm:$0xf] %v6454
        %6456 = vst.msk [vmem:[%s6361 + $0xa0] sm:$0xf] %vm406, %v6277
        %v6457 = vld [vmem:[%s6361 + $0xa4] sm:$0x1]
        %v6458 = vsel %vm417, %v6278, %v6457
        %6459 = vst [vmem:[%s6361 + $0xa4] sm:$0x1] %v6458
        %v6460 = vld [vmem:[%s6361 + $0xa8] sm:$0xf]
        %v6461 = vsel %vm1411, %v6285, %v6460
        %6462 = vst [vmem:[%s6361 + $0xa8] sm:$0xf] %v6461
        %6463 = vst.msk [vmem:[%s6361 + $0xac] sm:$0xf] %vm406, %v6294
        %v6464 = vld [vmem:[%s6361 + $0xb0] sm:$0x1]
        %v6465 = vsel %vm417, %v6295, %v6464
        %6466 = vst [vmem:[%s6361 + $0xb0] sm:$0x1] %v6465
        %v6467 = vld [vmem:[%s6361 + $0xb4] sm:$0xf]
        %v6468 = vsel %vm1411, %v6302, %v6467
        %6469 = vst [vmem:[%s6361 + $0xb4] sm:$0xf] %v6468
        %6470 = vst.msk [vmem:[%s6361 + $0xb8] sm:$0xf] %vm406, %v6311
        %v6471 = vld [vmem:[%s6361 + $0xbc] sm:$0x1]
        %v6472 = vsel %vm417, %v6312, %v6471
        %6473 = vst [vmem:[%s6361 + $0xbc] sm:$0x1] %v6472
        %v6474 = vld [vmem:[#allocation3] sm:$0xf]
        %v6475 = vld [vmem:[#allocation3 + $0x4] sm:$0xf]
        %v6476 = vld [vmem:[#allocation3 + $0xc] sm:$0xf]
        %v6477 = vld [vmem:[#allocation3 + $0x10] sm:$0xf]
        %v6478 = vld [vmem:[#allocation3 + $0x18] sm:$0xf]
        %v6479 = vld [vmem:[#allocation3 + $0x1c] sm:$0xf]
        %v6480 = vld [vmem:[#allocation3 + $0x24] sm:$0xf]
        %v6481 = vld [vmem:[#allocation3 + $0x28] sm:$0xf]
        %v6482 = vld [vmem:[#allocation3 + $0x30] sm:$0xf]
        %v6483 = vld [vmem:[#allocation3 + $0x34] sm:$0xf]
        %v6484 = vld [vmem:[#allocation3 + $0x3c] sm:$0xf]
        %v6485 = vld [vmem:[#allocation3 + $0x40] sm:$0xf]
        %v6486 = vld [vmem:[#allocation3 + $0x48] sm:$0xf]
        %v6487 = vld [vmem:[#allocation3 + $0x4c] sm:$0xf]
        %v6488 = vld [vmem:[#allocation3 + $0x54] sm:$0xf]
        %v6489 = vld [vmem:[#allocation3 + $0x58] sm:$0xf]
        %v6490 = vld [vmem:[#allocation3 + $0x60] sm:$0xf]
        %v6491 = vld [vmem:[#allocation3 + $0x64] sm:$0xf]
        %v6492 = vld [vmem:[#allocation3 + $0x6c] sm:$0xf]
        %v6493 = vld [vmem:[#allocation3 + $0x70] sm:$0xf]
        %v6494 = vld [vmem:[#allocation3 + $0x78] sm:$0xf]
        %v6495 = vld [vmem:[#allocation3 + $0x7c] sm:$0xf]
        %v6496 = vld [vmem:[#allocation3 + $0x84] sm:$0xf]
        %v6497 = vld [vmem:[#allocation3 + $0x88] sm:$0xf]
        %v6498 = vld [vmem:[#allocation3 + $0x90] sm:$0xf]
        %v6499 = vld [vmem:[#allocation3 + $0x94] sm:$0xf]
        %v6500 = vld [vmem:[#allocation3 + $0x9c] sm:$0xf]
        %v6501 = vld [vmem:[#allocation3 + $0xa0] sm:$0xf]
        %v6502 = vld [vmem:[#allocation3 + $0xa8] sm:$0xf]
        %v6503 = vld [vmem:[#allocation3 + $0xac] sm:$0xf]
        %v6504 = vld [vmem:[#allocation3 + $0xb4] sm:$0xf]
        %v6505 = vld [vmem:[#allocation3 + $0xb8] sm:$0xf]
        %v6506 = vld [vmem:[#allocation3 + $0xc0] sm:$0xf]
        %v6507 = vld [vmem:[#allocation3 + $0xc4] sm:$0xf]
        %v6508 = vld [vmem:[#allocation3 + $0xcc] sm:$0xf]
        %v6509 = vld [vmem:[#allocation3 + $0xd0] sm:$0xf]
        %v6510 = vld [vmem:[%s7] sm:$0x3]
        %s6511 = scalar_lea.vmem %s7, 6
        %v6512 = vld [vmem:[%s6511] sm:$0x3]
        %v6545 = vunpack.c.l.b16 %v6476
        %v6546 = vunpack.c.l.b16 %v6477
        %v6547 = vunpack.c.l.b16 %v6478
        %v6548 = vunpack.c.l.b16 %v6479
        %v6549 = vunpack.c.l.b16 %v6480
        %v6550 = vunpack.c.l.b16 %v6481
        %v6551 = vunpack.c.l.b16 %v6482
        %v6552 = vunpack.c.l.b16 %v6483
        %v6553 = vunpack.c.l.b16 %v6484
        %v6554 = vunpack.c.l.b16 %v6485
        %v6555 = vunpack.c.l.b16 %v6486
        %v6556 = vunpack.c.l.b16 %v6487
        %v6557 = vunpack.c.l.b16 %v6488
        %v6558 = vunpack.c.l.b16 %v6489
        %v6559 = vunpack.c.l.b16 %v6490
        %v6560 = vunpack.c.l.b16 %v6491
        %v6561 = vunpack.c.l.b16 %v6492
        %v6562 = vunpack.c.l.b16 %v6493
        %v6563 = vunpack.c.l.b16 %v6494
        %v6564 = vunpack.c.l.b16 %v6495
        %v6565 = vunpack.c.l.b16 %v6496
        %v6566 = vunpack.c.l.b16 %v6497
        %v6567 = vunpack.c.l.b16 %v6498
        %v6568 = vunpack.c.l.b16 %v6499
        %v6569 = vunpack.c.l.b16 %v6500
        %v6570 = vunpack.c.l.b16 %v6501
        %v6571 = vunpack.c.l.b16 %v6502
        %v6572 = vunpack.c.l.b16 %v6503
        %v6573 = vunpack.c.l.b16 %v6504
        %v6574 = vunpack.c.l.b16 %v6505
        %v6575 = vunpack.c.l.b16 %v6506
        %v6576 = vunpack.c.l.b16 %v6507
        %v6577 = vpack.c.b16 %v6546, %v6545
        %v6578 = vpack.c.b16 %v6548, %v6547
        %v6579 = vpack.c.b16 %v6550, %v6549
        %v6580 = vpack.c.b16 %v6552, %v6551
        %v6581 = vpack.c.b16 %v6554, %v6553
        %v6582 = vpack.c.b16 %v6556, %v6555
        %v6583 = vpack.c.b16 %v6558, %v6557
        %v6584 = vpack.c.b16 %v6560, %v6559
        %v6585 = vpack.c.b16 %v6562, %v6561
        %v6586 = vpack.c.b16 %v6564, %v6563
        %v6587 = vpack.c.b16 %v6566, %v6565
        %v6588 = vpack.c.b16 %v6568, %v6567
        %v6589 = vpack.c.b16 %v6570, %v6569
        %v6590 = vpack.c.b16 %v6572, %v6571
        %v6591 = vpack.c.b16 %v6574, %v6573
        %v6592 = vpack.c.b16 %v6576, %v6575
        %v6594 = vsel %vm1938, %v6577, 0
        %v6597 = vsel %vm1938, %v6578, 0
        %v6600 = vsel %vm1938, %v6579, 0
        %v6603 = vsel %vm1938, %v6580, 0
        %v6606 = vsel %vm1938, %v6581, 0
        %v6609 = vsel %vm1938, %v6582, 0
        %v6612 = vsel %vm1938, %v6583, 0
        %v6615 = vsel %vm1938, %v6584, 0
        %v6618 = vsel %vm1938, %v6585, 0
        %v6621 = vsel %vm1938, %v6586, 0
        %v6624 = vsel %vm1938, %v6587, 0
        %v6627 = vsel %vm1938, %v6588, 0
        %v6630 = vsel %vm1938, %v6589, 0
        %v6633 = vsel %vm1938, %v6590, 0
        %v6636 = vsel %vm1938, %v6591, 0
        %v6639 = vsel %vm1938, %v6592, 0
        %v6642 = vsel %vm1987, %v6512, 0
        %6644 = vmatprep.subr.bf16.mxu0 0
        %6645 = vmatpush1.bf16.msra.mxu0 %v6642
        %6646 = vmatprep.subr.bf16.mxu0 0
        %6647 = vmatpush1.bf16.msra.mxu0 0
        %6648 = vmatprep.subr.bf16.mxu0 0
        %6649 = vmatpush1.bf16.msra.mxu0 0
        %6650 = vmatprep.subr.bf16.mxu0 0
        %6651 = vmatpush1.bf16.msra.mxu0 0
        %6652 = vmatprep.subr.bf16.mxu0 0
        %6653 = vmatpush1.bf16.msra.mxu0 0
        %6654 = vmatprep.subr.bf16.mxu0 0
        %6655 = vmatpush1.bf16.msra.mxu0 0
        %6656 = vmatprep.subr.bf16.mxu0 0
        %6657 = vmatpush1.bf16.msra.mxu0 0
        %6658 = vmatprep.subr.bf16.mxu0 0
        %6659 = vmatpush1.bf16.msra.mxu0 0
        %6660 = vmatprep.subr.bf16.mxu0 0
        %6661 = vmatpush1.bf16.msra.mxu0 0
        %6662 = vmatprep.subr.bf16.mxu0 0
        %6663 = vmatpush1.bf16.msra.mxu0 0
        %6664 = vmatprep.subr.bf16.mxu0 0
        %6665 = vmatpush1.bf16.msra.mxu0 0
        %6666 = vmatprep.subr.bf16.mxu0 0
        %6667 = vmatpush1.bf16.msra.mxu0 0
        %6668 = vmatprep.subr.bf16.mxu0 0
        %6669 = vmatpush1.bf16.msra.mxu0 0
        %6670 = vmatprep.subr.bf16.mxu0 0
        %6671 = vmatpush1.bf16.msra.mxu0 0
        %6672 = vmatprep.subr.bf16.mxu0 0
        %6673 = vmatpush1.bf16.msra.mxu0 0
        %6674 = vmatprep.subr.bf16.mxu0 0
        %6675 = vmatpush1.bf16.msra.mxu0 0
        %6676 = vmatprep.mubr.bf16.mxu0 0
        %6677 = vmatmul.mubr.bf16.gmra.mrb[0].mxu0 %v6594
        %v6678 = vpop.f32.mrb[0].mxu0
        %v6679 = vadd.f32 0.0, %v6678
        %v6680 = vpop.f32.mrb[0].mxu0
        %v6681 = vpop.f32.mrb[0].mxu0
        %v6682 = vadd.f32 0.0, %v6681
        %v6683 = vpop.f32.mrb[0].mxu0
        %6684 = vmatprep.mubr.bf16.mxu0 0
        %6685 = vmatmul.mubr.bf16.gmra.mrb[0].mxu0 %v6597
        %v6686 = vpop.f32.mrb[0].mxu0
        %v6687 = vadd.f32 0.0, %v6686
        %v6688 = vpop.f32.mrb[0].mxu0
        %v6689 = vpop.f32.mrb[0].mxu0
        %v6690 = vadd.f32 0.0, %v6689
        %v6691 = vpop.f32.mrb[0].mxu0
        %6692 = vmatprep.mubr.bf16.mxu0 0
        %6693 = vmatmul.mubr.bf16.gmra.mrb[0].mxu0 %v6600
        %v6694 = vpop.f32.mrb[0].mxu0
        %v6695 = vadd.f32 0.0, %v6694
        %v6696 = vpop.f32.mrb[0].mxu0
        %v6697 = vpop.f32.mrb[0].mxu0
        %v6698 = vadd.f32 0.0, %v6697
        %v6699 = vpop.f32.mrb[0].mxu0
        %6700 = vmatprep.mubr.bf16.mxu0 0
        %6701 = vmatmul.mubr.bf16.gmra.mrb[0].mxu0 %v6603
        %v6702 = vpop.f32.mrb[0].mxu0
        %v6703 = vadd.f32 0.0, %v6702
        %v6704 = vpop.f32.mrb[0].mxu0
        %v6705 = vpop.f32.mrb[0].mxu0
        %v6706 = vadd.f32 0.0, %v6705
        %v6707 = vpop.f32.mrb[0].mxu0
        %6708 = vmatprep.mubr.bf16.mxu0 0
        %6709 = vmatmul.mubr.bf16.gmra.mrb[0].mxu0 %v6606
        %v6710 = vpop.f32.mrb[0].mxu0
        %v6711 = vadd.f32 0.0, %v6710
        %v6712 = vpop.f32.mrb[0].mxu0
        %v6713 = vpop.f32.mrb[0].mxu0
        %v6714 = vadd.f32 0.0, %v6713
        %v6715 = vpop.f32.mrb[0].mxu0
        %6716 = vmatprep.mubr.bf16.mxu0 0
        %6717 = vmatmul.mubr.bf16.gmra.mrb[0].mxu0 %v6609
        %v6718 = vpop.f32.mrb[0].mxu0
        %v6719 = vadd.f32 0.0, %v6718
        %v6720 = vpop.f32.mrb[0].mxu0
        %v6721 = vpop.f32.mrb[0].mxu0
        %v6722 = vadd.f32 0.0, %v6721
        %v6723 = vpop.f32.mrb[0].mxu0
        %6724 = vmatprep.mubr.bf16.mxu0 0
        %6725 = vmatmul.mubr.bf16.gmra.mrb[0].mxu0 %v6612
        %v6726 = vpop.f32.mrb[0].mxu0
        %v6727 = vadd.f32 0.0, %v6726
        %v6728 = vpop.f32.mrb[0].mxu0
        %v6729 = vpop.f32.mrb[0].mxu0
        %v6730 = vadd.f32 0.0, %v6729
        %v6731 = vpop.f32.mrb[0].mxu0
        %6732 = vmatprep.mubr.bf16.mxu0 0
        %6733 = vmatmul.mubr.bf16.gmra.mrb[0].mxu0 %v6615
        %v6734 = vpop.f32.mrb[0].mxu0
        %v6735 = vadd.f32 0.0, %v6734
        %v6736 = vpop.f32.mrb[0].mxu0
        %v6737 = vpop.f32.mrb[0].mxu0
        %v6738 = vadd.f32 0.0, %v6737
        %v6739 = vpop.f32.mrb[0].mxu0
        %6740 = vmatprep.mubr.bf16.mxu0 0
        %6741 = vmatmul.mubr.bf16.gmra.mrb[0].mxu0 %v6618
        %v6742 = vpop.f32.mrb[0].mxu0
        %v6743 = vadd.f32 0.0, %v6742
        %v6744 = vpop.f32.mrb[0].mxu0
        %v6745 = vpop.f32.mrb[0].mxu0
        %v6746 = vadd.f32 0.0, %v6745
        %v6747 = vpop.f32.mrb[0].mxu0
        %6748 = vmatprep.mubr.bf16.mxu0 0
        %6749 = vmatmul.mubr.bf16.gmra.mrb[0].mxu0 %v6621
        %v6750 = vpop.f32.mrb[0].mxu0
        %v6751 = vadd.f32 0.0, %v6750
        %v6752 = vpop.f32.mrb[0].mxu0
        %v6753 = vpop.f32.mrb[0].mxu0
        %v6754 = vadd.f32 0.0, %v6753
        %v6755 = vpop.f32.mrb[0].mxu0
        %6756 = vmatprep.mubr.bf16.mxu0 0
        %6757 = vmatmul.mubr.bf16.gmra.mrb[0].mxu0 %v6624
        %v6758 = vpop.f32.mrb[0].mxu0
        %v6759 = vadd.f32 0.0, %v6758
        %v6760 = vpop.f32.mrb[0].mxu0
        %v6761 = vpop.f32.mrb[0].mxu0
        %v6762 = vadd.f32 0.0, %v6761
        %v6763 = vpop.f32.mrb[0].mxu0
        %6764 = vmatprep.mubr.bf16.mxu0 0
        %6765 = vmatmul.mubr.bf16.gmra.mrb[0].mxu0 %v6627
        %v6766 = vpop.f32.mrb[0].mxu0
        %v6767 = vadd.f32 0.0, %v6766
        %v6768 = vpop.f32.mrb[0].mxu0
        %v6769 = vpop.f32.mrb[0].mxu0
        %v6770 = vadd.f32 0.0, %v6769
        %v6771 = vpop.f32.mrb[0].mxu0
        %6772 = vmatprep.mubr.bf16.mxu0 0
        %6773 = vmatmul.mubr.bf16.gmra.mrb[0].mxu0 %v6630
        %v6774 = vpop.f32.mrb[0].mxu0
        %v6775 = vadd.f32 0.0, %v6774
        %v6776 = vpop.f32.mrb[0].mxu0
        %v6777 = vpop.f32.mrb[0].mxu0
        %v6778 = vadd.f32 0.0, %v6777
        %v6779 = vpop.f32.mrb[0].mxu0
        %6780 = vmatprep.mubr.bf16.mxu0 0
        %6781 = vmatmul.mubr.bf16.gmra.mrb[0].mxu0 %v6633
        %v6782 = vpop.f32.mrb[0].mxu0
        %v6783 = vadd.f32 0.0, %v6782
        %v6784 = vpop.f32.mrb[0].mxu0
        %v6785 = vpop.f32.mrb[0].mxu0
        %v6786 = vadd.f32 0.0, %v6785
        %v6787 = vpop.f32.mrb[0].mxu0
        %6788 = vmatprep.mubr.bf16.mxu0 0
        %6789 = vmatmul.mubr.bf16.gmra.mrb[0].mxu0 %v6636
        %v6790 = vpop.f32.mrb[0].mxu0
        %v6791 = vadd.f32 0.0, %v6790
        %v6792 = vpop.f32.mrb[0].mxu0
        %v6793 = vpop.f32.mrb[0].mxu0
        %v6794 = vadd.f32 0.0, %v6793
        %v6795 = vpop.f32.mrb[0].mxu0
        %6796 = vmatprep.mubr.bf16.mxu0 0
        %6797 = vmatmul.mubr.bf16.gmra.mrb[0].mxu0 %v6639
        %v6798 = vpop.f32.mrb[0].mxu0
        %v6799 = vadd.f32 0.0, %v6798
        %v6800 = vpop.f32.mrb[0].mxu0
        %v6801 = vpop.f32.mrb[0].mxu0
        %v6802 = vadd.f32 0.0, %v6801
        %v6803 = vpop.f32.mrb[0].mxu0
        %6804 = vdwg.mxu0
        %v6807 = vunpack.c.l.b16 %v6474
        %v6808 = vunpack.c.l.b16 %v6475
        %v6809 = vpack.c.b16 %v6808, %v6807
        %v6811 = vsel %vm1938, %v6809, 0
        %v6814 = vsel %vm1987, %v6510, 0
        %6816 = vmatprep.subr.bf16.mxu0 0
        %6817 = vmatpush1.bf16.msra.mxu0 %v6814
        %6818 = vmatprep.subr.bf16.mxu0 0
        %6819 = vmatpush1.bf16.msra.mxu0 0
        %6820 = vmatprep.subr.bf16.mxu0 0
        %6821 = vmatpush1.bf16.msra.mxu0 0
        %6822 = vmatprep.subr.bf16.mxu0 0
        %6823 = vmatpush1.bf16.msra.mxu0 0
        %6824 = vmatprep.subr.bf16.mxu0 0
        %6825 = vmatpush1.bf16.msra.mxu0 0
        %6826 = vmatprep.subr.bf16.mxu0 0
        %6827 = vmatpush1.bf16.msra.mxu0 0
        %6828 = vmatprep.subr.bf16.mxu0 0
        %6829 = vmatpush1.bf16.msra.mxu0 0
        %6830 = vmatprep.subr.bf16.mxu0 0
        %6831 = vmatpush1.bf16.msra.mxu0 0
        %6832 = vmatprep.subr.bf16.mxu0 0
        %6833 = vmatpush1.bf16.msra.mxu0 0
        %6834 = vmatprep.subr.bf16.mxu0 0
        %6835 = vmatpush1.bf16.msra.mxu0 0
        %6836 = vmatprep.subr.bf16.mxu0 0
        %6837 = vmatpush1.bf16.msra.mxu0 0
        %6838 = vmatprep.subr.bf16.mxu0 0
        %6839 = vmatpush1.bf16.msra.mxu0 0
        %6840 = vmatprep.subr.bf16.mxu0 0
        %6841 = vmatpush1.bf16.msra.mxu0 0
        %6842 = vmatprep.subr.bf16.mxu0 0
        %6843 = vmatpush1.bf16.msra.mxu0 0
        %6844 = vmatprep.subr.bf16.mxu0 0
        %6845 = vmatpush1.bf16.msra.mxu0 0
        %6846 = vmatprep.subr.bf16.mxu0 0
        %6847 = vmatpush1.bf16.msra.mxu0 0
        %6848 = vmatprep.mubr.bf16.mxu0 0
        %6849 = vmatmul.mubr.bf16.gmra.mrb[0].mxu0 %v6811
        %v6850 = vpop.f32.mrb[0].mxu0
        %v6851 = vadd.f32 %v6679, %v6850
        %v6852 = vpop.f32.mrb[0].mxu0
        %v6853 = vpop.f32.mrb[0].mxu0
        %v6854 = vadd.f32 %v6682, %v6853
        %v6855 = vpop.f32.mrb[0].mxu0
        %6856 = vmatprep.mubr.bf16.mxu0 0
        %6857 = vmatmul.mubr.bf16.gmra.mrb[0].mxu0 %v6594
        %v6858 = vpop.f32.mrb[0].mxu0
        %v6859 = vadd.f32 %v6687, %v6858
        %v6860 = vpop.f32.mrb[0].mxu0
        %v6861 = vpop.f32.mrb[0].mxu0
        %v6862 = vadd.f32 %v6690, %v6861
        %v6863 = vpop.f32.mrb[0].mxu0
        %6864 = vmatprep.mubr.bf16.mxu0 0
        %6865 = vmatmul.mubr.bf16.gmra.mrb[0].mxu0 %v6597
        %v6866 = vpop.f32.mrb[0].mxu0
        %v6867 = vadd.f32 %v6695, %v6866
        %v6868 = vpop.f32.mrb[0].mxu0
        %v6869 = vpop.f32.mrb[0].mxu0
        %v6870 = vadd.f32 %v6698, %v6869
        %v6871 = vpop.f32.mrb[0].mxu0
        %6872 = vmatprep.mubr.bf16.mxu0 0
        %6873 = vmatmul.mubr.bf16.gmra.mrb[0].mxu0 %v6600
        %v6874 = vpop.f32.mrb[0].mxu0
        %v6875 = vadd.f32 %v6703, %v6874
        %v6876 = vpop.f32.mrb[0].mxu0
        %v6877 = vpop.f32.mrb[0].mxu0
        %v6878 = vadd.f32 %v6706, %v6877
        %v6879 = vpop.f32.mrb[0].mxu0
        %6880 = vmatprep.mubr.bf16.mxu0 0
        %6881 = vmatmul.mubr.bf16.gmra.mrb[0].mxu0 %v6603
        %v6882 = vpop.f32.mrb[0].mxu0
        %v6883 = vadd.f32 %v6711, %v6882
        %v6884 = vpop.f32.mrb[0].mxu0
        %v6885 = vpop.f32.mrb[0].mxu0
        %v6886 = vadd.f32 %v6714, %v6885
        %v6887 = vpop.f32.mrb[0].mxu0
        %6888 = vmatprep.mubr.bf16.mxu0 0
        %6889 = vmatmul.mubr.bf16.gmra.mrb[0].mxu0 %v6606
        %v6890 = vpop.f32.mrb[0].mxu0
        %v6891 = vadd.f32 %v6719, %v6890
        %v6892 = vpop.f32.mrb[0].mxu0
        %v6893 = vpop.f32.mrb[0].mxu0
        %v6894 = vadd.f32 %v6722, %v6893
        %v6895 = vpop.f32.mrb[0].mxu0
        %6896 = vmatprep.mubr.bf16.mxu0 0
        %6897 = vmatmul.mubr.bf16.gmra.mrb[0].mxu0 %v6609
        %v6898 = vpop.f32.mrb[0].mxu0
        %v6899 = vadd.f32 %v6727, %v6898
        %v6900 = vpop.f32.mrb[0].mxu0
        %v6901 = vpop.f32.mrb[0].mxu0
        %v6902 = vadd.f32 %v6730, %v6901
        %v6903 = vpop.f32.mrb[0].mxu0
        %6904 = vmatprep.mubr.bf16.mxu0 0
        %6905 = vmatmul.mubr.bf16.gmra.mrb[0].mxu0 %v6612
        %v6906 = vpop.f32.mrb[0].mxu0
        %v6907 = vadd.f32 %v6735, %v6906
        %v6908 = vpop.f32.mrb[0].mxu0
        %v6909 = vpop.f32.mrb[0].mxu0
        %v6910 = vadd.f32 %v6738, %v6909
        %v6911 = vpop.f32.mrb[0].mxu0
        %6912 = vmatprep.mubr.bf16.mxu0 0
        %6913 = vmatmul.mubr.bf16.gmra.mrb[0].mxu0 %v6615
        %v6914 = vpop.f32.mrb[0].mxu0
        %v6915 = vadd.f32 %v6743, %v6914
        %v6916 = vpop.f32.mrb[0].mxu0
        %v6917 = vpop.f32.mrb[0].mxu0
        %v6918 = vadd.f32 %v6746, %v6917
        %v6919 = vpop.f32.mrb[0].mxu0
        %6920 = vmatprep.mubr.bf16.mxu0 0
        %6921 = vmatmul.mubr.bf16.gmra.mrb[0].mxu0 %v6618
        %v6922 = vpop.f32.mrb[0].mxu0
        %v6923 = vadd.f32 %v6751, %v6922
        %v6924 = vpop.f32.mrb[0].mxu0
        %v6925 = vpop.f32.mrb[0].mxu0
        %v6926 = vadd.f32 %v6754, %v6925
        %v6927 = vpop.f32.mrb[0].mxu0
        %6928 = vmatprep.mubr.bf16.mxu0 0
        %6929 = vmatmul.mubr.bf16.gmra.mrb[0].mxu0 %v6621
        %v6930 = vpop.f32.mrb[0].mxu0
        %v6931 = vadd.f32 %v6759, %v6930
        %v6932 = vpop.f32.mrb[0].mxu0
        %v6933 = vpop.f32.mrb[0].mxu0
        %v6934 = vadd.f32 %v6762, %v6933
        %v6935 = vpop.f32.mrb[0].mxu0
        %6936 = vmatprep.mubr.bf16.mxu0 0
        %6937 = vmatmul.mubr.bf16.gmra.mrb[0].mxu0 %v6624
        %v6938 = vpop.f32.mrb[0].mxu0
        %v6939 = vadd.f32 %v6767, %v6938
        %v6940 = vpop.f32.mrb[0].mxu0
        %v6941 = vpop.f32.mrb[0].mxu0
        %v6942 = vadd.f32 %v6770, %v6941
        %v6943 = vpop.f32.mrb[0].mxu0
        %6944 = vmatprep.mubr.bf16.mxu0 0
        %6945 = vmatmul.mubr.bf16.gmra.mrb[0].mxu0 %v6627
        %v6946 = vpop.f32.mrb[0].mxu0
        %v6947 = vadd.f32 %v6775, %v6946
        %v6948 = vpop.f32.mrb[0].mxu0
        %v6949 = vpop.f32.mrb[0].mxu0
        %v6950 = vadd.f32 %v6778, %v6949
        %v6951 = vpop.f32.mrb[0].mxu0
        %6952 = vmatprep.mubr.bf16.mxu0 0
        %6953 = vmatmul.mubr.bf16.gmra.mrb[0].mxu0 %v6630
        %v6954 = vpop.f32.mrb[0].mxu0
        %v6955 = vadd.f32 %v6783, %v6954
        %v6956 = vpop.f32.mrb[0].mxu0
        %v6957 = vpop.f32.mrb[0].mxu0
        %v6958 = vadd.f32 %v6786, %v6957
        %v6959 = vpop.f32.mrb[0].mxu0
        %6960 = vmatprep.mubr.bf16.mxu0 0
        %6961 = vmatmul.mubr.bf16.gmra.mrb[0].mxu0 %v6633
        %v6962 = vpop.f32.mrb[0].mxu0
        %v6963 = vadd.f32 %v6791, %v6962
        %v6964 = vpop.f32.mrb[0].mxu0
        %v6965 = vpop.f32.mrb[0].mxu0
        %v6966 = vadd.f32 %v6794, %v6965
        %v6967 = vpop.f32.mrb[0].mxu0
        %6968 = vmatprep.mubr.bf16.mxu0 0
        %6969 = vmatmul.mubr.bf16.gmra.mrb[0].mxu0 %v6636
        %v6970 = vpop.f32.mrb[0].mxu0
        %v6971 = vadd.f32 %v6799, %v6970
        %v6972 = vpop.f32.mrb[0].mxu0
        %v6973 = vpop.f32.mrb[0].mxu0
        %v6974 = vadd.f32 %v6802, %v6973
        %v6975 = vpop.f32.mrb[0].mxu0
        %6976 = vdwg.mxu0
        %s6977 = scalar_lea.vmem %s7, 12
        %v6978 = vld [vmem:[%s6977] sm:$0x3]
        %v6981 = vunpack.c.l.b16 %v6508
        %v6982 = vunpack.c.l.b16 %v6509
        %v6983 = vpack.c.b16 %v6982, %v6981
        %v6985 = vsel %vm1938, %v6983, 0
        %v6988 = vsel %vm1987, %v6978, 0
        %6990 = vmatprep.subr.bf16.mxu0 0
        %6991 = vmatpush1.bf16.msra.mxu0 %v6988
        %6992 = vmatprep.subr.bf16.mxu0 0
        %6993 = vmatpush1.bf16.msra.mxu0 0
        %6994 = vmatprep.subr.bf16.mxu0 0
        %6995 = vmatpush1.bf16.msra.mxu0 0
        %6996 = vmatprep.subr.bf16.mxu0 0
        %6997 = vmatpush1.bf16.msra.mxu0 0
        %6998 = vmatprep.subr.bf16.mxu0 0
        %6999 = vmatpush1.bf16.msra.mxu0 0
        %7000 = vmatprep.subr.bf16.mxu0 0
        %7001 = vmatpush1.bf16.msra.mxu0 0
        %7002 = vmatprep.subr.bf16.mxu0 0
        %7003 = vmatpush1.bf16.msra.mxu0 0
        %7004 = vmatprep.subr.bf16.mxu0 0
        %7005 = vmatpush1.bf16.msra.mxu0 0
        %7006 = vmatprep.subr.bf16.mxu0 0
        %7007 = vmatpush1.bf16.msra.mxu0 0
        %7008 = vmatprep.subr.bf16.mxu0 0
        %7009 = vmatpush1.bf16.msra.mxu0 0
        %7010 = vmatprep.subr.bf16.mxu0 0
        %7011 = vmatpush1.bf16.msra.mxu0 0
        %7012 = vmatprep.subr.bf16.mxu0 0
        %7013 = vmatpush1.bf16.msra.mxu0 0
        %7014 = vmatprep.subr.bf16.mxu0 0
        %7015 = vmatpush1.bf16.msra.mxu0 0
        %7016 = vmatprep.subr.bf16.mxu0 0
        %7017 = vmatpush1.bf16.msra.mxu0 0
        %7018 = vmatprep.subr.bf16.mxu0 0
        %7019 = vmatpush1.bf16.msra.mxu0 0
        %7020 = vmatprep.subr.bf16.mxu0 0
        %7021 = vmatpush1.bf16.msra.mxu0 0
        %7022 = vmatprep.mubr.bf16.mxu0 0
        %7023 = vmatmul.mubr.bf16.gmra.mrb[0].mxu0 %v6597
        %v7024 = vpop.f32.mrb[0].mxu0
        %v7025 = vadd.f32 0.0, %v7024
        %v7026 = vpop.f32.mrb[0].mxu0
        %v7027 = vpop.f32.mrb[0].mxu0
        %v7028 = vadd.f32 0.0, %v7027
        %v7029 = vpop.f32.mrb[0].mxu0
        %7030 = vmatprep.mubr.bf16.mxu0 0
        %7031 = vmatmul.mubr.bf16.gmra.mrb[0].mxu0 %v6600
        %v7032 = vpop.f32.mrb[0].mxu0
        %v7033 = vadd.f32 0.0, %v7032
        %v7034 = vpop.f32.mrb[0].mxu0
        %v7035 = vpop.f32.mrb[0].mxu0
        %v7036 = vadd.f32 0.0, %v7035
        %v7037 = vpop.f32.mrb[0].mxu0
        %7038 = vmatprep.mubr.bf16.mxu0 0
        %7039 = vmatmul.mubr.bf16.gmra.mrb[0].mxu0 %v6603
        %v7040 = vpop.f32.mrb[0].mxu0
        %v7041 = vadd.f32 0.0, %v7040
        %v7042 = vpop.f32.mrb[0].mxu0
        %v7043 = vpop.f32.mrb[0].mxu0
        %v7044 = vadd.f32 0.0, %v7043
        %v7045 = vpop.f32.mrb[0].mxu0
        %7046 = vmatprep.mubr.bf16.mxu0 0
        %7047 = vmatmul.mubr.bf16.gmra.mrb[0].mxu0 %v6606
        %v7048 = vpop.f32.mrb[0].mxu0
        %v7049 = vadd.f32 0.0, %v7048
        %v7050 = vpop.f32.mrb[0].mxu0
        %v7051 = vpop.f32.mrb[0].mxu0
        %v7052 = vadd.f32 0.0, %v7051
        %v7053 = vpop.f32.mrb[0].mxu0
        %7054 = vmatprep.mubr.bf16.mxu0 0
        %7055 = vmatmul.mubr.bf16.gmra.mrb[0].mxu0 %v6609
        %v7056 = vpop.f32.mrb[0].mxu0
        %v7057 = vadd.f32 0.0, %v7056
        %v7058 = vpop.f32.mrb[0].mxu0
        %v7059 = vpop.f32.mrb[0].mxu0
        %v7060 = vadd.f32 0.0, %v7059
        %v7061 = vpop.f32.mrb[0].mxu0
        %7062 = vmatprep.mubr.bf16.mxu0 0
        %7063 = vmatmul.mubr.bf16.gmra.mrb[0].mxu0 %v6612
        %v7064 = vpop.f32.mrb[0].mxu0
        %v7065 = vadd.f32 0.0, %v7064
        %v7066 = vpop.f32.mrb[0].mxu0
        %v7067 = vpop.f32.mrb[0].mxu0
        %v7068 = vadd.f32 0.0, %v7067
        %v7069 = vpop.f32.mrb[0].mxu0
        %7070 = vmatprep.mubr.bf16.mxu0 0
        %7071 = vmatmul.mubr.bf16.gmra.mrb[0].mxu0 %v6615
        %v7072 = vpop.f32.mrb[0].mxu0
        %v7073 = vadd.f32 0.0, %v7072
        %v7074 = vpop.f32.mrb[0].mxu0
        %v7075 = vpop.f32.mrb[0].mxu0
        %v7076 = vadd.f32 0.0, %v7075
        %v7077 = vpop.f32.mrb[0].mxu0
        %7078 = vmatprep.mubr.bf16.mxu0 0
        %7079 = vmatmul.mubr.bf16.gmra.mrb[0].mxu0 %v6618
        %v7080 = vpop.f32.mrb[0].mxu0
        %v7081 = vadd.f32 0.0, %v7080
        %v7082 = vpop.f32.mrb[0].mxu0
        %v7083 = vpop.f32.mrb[0].mxu0
        %v7084 = vadd.f32 0.0, %v7083
        %v7085 = vpop.f32.mrb[0].mxu0
        %7086 = vmatprep.mubr.bf16.mxu0 0
        %7087 = vmatmul.mubr.bf16.gmra.mrb[0].mxu0 %v6621
        %v7088 = vpop.f32.mrb[0].mxu0
        %v7089 = vadd.f32 0.0, %v7088
        %v7090 = vpop.f32.mrb[0].mxu0
        %v7091 = vpop.f32.mrb[0].mxu0
        %v7092 = vadd.f32 0.0, %v7091
        %v7093 = vpop.f32.mrb[0].mxu0
        %7094 = vmatprep.mubr.bf16.mxu0 0
        %7095 = vmatmul.mubr.bf16.gmra.mrb[0].mxu0 %v6624
        %v7096 = vpop.f32.mrb[0].mxu0
        %v7097 = vadd.f32 0.0, %v7096
        %v7098 = vpop.f32.mrb[0].mxu0
        %v7099 = vpop.f32.mrb[0].mxu0
        %v7100 = vadd.f32 0.0, %v7099
        %v7101 = vpop.f32.mrb[0].mxu0
        %7102 = vmatprep.mubr.bf16.mxu0 0
        %7103 = vmatmul.mubr.bf16.gmra.mrb[0].mxu0 %v6627
        %v7104 = vpop.f32.mrb[0].mxu0
        %v7105 = vadd.f32 0.0, %v7104
        %v7106 = vpop.f32.mrb[0].mxu0
        %v7107 = vpop.f32.mrb[0].mxu0
        %v7108 = vadd.f32 0.0, %v7107
        %v7109 = vpop.f32.mrb[0].mxu0
        %7110 = vmatprep.mubr.bf16.mxu0 0
        %7111 = vmatmul.mubr.bf16.gmra.mrb[0].mxu0 %v6630
        %v7112 = vpop.f32.mrb[0].mxu0
        %v7113 = vadd.f32 0.0, %v7112
        %v7114 = vpop.f32.mrb[0].mxu0
        %v7115 = vpop.f32.mrb[0].mxu0
        %v7116 = vadd.f32 0.0, %v7115
        %v7117 = vpop.f32.mrb[0].mxu0
        %7118 = vmatprep.mubr.bf16.mxu0 0
        %7119 = vmatmul.mubr.bf16.gmra.mrb[0].mxu0 %v6633
        %v7120 = vpop.f32.mrb[0].mxu0
        %v7121 = vadd.f32 0.0, %v7120
        %v7122 = vpop.f32.mrb[0].mxu0
        %v7123 = vpop.f32.mrb[0].mxu0
        %v7124 = vadd.f32 0.0, %v7123
        %v7125 = vpop.f32.mrb[0].mxu0
        %7126 = vmatprep.mubr.bf16.mxu0 0
        %7127 = vmatmul.mubr.bf16.gmra.mrb[0].mxu0 %v6636
        %v7128 = vpop.f32.mrb[0].mxu0
        %v7129 = vadd.f32 0.0, %v7128
        %v7130 = vpop.f32.mrb[0].mxu0
        %v7131 = vpop.f32.mrb[0].mxu0
        %v7132 = vadd.f32 0.0, %v7131
        %v7133 = vpop.f32.mrb[0].mxu0
        %7134 = vmatprep.mubr.bf16.mxu0 0
        %7135 = vmatmul.mubr.bf16.gmra.mrb[0].mxu0 %v6639
        %v7136 = vpop.f32.mrb[0].mxu0
        %v7137 = vadd.f32 0.0, %v7136
        %v7138 = vpop.f32.mrb[0].mxu0
        %v7139 = vpop.f32.mrb[0].mxu0
        %v7140 = vadd.f32 0.0, %v7139
        %v7141 = vpop.f32.mrb[0].mxu0
        %7142 = vmatprep.mubr.bf16.mxu0 0
        %7143 = vmatmul.mubr.bf16.gmra.mrb[0].mxu0 %v6985
        %v7144 = vpop.f32.mrb[0].mxu0
        %v7145 = vadd.f32 0.0, %v7144
        %v7146 = vpop.f32.mrb[0].mxu0
        %v7147 = vpop.f32.mrb[0].mxu0
        %v7148 = vadd.f32 0.0, %v7147
        %v7149 = vpop.f32.mrb[0].mxu0
        %7150 = vdwg.mxu0
        %v7151 = vadd.f32 %v6851, %v7025
        %v7152 = vadd.f32 %v6854, %v7028
        %v7153 = vadd.f32 %v6859, %v7033
        %v7154 = vadd.f32 %v6862, %v7036
        %v7155 = vadd.f32 %v6867, %v7041
        %v7156 = vadd.f32 %v6870, %v7044
        %v7157 = vadd.f32 %v6875, %v7049
        %v7158 = vadd.f32 %v6878, %v7052
        %v7159 = vadd.f32 %v6883, %v7057
        %v7160 = vadd.f32 %v6886, %v7060
        %v7161 = vadd.f32 %v6891, %v7065
        %v7162 = vadd.f32 %v6894, %v7068
        %v7163 = vadd.f32 %v6899, %v7073
        %v7164 = vadd.f32 %v6902, %v7076
        %v7165 = vadd.f32 %v6907, %v7081
        %v7166 = vadd.f32 %v6910, %v7084
        %v7167 = vadd.f32 %v6915, %v7089
        %v7168 = vadd.f32 %v6918, %v7092
        %v7169 = vadd.f32 %v6923, %v7097
        %v7170 = vadd.f32 %v6926, %v7100
        %v7171 = vadd.f32 %v6931, %v7105
        %v7172 = vadd.f32 %v6934, %v7108
        %v7173 = vadd.f32 %v6939, %v7113
        %v7174 = vadd.f32 %v6942, %v7116
        %v7175 = vadd.f32 %v6947, %v7121
        %v7176 = vadd.f32 %v6950, %v7124
        %v7177 = vadd.f32 %v6955, %v7129
        %v7178 = vadd.f32 %v6958, %v7132
        %v7179 = vadd.f32 %v6963, %v7137
        %v7180 = vadd.f32 %v6966, %v7140
        %v7181 = vadd.f32 %v6971, %v7145
        %v7182 = vadd.f32 %v6974, %v7148
        %v7183 = vld [vmem:[#allocation3] sm:$0xf]
        %v7184 = vld [vmem:[#allocation3 + $0x4] sm:$0xf]
        %v7185 = vld [vmem:[#allocation3 + $0x8] sm:$0x1]
        %v7186 = vld [vmem:[#allocation3 + $0xc] sm:$0xf]
        %v7187 = vld [vmem:[#allocation3 + $0x10] sm:$0xf]
        %v7188 = vld [vmem:[#allocation3 + $0x14] sm:$0x1]
        %v7189 = vld [vmem:[#allocation3 + $0x18] sm:$0xf]
        %v7190 = vld [vmem:[#allocation3 + $0x1c] sm:$0xf]
        %v7191 = vld [vmem:[#allocation3 + $0x20] sm:$0x1]
        %v7192 = vld [vmem:[#allocation3 + $0x24] sm:$0xf]
        %v7193 = vld [vmem:[#allocation3 + $0x28] sm:$0xf]
        %v7194 = vld [vmem:[#allocation3 + $0x2c] sm:$0x1]
        %v7195 = vld [vmem:[#allocation3 + $0x30] sm:$0xf]
        %v7196 = vld [vmem:[#allocation3 + $0x34] sm:$0xf]
        %v7197 = vld [vmem:[#allocation3 + $0x38] sm:$0x1]
        %v7198 = vld [vmem:[#allocation3 + $0x3c] sm:$0xf]
        %v7199 = vld [vmem:[#allocation3 + $0x40] sm:$0xf]
        %v7200 = vld [vmem:[#allocation3 + $0x44] sm:$0x1]
        %v7201 = vld [vmem:[#allocation3 + $0x48] sm:$0xf]
        %v7202 = vld [vmem:[#allocation3 + $0x4c] sm:$0xf]
        %v7203 = vld [vmem:[#allocation3 + $0x50] sm:$0x1]
        %v7204 = vld [vmem:[#allocation3 + $0x54] sm:$0xf]
        %v7205 = vld [vmem:[#allocation3 + $0x58] sm:$0xf]
        %v7206 = vld [vmem:[#allocation3 + $0x5c] sm:$0x1]
        %v7207 = vld [vmem:[#allocation3 + $0x60] sm:$0xf]
        %v7208 = vld [vmem:[#allocation3 + $0x64] sm:$0xf]
        %v7209 = vld [vmem:[#allocation3 + $0x68] sm:$0x1]
        %v7210 = vld [vmem:[#allocation3 + $0x6c] sm:$0xf]
        %v7211 = vld [vmem:[#allocation3 + $0x70] sm:$0xf]
        %v7212 = vld [vmem:[#allocation3 + $0x74] sm:$0x1]
        %v7213 = vld [vmem:[#allocation3 + $0x78] sm:$0xf]
        %v7214 = vld [vmem:[#allocation3 + $0x7c] sm:$0xf]
        %v7215 = vld [vmem:[#allocation3 + $0x80] sm:$0x1]
        %v7216 = vld [vmem:[#allocation3 + $0x84] sm:$0xf]
        %v7217 = vld [vmem:[#allocation3 + $0x88] sm:$0xf]
        %v7218 = vld [vmem:[#allocation3 + $0x8c] sm:$0x1]
        %v7219 = vld [vmem:[#allocation3 + $0x90] sm:$0xf]
        %v7220 = vld [vmem:[#allocation3 + $0x94] sm:$0xf]
        %v7221 = vld [vmem:[#allocation3 + $0x98] sm:$0x1]
        %v7222 = vld [vmem:[#allocation3 + $0x9c] sm:$0xf]
        %v7223 = vld [vmem:[#allocation3 + $0xa0] sm:$0xf]
        %v7224 = vld [vmem:[#allocation3 + $0xa4] sm:$0x1]
        %v7225 = vld [vmem:[#allocation3 + $0xa8] sm:$0xf]
        %v7226 = vld [vmem:[#allocation3 + $0xac] sm:$0xf]
        %v7227 = vld [vmem:[#allocation3 + $0xb0] sm:$0x1]
        %v7228 = vld [vmem:[#allocation3 + $0xb4] sm:$0xf]
        %v7229 = vld [vmem:[#allocation3 + $0xb8] sm:$0xf]
        %v7230 = vld [vmem:[#allocation3 + $0xbc] sm:$0x1]
        %v7231 = vld [vmem:[#allocation3 + $0xc0] sm:$0xf]
        %v7232 = vld [vmem:[#allocation3 + $0xc4] sm:$0xf]
        %v7233 = vld [vmem:[#allocation3 + $0xc8] sm:$0x1]
        %v7234 = vld [vmem:[#allocation3 + $0xcc] sm:$0xf]
        %v7235 = vld [vmem:[#allocation3 + $0xd0] sm:$0xf]
        %v7236 = vld [vmem:[#allocation3 + $0xd4] sm:$0x1]
        %v7238 = vshrl.u32 %v7183, 16
        %v7240 = vrot.slane %v7238, 4
        %v7241 = vshll.u32 %v7183, 16
        %v7243 = vrot.slane %v7241, 5
        %v7244 = vor.u32 %v7240, %v7243
        %v7245 = vrot.slane %v7244, 4
        %v7247 = vshll.u32 %v7184, 16
        %v7249 = vrot.slane %v7247, 5
        %v7250 = vsel %vm2586, %v7245, %v7249
        %v7251 = vshrl.u32 %v7184, 16
        %v7253 = vrot.slane %v7251, 4
        %v7254 = vor.u32 %v7253, %v7249
        %v7255 = vrot.slane %v7254, 4
        %v7257 = vshll.u32 %v7185, 16
        %v7259 = vrot.slane %v7257, 5
        %v7260 = vsel %vm2586, %v7255, %v7259
        %v7262 = vshrl.u32 %v7186, 16
        %v7264 = vrot.slane %v7262, 4
        %v7265 = vshll.u32 %v7186, 16
        %v7267 = vrot.slane %v7265, 5
        %v7268 = vor.u32 %v7264, %v7267
        %v7269 = vrot.slane %v7268, 4
        %v7271 = vshll.u32 %v7187, 16
        %v7273 = vrot.slane %v7271, 5
        %v7274 = vsel %vm2586, %v7269, %v7273
        %v7275 = vshrl.u32 %v7187, 16
        %v7277 = vrot.slane %v7275, 4
        %v7278 = vor.u32 %v7277, %v7273
        %v7279 = vrot.slane %v7278, 4
        %v7281 = vshll.u32 %v7188, 16
        %v7283 = vrot.slane %v7281, 5
        %v7284 = vsel %vm2586, %v7279, %v7283
        %v7286 = vshrl.u32 %v7189, 16
        %v7288 = vrot.slane %v7286, 4
        %v7289 = vshll.u32 %v7189, 16
        %v7291 = vrot.slane %v7289, 5
        %v7292 = vor.u32 %v7288, %v7291
        %v7293 = vrot.slane %v7292, 4
        %v7295 = vshll.u32 %v7190, 16
        %v7297 = vrot.slane %v7295, 5
        %v7298 = vsel %vm2586, %v7293, %v7297
        %v7299 = vshrl.u32 %v7190, 16
        %v7301 = vrot.slane %v7299, 4
        %v7302 = vor.u32 %v7301, %v7297
        %v7303 = vrot.slane %v7302, 4
        %v7305 = vshll.u32 %v7191, 16
        %v7307 = vrot.slane %v7305, 5
        %v7308 = vsel %vm2586, %v7303, %v7307
        %v7310 = vshrl.u32 %v7192, 16
        %v7312 = vrot.slane %v7310, 4
        %v7313 = vshll.u32 %v7192, 16
        %v7315 = vrot.slane %v7313, 5
        %v7316 = vor.u32 %v7312, %v7315
        %v7317 = vrot.slane %v7316, 4
        %v7319 = vshll.u32 %v7193, 16
        %v7321 = vrot.slane %v7319, 5
        %v7322 = vsel %vm2586, %v7317, %v7321
        %v7323 = vshrl.u32 %v7193, 16
        %v7325 = vrot.slane %v7323, 4
        %v7326 = vor.u32 %v7325, %v7321
        %v7327 = vrot.slane %v7326, 4
        %v7329 = vshll.u32 %v7194, 16
        %v7331 = vrot.slane %v7329, 5
        %v7332 = vsel %vm2586, %v7327, %v7331
        %v7334 = vshrl.u32 %v7195, 16
        %v7336 = vrot.slane %v7334, 4
        %v7337 = vshll.u32 %v7195, 16
        %v7339 = vrot.slane %v7337, 5
        %v7340 = vor.u32 %v7336, %v7339
        %v7341 = vrot.slane %v7340, 4
        %v7343 = vshll.u32 %v7196, 16
        %v7345 = vrot.slane %v7343, 5
        %v7346 = vsel %vm2586, %v7341, %v7345
        %v7347 = vshrl.u32 %v7196, 16
        %v7349 = vrot.slane %v7347, 4
        %v7350 = vor.u32 %v7349, %v7345
        %v7351 = vrot.slane %v7350, 4
        %v7353 = vshll.u32 %v7197, 16
        %v7355 = vrot.slane %v7353, 5
        %v7356 = vsel %vm2586, %v7351, %v7355
        %v7358 = vshrl.u32 %v7198, 16
        %v7360 = vrot.slane %v7358, 4
        %v7361 = vshll.u32 %v7198, 16
        %v7363 = vrot.slane %v7361, 5
        %v7364 = vor.u32 %v7360, %v7363
        %v7365 = vrot.slane %v7364, 4
        %v7367 = vshll.u32 %v7199, 16
        %v7369 = vrot.slane %v7367, 5
        %v7370 = vsel %vm2586, %v7365, %v7369
        %v7371 = vshrl.u32 %v7199, 16
        %v7373 = vrot.slane %v7371, 4
        %v7374 = vor.u32 %v7373, %v7369
        %v7375 = vrot.slane %v7374, 4
        %v7377 = vshll.u32 %v7200, 16
        %v7379 = vrot.slane %v7377, 5
        %v7380 = vsel %vm2586, %v7375, %v7379
        %v7382 = vshrl.u32 %v7201, 16
        %v7384 = vrot.slane %v7382, 4
        %v7385 = vshll.u32 %v7201, 16
        %v7387 = vrot.slane %v7385, 5
        %v7388 = vor.u32 %v7384, %v7387
        %v7389 = vrot.slane %v7388, 4
        %v7391 = vshll.u32 %v7202, 16
        %v7393 = vrot.slane %v7391, 5
        %v7394 = vsel %vm2586, %v7389, %v7393
        %v7395 = vshrl.u32 %v7202, 16
        %v7397 = vrot.slane %v7395, 4
        %v7398 = vor.u32 %v7397, %v7393
        %v7399 = vrot.slane %v7398, 4
        %v7401 = vshll.u32 %v7203, 16
        %v7403 = vrot.slane %v7401, 5
        %v7404 = vsel %vm2586, %v7399, %v7403
        %v7406 = vshrl.u32 %v7204, 16
        %v7408 = vrot.slane %v7406, 4
        %v7409 = vshll.u32 %v7204, 16
        %v7411 = vrot.slane %v7409, 5
        %v7412 = vor.u32 %v7408, %v7411
        %v7413 = vrot.slane %v7412, 4
        %v7415 = vshll.u32 %v7205, 16
        %v7417 = vrot.slane %v7415, 5
        %v7418 = vsel %vm2586, %v7413, %v7417
        %v7419 = vshrl.u32 %v7205, 16
        %v7421 = vrot.slane %v7419, 4
        %v7422 = vor.u32 %v7421, %v7417
        %v7423 = vrot.slane %v7422, 4
        %v7425 = vshll.u32 %v7206, 16
        %v7427 = vrot.slane %v7425, 5
        %v7428 = vsel %vm2586, %v7423, %v7427
        %v7430 = vshrl.u32 %v7207, 16
        %v7432 = vrot.slane %v7430, 4
        %v7433 = vshll.u32 %v7207, 16
        %v7435 = vrot.slane %v7433, 5
        %v7436 = vor.u32 %v7432, %v7435
        %v7437 = vrot.slane %v7436, 4
        %v7439 = vshll.u32 %v7208, 16
        %v7441 = vrot.slane %v7439, 5
        %v7442 = vsel %vm2586, %v7437, %v7441
        %v7443 = vshrl.u32 %v7208, 16
        %v7445 = vrot.slane %v7443, 4
        %v7446 = vor.u32 %v7445, %v7441
        %v7447 = vrot.slane %v7446, 4
        %v7449 = vshll.u32 %v7209, 16
        %v7451 = vrot.slane %v7449, 5
        %v7452 = vsel %vm2586, %v7447, %v7451
        %v7454 = vshrl.u32 %v7210, 16
        %v7456 = vrot.slane %v7454, 4
        %v7457 = vshll.u32 %v7210, 16
        %v7459 = vrot.slane %v7457, 5
        %v7460 = vor.u32 %v7456, %v7459
        %v7461 = vrot.slane %v7460, 4
        %v7463 = vshll.u32 %v7211, 16
        %v7465 = vrot.slane %v7463, 5
        %v7466 = vsel %vm2586, %v7461, %v7465
        %v7467 = vshrl.u32 %v7211, 16
        %v7469 = vrot.slane %v7467, 4
        %v7470 = vor.u32 %v7469, %v7465
        %v7471 = vrot.slane %v7470, 4
        %v7473 = vshll.u32 %v7212, 16
        %v7475 = vrot.slane %v7473, 5
        %v7476 = vsel %vm2586, %v7471, %v7475
        %v7478 = vshrl.u32 %v7213, 16
        %v7480 = vrot.slane %v7478, 4
        %v7481 = vshll.u32 %v7213, 16
        %v7483 = vrot.slane %v7481, 5
        %v7484 = vor.u32 %v7480, %v7483
        %v7485 = vrot.slane %v7484, 4
        %v7487 = vshll.u32 %v7214, 16
        %v7489 = vrot.slane %v7487, 5
        %v7490 = vsel %vm2586, %v7485, %v7489
        %v7491 = vshrl.u32 %v7214, 16
        %v7493 = vrot.slane %v7491, 4
        %v7494 = vor.u32 %v7493, %v7489
        %v7495 = vrot.slane %v7494, 4
        %v7497 = vshll.u32 %v7215, 16
        %v7499 = vrot.slane %v7497, 5
        %v7500 = vsel %vm2586, %v7495, %v7499
        %v7502 = vshrl.u32 %v7216, 16
        %v7504 = vrot.slane %v7502, 4
        %v7505 = vshll.u32 %v7216, 16
        %v7507 = vrot.slane %v7505, 5
        %v7508 = vor.u32 %v7504, %v7507
        %v7509 = vrot.slane %v7508, 4
        %v7511 = vshll.u32 %v7217, 16
        %v7513 = vrot.slane %v7511, 5
        %v7514 = vsel %vm2586, %v7509, %v7513
        %v7515 = vshrl.u32 %v7217, 16
        %v7517 = vrot.slane %v7515, 4
        %v7518 = vor.u32 %v7517, %v7513
        %v7519 = vrot.slane %v7518, 4
        %v7521 = vshll.u32 %v7218, 16
        %v7523 = vrot.slane %v7521, 5
        %v7524 = vsel %vm2586, %v7519, %v7523
        %v7526 = vshrl.u32 %v7219, 16
        %v7528 = vrot.slane %v7526, 4
        %v7529 = vshll.u32 %v7219, 16
        %v7531 = vrot.slane %v7529, 5
        %v7532 = vor.u32 %v7528, %v7531
        %v7533 = vrot.slane %v7532, 4
        %v7535 = vshll.u32 %v7220, 16
        %v7537 = vrot.slane %v7535, 5
        %v7538 = vsel %vm2586, %v7533, %v7537
        %v7539 = vshrl.u32 %v7220, 16
        %v7541 = vrot.slane %v7539, 4
        %v7542 = vor.u32 %v7541, %v7537
        %v7543 = vrot.slane %v7542, 4
        %v7545 = vshll.u32 %v7221, 16
        %v7547 = vrot.slane %v7545, 5
        %v7548 = vsel %vm2586, %v7543, %v7547
        %v7550 = vshrl.u32 %v7222, 16
        %v7552 = vrot.slane %v7550, 4
        %v7553 = vshll.u32 %v7222, 16
        %v7555 = vrot.slane %v7553, 5
        %v7556 = vor.u32 %v7552, %v7555
        %v7557 = vrot.slane %v7556, 4
        %v7559 = vshll.u32 %v7223, 16
        %v7561 = vrot.slane %v7559, 5
        %v7562 = vsel %vm2586, %v7557, %v7561
        %v7563 = vshrl.u32 %v7223, 16
        %v7565 = vrot.slane %v7563, 4
        %v7566 = vor.u32 %v7565, %v7561
        %v7567 = vrot.slane %v7566, 4
        %v7569 = vshll.u32 %v7224, 16
        %v7571 = vrot.slane %v7569, 5
        %v7572 = vsel %vm2586, %v7567, %v7571
        %v7574 = vshrl.u32 %v7225, 16
        %v7576 = vrot.slane %v7574, 4
        %v7577 = vshll.u32 %v7225, 16
        %v7579 = vrot.slane %v7577, 5
        %v7580 = vor.u32 %v7576, %v7579
        %v7581 = vrot.slane %v7580, 4
        %v7583 = vshll.u32 %v7226, 16
        %v7585 = vrot.slane %v7583, 5
        %v7586 = vsel %vm2586, %v7581, %v7585
        %v7587 = vshrl.u32 %v7226, 16
        %v7589 = vrot.slane %v7587, 4
        %v7590 = vor.u32 %v7589, %v7585
        %v7591 = vrot.slane %v7590, 4
        %v7593 = vshll.u32 %v7227, 16
        %v7595 = vrot.slane %v7593, 5
        %v7596 = vsel %vm2586, %v7591, %v7595
        %v7598 = vshrl.u32 %v7228, 16
        %v7600 = vrot.slane %v7598, 4
        %v7601 = vshll.u32 %v7228, 16
        %v7603 = vrot.slane %v7601, 5
        %v7604 = vor.u32 %v7600, %v7603
        %v7605 = vrot.slane %v7604, 4
        %v7607 = vshll.u32 %v7229, 16
        %v7609 = vrot.slane %v7607, 5
        %v7610 = vsel %vm2586, %v7605, %v7609
        %v7611 = vshrl.u32 %v7229, 16
        %v7613 = vrot.slane %v7611, 4
        %v7614 = vor.u32 %v7613, %v7609
        %v7615 = vrot.slane %v7614, 4
        %v7617 = vshll.u32 %v7230, 16
        %v7619 = vrot.slane %v7617, 5
        %v7620 = vsel %vm2586, %v7615, %v7619
        %s7621 = scalar_lea.vmem %s7, 2
        %v7622 = vld [vmem:[%s7621] sm:$0x3]
        %v7623 = vunpack.c.l.b16 %v7250
        %v7624 = vunpack.c.l.b16 %v7260
        %v7625 = vunpack.c.l.b16 %v7274
        %v7626 = vunpack.c.l.b16 %v7284
        %v7627 = vunpack.c.l.b16 %v7298
        %v7628 = vunpack.c.l.b16 %v7308
        %v7629 = vunpack.c.l.b16 %v7322
        %v7630 = vunpack.c.l.b16 %v7332
        %v7631 = vunpack.c.l.b16 %v7346
        %v7632 = vunpack.c.l.b16 %v7356
        %v7633 = vunpack.c.l.b16 %v7370
        %v7634 = vunpack.c.l.b16 %v7380
        %v7635 = vunpack.c.l.b16 %v7394
        %v7636 = vunpack.c.l.b16 %v7404
        %v7637 = vunpack.c.l.b16 %v7418
        %v7638 = vunpack.c.l.b16 %v7428
        %v7639 = vunpack.c.l.b16 %v7442
        %v7640 = vunpack.c.l.b16 %v7452
        %v7641 = vunpack.c.l.b16 %v7466
        %v7642 = vunpack.c.l.b16 %v7476
        %v7643 = vunpack.c.l.b16 %v7490
        %v7644 = vunpack.c.l.b16 %v7500
        %v7645 = vunpack.c.l.b16 %v7514
        %v7646 = vunpack.c.l.b16 %v7524
        %v7647 = vunpack.c.l.b16 %v7538
        %v7648 = vunpack.c.l.b16 %v7548
        %v7649 = vunpack.c.l.b16 %v7562
        %v7650 = vunpack.c.l.b16 %v7572
        %v7651 = vunpack.c.l.b16 %v7586
        %v7652 = vunpack.c.l.b16 %v7596
        %v7653 = vunpack.c.l.b16 %v7610
        %v7654 = vunpack.c.l.b16 %v7620
        %v7655 = vpack.c.b16 %v7624, %v7623
        %v7656 = vpack.c.b16 %v7626, %v7625
        %v7657 = vpack.c.b16 %v7628, %v7627
        %v7658 = vpack.c.b16 %v7630, %v7629
        %v7659 = vpack.c.b16 %v7632, %v7631
        %v7660 = vpack.c.b16 %v7634, %v7633
        %v7661 = vpack.c.b16 %v7636, %v7635
        %v7662 = vpack.c.b16 %v7638, %v7637
        %v7663 = vpack.c.b16 %v7640, %v7639
        %v7664 = vpack.c.b16 %v7642, %v7641
        %v7665 = vpack.c.b16 %v7644, %v7643
        %v7666 = vpack.c.b16 %v7646, %v7645
        %v7667 = vpack.c.b16 %v7648, %v7647
        %v7668 = vpack.c.b16 %v7650, %v7649
        %v7669 = vpack.c.b16 %v7652, %v7651
        %v7670 = vpack.c.b16 %v7654, %v7653
        %v7672 = vsel %vm1938, %v7655, 0
        %v7675 = vsel %vm1938, %v7656, 0
        %v7678 = vsel %vm1938, %v7657, 0
        %v7681 = vsel %vm1938, %v7658, 0
        %v7684 = vsel %vm1938, %v7659, 0
        %v7687 = vsel %vm1938, %v7660, 0
        %v7690 = vsel %vm1938, %v7661, 0
        %v7693 = vsel %vm1938, %v7662, 0
        %v7696 = vsel %vm1938, %v7663, 0
        %v7699 = vsel %vm1938, %v7664, 0
        %v7702 = vsel %vm1938, %v7665, 0
        %v7705 = vsel %vm1938, %v7666, 0
        %v7708 = vsel %vm1938, %v7667, 0
        %v7711 = vsel %vm1938, %v7668, 0
        %v7714 = vsel %vm1938, %v7669, 0
        %v7717 = vsel %vm1938, %v7670, 0
        %v7720 = vsel %vm1987, %v7622, 0
        %7722 = vmatprep.subr.bf16.mxu0 0
        %7723 = vmatpush1.bf16.msra.mxu0 %v7720
        %7724 = vmatprep.subr.bf16.mxu0 0
        %7725 = vmatpush1.bf16.msra.mxu0 0
        %7726 = vmatprep.subr.bf16.mxu0 0
        %7727 = vmatpush1.bf16.msra.mxu0 0
        %7728 = vmatprep.subr.bf16.mxu0 0
        %7729 = vmatpush1.bf16.msra.mxu0 0
        %7730 = vmatprep.subr.bf16.mxu0 0
        %7731 = vmatpush1.bf16.msra.mxu0 0
        %7732 = vmatprep.subr.bf16.mxu0 0
        %7733 = vmatpush1.bf16.msra.mxu0 0
        %7734 = vmatprep.subr.bf16.mxu0 0
        %7735 = vmatpush1.bf16.msra.mxu0 0
        %7736 = vmatprep.subr.bf16.mxu0 0
        %7737 = vmatpush1.bf16.msra.mxu0 0
        %7738 = vmatprep.subr.bf16.mxu0 0
        %7739 = vmatpush1.bf16.msra.mxu0 0
        %7740 = vmatprep.subr.bf16.mxu0 0
        %7741 = vmatpush1.bf16.msra.mxu0 0
        %7742 = vmatprep.subr.bf16.mxu0 0
        %7743 = vmatpush1.bf16.msra.mxu0 0
        %7744 = vmatprep.subr.bf16.mxu0 0
        %7745 = vmatpush1.bf16.msra.mxu0 0
        %7746 = vmatprep.subr.bf16.mxu0 0
        %7747 = vmatpush1.bf16.msra.mxu0 0
        %7748 = vmatprep.subr.bf16.mxu0 0
        %7749 = vmatpush1.bf16.msra.mxu0 0
        %7750 = vmatprep.subr.bf16.mxu0 0
        %7751 = vmatpush1.bf16.msra.mxu0 0
        %7752 = vmatprep.subr.bf16.mxu0 0
        %7753 = vmatpush1.bf16.msra.mxu0 0
        %7754 = vmatprep.mubr.bf16.mxu0 0
        %7755 = vmatmul.mubr.bf16.gmra.mrb[0].mxu0 %v7672
        %v7756 = vpop.f32.mrb[0].mxu0
        %v7757 = vadd.f32 0.0, %v7756
        %v7758 = vpop.f32.mrb[0].mxu0
        %v7759 = vpop.f32.mrb[0].mxu0
        %v7760 = vadd.f32 0.0, %v7759
        %v7761 = vpop.f32.mrb[0].mxu0
        %7762 = vmatprep.mubr.bf16.mxu0 0
        %7763 = vmatmul.mubr.bf16.gmra.mrb[0].mxu0 %v7675
        %v7764 = vpop.f32.mrb[0].mxu0
        %v7765 = vadd.f32 0.0, %v7764
        %v7766 = vpop.f32.mrb[0].mxu0
        %v7767 = vpop.f32.mrb[0].mxu0
        %v7768 = vadd.f32 0.0, %v7767
        %v7769 = vpop.f32.mrb[0].mxu0
        %7770 = vmatprep.mubr.bf16.mxu0 0
        %7771 = vmatmul.mubr.bf16.gmra.mrb[0].mxu0 %v7678
        %v7772 = vpop.f32.mrb[0].mxu0
        %v7773 = vadd.f32 0.0, %v7772
        %v7774 = vpop.f32.mrb[0].mxu0
        %v7775 = vpop.f32.mrb[0].mxu0
        %v7776 = vadd.f32 0.0, %v7775
        %v7777 = vpop.f32.mrb[0].mxu0
        %7778 = vmatprep.mubr.bf16.mxu0 0
        %7779 = vmatmul.mubr.bf16.gmra.mrb[0].mxu0 %v7681
        %v7780 = vpop.f32.mrb[0].mxu0
        %v7781 = vadd.f32 0.0, %v7780
        %v7782 = vpop.f32.mrb[0].mxu0
        %v7783 = vpop.f32.mrb[0].mxu0
        %v7784 = vadd.f32 0.0, %v7783
        %v7785 = vpop.f32.mrb[0].mxu0
        %7786 = vmatprep.mubr.bf16.mxu0 0
        %7787 = vmatmul.mubr.bf16.gmra.mrb[0].mxu0 %v7684
        %v7788 = vpop.f32.mrb[0].mxu0
        %v7789 = vadd.f32 0.0, %v7788
        %v7790 = vpop.f32.mrb[0].mxu0
        %v7791 = vpop.f32.mrb[0].mxu0
        %v7792 = vadd.f32 0.0, %v7791
        %v7793 = vpop.f32.mrb[0].mxu0
        %7794 = vmatprep.mubr.bf16.mxu0 0
        %7795 = vmatmul.mubr.bf16.gmra.mrb[0].mxu0 %v7687
        %v7796 = vpop.f32.mrb[0].mxu0
        %v7797 = vadd.f32 0.0, %v7796
        %v7798 = vpop.f32.mrb[0].mxu0
        %v7799 = vpop.f32.mrb[0].mxu0
        %v7800 = vadd.f32 0.0, %v7799
        %v7801 = vpop.f32.mrb[0].mxu0
        %7802 = vmatprep.mubr.bf16.mxu0 0
        %7803 = vmatmul.mubr.bf16.gmra.mrb[0].mxu0 %v7690
        %v7804 = vpop.f32.mrb[0].mxu0
        %v7805 = vadd.f32 0.0, %v7804
        %v7806 = vpop.f32.mrb[0].mxu0
        %v7807 = vpop.f32.mrb[0].mxu0
        %v7808 = vadd.f32 0.0, %v7807
        %v7809 = vpop.f32.mrb[0].mxu0
        %7810 = vmatprep.mubr.bf16.mxu0 0
        %7811 = vmatmul.mubr.bf16.gmra.mrb[0].mxu0 %v7693
        %v7812 = vpop.f32.mrb[0].mxu0
        %v7813 = vadd.f32 0.0, %v7812
        %v7814 = vpop.f32.mrb[0].mxu0
        %v7815 = vpop.f32.mrb[0].mxu0
        %v7816 = vadd.f32 0.0, %v7815
        %v7817 = vpop.f32.mrb[0].mxu0
        %7818 = vmatprep.mubr.bf16.mxu0 0
        %7819 = vmatmul.mubr.bf16.gmra.mrb[0].mxu0 %v7696
        %v7820 = vpop.f32.mrb[0].mxu0
        %v7821 = vadd.f32 0.0, %v7820
        %v7822 = vpop.f32.mrb[0].mxu0
        %v7823 = vpop.f32.mrb[0].mxu0
        %v7824 = vadd.f32 0.0, %v7823
        %v7825 = vpop.f32.mrb[0].mxu0
        %7826 = vmatprep.mubr.bf16.mxu0 0
        %7827 = vmatmul.mubr.bf16.gmra.mrb[0].mxu0 %v7699
        %v7828 = vpop.f32.mrb[0].mxu0
        %v7829 = vadd.f32 0.0, %v7828
        %v7830 = vpop.f32.mrb[0].mxu0
        %v7831 = vpop.f32.mrb[0].mxu0
        %v7832 = vadd.f32 0.0, %v7831
        %v7833 = vpop.f32.mrb[0].mxu0
        %7834 = vmatprep.mubr.bf16.mxu0 0
        %7835 = vmatmul.mubr.bf16.gmra.mrb[0].mxu0 %v7702
        %v7836 = vpop.f32.mrb[0].mxu0
        %v7837 = vadd.f32 0.0, %v7836
        %v7838 = vpop.f32.mrb[0].mxu0
        %v7839 = vpop.f32.mrb[0].mxu0
        %v7840 = vadd.f32 0.0, %v7839
        %v7841 = vpop.f32.mrb[0].mxu0
        %7842 = vmatprep.mubr.bf16.mxu0 0
        %7843 = vmatmul.mubr.bf16.gmra.mrb[0].mxu0 %v7705
        %v7844 = vpop.f32.mrb[0].mxu0
        %v7845 = vadd.f32 0.0, %v7844
        %v7846 = vpop.f32.mrb[0].mxu0
        %v7847 = vpop.f32.mrb[0].mxu0
        %v7848 = vadd.f32 0.0, %v7847
        %v7849 = vpop.f32.mrb[0].mxu0
        %7850 = vmatprep.mubr.bf16.mxu0 0
        %7851 = vmatmul.mubr.bf16.gmra.mrb[0].mxu0 %v7708
        %v7852 = vpop.f32.mrb[0].mxu0
        %v7853 = vadd.f32 0.0, %v7852
        %v7854 = vpop.f32.mrb[0].mxu0
        %v7855 = vpop.f32.mrb[0].mxu0
        %v7856 = vadd.f32 0.0, %v7855
        %v7857 = vpop.f32.mrb[0].mxu0
        %7858 = vmatprep.mubr.bf16.mxu0 0
        %7859 = vmatmul.mubr.bf16.gmra.mrb[0].mxu0 %v7711
        %v7860 = vpop.f32.mrb[0].mxu0
        %v7861 = vadd.f32 0.0, %v7860
        %v7862 = vpop.f32.mrb[0].mxu0
        %v7863 = vpop.f32.mrb[0].mxu0
        %v7864 = vadd.f32 0.0, %v7863
        %v7865 = vpop.f32.mrb[0].mxu0
        %7866 = vmatprep.mubr.bf16.mxu0 0
        %7867 = vmatmul.mubr.bf16.gmra.mrb[0].mxu0 %v7714
        %v7868 = vpop.f32.mrb[0].mxu0
        %v7869 = vadd.f32 0.0, %v7868
        %v7870 = vpop.f32.mrb[0].mxu0
        %v7871 = vpop.f32.mrb[0].mxu0
        %v7872 = vadd.f32 0.0, %v7871
        %v7873 = vpop.f32.mrb[0].mxu0
        %7874 = vmatprep.mubr.bf16.mxu0 0
        %7875 = vmatmul.mubr.bf16.gmra.mrb[0].mxu0 %v7717
        %v7876 = vpop.f32.mrb[0].mxu0
        %v7877 = vadd.f32 0.0, %v7876
        %v7878 = vpop.f32.mrb[0].mxu0
        %v7879 = vpop.f32.mrb[0].mxu0
        %v7880 = vadd.f32 0.0, %v7879
        %v7881 = vpop.f32.mrb[0].mxu0
        %7882 = vdwg.mxu0
        %v7883 = vadd.f32 %v7151, %v7757
        %v7884 = vadd.f32 %v7152, %v7760
        %v7885 = vadd.f32 %v7153, %v7765
        %v7886 = vadd.f32 %v7154, %v7768
        %v7887 = vadd.f32 %v7155, %v7773
        %v7888 = vadd.f32 %v7156, %v7776
        %v7889 = vadd.f32 %v7157, %v7781
        %v7890 = vadd.f32 %v7158, %v7784
        %v7891 = vadd.f32 %v7159, %v7789
        %v7892 = vadd.f32 %v7160, %v7792
        %v7893 = vadd.f32 %v7161, %v7797
        %v7894 = vadd.f32 %v7162, %v7800
        %v7895 = vadd.f32 %v7163, %v7805
        %v7896 = vadd.f32 %v7164, %v7808
        %v7897 = vadd.f32 %v7165, %v7813
        %v7898 = vadd.f32 %v7166, %v7816
        %v7899 = vadd.f32 %v7167, %v7821
        %v7900 = vadd.f32 %v7168, %v7824
        %v7901 = vadd.f32 %v7169, %v7829
        %v7902 = vadd.f32 %v7170, %v7832
        %v7903 = vadd.f32 %v7171, %v7837
        %v7904 = vadd.f32 %v7172, %v7840
        %v7905 = vadd.f32 %v7173, %v7845
        %v7906 = vadd.f32 %v7174, %v7848
        %v7907 = vadd.f32 %v7175, %v7853
        %v7908 = vadd.f32 %v7176, %v7856
        %v7909 = vadd.f32 %v7177, %v7861
        %v7910 = vadd.f32 %v7178, %v7864
        %v7911 = vadd.f32 %v7179, %v7869
        %v7912 = vadd.f32 %v7180, %v7872
        %v7913 = vadd.f32 %v7181, %v7877
        %v7914 = vadd.f32 %v7182, %v7880
        %v7916 = vshrl.u32 %v7231, 16
        %v7918 = vrot.slane %v7916, 4
        %v7919 = vshll.u32 %v7231, 16
        %v7921 = vrot.slane %v7919, 5
        %v7922 = vor.u32 %v7918, %v7921
        %v7923 = vrot.slane %v7922, 4
        %v7925 = vshll.u32 %v7232, 16
        %v7927 = vrot.slane %v7925, 5
        %v7928 = vsel %vm2586, %v7923, %v7927
        %v7929 = vshrl.u32 %v7232, 16
        %v7931 = vrot.slane %v7929, 4
        %v7932 = vor.u32 %v7931, %v7927
        %v7933 = vrot.slane %v7932, 4
        %v7935 = vshll.u32 %v7233, 16
        %v7937 = vrot.slane %v7935, 5
        %v7938 = vsel %vm2586, %v7933, %v7937
        %s7939 = scalar_lea.vmem %s7, 8
        %v7940 = vld [vmem:[%s7939] sm:$0x3]
        %v7941 = vunpack.c.l.b16 %v7928
        %v7942 = vunpack.c.l.b16 %v7938
        %v7943 = vpack.c.b16 %v7942, %v7941
        %v7945 = vsel %vm1938, %v7943, 0
        %v7948 = vsel %vm1987, %v7940, 0
        %7950 = vmatprep.subr.bf16.mxu0 0
        %7951 = vmatpush1.bf16.msra.mxu0 %v7948
        %7952 = vmatprep.subr.bf16.mxu0 0
        %7953 = vmatpush1.bf16.msra.mxu0 0
        %7954 = vmatprep.subr.bf16.mxu0 0
        %7955 = vmatpush1.bf16.msra.mxu0 0
        %7956 = vmatprep.subr.bf16.mxu0 0
        %7957 = vmatpush1.bf16.msra.mxu0 0
        %7958 = vmatprep.subr.bf16.mxu0 0
        %7959 = vmatpush1.bf16.msra.mxu0 0
        %7960 = vmatprep.subr.bf16.mxu0 0
        %7961 = vmatpush1.bf16.msra.mxu0 0
        %7962 = vmatprep.subr.bf16.mxu0 0
        %7963 = vmatpush1.bf16.msra.mxu0 0
        %7964 = vmatprep.subr.bf16.mxu0 0
        %7965 = vmatpush1.bf16.msra.mxu0 0
        %7966 = vmatprep.subr.bf16.mxu0 0
        %7967 = vmatpush1.bf16.msra.mxu0 0
        %7968 = vmatprep.subr.bf16.mxu0 0
        %7969 = vmatpush1.bf16.msra.mxu0 0
        %7970 = vmatprep.subr.bf16.mxu0 0
        %7971 = vmatpush1.bf16.msra.mxu0 0
        %7972 = vmatprep.subr.bf16.mxu0 0
        %7973 = vmatpush1.bf16.msra.mxu0 0
        %7974 = vmatprep.subr.bf16.mxu0 0
        %7975 = vmatpush1.bf16.msra.mxu0 0
        %7976 = vmatprep.subr.bf16.mxu0 0
        %7977 = vmatpush1.bf16.msra.mxu0 0
        %7978 = vmatprep.subr.bf16.mxu0 0
        %7979 = vmatpush1.bf16.msra.mxu0 0
        %7980 = vmatprep.subr.bf16.mxu0 0
        %7981 = vmatpush1.bf16.msra.mxu0 0
        %7982 = vmatprep.mubr.bf16.mxu0 0
        %7983 = vmatmul.mubr.bf16.gmra.mrb[0].mxu0 %v7675
        %v7984 = vpop.f32.mrb[0].mxu0
        %v7985 = vadd.f32 0.0, %v7984
        %v7986 = vpop.f32.mrb[0].mxu0
        %v7987 = vpop.f32.mrb[0].mxu0
        %v7988 = vadd.f32 0.0, %v7987
        %v7989 = vpop.f32.mrb[0].mxu0
        %7990 = vmatprep.mubr.bf16.mxu0 0
        %7991 = vmatmul.mubr.bf16.gmra.mrb[0].mxu0 %v7678
        %v7992 = vpop.f32.mrb[0].mxu0
        %v7993 = vadd.f32 0.0, %v7992
        %v7994 = vpop.f32.mrb[0].mxu0
        %v7995 = vpop.f32.mrb[0].mxu0
        %v7996 = vadd.f32 0.0, %v7995
        %v7997 = vpop.f32.mrb[0].mxu0
        %7998 = vmatprep.mubr.bf16.mxu0 0
        %7999 = vmatmul.mubr.bf16.gmra.mrb[0].mxu0 %v7681
        %v8000 = vpop.f32.mrb[0].mxu0
        %v8001 = vadd.f32 0.0, %v8000
        %v8002 = vpop.f32.mrb[0].mxu0
        %v8003 = vpop.f32.mrb[0].mxu0
        %v8004 = vadd.f32 0.0, %v8003
        %v8005 = vpop.f32.mrb[0].mxu0
        %8006 = vmatprep.mubr.bf16.mxu0 0
        %8007 = vmatmul.mubr.bf16.gmra.mrb[0].mxu0 %v7684
        %v8008 = vpop.f32.mrb[0].mxu0
        %v8009 = vadd.f32 0.0, %v8008
        %v8010 = vpop.f32.mrb[0].mxu0
        %v8011 = vpop.f32.mrb[0].mxu0
        %v8012 = vadd.f32 0.0, %v8011
        %v8013 = vpop.f32.mrb[0].mxu0
        %8014 = vmatprep.mubr.bf16.mxu0 0
        %8015 = vmatmul.mubr.bf16.gmra.mrb[0].mxu0 %v7687
        %v8016 = vpop.f32.mrb[0].mxu0
        %v8017 = vadd.f32 0.0, %v8016
        %v8018 = vpop.f32.mrb[0].mxu0
        %v8019 = vpop.f32.mrb[0].mxu0
        %v8020 = vadd.f32 0.0, %v8019
        %v8021 = vpop.f32.mrb[0].mxu0
        %8022 = vmatprep.mubr.bf16.mxu0 0
        %8023 = vmatmul.mubr.bf16.gmra.mrb[0].mxu0 %v7690
        %v8024 = vpop.f32.mrb[0].mxu0
        %v8025 = vadd.f32 0.0, %v8024
        %v8026 = vpop.f32.mrb[0].mxu0
        %v8027 = vpop.f32.mrb[0].mxu0
        %v8028 = vadd.f32 0.0, %v8027
        %v8029 = vpop.f32.mrb[0].mxu0
        %8030 = vmatprep.mubr.bf16.mxu0 0
        %8031 = vmatmul.mubr.bf16.gmra.mrb[0].mxu0 %v7693
        %v8032 = vpop.f32.mrb[0].mxu0
        %v8033 = vadd.f32 0.0, %v8032
        %v8034 = vpop.f32.mrb[0].mxu0
        %v8035 = vpop.f32.mrb[0].mxu0
        %v8036 = vadd.f32 0.0, %v8035
        %v8037 = vpop.f32.mrb[0].mxu0
        %8038 = vmatprep.mubr.bf16.mxu0 0
        %8039 = vmatmul.mubr.bf16.gmra.mrb[0].mxu0 %v7696
        %v8040 = vpop.f32.mrb[0].mxu0
        %v8041 = vadd.f32 0.0, %v8040
        %v8042 = vpop.f32.mrb[0].mxu0
        %v8043 = vpop.f32.mrb[0].mxu0
        %v8044 = vadd.f32 0.0, %v8043
        %v8045 = vpop.f32.mrb[0].mxu0
        %8046 = vmatprep.mubr.bf16.mxu0 0
        %8047 = vmatmul.mubr.bf16.gmra.mrb[0].mxu0 %v7699
        %v8048 = vpop.f32.mrb[0].mxu0
        %v8049 = vadd.f32 0.0, %v8048
        %v8050 = vpop.f32.mrb[0].mxu0
        %v8051 = vpop.f32.mrb[0].mxu0
        %v8052 = vadd.f32 0.0, %v8051
        %v8053 = vpop.f32.mrb[0].mxu0
        %8054 = vmatprep.mubr.bf16.mxu0 0
        %8055 = vmatmul.mubr.bf16.gmra.mrb[0].mxu0 %v7702
        %v8056 = vpop.f32.mrb[0].mxu0
        %v8057 = vadd.f32 0.0, %v8056
        %v8058 = vpop.f32.mrb[0].mxu0
        %v8059 = vpop.f32.mrb[0].mxu0
        %v8060 = vadd.f32 0.0, %v8059
        %v8061 = vpop.f32.mrb[0].mxu0
        %8062 = vmatprep.mubr.bf16.mxu0 0
        %8063 = vmatmul.mubr.bf16.gmra.mrb[0].mxu0 %v7705
        %v8064 = vpop.f32.mrb[0].mxu0
        %v8065 = vadd.f32 0.0, %v8064
        %v8066 = vpop.f32.mrb[0].mxu0
        %v8067 = vpop.f32.mrb[0].mxu0
        %v8068 = vadd.f32 0.0, %v8067
        %v8069 = vpop.f32.mrb[0].mxu0
        %8070 = vmatprep.mubr.bf16.mxu0 0
        %8071 = vmatmul.mubr.bf16.gmra.mrb[0].mxu0 %v7708
        %v8072 = vpop.f32.mrb[0].mxu0
        %v8073 = vadd.f32 0.0, %v8072
        %v8074 = vpop.f32.mrb[0].mxu0
        %v8075 = vpop.f32.mrb[0].mxu0
        %v8076 = vadd.f32 0.0, %v8075
        %v8077 = vpop.f32.mrb[0].mxu0
        %8078 = vmatprep.mubr.bf16.mxu0 0
        %8079 = vmatmul.mubr.bf16.gmra.mrb[0].mxu0 %v7711
        %v8080 = vpop.f32.mrb[0].mxu0
        %v8081 = vadd.f32 0.0, %v8080
        %v8082 = vpop.f32.mrb[0].mxu0
        %v8083 = vpop.f32.mrb[0].mxu0
        %v8084 = vadd.f32 0.0, %v8083
        %v8085 = vpop.f32.mrb[0].mxu0
        %8086 = vmatprep.mubr.bf16.mxu0 0
        %8087 = vmatmul.mubr.bf16.gmra.mrb[0].mxu0 %v7714
        %v8088 = vpop.f32.mrb[0].mxu0
        %v8089 = vadd.f32 0.0, %v8088
        %v8090 = vpop.f32.mrb[0].mxu0
        %v8091 = vpop.f32.mrb[0].mxu0
        %v8092 = vadd.f32 0.0, %v8091
        %v8093 = vpop.f32.mrb[0].mxu0
        %8094 = vmatprep.mubr.bf16.mxu0 0
        %8095 = vmatmul.mubr.bf16.gmra.mrb[0].mxu0 %v7717
        %v8096 = vpop.f32.mrb[0].mxu0
        %v8097 = vadd.f32 0.0, %v8096
        %v8098 = vpop.f32.mrb[0].mxu0
        %v8099 = vpop.f32.mrb[0].mxu0
        %v8100 = vadd.f32 0.0, %v8099
        %v8101 = vpop.f32.mrb[0].mxu0
        %8102 = vmatprep.mubr.bf16.mxu0 0
        %8103 = vmatmul.mubr.bf16.gmra.mrb[0].mxu0 %v7945
        %v8104 = vpop.f32.mrb[0].mxu0
        %v8105 = vadd.f32 0.0, %v8104
        %v8106 = vpop.f32.mrb[0].mxu0
        %v8107 = vpop.f32.mrb[0].mxu0
        %v8108 = vadd.f32 0.0, %v8107
        %v8109 = vpop.f32.mrb[0].mxu0
        %8110 = vdwg.mxu0
        %v8111 = vadd.f32 %v7883, %v7985
        %v8112 = vadd.f32 %v7884, %v7988
        %v8113 = vadd.f32 %v7885, %v7993
        %v8114 = vadd.f32 %v7886, %v7996
        %v8115 = vadd.f32 %v7887, %v8001
        %v8116 = vadd.f32 %v7888, %v8004
        %v8117 = vadd.f32 %v7889, %v8009
        %v8118 = vadd.f32 %v7890, %v8012
        %v8119 = vadd.f32 %v7891, %v8017
        %v8120 = vadd.f32 %v7892, %v8020
        %v8121 = vadd.f32 %v7893, %v8025
        %v8122 = vadd.f32 %v7894, %v8028
        %v8123 = vadd.f32 %v7895, %v8033
        %v8124 = vadd.f32 %v7896, %v8036
        %v8125 = vadd.f32 %v7897, %v8041
        %v8126 = vadd.f32 %v7898, %v8044
        %v8127 = vadd.f32 %v7899, %v8049
        %v8128 = vadd.f32 %v7900, %v8052
        %v8129 = vadd.f32 %v7901, %v8057
        %v8130 = vadd.f32 %v7902, %v8060
        %v8131 = vadd.f32 %v7903, %v8065
        %v8132 = vadd.f32 %v7904, %v8068
        %v8133 = vadd.f32 %v7905, %v8073
        %v8134 = vadd.f32 %v7906, %v8076
        %v8135 = vadd.f32 %v7907, %v8081
        %v8136 = vadd.f32 %v7908, %v8084
        %v8137 = vadd.f32 %v7909, %v8089
        %v8138 = vadd.f32 %v7910, %v8092
        %v8139 = vadd.f32 %v7911, %v8097
        %v8140 = vadd.f32 %v7912, %v8100
        %v8141 = vadd.f32 %v7913, %v8105
        %v8142 = vadd.f32 %v7914, %v8108
        %v8144 = vshrl.u32 %v7234, 16
        %v8146 = vrot.slane %v8144, 4
        %v8147 = vshll.u32 %v7234, 16
        %v8149 = vrot.slane %v8147, 5
        %v8150 = vor.u32 %v8146, %v8149
        %v8151 = vrot.slane %v8150, 4
        %v8153 = vshll.u32 %v7235, 16
        %v8155 = vrot.slane %v8153, 5
        %v8156 = vsel %vm2586, %v8151, %v8155
        %v8157 = vshrl.u32 %v7235, 16
        %v8159 = vrot.slane %v8157, 4
        %v8160 = vor.u32 %v8159, %v8155
        %v8161 = vrot.slane %v8160, 4
        %v8163 = vshll.u32 %v7236, 16
        %v8165 = vrot.slane %v8163, 5
        %v8166 = vsel %vm2586, %v8161, %v8165
        %s8167 = scalar_lea.vmem %s7, 14
        %v8168 = vld [vmem:[%s8167] sm:$0x3]
        %v8169 = vunpack.c.l.b16 %v8156
        %v8170 = vunpack.c.l.b16 %v8166
        %v8171 = vpack.c.b16 %v8170, %v8169
        %v8173 = vsel %vm1938, %v8171, 0
        %v8176 = vsel %vm1987, %v8168, 0
        %8178 = vmatprep.subr.bf16.mxu0 0
        %8179 = vmatpush1.bf16.msra.mxu0 %v8176
        %8180 = vmatprep.subr.bf16.mxu0 0
        %8181 = vmatpush1.bf16.msra.mxu0 0
        %8182 = vmatprep.subr.bf16.mxu0 0
        %8183 = vmatpush1.bf16.msra.mxu0 0
        %8184 = vmatprep.subr.bf16.mxu0 0
        %8185 = vmatpush1.bf16.msra.mxu0 0
        %8186 = vmatprep.subr.bf16.mxu0 0
        %8187 = vmatpush1.bf16.msra.mxu0 0
        %8188 = vmatprep.subr.bf16.mxu0 0
        %8189 = vmatpush1.bf16.msra.mxu0 0
        %8190 = vmatprep.subr.bf16.mxu0 0
        %8191 = vmatpush1.bf16.msra.mxu0 0
        %8192 = vmatprep.subr.bf16.mxu0 0
        %8193 = vmatpush1.bf16.msra.mxu0 0
        %8194 = vmatprep.subr.bf16.mxu0 0
        %8195 = vmatpush1.bf16.msra.mxu0 0
        %8196 = vmatprep.subr.bf16.mxu0 0
        %8197 = vmatpush1.bf16.msra.mxu0 0
        %8198 = vmatprep.subr.bf16.mxu0 0
        %8199 = vmatpush1.bf16.msra.mxu0 0
        %8200 = vmatprep.subr.bf16.mxu0 0
        %8201 = vmatpush1.bf16.msra.mxu0 0
        %8202 = vmatprep.subr.bf16.mxu0 0
        %8203 = vmatpush1.bf16.msra.mxu0 0
        %8204 = vmatprep.subr.bf16.mxu0 0
        %8205 = vmatpush1.bf16.msra.mxu0 0
        %8206 = vmatprep.subr.bf16.mxu0 0
        %8207 = vmatpush1.bf16.msra.mxu0 0
        %8208 = vmatprep.subr.bf16.mxu0 0
        %8209 = vmatpush1.bf16.msra.mxu0 0
        %8210 = vmatprep.mubr.bf16.mxu0 0
        %8211 = vmatmul.mubr.bf16.gmra.mrb[0].mxu0 %v7678
        %v8212 = vpop.f32.mrb[0].mxu0
        %v8213 = vadd.f32 0.0, %v8212
        %v8214 = vpop.f32.mrb[0].mxu0
        %v8215 = vpop.f32.mrb[0].mxu0
        %v8216 = vadd.f32 0.0, %v8215
        %v8217 = vpop.f32.mrb[0].mxu0
        %8218 = vmatprep.mubr.bf16.mxu0 0
        %8219 = vmatmul.mubr.bf16.gmra.mrb[0].mxu0 %v7681
        %v8220 = vpop.f32.mrb[0].mxu0
        %v8221 = vadd.f32 0.0, %v8220
        %v8222 = vpop.f32.mrb[0].mxu0
        %v8223 = vpop.f32.mrb[0].mxu0
        %v8224 = vadd.f32 0.0, %v8223
        %v8225 = vpop.f32.mrb[0].mxu0
        %8226 = vmatprep.mubr.bf16.mxu0 0
        %8227 = vmatmul.mubr.bf16.gmra.mrb[0].mxu0 %v7684
        %v8228 = vpop.f32.mrb[0].mxu0
        %v8229 = vadd.f32 0.0, %v8228
        %v8230 = vpop.f32.mrb[0].mxu0
        %v8231 = vpop.f32.mrb[0].mxu0
        %v8232 = vadd.f32 0.0, %v8231
        %v8233 = vpop.f32.mrb[0].mxu0
        %8234 = vmatprep.mubr.bf16.mxu0 0
        %8235 = vmatmul.mubr.bf16.gmra.mrb[0].mxu0 %v7687
        %v8236 = vpop.f32.mrb[0].mxu0
        %v8237 = vadd.f32 0.0, %v8236
        %v8238 = vpop.f32.mrb[0].mxu0
        %v8239 = vpop.f32.mrb[0].mxu0
        %v8240 = vadd.f32 0.0, %v8239
        %v8241 = vpop.f32.mrb[0].mxu0
        %8242 = vmatprep.mubr.bf16.mxu0 0
        %8243 = vmatmul.mubr.bf16.gmra.mrb[0].mxu0 %v7690
        %v8244 = vpop.f32.mrb[0].mxu0
        %v8245 = vadd.f32 0.0, %v8244
        %v8246 = vpop.f32.mrb[0].mxu0
        %v8247 = vpop.f32.mrb[0].mxu0
        %v8248 = vadd.f32 0.0, %v8247
        %v8249 = vpop.f32.mrb[0].mxu0
        %8250 = vmatprep.mubr.bf16.mxu0 0
        %8251 = vmatmul.mubr.bf16.gmra.mrb[0].mxu0 %v7693
        %v8252 = vpop.f32.mrb[0].mxu0
        %v8253 = vadd.f32 0.0, %v8252
        %v8254 = vpop.f32.mrb[0].mxu0
        %v8255 = vpop.f32.mrb[0].mxu0
        %v8256 = vadd.f32 0.0, %v8255
        %v8257 = vpop.f32.mrb[0].mxu0
        %8258 = vmatprep.mubr.bf16.mxu0 0
        %8259 = vmatmul.mubr.bf16.gmra.mrb[0].mxu0 %v7696
        %v8260 = vpop.f32.mrb[0].mxu0
        %v8261 = vadd.f32 0.0, %v8260
        %v8262 = vpop.f32.mrb[0].mxu0
        %v8263 = vpop.f32.mrb[0].mxu0
        %v8264 = vadd.f32 0.0, %v8263
        %v8265 = vpop.f32.mrb[0].mxu0
        %8266 = vmatprep.mubr.bf16.mxu0 0
        %8267 = vmatmul.mubr.bf16.gmra.mrb[0].mxu0 %v7699
        %v8268 = vpop.f32.mrb[0].mxu0
        %v8269 = vadd.f32 0.0, %v8268
        %v8270 = vpop.f32.mrb[0].mxu0
        %v8271 = vpop.f32.mrb[0].mxu0
        %v8272 = vadd.f32 0.0, %v8271
        %v8273 = vpop.f32.mrb[0].mxu0
        %8274 = vmatprep.mubr.bf16.mxu0 0
        %8275 = vmatmul.mubr.bf16.gmra.mrb[0].mxu0 %v7702
        %v8276 = vpop.f32.mrb[0].mxu0
        %v8277 = vadd.f32 0.0, %v8276
        %v8278 = vpop.f32.mrb[0].mxu0
        %v8279 = vpop.f32.mrb[0].mxu0
        %v8280 = vadd.f32 0.0, %v8279
        %v8281 = vpop.f32.mrb[0].mxu0
        %8282 = vmatprep.mubr.bf16.mxu0 0
        %8283 = vmatmul.mubr.bf16.gmra.mrb[0].mxu0 %v7705
        %v8284 = vpop.f32.mrb[0].mxu0
        %v8285 = vadd.f32 0.0, %v8284
        %v8286 = vpop.f32.mrb[0].mxu0
        %v8287 = vpop.f32.mrb[0].mxu0
        %v8288 = vadd.f32 0.0, %v8287
        %v8289 = vpop.f32.mrb[0].mxu0
        %8290 = vmatprep.mubr.bf16.mxu0 0
        %8291 = vmatmul.mubr.bf16.gmra.mrb[0].mxu0 %v7708
        %v8292 = vpop.f32.mrb[0].mxu0
        %v8293 = vadd.f32 0.0, %v8292
        %v8294 = vpop.f32.mrb[0].mxu0
        %v8295 = vpop.f32.mrb[0].mxu0
        %v8296 = vadd.f32 0.0, %v8295
        %v8297 = vpop.f32.mrb[0].mxu0
        %8298 = vmatprep.mubr.bf16.mxu0 0
        %8299 = vmatmul.mubr.bf16.gmra.mrb[0].mxu0 %v7711
        %v8300 = vpop.f32.mrb[0].mxu0
        %v8301 = vadd.f32 0.0, %v8300
        %v8302 = vpop.f32.mrb[0].mxu0
        %v8303 = vpop.f32.mrb[0].mxu0
        %v8304 = vadd.f32 0.0, %v8303
        %v8305 = vpop.f32.mrb[0].mxu0
        %8306 = vmatprep.mubr.bf16.mxu0 0
        %8307 = vmatmul.mubr.bf16.gmra.mrb[0].mxu0 %v7714
        %v8308 = vpop.f32.mrb[0].mxu0
        %v8309 = vadd.f32 0.0, %v8308
        %v8310 = vpop.f32.mrb[0].mxu0
        %v8311 = vpop.f32.mrb[0].mxu0
        %v8312 = vadd.f32 0.0, %v8311
        %v8313 = vpop.f32.mrb[0].mxu0
        %8314 = vmatprep.mubr.bf16.mxu0 0
        %8315 = vmatmul.mubr.bf16.gmra.mrb[0].mxu0 %v7717
        %v8316 = vpop.f32.mrb[0].mxu0
        %v8317 = vadd.f32 0.0, %v8316
        %v8318 = vpop.f32.mrb[0].mxu0
        %v8319 = vpop.f32.mrb[0].mxu0
        %v8320 = vadd.f32 0.0, %v8319
        %v8321 = vpop.f32.mrb[0].mxu0
        %8322 = vmatprep.mubr.bf16.mxu0 0
        %8323 = vmatmul.mubr.bf16.gmra.mrb[0].mxu0 %v7945
        %v8324 = vpop.f32.mrb[0].mxu0
        %v8325 = vadd.f32 0.0, %v8324
        %v8326 = vpop.f32.mrb[0].mxu0
        %v8327 = vpop.f32.mrb[0].mxu0
        %v8328 = vadd.f32 0.0, %v8327
        %v8329 = vpop.f32.mrb[0].mxu0
        %8330 = vmatprep.mubr.bf16.mxu0 0
        %8331 = vmatmul.mubr.bf16.gmra.mrb[0].mxu0 %v8173
        %v8332 = vpop.f32.mrb[0].mxu0
        %v8333 = vadd.f32 0.0, %v8332
        %v8334 = vpop.f32.mrb[0].mxu0
        %v8335 = vpop.f32.mrb[0].mxu0
        %v8336 = vadd.f32 0.0, %v8335
        %v8337 = vpop.f32.mrb[0].mxu0
        %8338 = vdwg.mxu0
        %v8339 = vadd.f32 %v8111, %v8213
        %v8340 = vadd.f32 %v8112, %v8216
        %v8341 = vadd.f32 %v8113, %v8221
        %v8342 = vadd.f32 %v8114, %v8224
        %v8343 = vadd.f32 %v8115, %v8229
        %v8344 = vadd.f32 %v8116, %v8232
        %v8345 = vadd.f32 %v8117, %v8237
        %v8346 = vadd.f32 %v8118, %v8240
        %v8347 = vadd.f32 %v8119, %v8245
        %v8348 = vadd.f32 %v8120, %v8248
        %v8349 = vadd.f32 %v8121, %v8253
        %v8350 = vadd.f32 %v8122, %v8256
        %v8351 = vadd.f32 %v8123, %v8261
        %v8352 = vadd.f32 %v8124, %v8264
        %v8353 = vadd.f32 %v8125, %v8269
        %v8354 = vadd.f32 %v8126, %v8272
        %v8355 = vadd.f32 %v8127, %v8277
        %v8356 = vadd.f32 %v8128, %v8280
        %v8357 = vadd.f32 %v8129, %v8285
        %v8358 = vadd.f32 %v8130, %v8288
        %v8359 = vadd.f32 %v8131, %v8293
        %v8360 = vadd.f32 %v8132, %v8296
        %v8361 = vadd.f32 %v8133, %v8301
        %v8362 = vadd.f32 %v8134, %v8304
        %v8363 = vadd.f32 %v8135, %v8309
        %v8364 = vadd.f32 %v8136, %v8312
        %v8365 = vadd.f32 %v8137, %v8317
        %v8366 = vadd.f32 %v8138, %v8320
        %v8367 = vadd.f32 %v8139, %v8325
        %v8368 = vadd.f32 %v8140, %v8328
        %v8369 = vadd.f32 %v8141, %v8333
        %v8370 = vadd.f32 %v8142, %v8336
        %v8371 = vld [vmem:[#allocation3] sm:$0xe]
        %v8372 = vld [vmem:[#allocation3 + $0xc] sm:$0xe]
        %v8373 = vld [vmem:[#allocation3 + $0x18] sm:$0xe]
        %v8374 = vld [vmem:[#allocation3 + $0x24] sm:$0xe]
        %v8375 = vld [vmem:[#allocation3 + $0x30] sm:$0xe]
        %v8376 = vld [vmem:[#allocation3 + $0x3c] sm:$0xe]
        %v8377 = vld [vmem:[#allocation3 + $0x48] sm:$0xe]
        %v8378 = vld [vmem:[#allocation3 + $0x54] sm:$0xe]
        %v8379 = vld [vmem:[#allocation3 + $0x60] sm:$0xe]
        %v8380 = vld [vmem:[#allocation3 + $0x6c] sm:$0xe]
        %v8381 = vld [vmem:[#allocation3 + $0x78] sm:$0xe]
        %v8382 = vld [vmem:[#allocation3 + $0x84] sm:$0xe]
        %v8383 = vld [vmem:[#allocation3 + $0x90] sm:$0xe]
        %v8384 = vld [vmem:[#allocation3 + $0x9c] sm:$0xe]
        %v8385 = vld [vmem:[#allocation3 + $0xa8] sm:$0xe]
        %v8386 = vld [vmem:[#allocation3 + $0xb4] sm:$0xe]
        %v8387 = vld [vmem:[#allocation3 + $0xc0] sm:$0xe]
        %v8388 = vld [vmem:[#allocation3 + $0xcc] sm:$0xe]
        %v8437 = vrot.slane %v8371, 5
        %v8438 = vrot.slane %v8437, 4
        %v8439 = vrot.slane %v7184, 5
        %v8440 = vsel %vm3789, %v8438, %v8439
        %v8441 = vrot.slane %v8439, 4
        %v8442 = vrot.slane %v7185, 5
        %v8443 = vsel %vm3789, %v8441, %v8442
        %v8444 = vrot.slane %v8372, 5
        %v8445 = vrot.slane %v8444, 4
        %v8446 = vrot.slane %v7187, 5
        %v8447 = vsel %vm3789, %v8445, %v8446
        %v8448 = vrot.slane %v8446, 4
        %v8449 = vrot.slane %v7188, 5
        %v8450 = vsel %vm3789, %v8448, %v8449
        %v8451 = vrot.slane %v8373, 5
        %v8452 = vrot.slane %v8451, 4
        %v8453 = vrot.slane %v7190, 5
        %v8454 = vsel %vm3789, %v8452, %v8453
        %v8455 = vrot.slane %v8453, 4
        %v8456 = vrot.slane %v7191, 5
        %v8457 = vsel %vm3789, %v8455, %v8456
        %v8458 = vrot.slane %v8374, 5
        %v8459 = vrot.slane %v8458, 4
        %v8460 = vrot.slane %v7193, 5
        %v8461 = vsel %vm3789, %v8459, %v8460
        %v8462 = vrot.slane %v8460, 4
        %v8463 = vrot.slane %v7194, 5
        %v8464 = vsel %vm3789, %v8462, %v8463
        %v8465 = vrot.slane %v8375, 5
        %v8466 = vrot.slane %v8465, 4
        %v8467 = vrot.slane %v7196, 5
        %v8468 = vsel %vm3789, %v8466, %v8467
        %v8469 = vrot.slane %v8467, 4
        %v8470 = vrot.slane %v7197, 5
        %v8471 = vsel %vm3789, %v8469, %v8470
        %v8472 = vrot.slane %v8376, 5
        %v8473 = vrot.slane %v8472, 4
        %v8474 = vrot.slane %v7199, 5
        %v8475 = vsel %vm3789, %v8473, %v8474
        %v8476 = vrot.slane %v8474, 4
        %v8477 = vrot.slane %v7200, 5
        %v8478 = vsel %vm3789, %v8476, %v8477
        %v8479 = vrot.slane %v8377, 5
        %v8480 = vrot.slane %v8479, 4
        %v8481 = vrot.slane %v7202, 5
        %v8482 = vsel %vm3789, %v8480, %v8481
        %v8483 = vrot.slane %v8481, 4
        %v8484 = vrot.slane %v7203, 5
        %v8485 = vsel %vm3789, %v8483, %v8484
        %v8486 = vrot.slane %v8378, 5
        %v8487 = vrot.slane %v8486, 4
        %v8488 = vrot.slane %v7205, 5
        %v8489 = vsel %vm3789, %v8487, %v8488
        %v8490 = vrot.slane %v8488, 4
        %v8491 = vrot.slane %v7206, 5
        %v8492 = vsel %vm3789, %v8490, %v8491
        %v8493 = vrot.slane %v8379, 5
        %v8494 = vrot.slane %v8493, 4
        %v8495 = vrot.slane %v7208, 5
        %v8496 = vsel %vm3789, %v8494, %v8495
        %v8497 = vrot.slane %v8495, 4
        %v8498 = vrot.slane %v7209, 5
        %v8499 = vsel %vm3789, %v8497, %v8498
        %v8500 = vrot.slane %v8380, 5
        %v8501 = vrot.slane %v8500, 4
        %v8502 = vrot.slane %v7211, 5
        %v8503 = vsel %vm3789, %v8501, %v8502
        %v8504 = vrot.slane %v8502, 4
        %v8505 = vrot.slane %v7212, 5
        %v8506 = vsel %vm3789, %v8504, %v8505
        %v8507 = vrot.slane %v8381, 5
        %v8508 = vrot.slane %v8507, 4
        %v8509 = vrot.slane %v7214, 5
        %v8510 = vsel %vm3789, %v8508, %v8509
        %v8511 = vrot.slane %v8509, 4
        %v8512 = vrot.slane %v7215, 5
        %v8513 = vsel %vm3789, %v8511, %v8512
        %v8514 = vrot.slane %v8382, 5
        %v8515 = vrot.slane %v8514, 4
        %v8516 = vrot.slane %v7217, 5
        %v8517 = vsel %vm3789, %v8515, %v8516
        %v8518 = vrot.slane %v8516, 4
        %v8519 = vrot.slane %v7218, 5
        %v8520 = vsel %vm3789, %v8518, %v8519
        %v8521 = vrot.slane %v8383, 5
        %v8522 = vrot.slane %v8521, 4
        %v8523 = vrot.slane %v7220, 5
        %v8524 = vsel %vm3789, %v8522, %v8523
        %v8525 = vrot.slane %v8523, 4
        %v8526 = vrot.slane %v7221, 5
        %v8527 = vsel %vm3789, %v8525, %v8526
        %v8528 = vrot.slane %v8384, 5
        %v8529 = vrot.slane %v8528, 4
        %v8530 = vrot.slane %v7223, 5
        %v8531 = vsel %vm3789, %v8529, %v8530
        %v8532 = vrot.slane %v8530, 4
        %v8533 = vrot.slane %v7224, 5
        %v8534 = vsel %vm3789, %v8532, %v8533
        %v8535 = vrot.slane %v8385, 5
        %v8536 = vrot.slane %v8535, 4
        %v8537 = vrot.slane %v7226, 5
        %v8538 = vsel %vm3789, %v8536, %v8537
        %v8539 = vrot.slane %v8537, 4
        %v8540 = vrot.slane %v7227, 5
        %v8541 = vsel %vm3789, %v8539, %v8540
        %v8542 = vrot.slane %v8386, 5
        %v8543 = vrot.slane %v8542, 4
        %v8544 = vrot.slane %v7229, 5
        %v8545 = vsel %vm3789, %v8543, %v8544
        %v8546 = vrot.slane %v8544, 4
        %v8547 = vrot.slane %v7230, 5
        %v8548 = vsel %vm3789, %v8546, %v8547
        %s8549 = scalar_lea.vmem %s7, 4
        %v8550 = vld [vmem:[%s8549] sm:$0x3]
        %v8551 = vunpack.c.l.b16 %v8440
        %v8552 = vunpack.c.l.b16 %v8443
        %v8553 = vunpack.c.l.b16 %v8447
        %v8554 = vunpack.c.l.b16 %v8450
        %v8555 = vunpack.c.l.b16 %v8454
        %v8556 = vunpack.c.l.b16 %v8457
        %v8557 = vunpack.c.l.b16 %v8461
        %v8558 = vunpack.c.l.b16 %v8464
        %v8559 = vunpack.c.l.b16 %v8468
        %v8560 = vunpack.c.l.b16 %v8471
        %v8561 = vunpack.c.l.b16 %v8475
        %v8562 = vunpack.c.l.b16 %v8478
        %v8563 = vunpack.c.l.b16 %v8482
        %v8564 = vunpack.c.l.b16 %v8485
        %v8565 = vunpack.c.l.b16 %v8489
        %v8566 = vunpack.c.l.b16 %v8492
        %v8567 = vunpack.c.l.b16 %v8496
        %v8568 = vunpack.c.l.b16 %v8499
        %v8569 = vunpack.c.l.b16 %v8503
        %v8570 = vunpack.c.l.b16 %v8506
        %v8571 = vunpack.c.l.b16 %v8510
        %v8572 = vunpack.c.l.b16 %v8513
        %v8573 = vunpack.c.l.b16 %v8517
        %v8574 = vunpack.c.l.b16 %v8520
        %v8575 = vunpack.c.l.b16 %v8524
        %v8576 = vunpack.c.l.b16 %v8527
        %v8577 = vunpack.c.l.b16 %v8531
        %v8578 = vunpack.c.l.b16 %v8534
        %v8579 = vunpack.c.l.b16 %v8538
        %v8580 = vunpack.c.l.b16 %v8541
        %v8581 = vunpack.c.l.b16 %v8545
        %v8582 = vunpack.c.l.b16 %v8548
        %v8583 = vpack.c.b16 %v8552, %v8551
        %v8584 = vpack.c.b16 %v8554, %v8553
        %v8585 = vpack.c.b16 %v8556, %v8555
        %v8586 = vpack.c.b16 %v8558, %v8557
        %v8587 = vpack.c.b16 %v8560, %v8559
        %v8588 = vpack.c.b16 %v8562, %v8561
        %v8589 = vpack.c.b16 %v8564, %v8563
        %v8590 = vpack.c.b16 %v8566, %v8565
        %v8591 = vpack.c.b16 %v8568, %v8567
        %v8592 = vpack.c.b16 %v8570, %v8569
        %v8593 = vpack.c.b16 %v8572, %v8571
        %v8594 = vpack.c.b16 %v8574, %v8573
        %v8595 = vpack.c.b16 %v8576, %v8575
        %v8596 = vpack.c.b16 %v8578, %v8577
        %v8597 = vpack.c.b16 %v8580, %v8579
        %v8598 = vpack.c.b16 %v8582, %v8581
        %v8600 = vsel %vm1938, %v8583, 0
        %v8603 = vsel %vm1938, %v8584, 0
        %v8606 = vsel %vm1938, %v8585, 0
        %v8609 = vsel %vm1938, %v8586, 0
        %v8612 = vsel %vm1938, %v8587, 0
        %v8615 = vsel %vm1938, %v8588, 0
        %v8618 = vsel %vm1938, %v8589, 0
        %v8621 = vsel %vm1938, %v8590, 0
        %v8624 = vsel %vm1938, %v8591, 0
        %v8627 = vsel %vm1938, %v8592, 0
        %v8630 = vsel %vm1938, %v8593, 0
        %v8633 = vsel %vm1938, %v8594, 0
        %v8636 = vsel %vm1938, %v8595, 0
        %v8639 = vsel %vm1938, %v8596, 0
        %v8642 = vsel %vm1938, %v8597, 0
        %v8645 = vsel %vm1938, %v8598, 0
        %v8648 = vsel %vm1987, %v8550, 0
        %8650 = vmatprep.subr.bf16.mxu0 0
        %8651 = vmatpush1.bf16.msra.mxu0 %v8648
        %8652 = vmatprep.subr.bf16.mxu0 0
        %8653 = vmatpush1.bf16.msra.mxu0 0
        %8654 = vmatprep.subr.bf16.mxu0 0
        %8655 = vmatpush1.bf16.msra.mxu0 0
        %8656 = vmatprep.subr.bf16.mxu0 0
        %8657 = vmatpush1.bf16.msra.mxu0 0
        %8658 = vmatprep.subr.bf16.mxu0 0
        %8659 = vmatpush1.bf16.msra.mxu0 0
        %8660 = vmatprep.subr.bf16.mxu0 0
        %8661 = vmatpush1.bf16.msra.mxu0 0
        %8662 = vmatprep.subr.bf16.mxu0 0
        %8663 = vmatpush1.bf16.msra.mxu0 0
        %8664 = vmatprep.subr.bf16.mxu0 0
        %8665 = vmatpush1.bf16.msra.mxu0 0
        %8666 = vmatprep.subr.bf16.mxu0 0
        %8667 = vmatpush1.bf16.msra.mxu0 0
        %8668 = vmatprep.subr.bf16.mxu0 0
        %8669 = vmatpush1.bf16.msra.mxu0 0
        %8670 = vmatprep.subr.bf16.mxu0 0
        %8671 = vmatpush1.bf16.msra.mxu0 0
        %8672 = vmatprep.subr.bf16.mxu0 0
        %8673 = vmatpush1.bf16.msra.mxu0 0
        %8674 = vmatprep.subr.bf16.mxu0 0
        %8675 = vmatpush1.bf16.msra.mxu0 0
        %8676 = vmatprep.subr.bf16.mxu0 0
        %8677 = vmatpush1.bf16.msra.mxu0 0
        %8678 = vmatprep.subr.bf16.mxu0 0
        %8679 = vmatpush1.bf16.msra.mxu0 0
        %8680 = vmatprep.subr.bf16.mxu0 0
        %8681 = vmatpush1.bf16.msra.mxu0 0
        %8682 = vmatprep.mubr.bf16.mxu0 0
        %8683 = vmatmul.mubr.bf16.gmra.mrb[0].mxu0 %v8600
        %v8684 = vpop.f32.mrb[0].mxu0
        %v8685 = vadd.f32 0.0, %v8684
        %v8686 = vpop.f32.mrb[0].mxu0
        %v8687 = vpop.f32.mrb[0].mxu0
        %v8688 = vadd.f32 0.0, %v8687
        %v8689 = vpop.f32.mrb[0].mxu0
        %8690 = vmatprep.mubr.bf16.mxu0 0
        %8691 = vmatmul.mubr.bf16.gmra.mrb[0].mxu0 %v8603
        %v8692 = vpop.f32.mrb[0].mxu0
        %v8693 = vadd.f32 0.0, %v8692
        %v8694 = vpop.f32.mrb[0].mxu0
        %v8695 = vpop.f32.mrb[0].mxu0
        %v8696 = vadd.f32 0.0, %v8695
        %v8697 = vpop.f32.mrb[0].mxu0
        %8698 = vmatprep.mubr.bf16.mxu0 0
        %8699 = vmatmul.mubr.bf16.gmra.mrb[0].mxu0 %v8606
        %v8700 = vpop.f32.mrb[0].mxu0
        %v8701 = vadd.f32 0.0, %v8700
        %v8702 = vpop.f32.mrb[0].mxu0
        %v8703 = vpop.f32.mrb[0].mxu0
        %v8704 = vadd.f32 0.0, %v8703
        %v8705 = vpop.f32.mrb[0].mxu0
        %8706 = vmatprep.mubr.bf16.mxu0 0
        %8707 = vmatmul.mubr.bf16.gmra.mrb[0].mxu0 %v8609
        %v8708 = vpop.f32.mrb[0].mxu0
        %v8709 = vadd.f32 0.0, %v8708
        %v8710 = vpop.f32.mrb[0].mxu0
        %v8711 = vpop.f32.mrb[0].mxu0
        %v8712 = vadd.f32 0.0, %v8711
        %v8713 = vpop.f32.mrb[0].mxu0
        %8714 = vmatprep.mubr.bf16.mxu0 0
        %8715 = vmatmul.mubr.bf16.gmra.mrb[0].mxu0 %v8612
        %v8716 = vpop.f32.mrb[0].mxu0
        %v8717 = vadd.f32 0.0, %v8716
        %v8718 = vpop.f32.mrb[0].mxu0
        %v8719 = vpop.f32.mrb[0].mxu0
        %v8720 = vadd.f32 0.0, %v8719
        %v8721 = vpop.f32.mrb[0].mxu0
        %8722 = vmatprep.mubr.bf16.mxu0 0
        %8723 = vmatmul.mubr.bf16.gmra.mrb[0].mxu0 %v8615
        %v8724 = vpop.f32.mrb[0].mxu0
        %v8725 = vadd.f32 0.0, %v8724
        %v8726 = vpop.f32.mrb[0].mxu0
        %v8727 = vpop.f32.mrb[0].mxu0
        %v8728 = vadd.f32 0.0, %v8727
        %v8729 = vpop.f32.mrb[0].mxu0
        %8730 = vmatprep.mubr.bf16.mxu0 0
        %8731 = vmatmul.mubr.bf16.gmra.mrb[0].mxu0 %v8618
        %v8732 = vpop.f32.mrb[0].mxu0
        %v8733 = vadd.f32 0.0, %v8732
        %v8734 = vpop.f32.mrb[0].mxu0
        %v8735 = vpop.f32.mrb[0].mxu0
        %v8736 = vadd.f32 0.0, %v8735
        %v8737 = vpop.f32.mrb[0].mxu0
        %8738 = vmatprep.mubr.bf16.mxu0 0
        %8739 = vmatmul.mubr.bf16.gmra.mrb[0].mxu0 %v8621
        %v8740 = vpop.f32.mrb[0].mxu0
        %v8741 = vadd.f32 0.0, %v8740
        %v8742 = vpop.f32.mrb[0].mxu0
        %v8743 = vpop.f32.mrb[0].mxu0
        %v8744 = vadd.f32 0.0, %v8743
        %v8745 = vpop.f32.mrb[0].mxu0
        %8746 = vmatprep.mubr.bf16.mxu0 0
        %8747 = vmatmul.mubr.bf16.gmra.mrb[0].mxu0 %v8624
        %v8748 = vpop.f32.mrb[0].mxu0
        %v8749 = vadd.f32 0.0, %v8748
        %v8750 = vpop.f32.mrb[0].mxu0
        %v8751 = vpop.f32.mrb[0].mxu0
        %v8752 = vadd.f32 0.0, %v8751
        %v8753 = vpop.f32.mrb[0].mxu0
        %8754 = vmatprep.mubr.bf16.mxu0 0
        %8755 = vmatmul.mubr.bf16.gmra.mrb[0].mxu0 %v8627
        %v8756 = vpop.f32.mrb[0].mxu0
        %v8757 = vadd.f32 0.0, %v8756
        %v8758 = vpop.f32.mrb[0].mxu0
        %v8759 = vpop.f32.mrb[0].mxu0
        %v8760 = vadd.f32 0.0, %v8759
        %v8761 = vpop.f32.mrb[0].mxu0
        %8762 = vmatprep.mubr.bf16.mxu0 0
        %8763 = vmatmul.mubr.bf16.gmra.mrb[0].mxu0 %v8630
        %v8764 = vpop.f32.mrb[0].mxu0
        %v8765 = vadd.f32 0.0, %v8764
        %v8766 = vpop.f32.mrb[0].mxu0
        %v8767 = vpop.f32.mrb[0].mxu0
        %v8768 = vadd.f32 0.0, %v8767
        %v8769 = vpop.f32.mrb[0].mxu0
        %8770 = vmatprep.mubr.bf16.mxu0 0
        %8771 = vmatmul.mubr.bf16.gmra.mrb[0].mxu0 %v8633
        %v8772 = vpop.f32.mrb[0].mxu0
        %v8773 = vadd.f32 0.0, %v8772
        %v8774 = vpop.f32.mrb[0].mxu0
        %v8775 = vpop.f32.mrb[0].mxu0
        %v8776 = vadd.f32 0.0, %v8775
        %v8777 = vpop.f32.mrb[0].mxu0
        %8778 = vmatprep.mubr.bf16.mxu0 0
        %8779 = vmatmul.mubr.bf16.gmra.mrb[0].mxu0 %v8636
        %v8780 = vpop.f32.mrb[0].mxu0
        %v8781 = vadd.f32 0.0, %v8780
        %v8782 = vpop.f32.mrb[0].mxu0
        %v8783 = vpop.f32.mrb[0].mxu0
        %v8784 = vadd.f32 0.0, %v8783
        %v8785 = vpop.f32.mrb[0].mxu0
        %8786 = vmatprep.mubr.bf16.mxu0 0
        %8787 = vmatmul.mubr.bf16.gmra.mrb[0].mxu0 %v8639
        %v8788 = vpop.f32.mrb[0].mxu0
        %v8789 = vadd.f32 0.0, %v8788
        %v8790 = vpop.f32.mrb[0].mxu0
        %v8791 = vpop.f32.mrb[0].mxu0
        %v8792 = vadd.f32 0.0, %v8791
        %v8793 = vpop.f32.mrb[0].mxu0
        %8794 = vmatprep.mubr.bf16.mxu0 0
        %8795 = vmatmul.mubr.bf16.gmra.mrb[0].mxu0 %v8642
        %v8796 = vpop.f32.mrb[0].mxu0
        %v8797 = vadd.f32 0.0, %v8796
        %v8798 = vpop.f32.mrb[0].mxu0
        %v8799 = vpop.f32.mrb[0].mxu0
        %v8800 = vadd.f32 0.0, %v8799
        %v8801 = vpop.f32.mrb[0].mxu0
        %8802 = vmatprep.mubr.bf16.mxu0 0
        %8803 = vmatmul.mubr.bf16.gmra.mrb[0].mxu0 %v8645
        %v8804 = vpop.f32.mrb[0].mxu0
        %v8805 = vadd.f32 0.0, %v8804
        %v8806 = vpop.f32.mrb[0].mxu0
        %v8807 = vpop.f32.mrb[0].mxu0
        %v8808 = vadd.f32 0.0, %v8807
        %v8809 = vpop.f32.mrb[0].mxu0
        %8810 = vdwg.mxu0
        %v8811 = vadd.f32 %v8339, %v8685
        %v8812 = vadd.f32 %v8340, %v8688
        %v8813 = vadd.f32 %v8341, %v8693
        %v8814 = vadd.f32 %v8342, %v8696
        %v8815 = vadd.f32 %v8343, %v8701
        %v8816 = vadd.f32 %v8344, %v8704
        %v8817 = vadd.f32 %v8345, %v8709
        %v8818 = vadd.f32 %v8346, %v8712
        %v8819 = vadd.f32 %v8347, %v8717
        %v8820 = vadd.f32 %v8348, %v8720
        %v8821 = vadd.f32 %v8349, %v8725
        %v8822 = vadd.f32 %v8350, %v8728
        %v8823 = vadd.f32 %v8351, %v8733
        %v8824 = vadd.f32 %v8352, %v8736
        %v8825 = vadd.f32 %v8353, %v8741
        %v8826 = vadd.f32 %v8354, %v8744
        %v8827 = vadd.f32 %v8355, %v8749
        %v8828 = vadd.f32 %v8356, %v8752
        %v8829 = vadd.f32 %v8357, %v8757
        %v8830 = vadd.f32 %v8358, %v8760
        %v8831 = vadd.f32 %v8359, %v8765
        %v8832 = vadd.f32 %v8360, %v8768
        %v8833 = vadd.f32 %v8361, %v8773
        %v8834 = vadd.f32 %v8362, %v8776
        %v8835 = vadd.f32 %v8363, %v8781
        %v8836 = vadd.f32 %v8364, %v8784
        %v8837 = vadd.f32 %v8365, %v8789
        %v8838 = vadd.f32 %v8366, %v8792
        %v8839 = vadd.f32 %v8367, %v8797
        %v8840 = vadd.f32 %v8368, %v8800
        %v8841 = vadd.f32 %v8369, %v8805
        %v8842 = vadd.f32 %v8370, %v8808
        %v8846 = vrot.slane %v8387, 5
        %v8847 = vrot.slane %v8846, 4
        %v8848 = vrot.slane %v7232, 5
        %v8849 = vsel %vm3789, %v8847, %v8848
        %v8850 = vrot.slane %v8848, 4
        %v8851 = vrot.slane %v7233, 5
        %v8852 = vsel %vm3789, %v8850, %v8851
        %s8853 = scalar_lea.vmem %s7, 10
        %v8854 = vld [vmem:[%s8853] sm:$0x3]
        %v8855 = vunpack.c.l.b16 %v8849
        %v8856 = vunpack.c.l.b16 %v8852
        %v8857 = vpack.c.b16 %v8856, %v8855
        %v8859 = vsel %vm1938, %v8857, 0
        %v8862 = vsel %vm1987, %v8854, 0
        %8864 = vmatprep.subr.bf16.mxu0 0
        %8865 = vmatpush1.bf16.msra.mxu0 %v8862
        %8866 = vmatprep.subr.bf16.mxu0 0
        %8867 = vmatpush1.bf16.msra.mxu0 0
        %8868 = vmatprep.subr.bf16.mxu0 0
        %8869 = vmatpush1.bf16.msra.mxu0 0
        %8870 = vmatprep.subr.bf16.mxu0 0
        %8871 = vmatpush1.bf16.msra.mxu0 0
        %8872 = vmatprep.subr.bf16.mxu0 0
        %8873 = vmatpush1.bf16.msra.mxu0 0
        %8874 = vmatprep.subr.bf16.mxu0 0
        %8875 = vmatpush1.bf16.msra.mxu0 0
        %8876 = vmatprep.subr.bf16.mxu0 0
        %8877 = vmatpush1.bf16.msra.mxu0 0
        %8878 = vmatprep.subr.bf16.mxu0 0
        %8879 = vmatpush1.bf16.msra.mxu0 0
        %8880 = vmatprep.subr.bf16.mxu0 0
        %8881 = vmatpush1.bf16.msra.mxu0 0
        %8882 = vmatprep.subr.bf16.mxu0 0
        %8883 = vmatpush1.bf16.msra.mxu0 0
        %8884 = vmatprep.subr.bf16.mxu0 0
        %8885 = vmatpush1.bf16.msra.mxu0 0
        %8886 = vmatprep.subr.bf16.mxu0 0
        %8887 = vmatpush1.bf16.msra.mxu0 0
        %8888 = vmatprep.subr.bf16.mxu0 0
        %8889 = vmatpush1.bf16.msra.mxu0 0
        %8890 = vmatprep.subr.bf16.mxu0 0
        %8891 = vmatpush1.bf16.msra.mxu0 0
        %8892 = vmatprep.subr.bf16.mxu0 0
        %8893 = vmatpush1.bf16.msra.mxu0 0
        %8894 = vmatprep.subr.bf16.mxu0 0
        %8895 = vmatpush1.bf16.msra.mxu0 0
        %8896 = vmatprep.mubr.bf16.mxu0 0
        %8897 = vmatmul.mubr.bf16.gmra.mrb[0].mxu0 %v8603
        %v8898 = vpop.f32.mrb[0].mxu0
        %v8899 = vadd.f32 0.0, %v8898
        %v8900 = vpop.f32.mrb[0].mxu0
        %v8901 = vpop.f32.mrb[0].mxu0
        %v8902 = vadd.f32 0.0, %v8901
        %v8903 = vpop.f32.mrb[0].mxu0
        %8904 = vmatprep.mubr.bf16.mxu0 0
        %8905 = vmatmul.mubr.bf16.gmra.mrb[0].mxu0 %v8606
        %v8906 = vpop.f32.mrb[0].mxu0
        %v8907 = vadd.f32 0.0, %v8906
        %v8908 = vpop.f32.mrb[0].mxu0
        %v8909 = vpop.f32.mrb[0].mxu0
        %v8910 = vadd.f32 0.0, %v8909
        %v8911 = vpop.f32.mrb[0].mxu0
        %8912 = vmatprep.mubr.bf16.mxu0 0
        %8913 = vmatmul.mubr.bf16.gmra.mrb[0].mxu0 %v8609
        %v8914 = vpop.f32.mrb[0].mxu0
        %v8915 = vadd.f32 0.0, %v8914
        %v8916 = vpop.f32.mrb[0].mxu0
        %v8917 = vpop.f32.mrb[0].mxu0
        %v8918 = vadd.f32 0.0, %v8917
        %v8919 = vpop.f32.mrb[0].mxu0
        %8920 = vmatprep.mubr.bf16.mxu0 0
        %8921 = vmatmul.mubr.bf16.gmra.mrb[0].mxu0 %v8612
        %v8922 = vpop.f32.mrb[0].mxu0
        %v8923 = vadd.f32 0.0, %v8922
        %v8924 = vpop.f32.mrb[0].mxu0
        %v8925 = vpop.f32.mrb[0].mxu0
        %v8926 = vadd.f32 0.0, %v8925
        %v8927 = vpop.f32.mrb[0].mxu0
        %8928 = vmatprep.mubr.bf16.mxu0 0
        %8929 = vmatmul.mubr.bf16.gmra.mrb[0].mxu0 %v8615
        %v8930 = vpop.f32.mrb[0].mxu0
        %v8931 = vadd.f32 0.0, %v8930
        %v8932 = vpop.f32.mrb[0].mxu0
        %v8933 = vpop.f32.mrb[0].mxu0
        %v8934 = vadd.f32 0.0, %v8933
        %v8935 = vpop.f32.mrb[0].mxu0
        %8936 = vmatprep.mubr.bf16.mxu0 0
        %8937 = vmatmul.mubr.bf16.gmra.mrb[0].mxu0 %v8618
        %v8938 = vpop.f32.mrb[0].mxu0
        %v8939 = vadd.f32 0.0, %v8938
        %v8940 = vpop.f32.mrb[0].mxu0
        %v8941 = vpop.f32.mrb[0].mxu0
        %v8942 = vadd.f32 0.0, %v8941
        %v8943 = vpop.f32.mrb[0].mxu0
        %8944 = vmatprep.mubr.bf16.mxu0 0
        %8945 = vmatmul.mubr.bf16.gmra.mrb[0].mxu0 %v8621
        %v8946 = vpop.f32.mrb[0].mxu0
        %v8947 = vadd.f32 0.0, %v8946
        %v8948 = vpop.f32.mrb[0].mxu0
        %v8949 = vpop.f32.mrb[0].mxu0
        %v8950 = vadd.f32 0.0, %v8949
        %v8951 = vpop.f32.mrb[0].mxu0
        %8952 = vmatprep.mubr.bf16.mxu0 0
        %8953 = vmatmul.mubr.bf16.gmra.mrb[0].mxu0 %v8624
        %v8954 = vpop.f32.mrb[0].mxu0
        %v8955 = vadd.f32 0.0, %v8954
        %v8956 = vpop.f32.mrb[0].mxu0
        %v8957 = vpop.f32.mrb[0].mxu0
        %v8958 = vadd.f32 0.0, %v8957
        %v8959 = vpop.f32.mrb[0].mxu0
        %8960 = vmatprep.mubr.bf16.mxu0 0
        %8961 = vmatmul.mubr.bf16.gmra.mrb[0].mxu0 %v8627
        %v8962 = vpop.f32.mrb[0].mxu0
        %v8963 = vadd.f32 0.0, %v8962
        %v8964 = vpop.f32.mrb[0].mxu0
        %v8965 = vpop.f32.mrb[0].mxu0
        %v8966 = vadd.f32 0.0, %v8965
        %v8967 = vpop.f32.mrb[0].mxu0
        %8968 = vmatprep.mubr.bf16.mxu0 0
        %8969 = vmatmul.mubr.bf16.gmra.mrb[0].mxu0 %v8630
        %v8970 = vpop.f32.mrb[0].mxu0
        %v8971 = vadd.f32 0.0, %v8970
        %v8972 = vpop.f32.mrb[0].mxu0
        %v8973 = vpop.f32.mrb[0].mxu0
        %v8974 = vadd.f32 0.0, %v8973
        %v8975 = vpop.f32.mrb[0].mxu0
        %8976 = vmatprep.mubr.bf16.mxu0 0
        %8977 = vmatmul.mubr.bf16.gmra.mrb[0].mxu0 %v8633
        %v8978 = vpop.f32.mrb[0].mxu0
        %v8979 = vadd.f32 0.0, %v8978
        %v8980 = vpop.f32.mrb[0].mxu0
        %v8981 = vpop.f32.mrb[0].mxu0
        %v8982 = vadd.f32 0.0, %v8981
        %v8983 = vpop.f32.mrb[0].mxu0
        %8984 = vmatprep.mubr.bf16.mxu0 0
        %8985 = vmatmul.mubr.bf16.gmra.mrb[0].mxu0 %v8636
        %v8986 = vpop.f32.mrb[0].mxu0
        %v8987 = vadd.f32 0.0, %v8986
        %v8988 = vpop.f32.mrb[0].mxu0
        %v8989 = vpop.f32.mrb[0].mxu0
        %v8990 = vadd.f32 0.0, %v8989
        %v8991 = vpop.f32.mrb[0].mxu0
        %8992 = vmatprep.mubr.bf16.mxu0 0
        %8993 = vmatmul.mubr.bf16.gmra.mrb[0].mxu0 %v8639
        %v8994 = vpop.f32.mrb[0].mxu0
        %v8995 = vadd.f32 0.0, %v8994
        %v8996 = vpop.f32.mrb[0].mxu0
        %v8997 = vpop.f32.mrb[0].mxu0
        %v8998 = vadd.f32 0.0, %v8997
        %v8999 = vpop.f32.mrb[0].mxu0
        %9000 = vmatprep.mubr.bf16.mxu0 0
        %9001 = vmatmul.mubr.bf16.gmra.mrb[0].mxu0 %v8642
        %v9002 = vpop.f32.mrb[0].mxu0
        %v9003 = vadd.f32 0.0, %v9002
        %v9004 = vpop.f32.mrb[0].mxu0
        %v9005 = vpop.f32.mrb[0].mxu0
        %v9006 = vadd.f32 0.0, %v9005
        %v9007 = vpop.f32.mrb[0].mxu0
        %9008 = vmatprep.mubr.bf16.mxu0 0
        %9009 = vmatmul.mubr.bf16.gmra.mrb[0].mxu0 %v8645
        %v9010 = vpop.f32.mrb[0].mxu0
        %v9011 = vadd.f32 0.0, %v9010
        %v9012 = vpop.f32.mrb[0].mxu0
        %v9013 = vpop.f32.mrb[0].mxu0
        %v9014 = vadd.f32 0.0, %v9013
        %v9015 = vpop.f32.mrb[0].mxu0
        %9016 = vmatprep.mubr.bf16.mxu0 0
        %9017 = vmatmul.mubr.bf16.gmra.mrb[0].mxu0 %v8859
        %v9018 = vpop.f32.mrb[0].mxu0
        %v9019 = vadd.f32 0.0, %v9018
        %v9020 = vpop.f32.mrb[0].mxu0
        %v9021 = vpop.f32.mrb[0].mxu0
        %v9022 = vadd.f32 0.0, %v9021
        %v9023 = vpop.f32.mrb[0].mxu0
        %9024 = vdwg.mxu0
        %v9025 = vadd.f32 %v8811, %v8899
        %v9026 = vadd.f32 %v8812, %v8902
        %v9027 = vadd.f32 %v8813, %v8907
        %v9028 = vadd.f32 %v8814, %v8910
        %v9029 = vadd.f32 %v8815, %v8915
        %v9030 = vadd.f32 %v8816, %v8918
        %v9031 = vadd.f32 %v8817, %v8923
        %v9032 = vadd.f32 %v8818, %v8926
        %v9033 = vadd.f32 %v8819, %v8931
        %v9034 = vadd.f32 %v8820, %v8934
        %v9035 = vadd.f32 %v8821, %v8939
        %v9036 = vadd.f32 %v8822, %v8942
        %v9037 = vadd.f32 %v8823, %v8947
        %v9038 = vadd.f32 %v8824, %v8950
        %v9039 = vadd.f32 %v8825, %v8955
        %v9040 = vadd.f32 %v8826, %v8958
        %v9041 = vadd.f32 %v8827, %v8963
        %v9042 = vadd.f32 %v8828, %v8966
        %v9043 = vadd.f32 %v8829, %v8971
        %v9044 = vadd.f32 %v8830, %v8974
        %v9045 = vadd.f32 %v8831, %v8979
        %v9046 = vadd.f32 %v8832, %v8982
        %v9047 = vadd.f32 %v8833, %v8987
        %v9048 = vadd.f32 %v8834, %v8990
        %v9049 = vadd.f32 %v8835, %v8995
        %v9050 = vadd.f32 %v8836, %v8998
        %v9051 = vadd.f32 %v8837, %v9003
        %v9052 = vadd.f32 %v8838, %v9006
        %v9053 = vadd.f32 %v8839, %v9011
        %v9054 = vadd.f32 %v8840, %v9014
        %v9055 = vadd.f32 %v8841, %v9019
        %v9056 = vadd.f32 %v8842, %v9022
        %v9060 = vrot.slane %v8388, 5
        %v9061 = vrot.slane %v9060, 4
        %v9062 = vrot.slane %v7235, 5
        %v9063 = vsel %vm3789, %v9061, %v9062
        %v9064 = vrot.slane %v9062, 4
        %v9065 = vrot.slane %v7236, 5
        %v9066 = vsel %vm3789, %v9064, %v9065
        %s9067 = scalar_lea.vmem %s7, 16
        %v9068 = vld [vmem:[%s9067] sm:$0x3]
        %v9069 = vunpack.c.l.b16 %v9063
        %v9070 = vunpack.c.l.b16 %v9066
        %v9071 = vpack.c.b16 %v9070, %v9069
        %v9073 = vsel %vm1938, %v9071, 0
        %v9076 = vsel %vm1987, %v9068, 0
        %9078 = vmatprep.subr.bf16.mxu0 0
        %9079 = vmatpush1.bf16.msra.mxu0 %v9076
        %9080 = vmatprep.subr.bf16.mxu0 0
        %9081 = vmatpush1.bf16.msra.mxu0 0
        %9082 = vmatprep.subr.bf16.mxu0 0
        %9083 = vmatpush1.bf16.msra.mxu0 0
        %9084 = vmatprep.subr.bf16.mxu0 0
        %9085 = vmatpush1.bf16.msra.mxu0 0
        %9086 = vmatprep.subr.bf16.mxu0 0
        %9087 = vmatpush1.bf16.msra.mxu0 0
        %9088 = vmatprep.subr.bf16.mxu0 0
        %9089 = vmatpush1.bf16.msra.mxu0 0
        %9090 = vmatprep.subr.bf16.mxu0 0
        %9091 = vmatpush1.bf16.msra.mxu0 0
        %9092 = vmatprep.subr.bf16.mxu0 0
        %9093 = vmatpush1.bf16.msra.mxu0 0
        %9094 = vmatprep.subr.bf16.mxu0 0
        %9095 = vmatpush1.bf16.msra.mxu0 0
        %9096 = vmatprep.subr.bf16.mxu0 0
        %9097 = vmatpush1.bf16.msra.mxu0 0
        %9098 = vmatprep.subr.bf16.mxu0 0
        %9099 = vmatpush1.bf16.msra.mxu0 0
        %9100 = vmatprep.subr.bf16.mxu0 0
        %9101 = vmatpush1.bf16.msra.mxu0 0
        %9102 = vmatprep.subr.bf16.mxu0 0
        %9103 = vmatpush1.bf16.msra.mxu0 0
        %9104 = vmatprep.subr.bf16.mxu0 0
        %9105 = vmatpush1.bf16.msra.mxu0 0
        %9106 = vmatprep.subr.bf16.mxu0 0
        %9107 = vmatpush1.bf16.msra.mxu0 0
        %9108 = vmatprep.subr.bf16.mxu0 0
        %9109 = vmatpush1.bf16.msra.mxu0 0
        %9110 = vmatprep.mubr.bf16.mxu0 0
        %9111 = vmatmul.mubr.bf16.gmra.mrb[0].mxu0 %v8606
        %v9112 = vpop.f32.mrb[0].mxu0
        %v9113 = vadd.f32 0.0, %v9112
        %v9114 = vpop.f32.mrb[0].mxu0
        %v9115 = vpop.f32.mrb[0].mxu0
        %v9116 = vadd.f32 0.0, %v9115
        %v9117 = vpop.f32.mrb[0].mxu0
        %9118 = vmatprep.mubr.bf16.mxu0 0
        %9119 = vmatmul.mubr.bf16.gmra.mrb[0].mxu0 %v8609
        %v9120 = vpop.f32.mrb[0].mxu0
        %v9121 = vadd.f32 0.0, %v9120
        %v9122 = vpop.f32.mrb[0].mxu0
        %v9123 = vpop.f32.mrb[0].mxu0
        %v9124 = vadd.f32 0.0, %v9123
        %v9125 = vpop.f32.mrb[0].mxu0
        %9126 = vmatprep.mubr.bf16.mxu0 0
        %9127 = vmatmul.mubr.bf16.gmra.mrb[0].mxu0 %v8612
        %v9128 = vpop.f32.mrb[0].mxu0
        %v9129 = vadd.f32 0.0, %v9128
        %v9130 = vpop.f32.mrb[0].mxu0
        %v9131 = vpop.f32.mrb[0].mxu0
        %v9132 = vadd.f32 0.0, %v9131
        %v9133 = vpop.f32.mrb[0].mxu0
        %9134 = vmatprep.mubr.bf16.mxu0 0
        %9135 = vmatmul.mubr.bf16.gmra.mrb[0].mxu0 %v8615
        %v9136 = vpop.f32.mrb[0].mxu0
        %v9137 = vadd.f32 0.0, %v9136
        %v9138 = vpop.f32.mrb[0].mxu0
        %v9139 = vpop.f32.mrb[0].mxu0
        %v9140 = vadd.f32 0.0, %v9139
        %v9141 = vpop.f32.mrb[0].mxu0
        %9142 = vmatprep.mubr.bf16.mxu0 0
        %9143 = vmatmul.mubr.bf16.gmra.mrb[0].mxu0 %v8618
        %v9144 = vpop.f32.mrb[0].mxu0
        %v9145 = vadd.f32 0.0, %v9144
        %v9146 = vpop.f32.mrb[0].mxu0
        %v9147 = vpop.f32.mrb[0].mxu0
        %v9148 = vadd.f32 0.0, %v9147
        %v9149 = vpop.f32.mrb[0].mxu0
        %9150 = vmatprep.mubr.bf16.mxu0 0
        %9151 = vmatmul.mubr.bf16.gmra.mrb[0].mxu0 %v8621
        %v9152 = vpop.f32.mrb[0].mxu0
        %v9153 = vadd.f32 0.0, %v9152
        %v9154 = vpop.f32.mrb[0].mxu0
        %v9155 = vpop.f32.mrb[0].mxu0
        %v9156 = vadd.f32 0.0, %v9155
        %v9157 = vpop.f32.mrb[0].mxu0
        %9158 = vmatprep.mubr.bf16.mxu0 0
        %9159 = vmatmul.mubr.bf16.gmra.mrb[0].mxu0 %v8624
        %v9160 = vpop.f32.mrb[0].mxu0
        %v9161 = vadd.f32 0.0, %v9160
        %v9162 = vpop.f32.mrb[0].mxu0
        %v9163 = vpop.f32.mrb[0].mxu0
        %v9164 = vadd.f32 0.0, %v9163
        %v9165 = vpop.f32.mrb[0].mxu0
        %9166 = vmatprep.mubr.bf16.mxu0 0
        %9167 = vmatmul.mubr.bf16.gmra.mrb[0].mxu0 %v8627
        %v9168 = vpop.f32.mrb[0].mxu0
        %v9169 = vadd.f32 0.0, %v9168
        %v9170 = vpop.f32.mrb[0].mxu0
        %v9171 = vpop.f32.mrb[0].mxu0
        %v9172 = vadd.f32 0.0, %v9171
        %v9173 = vpop.f32.mrb[0].mxu0
        %9174 = vmatprep.mubr.bf16.mxu0 0
        %9175 = vmatmul.mubr.bf16.gmra.mrb[0].mxu0 %v8630
        %v9176 = vpop.f32.mrb[0].mxu0
        %v9177 = vadd.f32 0.0, %v9176
        %v9178 = vpop.f32.mrb[0].mxu0
        %v9179 = vpop.f32.mrb[0].mxu0
        %v9180 = vadd.f32 0.0, %v9179
        %v9181 = vpop.f32.mrb[0].mxu0
        %9182 = vmatprep.mubr.bf16.mxu0 0
        %9183 = vmatmul.mubr.bf16.gmra.mrb[0].mxu0 %v8633
        %v9184 = vpop.f32.mrb[0].mxu0
        %v9185 = vadd.f32 0.0, %v9184
        %v9186 = vpop.f32.mrb[0].mxu0
        %v9187 = vpop.f32.mrb[0].mxu0
        %v9188 = vadd.f32 0.0, %v9187
        %v9189 = vpop.f32.mrb[0].mxu0
        %9190 = vmatprep.mubr.bf16.mxu0 0
        %9191 = vmatmul.mubr.bf16.gmra.mrb[0].mxu0 %v8636
        %v9192 = vpop.f32.mrb[0].mxu0
        %v9193 = vadd.f32 0.0, %v9192
        %v9194 = vpop.f32.mrb[0].mxu0
        %v9195 = vpop.f32.mrb[0].mxu0
        %v9196 = vadd.f32 0.0, %v9195
        %v9197 = vpop.f32.mrb[0].mxu0
        %9198 = vmatprep.mubr.bf16.mxu0 0
        %9199 = vmatmul.mubr.bf16.gmra.mrb[0].mxu0 %v8639
        %v9200 = vpop.f32.mrb[0].mxu0
        %v9201 = vadd.f32 0.0, %v9200
        %v9202 = vpop.f32.mrb[0].mxu0
        %v9203 = vpop.f32.mrb[0].mxu0
        %v9204 = vadd.f32 0.0, %v9203
        %v9205 = vpop.f32.mrb[0].mxu0
        %9206 = vmatprep.mubr.bf16.mxu0 0
        %9207 = vmatmul.mubr.bf16.gmra.mrb[0].mxu0 %v8642
        %v9208 = vpop.f32.mrb[0].mxu0
        %v9209 = vadd.f32 0.0, %v9208
        %v9210 = vpop.f32.mrb[0].mxu0
        %v9211 = vpop.f32.mrb[0].mxu0
        %v9212 = vadd.f32 0.0, %v9211
        %v9213 = vpop.f32.mrb[0].mxu0
        %9214 = vmatprep.mubr.bf16.mxu0 0
        %9215 = vmatmul.mubr.bf16.gmra.mrb[0].mxu0 %v8645
        %v9216 = vpop.f32.mrb[0].mxu0
        %v9217 = vadd.f32 0.0, %v9216
        %v9218 = vpop.f32.mrb[0].mxu0
        %v9219 = vpop.f32.mrb[0].mxu0
        %v9220 = vadd.f32 0.0, %v9219
        %v9221 = vpop.f32.mrb[0].mxu0
        %9222 = vmatprep.mubr.bf16.mxu0 0
        %9223 = vmatmul.mubr.bf16.gmra.mrb[0].mxu0 %v8859
        %v9224 = vpop.f32.mrb[0].mxu0
        %v9225 = vadd.f32 0.0, %v9224
        %v9226 = vpop.f32.mrb[0].mxu0
        %v9227 = vpop.f32.mrb[0].mxu0
        %v9228 = vadd.f32 0.0, %v9227
        %v9229 = vpop.f32.mrb[0].mxu0
        %9230 = vmatprep.mubr.bf16.mxu0 0
        %9231 = vmatmul.mubr.bf16.gmra.mrb[0].mxu0 %v9073
        %v9232 = vpop.f32.mrb[0].mxu0
        %v9233 = vadd.f32 0.0, %v9232
        %v9234 = vpop.f32.mrb[0].mxu0
        %v9235 = vpop.f32.mrb[0].mxu0
        %v9236 = vadd.f32 0.0, %v9235
        %v9237 = vpop.f32.mrb[0].mxu0
        %9238 = vdwg.mxu0
        %v9239 = vadd.f32 %v9025, %v9113
        %v9240 = vadd.f32 %v9026, %v9116
        %v9241 = vadd.f32 %v9027, %v9121
        %v9242 = vadd.f32 %v9028, %v9124
        %v9243 = vadd.f32 %v9029, %v9129
        %v9244 = vadd.f32 %v9030, %v9132
        %v9245 = vadd.f32 %v9031, %v9137
        %v9246 = vadd.f32 %v9032, %v9140
        %v9247 = vadd.f32 %v9033, %v9145
        %v9248 = vadd.f32 %v9034, %v9148
        %v9249 = vadd.f32 %v9035, %v9153
        %v9250 = vadd.f32 %v9036, %v9156
        %v9251 = vadd.f32 %v9037, %v9161
        %v9252 = vadd.f32 %v9038, %v9164
        %v9253 = vadd.f32 %v9039, %v9169
        %v9254 = vadd.f32 %v9040, %v9172
        %v9255 = vadd.f32 %v9041, %v9177
        %v9256 = vadd.f32 %v9042, %v9180
        %v9257 = vadd.f32 %v9043, %v9185
        %v9258 = vadd.f32 %v9044, %v9188
        %v9259 = vadd.f32 %v9045, %v9193
        %v9260 = vadd.f32 %v9046, %v9196
        %v9261 = vadd.f32 %v9047, %v9201
        %v9262 = vadd.f32 %v9048, %v9204
        %v9263 = vadd.f32 %v9049, %v9209
        %v9264 = vadd.f32 %v9050, %v9212
        %v9265 = vadd.f32 %v9051, %v9217
        %v9266 = vadd.f32 %v9052, %v9220
        %v9267 = vadd.f32 %v9053, %v9225
        %v9268 = vadd.f32 %v9054, %v9228
        %v9269 = vadd.f32 %v9055, %v9233
        %v9270 = vadd.f32 %v9056, %v9236
        %v9271 = vld [vmem:[%s8] sm:$0x1]
        %v9273 = vlaneseq
        %v9274 = vshrl.u32 %v9273, 7
        %v9275 = vsub.s32 0, %v9274
        %v9276 = vrot.slane %v9271, %v9275
        %v9278 = vadd.f32 %v9239, %v9276
        %v9279 = vadd.f32 %v9240, %v9276
        %v9280 = vadd.f32 %v9241, %v9276
        %v9281 = vadd.f32 %v9242, %v9276
        %v9282 = vadd.f32 %v9243, %v9276
        %v9283 = vadd.f32 %v9244, %v9276
        %v9284 = vadd.f32 %v9245, %v9276
        %v9285 = vadd.f32 %v9246, %v9276
        %v9286 = vadd.f32 %v9247, %v9276
        %v9287 = vadd.f32 %v9248, %v9276
        %v9288 = vadd.f32 %v9249, %v9276
        %v9289 = vadd.f32 %v9250, %v9276
        %v9290 = vadd.f32 %v9251, %v9276
        %v9291 = vadd.f32 %v9252, %v9276
        %v9292 = vadd.f32 %v9253, %v9276
        %v9293 = vadd.f32 %v9254, %v9276
        %v9294 = vadd.f32 %v9255, %v9276
        %v9295 = vadd.f32 %v9256, %v9276
        %v9296 = vadd.f32 %v9257, %v9276
        %v9297 = vadd.f32 %v9258, %v9276
        %v9298 = vadd.f32 %v9259, %v9276
        %v9299 = vadd.f32 %v9260, %v9276
        %v9300 = vadd.f32 %v9261, %v9276
        %v9301 = vadd.f32 %v9262, %v9276
        %v9302 = vadd.f32 %v9263, %v9276
        %v9303 = vadd.f32 %v9264, %v9276
        %v9304 = vadd.f32 %v9265, %v9276
        %v9305 = vadd.f32 %v9266, %v9276
        %v9306 = vadd.f32 %v9267, %v9276
        %v9307 = vadd.f32 %v9268, %v9276
        %v9308 = vadd.f32 %v9269, %v9276
        %v9309 = vadd.f32 %v9270, %v9276
        %v9310 = vmax.f32 %v9278, 0.0
        %v9311 = vmax.f32 %v9279, 0.0
        %v9312 = vmax.f32 %v9280, 0.0
        %v9313 = vmax.f32 %v9281, 0.0
        %v9314 = vmax.f32 %v9282, 0.0
        %v9315 = vmax.f32 %v9283, 0.0
        %v9316 = vmax.f32 %v9284, 0.0
        %v9317 = vmax.f32 %v9285, 0.0
        %v9318 = vmax.f32 %v9286, 0.0
        %v9319 = vmax.f32 %v9287, 0.0
        %v9320 = vmax.f32 %v9288, 0.0
        %v9321 = vmax.f32 %v9289, 0.0
        %v9322 = vmax.f32 %v9290, 0.0
        %v9323 = vmax.f32 %v9291, 0.0
        %v9324 = vmax.f32 %v9292, 0.0
        %v9325 = vmax.f32 %v9293, 0.0
        %v9326 = vmax.f32 %v9294, 0.0
        %v9327 = vmax.f32 %v9295, 0.0
        %v9328 = vmax.f32 %v9296, 0.0
        %v9329 = vmax.f32 %v9297, 0.0
        %v9330 = vmax.f32 %v9298, 0.0
        %v9331 = vmax.f32 %v9299, 0.0
        %v9332 = vmax.f32 %v9300, 0.0
        %v9333 = vmax.f32 %v9301, 0.0
        %v9334 = vmax.f32 %v9302, 0.0
        %v9335 = vmax.f32 %v9303, 0.0
        %v9336 = vmax.f32 %v9304, 0.0
        %v9337 = vmax.f32 %v9305, 0.0
        %v9338 = vmax.f32 %v9306, 0.0
        %v9339 = vmax.f32 %v9307, 0.0
        %v9340 = vmax.f32 %v9308, 0.0
        %v9341 = vmax.f32 %v9309, 0.0
        %v9342 = vld [vmem:[%s366] sm:$0xff]
        %v9343 = vld [vmem:[%s366 + $0x8] sm:$0xff]
        %v9344 = vld [vmem:[%s366 + $0x10] sm:$0xff]
        %v9345 = vld [vmem:[%s366 + $0x18] sm:$0xff]
        %v9346 = vld [vmem:[%s366 + $0x20] sm:$0xff]
        %v9347 = vld [vmem:[%s366 + $0x28] sm:$0xff]
        %v9348 = vld [vmem:[%s366 + $0x30] sm:$0xff]
        %v9349 = vld [vmem:[%s366 + $0x38] sm:$0xff]
        %v9350 = vld [vmem:[%s366 + $0x40] sm:$0xff]
        %v9351 = vld [vmem:[%s366 + $0x48] sm:$0xff]
        %v9352 = vld [vmem:[%s366 + $0x50] sm:$0xff]
        %v9353 = vld [vmem:[%s366 + $0x58] sm:$0xff]
        %v9354 = vld [vmem:[%s366 + $0x60] sm:$0xff]
        %v9355 = vld [vmem:[%s366 + $0x68] sm:$0xff]
        %v9356 = vld [vmem:[%s366 + $0x70] sm:$0xff]
        %v9357 = vld [vmem:[%s366 + $0x78] sm:$0xff]
        %v9358 = vld [vmem:[%s366 + $0x80] sm:$0xff]
        %v9359 = vld [vmem:[%s366 + $0x88] sm:$0xff]
        %v9360 = vld [vmem:[%s366 + $0x90] sm:$0xff]
        %v9361 = vld [vmem:[%s366 + $0x98] sm:$0xff]
        %v9362 = vld [vmem:[%s366 + $0xa0] sm:$0xff]
        %v9363 = vld [vmem:[%s366 + $0xa8] sm:$0xff]
        %v9364 = vld [vmem:[%s366 + $0xb0] sm:$0xff]
        %v9365 = vld [vmem:[%s366 + $0xb8] sm:$0xff]
        %v9366 = vld [vmem:[%s366 + $0xc0] sm:$0xff]
        %v9367 = vld [vmem:[%s366 + $0xc8] sm:$0xff]
        %v9368 = vld [vmem:[%s366 + $0xd0] sm:$0xff]
        %v9369 = vld [vmem:[%s366 + $0xd8] sm:$0xff]
        %v9370 = vld [vmem:[%s366 + $0xe0] sm:$0xff]
        %v9371 = vld [vmem:[%s366 + $0xe8] sm:$0xff]
        %v9372 = vld [vmem:[%s366 + $0xf0] sm:$0xff]
        %v9373 = vld [vmem:[%s366 + $0xf8] sm:$0xff]
        %v9374 = vpack.c.bf16 %v9311, %v9310
        %v9375 = vpack.c.bf16 %v9313, %v9312
        %v9376 = vpack.c.bf16 %v9315, %v9314
        %v9377 = vpack.c.bf16 %v9317, %v9316
        %v9378 = vpack.c.bf16 %v9319, %v9318
        %v9379 = vpack.c.bf16 %v9321, %v9320
        %v9380 = vpack.c.bf16 %v9323, %v9322
        %v9381 = vpack.c.bf16 %v9325, %v9324
        %v9382 = vpack.c.bf16 %v9327, %v9326
        %v9383 = vpack.c.bf16 %v9329, %v9328
        %v9384 = vpack.c.bf16 %v9331, %v9330
        %v9385 = vpack.c.bf16 %v9333, %v9332
        %v9386 = vpack.c.bf16 %v9335, %v9334
        %v9387 = vpack.c.bf16 %v9337, %v9336
        %v9388 = vpack.c.bf16 %v9339, %v9338
        %v9389 = vpack.c.bf16 %v9341, %v9340
        %v9390 = vld [vmem:[%s9] sm:$0x3]
        %v9391 = vld [vmem:[%s10] sm:$0x1]
        %v9393 = vlaneseq
        %v9394 = vshrl.u32 %v9393, 7
        %v9395 = vsub.s32 0, %v9394
        %v9396 = vrot.slane %v9391, %v9395
        %v9399 = vsel %vm1938, %v9374, 0
        %v9402 = vsel %vm1938, %v9375, 0
        %v9405 = vsel %vm1938, %v9376, 0
        %v9408 = vsel %vm1938, %v9377, 0
        %v9411 = vsel %vm1938, %v9378, 0
        %v9414 = vsel %vm1938, %v9379, 0
        %v9417 = vsel %vm1938, %v9380, 0
        %v9420 = vsel %vm1938, %v9381, 0
        %v9423 = vsel %vm1938, %v9382, 0
        %v9426 = vsel %vm1938, %v9383, 0
        %v9429 = vsel %vm1938, %v9384, 0
        %v9432 = vsel %vm1938, %v9385, 0
        %v9435 = vsel %vm1938, %v9386, 0
        %v9438 = vsel %vm1938, %v9387, 0
        %v9441 = vsel %vm1938, %v9388, 0
        %v9444 = vsel %vm1938, %v9389, 0
        %v9447 = vsel %vm1987, %v9390, 0
        %9449 = vmatprep.subr.bf16.mxu0 0
        %9450 = vmatpush1.bf16.msra.mxu0 %v9447
        %9451 = vmatprep.subr.bf16.mxu0 0
        %9452 = vmatpush1.bf16.msra.mxu0 0
        %9453 = vmatprep.subr.bf16.mxu0 0
        %9454 = vmatpush1.bf16.msra.mxu0 0
        %9455 = vmatprep.subr.bf16.mxu0 0
        %9456 = vmatpush1.bf16.msra.mxu0 0
        %9457 = vmatprep.subr.bf16.mxu0 0
        %9458 = vmatpush1.bf16.msra.mxu0 0
        %9459 = vmatprep.subr.bf16.mxu0 0
        %9460 = vmatpush1.bf16.msra.mxu0 0
        %9461 = vmatprep.subr.bf16.mxu0 0
        %9462 = vmatpush1.bf16.msra.mxu0 0
        %9463 = vmatprep.subr.bf16.mxu0 0
        %9464 = vmatpush1.bf16.msra.mxu0 0
        %9465 = vmatprep.subr.bf16.mxu0 0
        %9466 = vmatpush1.bf16.msra.mxu0 0
        %9467 = vmatprep.subr.bf16.mxu0 0
        %9468 = vmatpush1.bf16.msra.mxu0 0
        %9469 = vmatprep.subr.bf16.mxu0 0
        %9470 = vmatpush1.bf16.msra.mxu0 0
        %9471 = vmatprep.subr.bf16.mxu0 0
        %9472 = vmatpush1.bf16.msra.mxu0 0
        %9473 = vmatprep.subr.bf16.mxu0 0
        %9474 = vmatpush1.bf16.msra.mxu0 0
        %9475 = vmatprep.subr.bf16.mxu0 0
        %9476 = vmatpush1.bf16.msra.mxu0 0
        %9477 = vmatprep.subr.bf16.mxu0 0
        %9478 = vmatpush1.bf16.msra.mxu0 0
        %9479 = vmatprep.subr.bf16.mxu0 0
        %9480 = vmatpush1.bf16.msra.mxu0 0
        %9481 = vmatprep.mubr.bf16.mxu0 0
        %9482 = vmatmul.mubr.bf16.gmra.mrb[0].mxu0 %v9399
        %v9483 = vpop.f32.mrb[0].mxu0
        %v9484 = vadd.f32 %v9396, %v9483
        %v9485 = vpop.f32.mrb[0].mxu0
        %v9486 = vpop.f32.mrb[0].mxu0
        %v9487 = vadd.f32 %v9396, %v9486
        %v9488 = vpop.f32.mrb[0].mxu0
        %9489 = vmatprep.mubr.bf16.mxu0 0
        %9490 = vmatmul.mubr.bf16.gmra.mrb[0].mxu0 %v9402
        %v9491 = vpop.f32.mrb[0].mxu0
        %v9492 = vadd.f32 %v9396, %v9491
        %v9493 = vpop.f32.mrb[0].mxu0
        %v9494 = vpop.f32.mrb[0].mxu0
        %v9495 = vadd.f32 %v9396, %v9494
        %v9496 = vpop.f32.mrb[0].mxu0
        %9497 = vmatprep.mubr.bf16.mxu0 0
        %9498 = vmatmul.mubr.bf16.gmra.mrb[0].mxu0 %v9405
        %v9499 = vpop.f32.mrb[0].mxu0
        %v9500 = vadd.f32 %v9396, %v9499
        %v9501 = vpop.f32.mrb[0].mxu0
        %v9502 = vpop.f32.mrb[0].mxu0
        %v9503 = vadd.f32 %v9396, %v9502
        %v9504 = vpop.f32.mrb[0].mxu0
        %9505 = vmatprep.mubr.bf16.mxu0 0
        %9506 = vmatmul.mubr.bf16.gmra.mrb[0].mxu0 %v9408
        %v9507 = vpop.f32.mrb[0].mxu0
        %v9508 = vadd.f32 %v9396, %v9507
        %v9509 = vpop.f32.mrb[0].mxu0
        %v9510 = vpop.f32.mrb[0].mxu0
        %v9511 = vadd.f32 %v9396, %v9510
        %v9512 = vpop.f32.mrb[0].mxu0
        %9513 = vmatprep.mubr.bf16.mxu0 0
        %9514 = vmatmul.mubr.bf16.gmra.mrb[0].mxu0 %v9411
        %v9515 = vpop.f32.mrb[0].mxu0
        %v9516 = vadd.f32 %v9396, %v9515
        %v9517 = vpop.f32.mrb[0].mxu0
        %v9518 = vpop.f32.mrb[0].mxu0
        %v9519 = vadd.f32 %v9396, %v9518
        %v9520 = vpop.f32.mrb[0].mxu0
        %9521 = vmatprep.mubr.bf16.mxu0 0
        %9522 = vmatmul.mubr.bf16.gmra.mrb[0].mxu0 %v9414
        %v9523 = vpop.f32.mrb[0].mxu0
        %v9524 = vadd.f32 %v9396, %v9523
        %v9525 = vpop.f32.mrb[0].mxu0
        %v9526 = vpop.f32.mrb[0].mxu0
        %v9527 = vadd.f32 %v9396, %v9526
        %v9528 = vpop.f32.mrb[0].mxu0
        %9529 = vmatprep.mubr.bf16.mxu0 0
        %9530 = vmatmul.mubr.bf16.gmra.mrb[0].mxu0 %v9417
        %v9531 = vpop.f32.mrb[0].mxu0
        %v9532 = vadd.f32 %v9396, %v9531
        %v9533 = vpop.f32.mrb[0].mxu0
        %v9534 = vpop.f32.mrb[0].mxu0
        %v9535 = vadd.f32 %v9396, %v9534
        %v9536 = vpop.f32.mrb[0].mxu0
        %9537 = vmatprep.mubr.bf16.mxu0 0
        %9538 = vmatmul.mubr.bf16.gmra.mrb[0].mxu0 %v9420
        %v9539 = vpop.f32.mrb[0].mxu0
        %v9540 = vadd.f32 %v9396, %v9539
        %v9541 = vpop.f32.mrb[0].mxu0
        %v9542 = vpop.f32.mrb[0].mxu0
        %v9543 = vadd.f32 %v9396, %v9542
        %v9544 = vpop.f32.mrb[0].mxu0
        %9545 = vmatprep.mubr.bf16.mxu0 0
        %9546 = vmatmul.mubr.bf16.gmra.mrb[0].mxu0 %v9423
        %v9547 = vpop.f32.mrb[0].mxu0
        %v9548 = vadd.f32 %v9396, %v9547
        %v9549 = vpop.f32.mrb[0].mxu0
        %v9550 = vpop.f32.mrb[0].mxu0
        %v9551 = vadd.f32 %v9396, %v9550
        %v9552 = vpop.f32.mrb[0].mxu0
        %9553 = vmatprep.mubr.bf16.mxu0 0
        %9554 = vmatmul.mubr.bf16.gmra.mrb[0].mxu0 %v9426
        %v9555 = vpop.f32.mrb[0].mxu0
        %v9556 = vadd.f32 %v9396, %v9555
        %v9557 = vpop.f32.mrb[0].mxu0
        %v9558 = vpop.f32.mrb[0].mxu0
        %v9559 = vadd.f32 %v9396, %v9558
        %v9560 = vpop.f32.mrb[0].mxu0
        %9561 = vmatprep.mubr.bf16.mxu0 0
        %9562 = vmatmul.mubr.bf16.gmra.mrb[0].mxu0 %v9429
        %v9563 = vpop.f32.mrb[0].mxu0
        %v9564 = vadd.f32 %v9396, %v9563
        %v9565 = vpop.f32.mrb[0].mxu0
        %v9566 = vpop.f32.mrb[0].mxu0
        %v9567 = vadd.f32 %v9396, %v9566
        %v9568 = vpop.f32.mrb[0].mxu0
        %9569 = vmatprep.mubr.bf16.mxu0 0
        %9570 = vmatmul.mubr.bf16.gmra.mrb[0].mxu0 %v9432
        %v9571 = vpop.f32.mrb[0].mxu0
        %v9572 = vadd.f32 %v9396, %v9571
        %v9573 = vpop.f32.mrb[0].mxu0
        %v9574 = vpop.f32.mrb[0].mxu0
        %v9575 = vadd.f32 %v9396, %v9574
        %v9576 = vpop.f32.mrb[0].mxu0
        %9577 = vmatprep.mubr.bf16.mxu0 0
        %9578 = vmatmul.mubr.bf16.gmra.mrb[0].mxu0 %v9435
        %v9579 = vpop.f32.mrb[0].mxu0
        %v9580 = vadd.f32 %v9396, %v9579
        %v9581 = vpop.f32.mrb[0].mxu0
        %v9582 = vpop.f32.mrb[0].mxu0
        %v9583 = vadd.f32 %v9396, %v9582
        %v9584 = vpop.f32.mrb[0].mxu0
        %9585 = vmatprep.mubr.bf16.mxu0 0
        %9586 = vmatmul.mubr.bf16.gmra.mrb[0].mxu0 %v9438
        %v9587 = vpop.f32.mrb[0].mxu0
        %v9588 = vadd.f32 %v9396, %v9587
        %v9589 = vpop.f32.mrb[0].mxu0
        %v9590 = vpop.f32.mrb[0].mxu0
        %v9591 = vadd.f32 %v9396, %v9590
        %v9592 = vpop.f32.mrb[0].mxu0
        %9593 = vmatprep.mubr.bf16.mxu0 0
        %9594 = vmatmul.mubr.bf16.gmra.mrb[0].mxu0 %v9441
        %v9595 = vpop.f32.mrb[0].mxu0
        %v9596 = vadd.f32 %v9396, %v9595
        %v9597 = vpop.f32.mrb[0].mxu0
        %v9598 = vpop.f32.mrb[0].mxu0
        %v9599 = vadd.f32 %v9396, %v9598
        %v9600 = vpop.f32.mrb[0].mxu0
        %9601 = vmatprep.mubr.bf16.mxu0 0
        %9602 = vmatmul.mubr.bf16.gmra.mrb[0].mxu0 %v9444
        %v9603 = vpop.f32.mrb[0].mxu0
        %v9604 = vadd.f32 %v9396, %v9603
        %v9605 = vpop.f32.mrb[0].mxu0
        %v9606 = vpop.f32.mrb[0].mxu0
        %v9607 = vadd.f32 %v9396, %v9606
        %v9608 = vpop.f32.mrb[0].mxu0
        %9609 = vdwg.mxu0
        %v9610 = vadd.f32 %v9484, %v9342
        %v9611 = vadd.f32 %v9487, %v9343
        %v9612 = vadd.f32 %v9492, %v9344
        %v9613 = vadd.f32 %v9495, %v9345
        %v9614 = vadd.f32 %v9500, %v9346
        %v9615 = vadd.f32 %v9503, %v9347
        %v9616 = vadd.f32 %v9508, %v9348
        %v9617 = vadd.f32 %v9511, %v9349
        %v9618 = vadd.f32 %v9516, %v9350
        %v9619 = vadd.f32 %v9519, %v9351
        %v9620 = vadd.f32 %v9524, %v9352
        %v9621 = vadd.f32 %v9527, %v9353
        %v9622 = vadd.f32 %v9532, %v9354
        %v9623 = vadd.f32 %v9535, %v9355
        %v9624 = vadd.f32 %v9540, %v9356
        %v9625 = vadd.f32 %v9543, %v9357
        %v9626 = vadd.f32 %v9548, %v9358
        %v9627 = vadd.f32 %v9551, %v9359
        %v9628 = vadd.f32 %v9556, %v9360
        %v9629 = vadd.f32 %v9559, %v9361
        %v9630 = vadd.f32 %v9564, %v9362
        %v9631 = vadd.f32 %v9567, %v9363
        %v9632 = vadd.f32 %v9572, %v9364
        %v9633 = vadd.f32 %v9575, %v9365
        %v9634 = vadd.f32 %v9580, %v9366
        %v9635 = vadd.f32 %v9583, %v9367
        %v9636 = vadd.f32 %v9588, %v9368
        %v9637 = vadd.f32 %v9591, %v9369
        %v9638 = vadd.f32 %v9596, %v9370
        %v9639 = vadd.f32 %v9599, %v9371
        %v9640 = vadd.f32 %v9604, %v9372
        %v9641 = vadd.f32 %v9607, %v9373
        %v9642 = vmax.f32 %v9610, 0.0
        %v9643 = vmax.f32 %v9611, 0.0
        %v9644 = vmax.f32 %v9612, 0.0
        %v9645 = vmax.f32 %v9613, 0.0
        %v9646 = vmax.f32 %v9614, 0.0
        %v9647 = vmax.f32 %v9615, 0.0
        %v9648 = vmax.f32 %v9616, 0.0
        %v9649 = vmax.f32 %v9617, 0.0
        %v9650 = vmax.f32 %v9618, 0.0
        %v9651 = vmax.f32 %v9619, 0.0
        %v9652 = vmax.f32 %v9620, 0.0
        %v9653 = vmax.f32 %v9621, 0.0
        %v9654 = vmax.f32 %v9622, 0.0
        %v9655 = vmax.f32 %v9623, 0.0
        %v9656 = vmax.f32 %v9624, 0.0
        %v9657 = vmax.f32 %v9625, 0.0
        %v9658 = vmax.f32 %v9626, 0.0
        %v9659 = vmax.f32 %v9627, 0.0
        %v9660 = vmax.f32 %v9628, 0.0
        %v9661 = vmax.f32 %v9629, 0.0
        %v9662 = vmax.f32 %v9630, 0.0
        %v9663 = vmax.f32 %v9631, 0.0
        %v9664 = vmax.f32 %v9632, 0.0
        %v9665 = vmax.f32 %v9633, 0.0
        %v9666 = vmax.f32 %v9634, 0.0
        %v9667 = vmax.f32 %v9635, 0.0
        %v9668 = vmax.f32 %v9636, 0.0
        %v9669 = vmax.f32 %v9637, 0.0
        %v9670 = vmax.f32 %v9638, 0.0
        %v9671 = vmax.f32 %v9639, 0.0
        %v9672 = vmax.f32 %v9640, 0.0
        %v9673 = vmax.f32 %v9641, 0.0
        %9674 = vst.msk [vmem:[%s404] sm:$0xff] %vm749, %v9642
        %9675 = vst.msk [vmem:[%s404 + $0x8] sm:$0xff] %vm749, %v9643
        %9676 = vst.msk [vmem:[%s404 + $0x10] sm:$0xff] %vm749, %v9644
        %9677 = vst.msk [vmem:[%s404 + $0x18] sm:$0xff] %vm749, %v9645
        %9678 = vst.msk [vmem:[%s404 + $0x20] sm:$0xff] %vm749, %v9646
        %9679 = vst.msk [vmem:[%s404 + $0x28] sm:$0xff] %vm749, %v9647
        %9680 = vst.msk [vmem:[%s404 + $0x30] sm:$0xff] %vm749, %v9648
        %9681 = vst.msk [vmem:[%s404 + $0x38] sm:$0xff] %vm749, %v9649
        %9682 = vst.msk [vmem:[%s404 + $0x40] sm:$0xff] %vm749, %v9650
        %9683 = vst.msk [vmem:[%s404 + $0x48] sm:$0xff] %vm749, %v9651
        %9684 = vst.msk [vmem:[%s404 + $0x50] sm:$0xff] %vm749, %v9652
        %9685 = vst.msk [vmem:[%s404 + $0x58] sm:$0xff] %vm749, %v9653
        %9686 = vst.msk [vmem:[%s404 + $0x60] sm:$0xff] %vm749, %v9654
        %9687 = vst.msk [vmem:[%s404 + $0x68] sm:$0xff] %vm749, %v9655
        %9688 = vst.msk [vmem:[%s404 + $0x70] sm:$0xff] %vm749, %v9656
        %9689 = vst.msk [vmem:[%s404 + $0x78] sm:$0xff] %vm749, %v9657
        %9690 = vst.msk [vmem:[%s404 + $0x80] sm:$0xff] %vm749, %v9658
        %9691 = vst.msk [vmem:[%s404 + $0x88] sm:$0xff] %vm749, %v9659
        %9692 = vst.msk [vmem:[%s404 + $0x90] sm:$0xff] %vm749, %v9660
        %9693 = vst.msk [vmem:[%s404 + $0x98] sm:$0xff] %vm749, %v9661
        %9694 = vst.msk [vmem:[%s404 + $0xa0] sm:$0xff] %vm749, %v9662
        %9695 = vst.msk [vmem:[%s404 + $0xa8] sm:$0xff] %vm749, %v9663
        %9696 = vst.msk [vmem:[%s404 + $0xb0] sm:$0xff] %vm749, %v9664
        %9697 = vst.msk [vmem:[%s404 + $0xb8] sm:$0xff] %vm749, %v9665
        %9698 = vst.msk [vmem:[%s404 + $0xc0] sm:$0xff] %vm749, %v9666
        %9699 = vst.msk [vmem:[%s404 + $0xc8] sm:$0xff] %vm749, %v9667
        %9700 = vst.msk [vmem:[%s404 + $0xd0] sm:$0xff] %vm749, %v9668
        %9701 = vst.msk [vmem:[%s404 + $0xd8] sm:$0xff] %vm749, %v9669
        %9702 = vst.msk [vmem:[%s404 + $0xe0] sm:$0xff] %vm749, %v9670
        %9703 = vst.msk [vmem:[%s404 + $0xe8] sm:$0xff] %vm749, %v9671
        %9704 = vst.msk [vmem:[%s404 + $0xf0] sm:$0xff] %vm749, %v9672
        %9705 = vst.msk [vmem:[%s404 + $0xf8] sm:$0xff] %vm749, %v9673
        %s9706 = sand.u32 %s272, 1
        %s9707 = scalar_lea.sflag [#allocation7], %s9706
        %s9708 = sand.u32 %s272, 1
        %s9709 = smul.addr %s9708, 256
        %s9710 = scalar_lea.vmem [#allocation8], %s9709
        // Predicated region
        $region69: #{tpu_custom_call.1} parent=63 // pred_check
          %p9711 = pneg %p282
        $region70: #{tpu_custom_call.1} parent=63 // pred_check_branch
          %9713 = sbr.rel (%p9711) target = $region72
        $region71: #{tpu_custom_call.1} parent=63 // pred_region
          %s9715 = ssub.s32 4096, 4096
          %9716 = vsyncadd %s9707, %s9715
          %s9717 = smul.addr %s28, 32
          %s9718 = smul.addr %s9717, 128
          %s9719 = scalar_lea.hbm %s11, %s9718
          %s9720 = sshll.u32 %s9710, 4
          %s9721 = int_to_ptr.vmem [resolvable:$true] %s9720
          %9726 = dma.vmem_to_hbm [thread:$0]  %s9721, 4096, %s9719, %s9707, 128, 128, 8
        $region72: #{tpu_custom_call.1} parent=63 // pred_fallthru
          _
      $region64: #{tpu_custom_call.1} parent=5 // pred_fallthru
        _
      %p9727 = scmp.le.s32.totalorder 2, %s23
      // Predicated region
      $region73: #{tpu_custom_call.1} parent=5 // pred_check
        %p9728 = pneg %p9727
      $region74: #{tpu_custom_call.1} parent=5 // pred_check_branch
        %9730 = sbr.rel (%p9728) target = $region76
      $region75: #{tpu_custom_call.1} parent=5 // pred_region
        %s9731 = ssub.s32 %s23, 2
        // Predicated region
        $region77: #{tpu_custom_call.1} parent=75 // pred_check
          %p9732 = pneg %p288
        $region78: #{tpu_custom_call.1} parent=75 // pred_check_branch
          %9734 = sbr.rel (%p9732) target = $region80
        $region79: #{tpu_custom_call.1} parent=75 // pred_region
          %s9735 = sand.u32 %s273, 1
          %s9736 = scalar_lea.sflag [#allocation7], %s9735
          %s9737 = sand.u32 %s273, 1
          %s9738 = smul.addr %s9737, 256
          %s9739 = scalar_lea.vmem [#allocation8], %s9738
          %9740 = dma.done %s9736, 4096
        $region80: #{tpu_custom_call.1} parent=75 // pred_fallthru
          _
      $region76: #{tpu_custom_call.1} parent=5 // pred_fallthru
        _
    $region6: #{tpu_custom_call.1} parent=1 // loop_footer
      %s27 = sadd.s32 1, %s23
    $region7: #{tpu_custom_call.1} parent=1 // loop_footer_branch
      %22 = sbr.rel target = $region3
    $region8: #{tpu_custom_call.1} parent=1 // loop_exit
      _
    %9741 = vsyncpa [#allocation6], 1
    %s9742 = scalar_lea.sflag [#allocation6], 1
    %9743 = vsyncpa %s9742, 1
    %9744 = vsyncpa [#allocation7], 1
    %s9745 = scalar_lea.sflag [#allocation7], 1
    %9746 = vsyncpa %s9745, 1

</llo_original>
